<compile_context>
chip_gen: v7x
topology: tpu7x:2x2x1
jax: 0.10.0
libtpu: 0.0.40
codegen_flags: <defaults>
</compile_context>

<pallas_src>
import jax
import jax.numpy as jnp
from jax.experimental import pallas as pl
from jax.experimental.pallas import tpu as pltpu


# ----------------------------------------------------------------------------
# Fused bottleneck kernel
# ----------------------------------------------------------------------------
def _make_bottleneck_kernel(*, H, W, Wp, Cin, P, Cout, tho, Wo, stride,
                            has_downsample):
    s = stride
    body_rows = tho * s              # input rows (padded coords) in the body block
    slab_rows = body_rows + 2        # body + 2 halo rows
    M = tho * Wo                     # output pixels per row tile

    def _sub_rows(t, rows):
        # (rows*s, Wsel, C) -> (rows, Wsel, C), keep every s-th row.
        if s == 1:
            return t
        return t.reshape(rows, s, t.shape[1], t.shape[2])[:, 0]

    def _sub_cols(t, cols):
        # (R, cols*s, C) -> (R, cols, C), keep every s-th column.
        if s == 1:
            return t
        return t.reshape(t.shape[0], cols, s, t.shape[2])[:, :, 0]

    def kernel(body_ref, hal0_ref, hal1_ref, w1_ref, b1_ref, w2_ref, b2_ref,
               w3_ref, b3_ref, *rest):
        if has_downsample:
            wd_ref, o_ref = rest
        else:
            (o_ref,) = rest

        i = pl.program_id(1)
        r0 = i * body_rows           # first padded-coord row held by this slab

        # Haloed input slab for this tile: body block + 2 single-row halos
        # (all three are small, auto-pipelined DMAs).  dtype: bf16.
        slab = jnp.concatenate(
            [body_ref[...], hal0_ref[...], hal1_ref[...]], axis=0)   # (slab_rows, Wp, Cin)

        # --- conv1 (1x1, BN scale pre-folded) + bias + relu (f32 accumulate) --
        h1 = jnp.dot(slab.reshape(slab_rows * Wp, Cin), w1_ref[...],
                     preferred_element_type=jnp.float32)
        h1 = jnp.maximum(h1 + b1_ref[...], 0.0).reshape(slab_rows, Wp, P)

        # conv2's padding zero-pads *h1*, not relu(bn1(conv1(0))): zero every
        # position that came from a padded input row/column.  The mask is built
        # from tiny (slab_rows,1) / (1,Wp) iotas (cheap per step).
        row_ids = jax.lax.broadcasted_iota(jnp.int32, (slab_rows, 1), 0) + r0
        col_ids = jax.lax.broadcasted_iota(jnp.int32, (1, Wp), 1)
        interior = ((row_ids >= 1) & (row_ids <= H)) & \
                   ((col_ids >= 1) & (col_ids <= W))                 # (slab_rows, Wp)
        h1 = (h1 * interior.astype(jnp.float32)[:, :, None]).astype(jnp.bfloat16)

        # --- conv2 (3x3, stride s): 9 accumulating MXU dots (no lane concat) --
        col_views = [_sub_cols(h1[:, dx:dx + Wo * s, :], Wo) for dx in range(3)]
        acc2 = None
        for dy in range(3):
            for dx in range(3):
                tap = _sub_rows(col_views[dx][dy:dy + body_rows], tho)   # (tho, Wo, P)
                d = jnp.dot(tap.reshape(M, P), w2_ref[3 * dy + dx],
                            preferred_element_type=jnp.float32)
                acc2 = d if acc2 is None else acc2 + d
        h2 = jnp.maximum(acc2 + b2_ref[...], 0.0).astype(jnp.bfloat16)   # (M, P)

        # --- conv3 (1x1) + bn3 + residual (+ downsample as 2nd dot) + relu ---
        out = jnp.dot(h2, w3_ref[...],
                      preferred_element_type=jnp.float32) + b3_ref[...]  # (M, Cout)
        xres = _sub_rows(_sub_cols(slab[1:1 + body_rows, 1:1 + Wo * s, :], Wo), tho)
        xres = xres.reshape(M, Cin)
        if has_downsample:
            out = out + jnp.dot(xres, wd_ref[...],
                                preferred_element_type=jnp.float32)
        else:
            out = out + xres.astype(jnp.float32)
        o_ref[...] = jnp.maximum(out, 0.0).reshape(tho, Wo, Cout)

    return kernel


# ----------------------------------------------------------------------------
# Row-tile chooser: largest divisor of Ho fitting a VMEM budget, preferring
# MXU-friendly M = tho*Wo (multiples of 256, then 128).
# ----------------------------------------------------------------------------
def _choose_row_tile(Ho, Wo, Wp, Cin, P, Cout, stride,
                     vmem_budget=20 * 1024 * 1024):
    def est(tho):
        body_rows = tho * stride
        slab_rows = body_rows + 2
        io = (2 * slab_rows * Wp * Cin * 2          # double-buffered bf16 input slab
              + 2 * tho * Wo * Cout * 4)            # double-buffered f32 output
        live = (slab_rows * Wp * max(Cin, P) * 4    # slab / h1
                + tho * Wo * (2 * P + Cout + Cin) * 4)
        return io + live

    divisors = [t for t in range(1, Ho + 1) if Ho % t == 0]
    fitting = [t for t in divisors if est(t) <= vmem_budget] or [1]
    for align in (256, 128, 8):
        good = [t for t in fitting if (t * Wo) % align == 0]
        if good:
            return max(good)
    return max(fitting)


# ----------------------------------------------------------------------------
# Bottleneck forward (NHWC in / NHWC out)
# ----------------------------------------------------------------------------
def bottleneck_forward(x, params, stride=1):
    N, H, W, Cin = x.shape
    P = params["w1"].shape[1]
    Cout = params["w3"].shape[1]
    s = int(stride)
    has_ds = "wd" in params
    if not has_ds:
        assert s == 1 and Cin == Cout, "identity residual needs stride=1, Cin==Cout"

    Ho = (H - 1) // s + 1
    Wo = (W - 1) // s + 1

    # Pad the raw input once (top/left by 1; bottom/right just enough that every
    # slab slice is in-bounds).  Padded values are always masked in-kernel, so
    # their contents are irrelevant.  Stored bf16 to halve HBM input traffic.
    pad_bottom = max(1, Ho * s + 1 - H)
    pad_right = max(1, Wo * s + 1 - W)
    xp = jnp.pad(x, ((0, 0), (1, pad_bottom), (1, pad_right), (0, 0)))
    xp = xp.astype(jnp.bfloat16)
    Hp = H + 1 + pad_bottom
    Wp = W + 1 + pad_right

    tho = _choose_row_tile(Ho, Wo, Wp, Cin, P, Cout, s)
    num_tiles = Ho // tho
    body_rows = tho * s

    # Fold eval-mode BN scales into the conv weights (in f32), then cast the
    # matmul operands to bf16; per-channel biases stay f32 (added post-matmul).
    w1 = (params["w1"] * params["s1"]).astype(jnp.bfloat16)                 # (Cin, P)
    b1 = params["b1"]
    w2 = (params["w2"] * params["s2"]).reshape(9, P, P).astype(jnp.bfloat16)
    b2 = params["b2"]
    w3 = (params["w3"] * params["s3"]).astype(jnp.bfloat16)                 # (P, Cout)
    if has_ds:
        wd = (params["wd"] * params["sd"]).astype(jnp.bfloat16)             # (Cin, Cout)
        b3 = params["b3"] + params["bd"]
    else:
        b3 = params["b3"]

    kernel = _make_bottleneck_kernel(
        H=H, W=W, Wp=Wp, Cin=Cin, P=P, Cout=Cout,
        tho=tho, Wo=Wo, stride=s, has_downsample=has_ds)

    in_specs = [
        # Per-tile haloed slab: body rows + two single-row halos.  The input
        # stays in HBM; only ~(tho*s+2) rows live in VMEM per buffer.
        pl.BlockSpec((None, body_rows, Wp, Cin), lambda n, i: (n, i, 0, 0)),
        pl.BlockSpec((None, 1, Wp, Cin),
                     lambda n, i: (n, (i + 1) * body_rows, 0, 0)),
        pl.BlockSpec((None, 1, Wp, Cin),
                     lambda n, i: (n, (i + 1) * body_rows + 1, 0, 0)),
        pl.BlockSpec((Cin, P), lambda n, i: (0, 0)),
        pl.BlockSpec((1, P), lambda n, i: (0, 0)),
        pl.BlockSpec((9, P, P), lambda n, i: (0, 0, 0)),
        pl.BlockSpec((1, P), lambda n, i: (0, 0)),
        pl.BlockSpec((P, Cout), lambda n, i: (0, 0)),
        pl.BlockSpec((1, Cout), lambda n, i: (0, 0)),
    ]
    args = [xp, xp, xp, w1, b1, w2, b2, w3, b3]
    if has_ds:
        in_specs.append(pl.BlockSpec((Cin, Cout), lambda n, i: (0, 0)))
        args.append(wd)

    out = pl.pallas_call(
        kernel,
        out_shape=jax.ShapeDtypeStruct((N, Ho, Wo, Cout), jnp.float32),
        grid=(N, num_tiles),
        in_specs=in_specs,
        out_specs=pl.BlockSpec((None, tho, Wo, Cout), lambda n, i: (n, i, 0, 0)),
        compiler_params=pltpu.CompilerParams(
            dimension_semantics=("parallel", "parallel"),
            vmem_limit_bytes=32 * 1024 * 1024),
    )(*args)
    return out


# ----------------------------------------------------------------------------
# Deterministic parameter init + pure-JAX reference
# ----------------------------------------------------------------------------
def init_params(key, in_planes, planes, stride=1, expansion=4):
    out_planes = expansion * planes
    keys = jax.random.split(key, 8)

    def bn_fold(k, c):
        kg, kb, km, kv = jax.random.split(k, 4)
        gamma = 1.0 + 0.1 * jax.random.normal(kg, (c,))
        beta = 0.1 * jax.random.normal(kb, (c,))
        mean = 0.1 * jax.random.normal(km, (c,))
        var = jnp.abs(jax.random.normal(kv, (c,))) + 0.5
        scale = gamma / jnp.sqrt(var + 1e-5)
        bias = beta - mean * scale
        return (scale.reshape(1, c).astype(jnp.float32),
                bias.reshape(1, c).astype(jnp.float32))

    p = {}
    p["w1"] = (0.1 * jax.random.normal(keys[0], (in_planes, planes))).astype(jnp.float32)
    p["s1"], p["b1"] = bn_fold(keys[1], planes)
    p["w2"] = (0.1 * jax.random.normal(keys[2], (3, 3, planes, planes))).astype(jnp.float32)
    p["s2"], p["b2"] = bn_fold(keys[3], planes)
    p["w3"] = (0.1 * jax.random.normal(keys[4], (planes, out_planes))).astype(jnp.float32)
    p["s3"], p["b3"] = bn_fold(keys[5], out_planes)
    if stride != 1 or in_planes != out_planes:
        p["wd"] = (0.1 * jax.random.normal(keys[6], (in_planes, out_planes))).astype(jnp.float32)
        p["sd"], p["bd"] = bn_fold(keys[7], out_planes)
    return p


def reference_forward(x, params, stride=1):
    dn = ("NHWC", "HWIO", "NHWC")

    def conv1x1(x, w, s):
        w4 = w.reshape(1, 1, w.shape[0], w.shape[1])
        return jax.lax.conv_general_dilated(x, w4, (s, s), "VALID", dimension_numbers=dn)

    def conv3x3(x, w, s):
        return jax.lax.conv_general_dilated(x, w, (s, s), ((1, 1), (1, 1)), dimension_numbers=dn)

    def bn(x, scale, bias):
        return x * scale.reshape(1, 1, 1, -1) + bias.reshape(1, 1, 1, -1)

    h = jax.nn.relu(bn(conv1x1(x, params["w1"], 1), params["s1"], params["b1"]))
    h = jax.nn.relu(bn(conv3x3(h, params["w2"], stride), params["s2"], params["b2"]))
    h = bn(conv1x1(h, params["w3"], 1), params["s3"], params["b3"])
    if "wd" in params:
        r = bn(conv1x1(x, params["wd"], stride), params["sd"], params["bd"])
    else:
        r = x
    return jax.nn.relu(h + r)


# ----------------------------------------------------------------------------
if __name__ == "__main__":
    key = jax.random.PRNGKey(0)
    kx, kp, kx2, kp2 = jax.random.split(key, 4)

    def _check(name, x_nchw, params, stride):
        x = jnp.transpose(x_nchw, (0, 2, 3, 1))          # NCHW (PyTorch) -> NHWC
        out = jax.block_until_ready(bottleneck_forward(x, params, stride))
        ref = reference_forward(x, params, stride)
        assert out.shape == ref.shape, (out.shape, ref.shape)
        err = float(jnp.max(jnp.abs(out - ref)))
        # bf16 MXU operands with f32 accumulation -> loosened tolerance
        tol = 3e-2 * (1.0 + float(jnp.max(jnp.abs(ref))))
        if err > tol:
            raise AssertionError(f"{name}: max abs err {err} > tol {tol}")

    # --- config from the spec: Bottleneck(in_planes=4, planes=8), stride=1
    #     (downsample residual path)
    N, H, W = 2, 16, 16
    x1 = jax.random.normal(kx, (N, 4, H, W), dtype=jnp.float32)
    p1 = init_params(kp, 4, 8, 1)
    _check("downsample-path", x1, p1, 1)

    # --- identity residual path: in_planes == expansion * planes, stride=1
    x2 = jax.random.normal(kx2, (N, 32, H, W), dtype=jnp.float32)
    p2 = init_params(kp2, 32, 8, 1)
    _check("identity-path", x2, p2, 1)

    print("KERNEL_OK")
</pallas_src>

<mosaic_0001>
module attributes {stable_mosaic.version = 11 : i64} {
  func.func @kernel(%arg0: i32, %arg1: i32, %arg2: memref<1x16x18x4xbf16, #tpu.memory_space<vmem>>, %arg3: memref<1x1x18x4xbf16, #tpu.memory_space<vmem>>, %arg4: memref<1x1x18x4xbf16, #tpu.memory_space<vmem>>, %arg5: memref<4x8xbf16, #tpu.memory_space<vmem>>, %arg6: memref<1x8xf32, #tpu.memory_space<vmem>>, %arg7: memref<9x8x8xbf16, #tpu.memory_space<vmem>>, %arg8: memref<1x8xf32, #tpu.memory_space<vmem>>, %arg9: memref<8x32xbf16, #tpu.memory_space<vmem>>, %arg10: memref<1x32xf32, #tpu.memory_space<vmem>>, %arg11: memref<4x32xbf16, #tpu.memory_space<vmem>>, %arg12: memref<1x16x16x32xf32, #tpu.memory_space<vmem>>) attributes {dimension_semantics = [#tpu.dimension_semantics<parallel>, #tpu.dimension_semantics<parallel>], iteration_bounds = array<i64: 2, 1>, scalar_prefetch = 0 : i64, scratch_operands = 0 : i64, tpu.core_type = #tpu.core_type<tc>, window_params = [{transform_indices = @transform_0, window_bounds = array<i64: 1, 16, 18, 4>}, {transform_indices = @transform_1, window_bounds = array<i64: 1, 1, 18, 4>}, {transform_indices = @transform_2, window_bounds = array<i64: 1, 1, 18, 4>}, {pipeline_mode = #tpu.pipeline_mode<synchronous>, transform_indices = @transform_3, window_bounds = array<i64: 4, 8>}, {pipeline_mode = #tpu.pipeline_mode<synchronous>, transform_indices = @transform_4, window_bounds = array<i64: 1, 8>}, {pipeline_mode = #tpu.pipeline_mode<synchronous>, transform_indices = @transform_5, window_bounds = array<i64: 9, 8, 8>}, {pipeline_mode = #tpu.pipeline_mode<synchronous>, transform_indices = @transform_6, window_bounds = array<i64: 1, 8>}, {pipeline_mode = #tpu.pipeline_mode<synchronous>, transform_indices = @transform_7, window_bounds = array<i64: 8, 32>}, {pipeline_mode = #tpu.pipeline_mode<synchronous>, transform_indices = @transform_8, window_bounds = array<i64: 1, 32>}, {pipeline_mode = #tpu.pipeline_mode<synchronous>, transform_indices = @transform_9, window_bounds = array<i64: 4, 32>}, {transform_indices = @transform_10, window_bounds = array<i64: 1, 16, 16, 32>}]} {
    %c16_i32 = arith.constant 16 : i32
    %0 = arith.muli %arg1, %c16_i32 : i32
    %c0 = arith.constant 0 : index
    %c0_0 = arith.constant 0 : index
    %c0_1 = arith.constant 0 : index
    %c0_2 = arith.constant 0 : index
    %1 = vector.load %arg2[%c0, %c0_0, %c0_1, %c0_2] : memref<1x16x18x4xbf16, #tpu.memory_space<vmem>>, vector<1x16x18x4xbf16>
    %2 = vector.shape_cast %1 : vector<1x16x18x4xbf16> to vector<16x18x4xbf16>
    %c0_3 = arith.constant 0 : index
    %c0_4 = arith.constant 0 : index
    %c0_5 = arith.constant 0 : index
    %c0_6 = arith.constant 0 : index
    %3 = vector.load %arg3[%c0_3, %c0_4, %c0_5, %c0_6] : memref<1x1x18x4xbf16, #tpu.memory_space<vmem>>, vector<1x1x18x4xbf16>
    %4 = vector.shape_cast %3 : vector<1x1x18x4xbf16> to vector<1x18x4xbf16>
    %c0_7 = arith.constant 0 : index
    %c0_8 = arith.constant 0 : index
    %c0_9 = arith.constant 0 : index
    %c0_10 = arith.constant 0 : index
    %5 = vector.load %arg4[%c0_7, %c0_8, %c0_9, %c0_10] : memref<1x1x18x4xbf16, #tpu.memory_space<vmem>>, vector<1x1x18x4xbf16>
    %6 = vector.shape_cast %5 : vector<1x1x18x4xbf16> to vector<1x18x4xbf16>
    %7 = tpu.concatenate %2, %4, %6 in 0 : vector<16x18x4xbf16>, vector<1x18x4xbf16>, vector<1x18x4xbf16> -> vector<18x18x4xbf16>
    %8 = vector.shape_cast %7 : vector<18x18x4xbf16> to vector<324x4xbf16>
    %c0_11 = arith.constant 0 : index
    %c0_12 = arith.constant 0 : index
    %9 = vector.load %arg5[%c0_11, %c0_12] : memref<4x8xbf16, #tpu.memory_space<vmem>>, vector<4x8xbf16>
    %cst = arith.constant dense<0.000000e+00> : vector<324x8xf32>
    %10 = tpu.matmul %8, %9, %cst {dimension_numbers = #tpu.dot_dimension_numbers<[1], [0], [0], [1], [0, 0, 1, 1], [], []>} : vector<324x4xbf16>, vector<4x8xbf16>, vector<324x8xf32> -> vector<324x8xf32>
    %c0_13 = arith.constant 0 : index
    %c0_14 = arith.constant 0 : index
    %11 = vector.load %arg6[%c0_13, %c0_14] : memref<1x8xf32, #tpu.memory_space<vmem>>, vector<1x8xf32>
    %12 = vector.broadcast %11 : vector<1x8xf32> to vector<324x8xf32>
    %13 = arith.addf %10, %12 : vector<324x8xf32>
    %cst_15 = arith.constant 0.000000e+00 : f32
    %14 = vector.broadcast %cst_15 : f32 to vector<324x8xf32>
    %15 = arith.maximumf %13, %14 : vector<324x8xf32>
    %16 = vector.shape_cast %15 : vector<324x8xf32> to vector<18x18x8xf32>
    %17 = tpu.iota {dimensions = array<i32: 0>} : vector<18x1xi32>
    %18 = vector.broadcast %0 : i32 to vector<18x1xi32>
    %19 = arith.addi %17, %18 : vector<18x1xi32>
    %20 = tpu.iota {dimensions = array<i32: 1>} : vector<1x18xi32>
    %c1_i32 = arith.constant 1 : i32
    %21 = vector.broadcast %c1_i32 : i32 to vector<18x1xi32>
    %22 = arith.cmpi sge, %19, %21 : vector<18x1xi32>
    %c16_i32_16 = arith.constant 16 : i32
    %23 = vector.broadcast %c16_i32_16 : i32 to vector<18x1xi32>
    %24 = arith.cmpi sle, %19, %23 : vector<18x1xi32>
    %25 = arith.andi %22, %24 : vector<18x1xi1>
    %c1_i32_17 = arith.constant 1 : i32
    %26 = vector.broadcast %c1_i32_17 : i32 to vector<1x18xi32>
    %27 = arith.cmpi sge, %20, %26 : vector<1x18xi32>
    %c16_i32_18 = arith.constant 16 : i32
    %28 = vector.broadcast %c16_i32_18 : i32 to vector<1x18xi32>
    %29 = arith.cmpi sle, %20, %28 : vector<1x18xi32>
    %30 = arith.andi %27, %29 : vector<1x18xi1>
    %31 = vector.broadcast %25 : vector<18x1xi1> to vector<18x18xi1>
    %32 = vector.broadcast %30 : vector<1x18xi1> to vector<18x18xi1>
    %33 = arith.andi %31, %32 : vector<18x18xi1>
    %34 = arith.extui %33 : vector<18x18xi1> to vector<18x18xi32>
    %35 = arith.sitofp %34 : vector<18x18xi32> to vector<18x18xf32>
    %36 = vector.shape_cast %35 : vector<18x18xf32> to vector<18x18x1xf32>
    %37 = vector.broadcast %36 : vector<18x18x1xf32> to vector<18x18x8xf32>
    %38 = arith.mulf %16, %37 : vector<18x18x8xf32>
    %39 = arith.truncf %38 : vector<18x18x8xf32> to vector<18x18x8xbf16>
    %40 = vector.extract_strided_slice %39 {offsets = [0, 0, 0], sizes = [18, 16, 8], strides = [1, 1, 1]} : vector<18x18x8xbf16> to vector<18x16x8xbf16>
    %41 = vector.extract_strided_slice %39 {offsets = [0, 1, 0], sizes = [18, 16, 8], strides = [1, 1, 1]} : vector<18x18x8xbf16> to vector<18x16x8xbf16>
    %42 = vector.extract_strided_slice %39 {offsets = [0, 2, 0], sizes = [18, 16, 8], strides = [1, 1, 1]} : vector<18x18x8xbf16> to vector<18x16x8xbf16>
    %43 = vector.extract_strided_slice %40 {offsets = [0, 0, 0], sizes = [16, 16, 8], strides = [1, 1, 1]} : vector<18x16x8xbf16> to vector<16x16x8xbf16>
    %44 = vector.shape_cast %43 : vector<16x16x8xbf16> to vector<256x8xbf16>
    %c0_19 = arith.constant 0 : index
    %c0_20 = arith.constant 0 : index
    %c0_21 = arith.constant 0 : index
    %45 = vector.load %arg7[%c0_19, %c0_20, %c0_21] : memref<9x8x8xbf16, #tpu.memory_space<vmem>>, vector<1x8x8xbf16>
    %46 = vector.shape_cast %45 : vector<1x8x8xbf16> to vector<8x8xbf16>
    %cst_22 = arith.constant dense<0.000000e+00> : vector<256x8xf32>
    %47 = tpu.matmul %44, %46, %cst_22 {dimension_numbers = #tpu.dot_dimension_numbers<[1], [0], [0], [1], [0, 0, 1, 1], [], []>} : vector<256x8xbf16>, vector<8x8xbf16>, vector<256x8xf32> -> vector<256x8xf32>
    %48 = vector.extract_strided_slice %41 {offsets = [0, 0, 0], sizes = [16, 16, 8], strides = [1, 1, 1]} : vector<18x16x8xbf16> to vector<16x16x8xbf16>
    %49 = vector.shape_cast %48 : vector<16x16x8xbf16> to vector<256x8xbf16>
    %c1 = arith.constant 1 : index
    %c0_23 = arith.constant 0 : index
    %c0_24 = arith.constant 0 : index
    %50 = vector.load %arg7[%c1, %c0_23, %c0_24] : memref<9x8x8xbf16, #tpu.memory_space<vmem>>, vector<1x8x8xbf16>
    %51 = vector.shape_cast %50 : vector<1x8x8xbf16> to vector<8x8xbf16>
    %cst_25 = arith.constant dense<0.000000e+00> : vector<256x8xf32>
    %52 = tpu.matmul %49, %51, %cst_25 {dimension_numbers = #tpu.dot_dimension_numbers<[1], [0], [0], [1], [0, 0, 1, 1], [], []>} : vector<256x8xbf16>, vector<8x8xbf16>, vector<256x8xf32> -> vector<256x8xf32>
    %53 = arith.addf %47, %52 : vector<256x8xf32>
    %54 = vector.extract_strided_slice %42 {offsets = [0, 0, 0], sizes = [16, 16, 8], strides = [1, 1, 1]} : vector<18x16x8xbf16> to vector<16x16x8xbf16>
    %55 = vector.shape_cast %54 : vector<16x16x8xbf16> to vector<256x8xbf16>
    %c2 = arith.constant 2 : index
    %c0_26 = arith.constant 0 : index
    %c0_27 = arith.constant 0 : index
    %56 = vector.load %arg7[%c2, %c0_26, %c0_27] : memref<9x8x8xbf16, #tpu.memory_space<vmem>>, vector<1x8x8xbf16>
    %57 = vector.shape_cast %56 : vector<1x8x8xbf16> to vector<8x8xbf16>
    %cst_28 = arith.constant dense<0.000000e+00> : vector<256x8xf32>
    %58 = tpu.matmul %55, %57, %cst_28 {dimension_numbers = #tpu.dot_dimension_numbers<[1], [0], [0], [1], [0, 0, 1, 1], [], []>} : vector<256x8xbf16>, vector<8x8xbf16>, vector<256x8xf32> -> vector<256x8xf32>
    %59 = arith.addf %53, %58 : vector<256x8xf32>
    %60 = vector.extract_strided_slice %40 {offsets = [1, 0, 0], sizes = [16, 16, 8], strides = [1, 1, 1]} : vector<18x16x8xbf16> to vector<16x16x8xbf16>
    %61 = vector.shape_cast %60 : vector<16x16x8xbf16> to vector<256x8xbf16>
    %c3 = arith.constant 3 : index
    %c0_29 = arith.constant 0 : index
    %c0_30 = arith.constant 0 : index
    %62 = vector.load %arg7[%c3, %c0_29, %c0_30] : memref<9x8x8xbf16, #tpu.memory_space<vmem>>, vector<1x8x8xbf16>
    %63 = vector.shape_cast %62 : vector<1x8x8xbf16> to vector<8x8xbf16>
    %cst_31 = arith.constant dense<0.000000e+00> : vector<256x8xf32>
    %64 = tpu.matmul %61, %63, %cst_31 {dimension_numbers = #tpu.dot_dimension_numbers<[1], [0], [0], [1], [0, 0, 1, 1], [], []>} : vector<256x8xbf16>, vector<8x8xbf16>, vector<256x8xf32> -> vector<256x8xf32>
    %65 = arith.addf %59, %64 : vector<256x8xf32>
    %66 = vector.extract_strided_slice %41 {offsets = [1, 0, 0], sizes = [16, 16, 8], strides = [1, 1, 1]} : vector<18x16x8xbf16> to vector<16x16x8xbf16>
    %67 = vector.shape_cast %66 : vector<16x16x8xbf16> to vector<256x8xbf16>
    %c4 = arith.constant 4 : index
    %c0_32 = arith.constant 0 : index
    %c0_33 = arith.constant 0 : index
    %68 = vector.load %arg7[%c4, %c0_32, %c0_33] : memref<9x8x8xbf16, #tpu.memory_space<vmem>>, vector<1x8x8xbf16>
    %69 = vector.shape_cast %68 : vector<1x8x8xbf16> to vector<8x8xbf16>
    %cst_34 = arith.constant dense<0.000000e+00> : vector<256x8xf32>
    %70 = tpu.matmul %67, %69, %cst_34 {dimension_numbers = #tpu.dot_dimension_numbers<[1], [0], [0], [1], [0, 0, 1, 1], [], []>} : vector<256x8xbf16>, vector<8x8xbf16>, vector<256x8xf32> -> vector<256x8xf32>
    %71 = arith.addf %65, %70 : vector<256x8xf32>
    %72 = vector.extract_strided_slice %42 {offsets = [1, 0, 0], sizes = [16, 16, 8], strides = [1, 1, 1]} : vector<18x16x8xbf16> to vector<16x16x8xbf16>
    %73 = vector.shape_cast %72 : vector<16x16x8xbf16> to vector<256x8xbf16>
    %c5 = arith.constant 5 : index
    %c0_35 = arith.constant 0 : index
    %c0_36 = arith.constant 0 : index
    %74 = vector.load %arg7[%c5, %c0_35, %c0_36] : memref<9x8x8xbf16, #tpu.memory_space<vmem>>, vector<1x8x8xbf16>
    %75 = vector.shape_cast %74 : vector<1x8x8xbf16> to vector<8x8xbf16>
    %cst_37 = arith.constant dense<0.000000e+00> : vector<256x8xf32>
    %76 = tpu.matmul %73, %75, %cst_37 {dimension_numbers = #tpu.dot_dimension_numbers<[1], [0], [0], [1], [0, 0, 1, 1], [], []>} : vector<256x8xbf16>, vector<8x8xbf16>, vector<256x8xf32> -> vector<256x8xf32>
    %77 = arith.addf %71, %76 : vector<256x8xf32>
    %78 = vector.extract_strided_slice %40 {offsets = [2, 0, 0], sizes = [16, 16, 8], strides = [1, 1, 1]} : vector<18x16x8xbf16> to vector<16x16x8xbf16>
    %79 = vector.shape_cast %78 : vector<16x16x8xbf16> to vector<256x8xbf16>
    %c6 = arith.constant 6 : index
    %c0_38 = arith.constant 0 : index
    %c0_39 = arith.constant 0 : index
    %80 = vector.load %arg7[%c6, %c0_38, %c0_39] : memref<9x8x8xbf16, #tpu.memory_space<vmem>>, vector<1x8x8xbf16>
    %81 = vector.shape_cast %80 : vector<1x8x8xbf16> to vector<8x8xbf16>
    %cst_40 = arith.constant dense<0.000000e+00> : vector<256x8xf32>
    %82 = tpu.matmul %79, %81, %cst_40 {dimension_numbers = #tpu.dot_dimension_numbers<[1], [0], [0], [1], [0, 0, 1, 1], [], []>} : vector<256x8xbf16>, vector<8x8xbf16>, vector<256x8xf32> -> vector<256x8xf32>
    %83 = arith.addf %77, %82 : vector<256x8xf32>
    %84 = vector.extract_strided_slice %41 {offsets = [2, 0, 0], sizes = [16, 16, 8], strides = [1, 1, 1]} : vector<18x16x8xbf16> to vector<16x16x8xbf16>
    %85 = vector.shape_cast %84 : vector<16x16x8xbf16> to vector<256x8xbf16>
    %c7 = arith.constant 7 : index
    %c0_41 = arith.constant 0 : index
    %c0_42 = arith.constant 0 : index
    %86 = vector.load %arg7[%c7, %c0_41, %c0_42] : memref<9x8x8xbf16, #tpu.memory_space<vmem>>, vector<1x8x8xbf16>
    %87 = vector.shape_cast %86 : vector<1x8x8xbf16> to vector<8x8xbf16>
    %cst_43 = arith.constant dense<0.000000e+00> : vector<256x8xf32>
    %88 = tpu.matmul %85, %87, %cst_43 {dimension_numbers = #tpu.dot_dimension_numbers<[1], [0], [0], [1], [0, 0, 1, 1], [], []>} : vector<256x8xbf16>, vector<8x8xbf16>, vector<256x8xf32> -> vector<256x8xf32>
    %89 = arith.addf %83, %88 : vector<256x8xf32>
    %90 = vector.extract_strided_slice %42 {offsets = [2, 0, 0], sizes = [16, 16, 8], strides = [1, 1, 1]} : vector<18x16x8xbf16> to vector<16x16x8xbf16>
    %91 = vector.shape_cast %90 : vector<16x16x8xbf16> to vector<256x8xbf16>
    %c8 = arith.constant 8 : index
    %c0_44 = arith.constant 0 : index
    %c0_45 = arith.constant 0 : index
    %92 = vector.load %arg7[%c8, %c0_44, %c0_45] : memref<9x8x8xbf16, #tpu.memory_space<vmem>>, vector<1x8x8xbf16>
    %93 = vector.shape_cast %92 : vector<1x8x8xbf16> to vector<8x8xbf16>
    %cst_46 = arith.constant dense<0.000000e+00> : vector<256x8xf32>
    %94 = tpu.matmul %91, %93, %cst_46 {dimension_numbers = #tpu.dot_dimension_numbers<[1], [0], [0], [1], [0, 0, 1, 1], [], []>} : vector<256x8xbf16>, vector<8x8xbf16>, vector<256x8xf32> -> vector<256x8xf32>
    %95 = arith.addf %89, %94 : vector<256x8xf32>
    %c0_47 = arith.constant 0 : index
    %c0_48 = arith.constant 0 : index
    %96 = vector.load %arg8[%c0_47, %c0_48] : memref<1x8xf32, #tpu.memory_space<vmem>>, vector<1x8xf32>
    %97 = vector.broadcast %96 : vector<1x8xf32> to vector<256x8xf32>
    %98 = arith.addf %95, %97 : vector<256x8xf32>
    %cst_49 = arith.constant 0.000000e+00 : f32
    %99 = vector.broadcast %cst_49 : f32 to vector<256x8xf32>
    %100 = arith.maximumf %98, %99 : vector<256x8xf32>
    %101 = arith.truncf %100 : vector<256x8xf32> to vector<256x8xbf16>
    %c0_50 = arith.constant 0 : index
    %c0_51 = arith.constant 0 : index
    %102 = vector.load %arg9[%c0_50, %c0_51] : memref<8x32xbf16, #tpu.memory_space<vmem>>, vector<8x32xbf16>
    %cst_52 = arith.constant dense<0.000000e+00> : vector<256x32xf32>
    %103 = tpu.matmul %101, %102, %cst_52 {dimension_numbers = #tpu.dot_dimension_numbers<[1], [0], [0], [1], [0, 0, 1, 1], [], []>} : vector<256x8xbf16>, vector<8x32xbf16>, vector<256x32xf32> -> vector<256x32xf32>
    %c0_53 = arith.constant 0 : index
    %c0_54 = arith.constant 0 : index
    %104 = vector.load %arg10[%c0_53, %c0_54] : memref<1x32xf32, #tpu.memory_space<vmem>>, vector<1x32xf32>
    %105 = vector.broadcast %104 : vector<1x32xf32> to vector<256x32xf32>
    %106 = arith.addf %103, %105 : vector<256x32xf32>
    %107 = vector.extract_strided_slice %7 {offsets = [1, 1, 0], sizes = [16, 16, 4], strides = [1, 1, 1]} : vector<18x18x4xbf16> to vector<16x16x4xbf16>
    %108 = vector.shape_cast %107 : vector<16x16x4xbf16> to vector<256x4xbf16>
    %c0_55 = arith.constant 0 : index
    %c0_56 = arith.constant 0 : index
    %109 = vector.load %arg11[%c0_55, %c0_56] : memref<4x32xbf16, #tpu.memory_space<vmem>>, vector<4x32xbf16>
    %cst_57 = arith.constant dense<0.000000e+00> : vector<256x32xf32>
    %110 = tpu.matmul %108, %109, %cst_57 {dimension_numbers = #tpu.dot_dimension_numbers<[1], [0], [0], [1], [0, 0, 1, 1], [], []>} : vector<256x4xbf16>, vector<4x32xbf16>, vector<256x32xf32> -> vector<256x32xf32>
    %111 = arith.addf %106, %110 : vector<256x32xf32>
    %cst_58 = arith.constant 0.000000e+00 : f32
    %112 = vector.broadcast %cst_58 : f32 to vector<256x32xf32>
    %113 = arith.maximumf %111, %112 : vector<256x32xf32>
    %114 = vector.shape_cast %113 : vector<256x32xf32> to vector<16x16x32xf32>
    %c0_59 = arith.constant 0 : index
    %c0_60 = arith.constant 0 : index
    %c0_61 = arith.constant 0 : index
    %c0_62 = arith.constant 0 : index
    %115 = vector.load %arg12[%c0_59, %c0_60, %c0_61, %c0_62] : memref<1x16x16x32xf32, #tpu.memory_space<vmem>>, vector<1x16x16x32xf32>
    %116 = vector.shape_cast %115 : vector<1x16x16x32xf32> to vector<16x16x32xf32>
    %117 = vector.shape_cast %114 : vector<16x16x32xf32> to vector<1x16x16x32xf32>
    tpu.vector_store %arg12[%c0_59, %c0_60, %c0_61, %c0_62], %117 {strides = array<i32>} : memref<1x16x16x32xf32, #tpu.memory_space<vmem>>, vector<1x16x16x32xf32>,
    return
  }
  func.func @transform_0(%arg0: i32, %arg1: i32) -> (i32, i32, i32, i32) {
    %c0_i32 = arith.constant 0 : i32
    %c0_i32_0 = arith.constant 0 : i32
    %c0_i32_1 = arith.constant 0 : i32
    return %arg0, %arg1, %c0_i32, %c0_i32_0 : i32, i32, i32, i32
  }
  func.func @transform_1(%arg0: i32, %arg1: i32) -> (i32, i32, i32, i32) {
    %c1_i32 = arith.constant 1 : i32
    %0 = arith.addi %arg1, %c1_i32 : i32
    %c16_i32 = arith.constant 16 : i32
    %1 = arith.muli %0, %c16_i32 : i32
    %c0_i32 = arith.constant 0 : i32
    %c0_i32_0 = arith.constant 0 : i32
    %c0_i32_1 = arith.constant 0 : i32
    return %arg0, %1, %c0_i32, %c0_i32_0 : i32, i32, i32, i32
  }
  func.func @transform_2(%arg0: i32, %arg1: i32) -> (i32, i32, i32, i32) {
    %c1_i32 = arith.constant 1 : i32
    %0 = arith.addi %arg1, %c1_i32 : i32
    %c16_i32 = arith.constant 16 : i32
    %1 = arith.muli %0, %c16_i32 : i32
    %c1_i32_0 = arith.constant 1 : i32
    %2 = arith.addi %1, %c1_i32_0 : i32
    %c0_i32 = arith.constant 0 : i32
    %c0_i32_1 = arith.constant 0 : i32
    %c0_i32_2 = arith.constant 0 : i32
    return %arg0, %2, %c0_i32, %c0_i32_1 : i32, i32, i32, i32
  }
  func.func @transform_3(%arg0: i32, %arg1: i32) -> (i32, i32) {
    %c0_i32 = arith.constant 0 : i32
    %c0_i32_0 = arith.constant 0 : i32
    %c0_i32_1 = arith.constant 0 : i32
    return %c0_i32, %c0_i32_0 : i32, i32
  }
  func.func @transform_4(%arg0: i32, %arg1: i32) -> (i32, i32) {
    %c0_i32 = arith.constant 0 : i32
    %c0_i32_0 = arith.constant 0 : i32
    %c0_i32_1 = arith.constant 0 : i32
    return %c0_i32, %c0_i32_0 : i32, i32
  }
  func.func @transform_5(%arg0: i32, %arg1: i32) -> (i32, i32, i32) {
    %c0_i32 = arith.constant 0 : i32
    %c0_i32_0 = arith.constant 0 : i32
    %c0_i32_1 = arith.constant 0 : i32
    %c0_i32_2 = arith.constant 0 : i32
    return %c0_i32, %c0_i32_0, %c0_i32_1 : i32, i32, i32
  }
  func.func @transform_6(%arg0: i32, %arg1: i32) -> (i32, i32) {
    %c0_i32 = arith.constant 0 : i32
    %c0_i32_0 = arith.constant 0 : i32
    %c0_i32_1 = arith.constant 0 : i32
    return %c0_i32, %c0_i32_0 : i32, i32
  }
  func.func @transform_7(%arg0: i32, %arg1: i32) -> (i32, i32) {
    %c0_i32 = arith.constant 0 : i32
    %c0_i32_0 = arith.constant 0 : i32
    %c0_i32_1 = arith.constant 0 : i32
    return %c0_i32, %c0_i32_0 : i32, i32
  }
  func.func @transform_8(%arg0: i32, %arg1: i32) -> (i32, i32) {
    %c0_i32 = arith.constant 0 : i32
    %c0_i32_0 = arith.constant 0 : i32
    %c0_i32_1 = arith.constant 0 : i32
    return %c0_i32, %c0_i32_0 : i32, i32
  }
  func.func @transform_9(%arg0: i32, %arg1: i32) -> (i32, i32) {
    %c0_i32 = arith.constant 0 : i32
    %c0_i32_0 = arith.constant 0 : i32
    %c0_i32_1 = arith.constant 0 : i32
    return %c0_i32, %c0_i32_0 : i32, i32
  }
  func.func @transform_10(%arg0: i32, %arg1: i32) -> (i32, i32, i32, i32) {
    %c0_i32 = arith.constant 0 : i32
    %c0_i32_0 = arith.constant 0 : i32
    %c0_i32_1 = arith.constant 0 : i32
    return %arg0, %arg1, %c0_i32, %c0_i32_0 : i32, i32, i32, i32
  }
}

</mosaic_0001>

<llo_original>
// kernel: tpu_custom_call.1
$region0: #{tpu_custom_call.1}
  #allocation0 [shape = 'u32[]', space=smem, size = 0x4, offset = 0x4, fixed_abs, tag = 'smem constant byte address 0x4 - core index']
  #allocation1 [shape = 'u32[144,128]{1,0:T(1,128)}', space=vmem, size = 0x12000, scoped, tag = 'internal scratch']
  %s0 = inlined_call_operand.vmem [shape: bf16[2,18,18,4], index: 0, kind: input, shape index: {}]
  %s1 = inlined_call_operand.vmem [shape: bf16[2,18,18,4], index: 1, kind: input, shape index: {}]
  %s2 = inlined_call_operand.vmem [shape: bf16[2,18,18,4], index: 2, kind: input, shape index: {}]
  %s3 = inlined_call_operand.vmem [shape: bf16[4,8], index: 3, kind: input, shape index: {}]
  %s4 = inlined_call_operand.vmem [shape: f32[1,8], index: 4, kind: input, shape index: {}]
  %s5 = inlined_call_operand.vmem [shape: bf16[9,8,8], index: 5, kind: input, shape index: {}]
  %s6 = inlined_call_operand.vmem [shape: f32[1,8], index: 6, kind: input, shape index: {}]
  %s7 = inlined_call_operand.vmem [shape: bf16[8,32], index: 7, kind: input, shape index: {}]
  %s8 = inlined_call_operand.vmem [shape: f32[1,32], index: 8, kind: input, shape index: {}]
  %s9 = inlined_call_operand.vmem [shape: bf16[4,32], index: 9, kind: input, shape index: {}]
  %s10 = inlined_call_operand.hbm [shape: f32[2,16,16,32], index: 10, kind: output, shape index: {}]
  %s11 = sld [smem:[#allocation0]]
  $region73: #{tpu_custom_call.1} parent=0
    _
  %s13 = ssub.s32 1, %s11
  %s14 = scalar_select 0, %s13, %s11
  $region1: #{tpu_custom_call.1} parent=0
    #allocation2 [shape = 'u8[262144]{0}', space=vmem, size = 0x40000, scoped, tag = 'output window, operand 0']
    #allocation3 [shape = 's32[2]{0}', space=sflag, size = 0x8, scoped, tag = 'scoped memory for tpu_custom_call.1']
    %15 = vsyncpa [#allocation3], 0
    %s16 = scalar_lea.sflag [#allocation3], 1
    %17 = vsyncpa %s16, 0
    loop: start=0, step=1, limit=4
    $region2: #{tpu_custom_call.1} parent=1 // loop_pre_header
      _
    $region3: #{tpu_custom_call.1} parent=1 // loop_header
      %s19 = sphi 0, %s23
      %p20 = scmp.ge.s32.totalorder %s19, 4
      %s26 = sphi 0, %s38
      %s27 = sphi 0, %s34
      %s28 = sphi 0, %s26
      %s29 = sphi 0, %s27
      %s30 = sphi 0, %s28
      %s31 = sphi 0, %s29
      %s43 = sphi 0, %s45
      %s46 = sphi 0, %s43
      %s47 = sphi 0, %s46
      %s63 = sphi 0, %s47
      %s75 = sphi 0, %s77
      %s78 = sphi 0, %s75
      %s79 = sphi 0, %s78
      %s95 = sphi 0, %s79
      %s109 = sphi 0, %s111
      %s112 = sphi 0, %s109
      %s113 = sphi 0, %s112
      %s129 = sphi 0, %s113
      %s133 = sphi 0, %s133
      %s135 = sphi 0, %s133
      %s136 = sphi 0, %s135
      %s150 = sphi 0, %s136
      %s154 = sphi 0, %s154
      %s156 = sphi 0, %s154
      %s157 = sphi 0, %s156
      %s171 = sphi 0, %s157
      %s175 = sphi 0, %s175
      %s177 = sphi 0, %s175
      %s178 = sphi 0, %s177
      %s192 = sphi 0, %s178
      %s196 = sphi 0, %s196
      %s198 = sphi 0, %s196
      %s199 = sphi 0, %s198
      %s213 = sphi 0, %s199
      %s217 = sphi 0, %s217
      %s219 = sphi 0, %s217
      %s220 = sphi 0, %s219
      %s234 = sphi 0, %s220
      %s238 = sphi 0, %s238
      %s240 = sphi 0, %s238
      %s241 = sphi 0, %s240
      %s255 = sphi 0, %s241
      %s259 = sphi 0, %s259
      %s261 = sphi 0, %s259
      %s262 = sphi 0, %s261
      %s276 = sphi 0, %s262
      %s284 = sphi 0, %s286
      %s287 = sphi 0, %s284
      %s288 = sphi 0, %s287
      %s304 = sphi 0, %s288
    $region4: #{tpu_custom_call.1} parent=1 // loop_header_branch
      %22 = sbr.rel (%p20) target = $region8
    $region5: #{tpu_custom_call.1} parent=1 // loop_body
      %s24 = ssub.s32 %s19, 1
      %s25 = ssub.s32 %s19, 2
      %s32 = sadd.s32 1, %s27
      %p33 = scmp.ge.s32.totalorder %s32, 1
      %s34 = scalar_select %p33, 0, %s32
      %s35 = sadd.s32 1, %s26
      %s36 = scalar_select %p33, %s35, %s26
      %p37 = scmp.ge.s32.totalorder %s36, 2
      %s38 = scalar_select %p37, 0, %s36
      %s39 = ssub.s32 %s26, %s38
      %s40 = ssub.s32 %s27, %s34
      %s41 = sor.u32 %s39, %s40
      %p42 = scmp.eq.s32.totalorder %s41, 0
      %s44 = sadd.s32 %s43, 1
      %s45 = scalar_select %p42, %s43, %s44
      %p48 = pneg %p42
      %p49 = scmp.eq.s32.totalorder %s19, 1
      %p50 = por %p48, %p49
      %p51 = scmp.ne.s32.totalorder %s43, %s46
      %p52 = scmp.eq.s32.totalorder %s19, 0
      %p53 = por %p51, %p52
      %p54 = scmp.ne.s32.totalorder %s43, %s46
      %p55 = scmp.eq.s32.totalorder %s24, 1
      %p56 = por %p54, %p55
      %p57 = scmp.ne.s32.totalorder %s46, %s47
      %p58 = scmp.eq.s32.totalorder %s24, 0
      %p59 = por %p57, %p58
      %p60 = scmp.ne.s32.totalorder %s46, %s47
      %p61 = scmp.eq.s32.totalorder %s25, 1
      %p62 = por %p60, %p61
      %p64 = scmp.ne.s32.totalorder %s47, %s63
      %p65 = scmp.eq.s32.totalorder %s25, 0
      %p66 = por %p64, %p65
      %s67 = sadd.s32 %s27, 1
      %s68 = smul.u32 %s67, 16
      %s69 = sadd.s32 %s34, 1
      %s70 = smul.u32 %s69, 16
      %s71 = ssub.s32 %s26, %s38
      %s72 = ssub.s32 %s68, %s70
      %s73 = sor.u32 %s71, %s72
      %p74 = scmp.eq.s32.totalorder %s73, 0
      %s76 = sadd.s32 %s75, 1
      %s77 = scalar_select %p74, %s75, %s76
      %p80 = pneg %p74
      %p81 = scmp.eq.s32.totalorder %s19, 1
      %p82 = por %p80, %p81
      %p83 = scmp.ne.s32.totalorder %s75, %s78
      %p84 = scmp.eq.s32.totalorder %s19, 0
      %p85 = por %p83, %p84
      %p86 = scmp.ne.s32.totalorder %s75, %s78
      %p87 = scmp.eq.s32.totalorder %s24, 1
      %p88 = por %p86, %p87
      %p89 = scmp.ne.s32.totalorder %s78, %s79
      %p90 = scmp.eq.s32.totalorder %s24, 0
      %p91 = por %p89, %p90
      %p92 = scmp.ne.s32.totalorder %s78, %s79
      %p93 = scmp.eq.s32.totalorder %s25, 1
      %p94 = por %p92, %p93
      %p96 = scmp.ne.s32.totalorder %s79, %s95
      %p97 = scmp.eq.s32.totalorder %s25, 0
      %p98 = por %p96, %p97
      %s99 = sadd.s32 %s27, 1
      %s100 = smul.u32 %s99, 16
      %s101 = sadd.s32 %s100, 1
      %s102 = sadd.s32 %s34, 1
      %s103 = smul.u32 %s102, 16
      %s104 = sadd.s32 %s103, 1
      %s105 = ssub.s32 %s26, %s38
      %s106 = ssub.s32 %s101, %s104
      %s107 = sor.u32 %s105, %s106
      %p108 = scmp.eq.s32.totalorder %s107, 0
      %s110 = sadd.s32 %s109, 1
      %s111 = scalar_select %p108, %s109, %s110
      %p114 = pneg %p108
      %p115 = scmp.eq.s32.totalorder %s19, 1
      %p116 = por %p114, %p115
      %p117 = scmp.ne.s32.totalorder %s109, %s112
      %p118 = scmp.eq.s32.totalorder %s19, 0
      %p119 = por %p117, %p118
      %p120 = scmp.ne.s32.totalorder %s109, %s112
      %p121 = scmp.eq.s32.totalorder %s24, 1
      %p122 = por %p120, %p121
      %p123 = scmp.ne.s32.totalorder %s112, %s113
      %p124 = scmp.eq.s32.totalorder %s24, 0
      %p125 = por %p123, %p124
      %p126 = scmp.ne.s32.totalorder %s112, %s113
      %p127 = scmp.eq.s32.totalorder %s25, 1
      %p128 = por %p126, %p127
      %p130 = scmp.ne.s32.totalorder %s113, %s129
      %p131 = scmp.eq.s32.totalorder %s25, 0
      %p132 = por %p130, %p131
      %s134 = sadd.s32 %s133, 1
      %p137 = scmp.eq.s32.totalorder %s19, 1
      %p138 = scmp.ne.s32.totalorder %s133, %s135
      %p139 = scmp.eq.s32.totalorder %s19, 0
      %p140 = por %p138, %p139
      %p141 = scmp.ne.s32.totalorder %s133, %s135
      %p142 = scmp.eq.s32.totalorder %s24, 1
      %p143 = por %p141, %p142
      %p144 = scmp.ne.s32.totalorder %s135, %s136
      %p145 = scmp.eq.s32.totalorder %s24, 0
      %p146 = por %p144, %p145
      %p147 = scmp.ne.s32.totalorder %s135, %s136
      %p148 = scmp.eq.s32.totalorder %s25, 1
      %p149 = por %p147, %p148
      %p151 = scmp.ne.s32.totalorder %s136, %s150
      %p152 = scmp.eq.s32.totalorder %s25, 0
      %p153 = por %p151, %p152
      %s155 = sadd.s32 %s154, 1
      %p158 = scmp.eq.s32.totalorder %s19, 1
      %p159 = scmp.ne.s32.totalorder %s154, %s156
      %p160 = scmp.eq.s32.totalorder %s19, 0
      %p161 = por %p159, %p160
      %p162 = scmp.ne.s32.totalorder %s154, %s156
      %p163 = scmp.eq.s32.totalorder %s24, 1
      %p164 = por %p162, %p163
      %p165 = scmp.ne.s32.totalorder %s156, %s157
      %p166 = scmp.eq.s32.totalorder %s24, 0
      %p167 = por %p165, %p166
      %p168 = scmp.ne.s32.totalorder %s156, %s157
      %p169 = scmp.eq.s32.totalorder %s25, 1
      %p170 = por %p168, %p169
      %p172 = scmp.ne.s32.totalorder %s157, %s171
      %p173 = scmp.eq.s32.totalorder %s25, 0
      %p174 = por %p172, %p173
      %s176 = sadd.s32 %s175, 1
      %p179 = scmp.eq.s32.totalorder %s19, 1
      %p180 = scmp.ne.s32.totalorder %s175, %s177
      %p181 = scmp.eq.s32.totalorder %s19, 0
      %p182 = por %p180, %p181
      %p183 = scmp.ne.s32.totalorder %s175, %s177
      %p184 = scmp.eq.s32.totalorder %s24, 1
      %p185 = por %p183, %p184
      %p186 = scmp.ne.s32.totalorder %s177, %s178
      %p187 = scmp.eq.s32.totalorder %s24, 0
      %p188 = por %p186, %p187
      %p189 = scmp.ne.s32.totalorder %s177, %s178
      %p190 = scmp.eq.s32.totalorder %s25, 1
      %p191 = por %p189, %p190
      %p193 = scmp.ne.s32.totalorder %s178, %s192
      %p194 = scmp.eq.s32.totalorder %s25, 0
      %p195 = por %p193, %p194
      %s197 = sadd.s32 %s196, 1
      %p200 = scmp.eq.s32.totalorder %s19, 1
      %p201 = scmp.ne.s32.totalorder %s196, %s198
      %p202 = scmp.eq.s32.totalorder %s19, 0
      %p203 = por %p201, %p202
      %p204 = scmp.ne.s32.totalorder %s196, %s198
      %p205 = scmp.eq.s32.totalorder %s24, 1
      %p206 = por %p204, %p205
      %p207 = scmp.ne.s32.totalorder %s198, %s199
      %p208 = scmp.eq.s32.totalorder %s24, 0
      %p209 = por %p207, %p208
      %p210 = scmp.ne.s32.totalorder %s198, %s199
      %p211 = scmp.eq.s32.totalorder %s25, 1
      %p212 = por %p210, %p211
      %p214 = scmp.ne.s32.totalorder %s199, %s213
      %p215 = scmp.eq.s32.totalorder %s25, 0
      %p216 = por %p214, %p215
      %s218 = sadd.s32 %s217, 1
      %p221 = scmp.eq.s32.totalorder %s19, 1
      %p222 = scmp.ne.s32.totalorder %s217, %s219
      %p223 = scmp.eq.s32.totalorder %s19, 0
      %p224 = por %p222, %p223
      %p225 = scmp.ne.s32.totalorder %s217, %s219
      %p226 = scmp.eq.s32.totalorder %s24, 1
      %p227 = por %p225, %p226
      %p228 = scmp.ne.s32.totalorder %s219, %s220
      %p229 = scmp.eq.s32.totalorder %s24, 0
      %p230 = por %p228, %p229
      %p231 = scmp.ne.s32.totalorder %s219, %s220
      %p232 = scmp.eq.s32.totalorder %s25, 1
      %p233 = por %p231, %p232
      %p235 = scmp.ne.s32.totalorder %s220, %s234
      %p236 = scmp.eq.s32.totalorder %s25, 0
      %p237 = por %p235, %p236
      %s239 = sadd.s32 %s238, 1
      %p242 = scmp.eq.s32.totalorder %s19, 1
      %p243 = scmp.ne.s32.totalorder %s238, %s240
      %p244 = scmp.eq.s32.totalorder %s19, 0
      %p245 = por %p243, %p244
      %p246 = scmp.ne.s32.totalorder %s238, %s240
      %p247 = scmp.eq.s32.totalorder %s24, 1
      %p248 = por %p246, %p247
      %p249 = scmp.ne.s32.totalorder %s240, %s241
      %p250 = scmp.eq.s32.totalorder %s24, 0
      %p251 = por %p249, %p250
      %p252 = scmp.ne.s32.totalorder %s240, %s241
      %p253 = scmp.eq.s32.totalorder %s25, 1
      %p254 = por %p252, %p253
      %p256 = scmp.ne.s32.totalorder %s241, %s255
      %p257 = scmp.eq.s32.totalorder %s25, 0
      %p258 = por %p256, %p257
      %s260 = sadd.s32 %s259, 1
      %p263 = scmp.eq.s32.totalorder %s19, 1
      %p264 = scmp.ne.s32.totalorder %s259, %s261
      %p265 = scmp.eq.s32.totalorder %s19, 0
      %p266 = por %p264, %p265
      %p267 = scmp.ne.s32.totalorder %s259, %s261
      %p268 = scmp.eq.s32.totalorder %s24, 1
      %p269 = por %p267, %p268
      %p270 = scmp.ne.s32.totalorder %s261, %s262
      %p271 = scmp.eq.s32.totalorder %s24, 0
      %p272 = por %p270, %p271
      %p273 = scmp.ne.s32.totalorder %s261, %s262
      %p274 = scmp.eq.s32.totalorder %s25, 1
      %p275 = por %p273, %p274
      %p277 = scmp.ne.s32.totalorder %s262, %s276
      %p278 = scmp.eq.s32.totalorder %s25, 0
      %p279 = por %p277, %p278
      %s280 = ssub.s32 %s26, %s38
      %s281 = ssub.s32 %s27, %s34
      %s282 = sor.u32 %s280, %s281
      %p283 = scmp.eq.s32.totalorder %s282, 0
      %s285 = sadd.s32 %s284, 1
      %s286 = scalar_select %p283, %s284, %s285
      %p289 = pneg %p283
      %p290 = scmp.eq.s32.totalorder %s19, 1
      %p291 = por %p289, %p290
      %p292 = scmp.ne.s32.totalorder %s284, %s287
      %p293 = scmp.eq.s32.totalorder %s19, 0
      %p294 = por %p292, %p293
      %p295 = scmp.ne.s32.totalorder %s284, %s287
      %p296 = scmp.eq.s32.totalorder %s24, 1
      %p297 = por %p295, %p296
      %p298 = scmp.ne.s32.totalorder %s287, %s288
      %p299 = scmp.eq.s32.totalorder %s24, 0
      %p300 = por %p298, %p299
      %p301 = scmp.ne.s32.totalorder %s287, %s288
      %p302 = scmp.eq.s32.totalorder %s25, 1
      %p303 = por %p301, %p302
      %p305 = scmp.ne.s32.totalorder %s288, %s304
      %p306 = scmp.eq.s32.totalorder %s25, 0
      %p307 = por %p305, %p306
      %p308 = scmp.le.s32.totalorder 1, %s19
      %p309 = scmp.lt.s32.totalorder %s19, 3
      %p310 = pnand %p308, %p309
      %p311 = pneg %p310
      // Predicated region
      $region9: #{tpu_custom_call.1} parent=5 // pred_check
        _
      $region10: #{tpu_custom_call.1} parent=5 // pred_check_branch
        %313 = sbr.rel (%p310) target = $region12
      $region11: #{tpu_custom_call.1} parent=5 // pred_region
        %s314 = ssub.s32 %s19, 1
        // Predicated region
        $region13: #{tpu_custom_call.1} parent=11 // pred_check
          %p315 = pneg %p146
        $region14: #{tpu_custom_call.1} parent=11 // pred_check_branch
          %317 = sbr.rel (%p315) target = $region16
        $region15: #{tpu_custom_call.1} parent=11 // pred_region
          _
        $region16: #{tpu_custom_call.1} parent=11 // pred_fallthru
          _
        // Predicated region
        $region17: #{tpu_custom_call.1} parent=11 // pred_check
          %p318 = pneg %p167
        $region18: #{tpu_custom_call.1} parent=11 // pred_check_branch
          %320 = sbr.rel (%p318) target = $region20
        $region19: #{tpu_custom_call.1} parent=11 // pred_region
          _
        $region20: #{tpu_custom_call.1} parent=11 // pred_fallthru
          _
        // Predicated region
        $region21: #{tpu_custom_call.1} parent=11 // pred_check
          %p321 = pneg %p188
        $region22: #{tpu_custom_call.1} parent=11 // pred_check_branch
          %323 = sbr.rel (%p321) target = $region24
        $region23: #{tpu_custom_call.1} parent=11 // pred_region
          _
        $region24: #{tpu_custom_call.1} parent=11 // pred_fallthru
          _
        // Predicated region
        $region25: #{tpu_custom_call.1} parent=11 // pred_check
          %p324 = pneg %p209
        $region26: #{tpu_custom_call.1} parent=11 // pred_check_branch
          %326 = sbr.rel (%p324) target = $region28
        $region27: #{tpu_custom_call.1} parent=11 // pred_region
          _
        $region28: #{tpu_custom_call.1} parent=11 // pred_fallthru
          _
        // Predicated region
        $region29: #{tpu_custom_call.1} parent=11 // pred_check
          %p327 = pneg %p230
        $region30: #{tpu_custom_call.1} parent=11 // pred_check_branch
          %329 = sbr.rel (%p327) target = $region32
        $region31: #{tpu_custom_call.1} parent=11 // pred_region
          _
        $region32: #{tpu_custom_call.1} parent=11 // pred_fallthru
          _
        // Predicated region
        $region33: #{tpu_custom_call.1} parent=11 // pred_check
          %p330 = pneg %p251
        $region34: #{tpu_custom_call.1} parent=11 // pred_check_branch
          %332 = sbr.rel (%p330) target = $region36
        $region35: #{tpu_custom_call.1} parent=11 // pred_region
          _
        $region36: #{tpu_custom_call.1} parent=11 // pred_fallthru
          _
        // Predicated region
        $region37: #{tpu_custom_call.1} parent=11 // pred_check
          %p333 = pneg %p272
        $region38: #{tpu_custom_call.1} parent=11 // pred_check_branch
          %335 = sbr.rel (%p333) target = $region40
        $region39: #{tpu_custom_call.1} parent=11 // pred_region
          _
        $region40: #{tpu_custom_call.1} parent=11 // pred_fallthru
          _
      $region12: #{tpu_custom_call.1} parent=5 // pred_fallthru
        _
      %p336 = scmp.lt.s32.totalorder %s19, 2
      // Predicated region
      $region41: #{tpu_custom_call.1} parent=5 // pred_check
        %p337 = pneg %p336
      $region42: #{tpu_custom_call.1} parent=5 // pred_check_branch
        %339 = sbr.rel (%p337) target = $region44
      $region43: #{tpu_custom_call.1} parent=5 // pred_region
        // Predicated region
        $region45: #{tpu_custom_call.1} parent=43 // pred_check
          %p340 = pneg %p53
        $region46: #{tpu_custom_call.1} parent=43 // pred_check_branch
          %342 = sbr.rel (%p340) target = $region48
        $region47: #{tpu_custom_call.1} parent=43 // pred_region
          %s343 = smul.u32 16, %s27
          %s344 = ssub.s32 18, %s343
          %p345 = scmp.lt.s32.totalorder %s344, 16
          %s346 = scalar_select %p345, %s344, 16
          %s347 = smul.u32 64, %s346
          %s348 = smul.u32 %s347, 3
          %p349 = scmp.lt.s32.totalorder %s26, 1
          %s350 = scalar_select %p349, %s26, 1
          %p351 = scmp.lt.s32.totalorder %s343, 17
          %s352 = scalar_select %p351, %s343, 17
          %s353 = smul.addr %s352, 3
          %s354 = smul.addr %s350, 54
          %s355 = sadd.s32 %s353, %s354
          %s356 = smul.addr %s355, 4
          %s357 = scalar_lea.vmem %s0, %s356
          %s358 = smul.u32 16, %s27
          %s359 = ssub.s32 18, %s358
          %p360 = scmp.lt.s32.totalorder %s359, 16
          %s361 = scalar_select %p360, %s359, 16
          %s362 = smul.u32 64, %s361
          %s363 = smul.u32 %s362, 3
        $region48: #{tpu_custom_call.1} parent=43 // pred_fallthru
          _
        // Predicated region
        $region49: #{tpu_custom_call.1} parent=43 // pred_check
          %p364 = pneg %p85
        $region50: #{tpu_custom_call.1} parent=43 // pred_check_branch
          %366 = sbr.rel (%p364) target = $region52
        $region51: #{tpu_custom_call.1} parent=43 // pred_region
          %s367 = sadd.s32 %s27, 1
          %s368 = smul.u32 %s367, 16
          %p369 = scmp.lt.s32.totalorder %s26, 1
          %s370 = scalar_select %p369, %s26, 1
          %p371 = scmp.lt.s32.totalorder %s368, 17
          %s372 = scalar_select %p371, %s368, 17
          %s373 = smul.addr %s372, 3
          %s374 = smul.addr %s370, 54
          %s375 = sadd.s32 %s373, %s374
          %s376 = smul.addr %s375, 4
          %s377 = scalar_lea.vmem %s1, %s376
          %s378 = sadd.s32 %s27, 1
          %s379 = smul.u32 %s378, 16
        $region52: #{tpu_custom_call.1} parent=43 // pred_fallthru
          _
        // Predicated region
        $region53: #{tpu_custom_call.1} parent=43 // pred_check
          %p380 = pneg %p119
        $region54: #{tpu_custom_call.1} parent=43 // pred_check_branch
          %382 = sbr.rel (%p380) target = $region56
        $region55: #{tpu_custom_call.1} parent=43 // pred_region
          %s383 = sadd.s32 %s27, 1
          %s384 = smul.u32 %s383, 16
          %s385 = sadd.s32 %s384, 1
          %p386 = scmp.lt.s32.totalorder %s26, 1
          %s387 = scalar_select %p386, %s26, 1
          %p388 = scmp.lt.s32.totalorder %s385, 17
          %s389 = scalar_select %p388, %s385, 17
          %s390 = smul.addr %s389, 3
          %s391 = smul.addr %s387, 54
          %s392 = sadd.s32 %s390, %s391
          %s393 = smul.addr %s392, 4
          %s394 = scalar_lea.vmem %s2, %s393
          %s395 = sadd.s32 %s27, 1
          %s396 = smul.u32 %s395, 16
          %s397 = sadd.s32 %s396, 1
        $region56: #{tpu_custom_call.1} parent=43 // pred_fallthru
          _
      $region44: #{tpu_custom_call.1} parent=5 // pred_fallthru
        _
      %p398 = scmp.le.s32.totalorder 1, %s19
      %p399 = scmp.lt.s32.totalorder %s19, 3
      %p400 = pnand %p398, %p399
      %p401 = pneg %p400
      // Predicated region
      $region57: #{tpu_custom_call.1} parent=5 // pred_check
        _
      $region58: #{tpu_custom_call.1} parent=5 // pred_check_branch
        %403 = sbr.rel (%p400) target = $region60
      $region59: #{tpu_custom_call.1} parent=5 // pred_region
        %s404 = ssub.s32 %s19, 1
        %s405 = smul.u32 16, %s29
        %s406 = ssub.s32 18, %s405
        %p407 = scmp.lt.s32.totalorder %s406, 16
        %s408 = scalar_select %p407, %s406, 16
        %s409 = smul.u32 64, %s408
        %s410 = smul.u32 %s409, 3
        %p411 = scmp.lt.s32.totalorder %s28, 1
        %s412 = scalar_select %p411, %s28, 1
        %p413 = scmp.lt.s32.totalorder %s405, 17
        %s414 = scalar_select %p413, %s405, 17
        %s415 = smul.addr %s414, 3
        %s416 = smul.addr %s412, 54
        %s417 = sadd.s32 %s415, %s416
        %s418 = smul.addr %s417, 4
        %s419 = scalar_lea.vmem %s0, %s418
        %p420 = pneg %p59
        %p421 = pneg %p56
        %s422 = sadd.s32 %s29, 1
        %s423 = smul.u32 %s422, 16
        %p424 = scmp.lt.s32.totalorder %s28, 1
        %s425 = scalar_select %p424, %s28, 1
        %p426 = scmp.lt.s32.totalorder %s423, 17
        %s427 = scalar_select %p426, %s423, 17
        %s428 = smul.addr %s427, 3
        %s429 = smul.addr %s425, 54
        %s430 = sadd.s32 %s428, %s429
        %s431 = smul.addr %s430, 4
        %s432 = scalar_lea.vmem %s1, %s431
        %p433 = pneg %p91
        %p434 = pneg %p88
        %s435 = sadd.s32 %s29, 1
        %s436 = smul.u32 %s435, 16
        %s437 = sadd.s32 %s436, 1
        %p438 = scmp.lt.s32.totalorder %s28, 1
        %s439 = scalar_select %p438, %s28, 1
        %p440 = scmp.lt.s32.totalorder %s437, 17
        %s441 = scalar_select %p440, %s437, 17
        %s442 = smul.addr %s441, 3
        %s443 = smul.addr %s439, 54
        %s444 = sadd.s32 %s442, %s443
        %s445 = smul.addr %s444, 4
        %s446 = scalar_lea.vmem %s2, %s445
        %p447 = pneg %p125
        %p448 = pneg %p122
        %p449 = pneg %p146
        %p450 = pneg %p143
        %p451 = pneg %p167
        %p452 = pneg %p164
        %p453 = pneg %p188
        %p454 = pneg %p185
        %p455 = pneg %p209
        %p456 = pneg %p206
        %p457 = pneg %p230
        %p458 = pneg %p227
        %p459 = pneg %p251
        %p460 = pneg %p248
        %p461 = pneg %p272
        %p462 = pneg %p269
        %p463 = pneg %p300
        %p464 = pneg %p297
        %s465 = sand.u32 %s287, 1
        %s466 = scalar_lea.sflag [#allocation3], %s465
        %s467 = sand.u32 %s287, 1
        %s468 = smul.addr %s467, 256
        %s469 = scalar_lea.vmem [#allocation2], %s468
        %s470 = smul.u32 16, %s29
        %s471 = ssub.s32 18, %s470
        %p472 = scmp.lt.s32.totalorder %s471, 16
        %s473 = scalar_select %p472, %s471, 16
        %s474 = smul.u32 64, %s473
        %s475 = smul.u32 %s474, 3
        %p476 = scmp.lt.s32.totalorder %s28, 1
        %s477 = scalar_select %p476, %s28, 1
        %p478 = scmp.lt.s32.totalorder %s470, 17
        %s479 = scalar_select %p478, %s470, 17
        %s480 = smul.addr %s479, 3
        %s481 = smul.addr %s477, 54
        %s482 = sadd.s32 %s480, %s481
        %s483 = smul.addr %s482, 4
        %s484 = scalar_lea.vmem %s0, %s483
        %s485 = smul.u32 16, %s29
        %s486 = ssub.s32 18, %s485
        %p487 = scmp.lt.s32.totalorder %s486, 16
        %s488 = scalar_select %p487, %s486, 16
        %s489 = smul.u32 64, %s488
        %s490 = smul.u32 %s489, 3
        %s491 = sadd.s32 %s29, 1
        %s492 = smul.u32 %s491, 16
        %p493 = scmp.lt.s32.totalorder %s28, 1
        %s494 = scalar_select %p493, %s28, 1
        %p495 = scmp.lt.s32.totalorder %s492, 17
        %s496 = scalar_select %p495, %s492, 17
        %s497 = smul.addr %s496, 3
        %s498 = smul.addr %s494, 54
        %s499 = sadd.s32 %s497, %s498
        %s500 = smul.addr %s499, 4
        %s501 = scalar_lea.vmem %s1, %s500
        %s502 = sadd.s32 %s29, 1
        %s503 = smul.u32 %s502, 16
        %s504 = sadd.s32 %s29, 1
        %s505 = smul.u32 %s504, 16
        %s506 = sadd.s32 %s505, 1
        %p507 = scmp.lt.s32.totalorder %s28, 1
        %s508 = scalar_select %p507, %s28, 1
        %p509 = scmp.lt.s32.totalorder %s506, 17
        %s510 = scalar_select %p509, %s506, 17
        %s511 = smul.addr %s510, 3
        %s512 = smul.addr %s508, 54
        %s513 = sadd.s32 %s511, %s512
        %s514 = smul.addr %s513, 4
        %s515 = scalar_lea.vmem %s2, %s514
        %s516 = sadd.s32 %s29, 1
        %s517 = smul.u32 %s516, 16
        %s518 = sadd.s32 %s517, 1
        %s519 = smul.u32 16, %s29
        %s521 = smul.u32 %s29, 16
        %v522 = vld [vmem:[%s484] sm:$0xf]
        %v523 = vld [vmem:[%s484 + $0x4] sm:$0xf]
        %v524 = vld [vmem:[%s484 + $0x8] sm:$0x1]
        %v525 = vld [vmem:[%s484 + $0xc] sm:$0xf]
        %v526 = vld [vmem:[%s484 + $0x10] sm:$0xf]
        %v527 = vld [vmem:[%s484 + $0x14] sm:$0x1]
        %v528 = vld [vmem:[%s484 + $0x18] sm:$0xf]
        %v529 = vld [vmem:[%s484 + $0x1c] sm:$0xf]
        %v530 = vld [vmem:[%s484 + $0x20] sm:$0x1]
        %v531 = vld [vmem:[%s484 + $0x24] sm:$0xf]
        %v532 = vld [vmem:[%s484 + $0x28] sm:$0xf]
        %v533 = vld [vmem:[%s484 + $0x2c] sm:$0x1]
        %v534 = vld [vmem:[%s484 + $0x30] sm:$0xf]
        %v535 = vld [vmem:[%s484 + $0x34] sm:$0xf]
        %v536 = vld [vmem:[%s484 + $0x38] sm:$0x1]
        %v537 = vld [vmem:[%s484 + $0x3c] sm:$0xf]
        %v538 = vld [vmem:[%s484 + $0x40] sm:$0xf]
        %v539 = vld [vmem:[%s484 + $0x44] sm:$0x1]
        %v540 = vld [vmem:[%s484 + $0x48] sm:$0xf]
        %v541 = vld [vmem:[%s484 + $0x4c] sm:$0xf]
        %v542 = vld [vmem:[%s484 + $0x50] sm:$0x1]
        %v543 = vld [vmem:[%s484 + $0x54] sm:$0xf]
        %v544 = vld [vmem:[%s484 + $0x58] sm:$0xf]
        %v545 = vld [vmem:[%s484 + $0x5c] sm:$0x1]
        %v546 = vld [vmem:[%s484 + $0x60] sm:$0xf]
        %v547 = vld [vmem:[%s484 + $0x64] sm:$0xf]
        %v548 = vld [vmem:[%s484 + $0x68] sm:$0x1]
        %v549 = vld [vmem:[%s484 + $0x6c] sm:$0xf]
        %v550 = vld [vmem:[%s484 + $0x70] sm:$0xf]
        %v551 = vld [vmem:[%s484 + $0x74] sm:$0x1]
        %v552 = vld [vmem:[%s484 + $0x78] sm:$0xf]
        %v553 = vld [vmem:[%s484 + $0x7c] sm:$0xf]
        %v554 = vld [vmem:[%s484 + $0x80] sm:$0x1]
        %v555 = vld [vmem:[%s484 + $0x84] sm:$0xf]
        %v556 = vld [vmem:[%s484 + $0x88] sm:$0xf]
        %v557 = vld [vmem:[%s484 + $0x8c] sm:$0x1]
        %v558 = vld [vmem:[%s484 + $0x90] sm:$0xf]
        %v559 = vld [vmem:[%s484 + $0x94] sm:$0xf]
        %v560 = vld [vmem:[%s484 + $0x98] sm:$0x1]
        %v561 = vld [vmem:[%s484 + $0x9c] sm:$0xf]
        %v562 = vld [vmem:[%s484 + $0xa0] sm:$0xf]
        %v563 = vld [vmem:[%s484 + $0xa4] sm:$0x1]
        %v564 = vld [vmem:[%s484 + $0xa8] sm:$0xf]
        %v565 = vld [vmem:[%s484 + $0xac] sm:$0xf]
        %v566 = vld [vmem:[%s484 + $0xb0] sm:$0x1]
        %v567 = vld [vmem:[%s484 + $0xb4] sm:$0xf]
        %v568 = vld [vmem:[%s484 + $0xb8] sm:$0xf]
        %v569 = vld [vmem:[%s484 + $0xbc] sm:$0x1]
        %v570 = vld [vmem:[%s501] sm:$0xf]
        %v571 = vld [vmem:[%s501 + $0x4] sm:$0xf]
        %v572 = vld [vmem:[%s501 + $0x8] sm:$0x1]
        %v573 = vld [vmem:[%s515] sm:$0xf]
        %v574 = vld [vmem:[%s515 + $0x4] sm:$0xf]
        %v575 = vld [vmem:[%s515 + $0x8] sm:$0x1]
        %v631 = vunpack.c.l.s4 1966171168
        %v632 = vunpack.c.0.s8 %v631
        %v633 = vlaneseq
        %v634 = vshrl.u32 %v633, 7
        %v635 = vsub.s32 %v632, %v634
        %v636 = vrot.slane %v522, %v635
        %v637 = vcombine.high %v636, %v636
        %v639 = vunpack.c.l.s4 1966171168
        %v640 = vunpack.c.0.s8 %v639
        %v641 = vlaneseq
        %v642 = vshrl.u32 %v641, 7
        %v643 = vsub.s32 %v640, %v642
        %v644 = vrot.slane %v636, %v643
        %v646 = vunpack.c.l.s4 1966171168
        %v647 = vunpack.c.0.s8 %v646
        %v648 = vlaneseq
        %v649 = vshrl.u32 %v648, 7
        %v650 = vsub.s32 %v647, %v649
        %v651 = vrot.slane %v637, %v650
        %v652 = vcombine.high %v644, %v644
        %v653 = vcombine.high %v651, %v651
        %v655 = vunpack.c.l.s4 1966171168
        %v656 = vunpack.c.0.s8 %v655
        %v657 = vlaneseq
        %v658 = vshrl.u32 %v657, 7
        %v659 = vsub.s32 %v656, %v658
        %v660 = vrot.slane %v523, %v659
        %v661 = vcombine.high %v660, %v660
        %v663 = vunpack.c.l.s4 1966171168
        %v664 = vunpack.c.0.s8 %v663
        %v665 = vlaneseq
        %v666 = vshrl.u32 %v665, 7
        %v667 = vsub.s32 %v664, %v666
        %v668 = vrot.slane %v660, %v667
        %v670 = vunpack.c.l.s4 1966171168
        %v671 = vunpack.c.0.s8 %v670
        %v672 = vlaneseq
        %v673 = vshrl.u32 %v672, 7
        %v674 = vsub.s32 %v671, %v673
        %v675 = vrot.slane %v661, %v674
        %v676 = vcombine.high %v668, %v668
        %v677 = vcombine.high %v675, %v675
        %v679 = vunpack.c.l.s4 1966171168
        %v680 = vunpack.c.0.s8 %v679
        %v681 = vlaneseq
        %v682 = vshrl.u32 %v681, 7
        %v683 = vsub.s32 %v680, %v682
        %v684 = vrot.slane %v524, %v683
        %v686 = vunpack.c.l.s4 1966171168
        %v687 = vunpack.c.0.s8 %v686
        %v688 = vlaneseq
        %v689 = vshrl.u32 %v688, 7
        %v690 = vsub.s32 %v687, %v689
        %v691 = vrot.slane %v684, %v690
        %v693 = vunpack.c.l.s4 1966171168
        %v694 = vunpack.c.0.s8 %v693
        %v695 = vlaneseq
        %v696 = vshrl.u32 %v695, 7
        %v697 = vsub.s32 %v694, %v696
        %v698 = vrot.slane %v525, %v697
        %v699 = vcombine.high %v698, %v698
        %v701 = vunpack.c.l.s4 1966171168
        %v702 = vunpack.c.0.s8 %v701
        %v703 = vlaneseq
        %v704 = vshrl.u32 %v703, 7
        %v705 = vsub.s32 %v702, %v704
        %v706 = vrot.slane %v698, %v705
        %v708 = vunpack.c.l.s4 1966171168
        %v709 = vunpack.c.0.s8 %v708
        %v710 = vlaneseq
        %v711 = vshrl.u32 %v710, 7
        %v712 = vsub.s32 %v709, %v711
        %v713 = vrot.slane %v699, %v712
        %v714 = vcombine.high %v706, %v706
        %v715 = vcombine.high %v713, %v713
        %v717 = vunpack.c.l.s4 1966171168
        %v718 = vunpack.c.0.s8 %v717
        %v719 = vlaneseq
        %v720 = vshrl.u32 %v719, 7
        %v721 = vsub.s32 %v718, %v720
        %v722 = vrot.slane %v526, %v721
        %v723 = vcombine.high %v722, %v722
        %v725 = vunpack.c.l.s4 1966171168
        %v726 = vunpack.c.0.s8 %v725
        %v727 = vlaneseq
        %v728 = vshrl.u32 %v727, 7
        %v729 = vsub.s32 %v726, %v728
        %v730 = vrot.slane %v722, %v729
        %v732 = vunpack.c.l.s4 1966171168
        %v733 = vunpack.c.0.s8 %v732
        %v734 = vlaneseq
        %v735 = vshrl.u32 %v734, 7
        %v736 = vsub.s32 %v733, %v735
        %v737 = vrot.slane %v723, %v736
        %v738 = vcombine.high %v730, %v730
        %v739 = vcombine.high %v737, %v737
        %v741 = vunpack.c.l.s4 1966171168
        %v742 = vunpack.c.0.s8 %v741
        %v743 = vlaneseq
        %v744 = vshrl.u32 %v743, 7
        %v745 = vsub.s32 %v742, %v744
        %v746 = vrot.slane %v527, %v745
        %v748 = vunpack.c.l.s4 1966171168
        %v749 = vunpack.c.0.s8 %v748
        %v750 = vlaneseq
        %v751 = vshrl.u32 %v750, 7
        %v752 = vsub.s32 %v749, %v751
        %v753 = vrot.slane %v746, %v752
        %v755 = vunpack.c.l.s4 1966171168
        %v756 = vunpack.c.0.s8 %v755
        %v757 = vlaneseq
        %v758 = vshrl.u32 %v757, 7
        %v759 = vsub.s32 %v756, %v758
        %v760 = vrot.slane %v528, %v759
        %v761 = vcombine.high %v760, %v760
        %v763 = vunpack.c.l.s4 1966171168
        %v764 = vunpack.c.0.s8 %v763
        %v765 = vlaneseq
        %v766 = vshrl.u32 %v765, 7
        %v767 = vsub.s32 %v764, %v766
        %v768 = vrot.slane %v760, %v767
        %v770 = vunpack.c.l.s4 1966171168
        %v771 = vunpack.c.0.s8 %v770
        %v772 = vlaneseq
        %v773 = vshrl.u32 %v772, 7
        %v774 = vsub.s32 %v771, %v773
        %v775 = vrot.slane %v761, %v774
        %v776 = vcombine.high %v768, %v768
        %v777 = vcombine.high %v775, %v775
        %v779 = vunpack.c.l.s4 1966171168
        %v780 = vunpack.c.0.s8 %v779
        %v781 = vlaneseq
        %v782 = vshrl.u32 %v781, 7
        %v783 = vsub.s32 %v780, %v782
        %v784 = vrot.slane %v529, %v783
        %v785 = vcombine.high %v784, %v784
        %v787 = vunpack.c.l.s4 1966171168
        %v788 = vunpack.c.0.s8 %v787
        %v789 = vlaneseq
        %v790 = vshrl.u32 %v789, 7
        %v791 = vsub.s32 %v788, %v790
        %v792 = vrot.slane %v784, %v791
        %v794 = vunpack.c.l.s4 1966171168
        %v795 = vunpack.c.0.s8 %v794
        %v796 = vlaneseq
        %v797 = vshrl.u32 %v796, 7
        %v798 = vsub.s32 %v795, %v797
        %v799 = vrot.slane %v785, %v798
        %v800 = vcombine.high %v792, %v792
        %v801 = vcombine.high %v799, %v799
        %v803 = vunpack.c.l.s4 1966171168
        %v804 = vunpack.c.0.s8 %v803
        %v805 = vlaneseq
        %v806 = vshrl.u32 %v805, 7
        %v807 = vsub.s32 %v804, %v806
        %v808 = vrot.slane %v530, %v807
        %v810 = vunpack.c.l.s4 1966171168
        %v811 = vunpack.c.0.s8 %v810
        %v812 = vlaneseq
        %v813 = vshrl.u32 %v812, 7
        %v814 = vsub.s32 %v811, %v813
        %v815 = vrot.slane %v808, %v814
        %v817 = vunpack.c.l.s4 1966171168
        %v818 = vunpack.c.0.s8 %v817
        %v819 = vlaneseq
        %v820 = vshrl.u32 %v819, 7
        %v821 = vsub.s32 %v818, %v820
        %v822 = vrot.slane %v531, %v821
        %v823 = vcombine.high %v822, %v822
        %v825 = vunpack.c.l.s4 1966171168
        %v826 = vunpack.c.0.s8 %v825
        %v827 = vlaneseq
        %v828 = vshrl.u32 %v827, 7
        %v829 = vsub.s32 %v826, %v828
        %v830 = vrot.slane %v822, %v829
        %v832 = vunpack.c.l.s4 1966171168
        %v833 = vunpack.c.0.s8 %v832
        %v834 = vlaneseq
        %v835 = vshrl.u32 %v834, 7
        %v836 = vsub.s32 %v833, %v835
        %v837 = vrot.slane %v823, %v836
        %v838 = vcombine.high %v830, %v830
        %v839 = vcombine.high %v837, %v837
        %v841 = vunpack.c.l.s4 1966171168
        %v842 = vunpack.c.0.s8 %v841
        %v843 = vlaneseq
        %v844 = vshrl.u32 %v843, 7
        %v845 = vsub.s32 %v842, %v844
        %v846 = vrot.slane %v532, %v845
        %v847 = vcombine.high %v846, %v846
        %v849 = vunpack.c.l.s4 1966171168
        %v850 = vunpack.c.0.s8 %v849
        %v851 = vlaneseq
        %v852 = vshrl.u32 %v851, 7
        %v853 = vsub.s32 %v850, %v852
        %v854 = vrot.slane %v846, %v853
        %v856 = vunpack.c.l.s4 1966171168
        %v857 = vunpack.c.0.s8 %v856
        %v858 = vlaneseq
        %v859 = vshrl.u32 %v858, 7
        %v860 = vsub.s32 %v857, %v859
        %v861 = vrot.slane %v847, %v860
        %v862 = vcombine.high %v854, %v854
        %v863 = vcombine.high %v861, %v861
        %v865 = vunpack.c.l.s4 1966171168
        %v866 = vunpack.c.0.s8 %v865
        %v867 = vlaneseq
        %v868 = vshrl.u32 %v867, 7
        %v869 = vsub.s32 %v866, %v868
        %v870 = vrot.slane %v533, %v869
        %v872 = vunpack.c.l.s4 1966171168
        %v873 = vunpack.c.0.s8 %v872
        %v874 = vlaneseq
        %v875 = vshrl.u32 %v874, 7
        %v876 = vsub.s32 %v873, %v875
        %v877 = vrot.slane %v870, %v876
        %v879 = vunpack.c.l.s4 1966171168
        %v880 = vunpack.c.0.s8 %v879
        %v881 = vlaneseq
        %v882 = vshrl.u32 %v881, 7
        %v883 = vsub.s32 %v880, %v882
        %v884 = vrot.slane %v534, %v883
        %v885 = vcombine.high %v884, %v884
        %v887 = vunpack.c.l.s4 1966171168
        %v888 = vunpack.c.0.s8 %v887
        %v889 = vlaneseq
        %v890 = vshrl.u32 %v889, 7
        %v891 = vsub.s32 %v888, %v890
        %v892 = vrot.slane %v884, %v891
        %v894 = vunpack.c.l.s4 1966171168
        %v895 = vunpack.c.0.s8 %v894
        %v896 = vlaneseq
        %v897 = vshrl.u32 %v896, 7
        %v898 = vsub.s32 %v895, %v897
        %v899 = vrot.slane %v885, %v898
        %v900 = vcombine.high %v892, %v892
        %v901 = vcombine.high %v899, %v899
        %v903 = vunpack.c.l.s4 1966171168
        %v904 = vunpack.c.0.s8 %v903
        %v905 = vlaneseq
        %v906 = vshrl.u32 %v905, 7
        %v907 = vsub.s32 %v904, %v906
        %v908 = vrot.slane %v535, %v907
        %v909 = vcombine.high %v908, %v908
        %v911 = vunpack.c.l.s4 1966171168
        %v912 = vunpack.c.0.s8 %v911
        %v913 = vlaneseq
        %v914 = vshrl.u32 %v913, 7
        %v915 = vsub.s32 %v912, %v914
        %v916 = vrot.slane %v908, %v915
        %v918 = vunpack.c.l.s4 1966171168
        %v919 = vunpack.c.0.s8 %v918
        %v920 = vlaneseq
        %v921 = vshrl.u32 %v920, 7
        %v922 = vsub.s32 %v919, %v921
        %v923 = vrot.slane %v909, %v922
        %v924 = vcombine.high %v916, %v916
        %v925 = vcombine.high %v923, %v923
        %v927 = vunpack.c.l.s4 1966171168
        %v928 = vunpack.c.0.s8 %v927
        %v929 = vlaneseq
        %v930 = vshrl.u32 %v929, 7
        %v931 = vsub.s32 %v928, %v930
        %v932 = vrot.slane %v536, %v931
        %v934 = vunpack.c.l.s4 1966171168
        %v935 = vunpack.c.0.s8 %v934
        %v936 = vlaneseq
        %v937 = vshrl.u32 %v936, 7
        %v938 = vsub.s32 %v935, %v937
        %v939 = vrot.slane %v932, %v938
        %v941 = vunpack.c.l.s4 1966171168
        %v942 = vunpack.c.0.s8 %v941
        %v943 = vlaneseq
        %v944 = vshrl.u32 %v943, 7
        %v945 = vsub.s32 %v942, %v944
        %v946 = vrot.slane %v537, %v945
        %v947 = vcombine.high %v946, %v946
        %v949 = vunpack.c.l.s4 1966171168
        %v950 = vunpack.c.0.s8 %v949
        %v951 = vlaneseq
        %v952 = vshrl.u32 %v951, 7
        %v953 = vsub.s32 %v950, %v952
        %v954 = vrot.slane %v946, %v953
        %v956 = vunpack.c.l.s4 1966171168
        %v957 = vunpack.c.0.s8 %v956
        %v958 = vlaneseq
        %v959 = vshrl.u32 %v958, 7
        %v960 = vsub.s32 %v957, %v959
        %v961 = vrot.slane %v947, %v960
        %v962 = vcombine.high %v954, %v954
        %v963 = vcombine.high %v961, %v961
        %v965 = vunpack.c.l.s4 1966171168
        %v966 = vunpack.c.0.s8 %v965
        %v967 = vlaneseq
        %v968 = vshrl.u32 %v967, 7
        %v969 = vsub.s32 %v966, %v968
        %v970 = vrot.slane %v538, %v969
        %v971 = vcombine.high %v970, %v970
        %v973 = vunpack.c.l.s4 1966171168
        %v974 = vunpack.c.0.s8 %v973
        %v975 = vlaneseq
        %v976 = vshrl.u32 %v975, 7
        %v977 = vsub.s32 %v974, %v976
        %v978 = vrot.slane %v970, %v977
        %v980 = vunpack.c.l.s4 1966171168
        %v981 = vunpack.c.0.s8 %v980
        %v982 = vlaneseq
        %v983 = vshrl.u32 %v982, 7
        %v984 = vsub.s32 %v981, %v983
        %v985 = vrot.slane %v971, %v984
        %v986 = vcombine.high %v978, %v978
        %v987 = vcombine.high %v985, %v985
        %v989 = vunpack.c.l.s4 1966171168
        %v990 = vunpack.c.0.s8 %v989
        %v991 = vlaneseq
        %v992 = vshrl.u32 %v991, 7
        %v993 = vsub.s32 %v990, %v992
        %v994 = vrot.slane %v539, %v993
        %v996 = vunpack.c.l.s4 1966171168
        %v997 = vunpack.c.0.s8 %v996
        %v998 = vlaneseq
        %v999 = vshrl.u32 %v998, 7
        %v1000 = vsub.s32 %v997, %v999
        %v1001 = vrot.slane %v994, %v1000
        %v1003 = vunpack.c.l.s4 1966171168
        %v1004 = vunpack.c.0.s8 %v1003
        %v1005 = vlaneseq
        %v1006 = vshrl.u32 %v1005, 7
        %v1007 = vsub.s32 %v1004, %v1006
        %v1008 = vrot.slane %v540, %v1007
        %v1009 = vcombine.high %v1008, %v1008
        %v1011 = vunpack.c.l.s4 1966171168
        %v1012 = vunpack.c.0.s8 %v1011
        %v1013 = vlaneseq
        %v1014 = vshrl.u32 %v1013, 7
        %v1015 = vsub.s32 %v1012, %v1014
        %v1016 = vrot.slane %v1008, %v1015
        %v1018 = vunpack.c.l.s4 1966171168
        %v1019 = vunpack.c.0.s8 %v1018
        %v1020 = vlaneseq
        %v1021 = vshrl.u32 %v1020, 7
        %v1022 = vsub.s32 %v1019, %v1021
        %v1023 = vrot.slane %v1009, %v1022
        %v1024 = vcombine.high %v1016, %v1016
        %v1025 = vcombine.high %v1023, %v1023
        %v1027 = vunpack.c.l.s4 1966171168
        %v1028 = vunpack.c.0.s8 %v1027
        %v1029 = vlaneseq
        %v1030 = vshrl.u32 %v1029, 7
        %v1031 = vsub.s32 %v1028, %v1030
        %v1032 = vrot.slane %v541, %v1031
        %v1033 = vcombine.high %v1032, %v1032
        %v1035 = vunpack.c.l.s4 1966171168
        %v1036 = vunpack.c.0.s8 %v1035
        %v1037 = vlaneseq
        %v1038 = vshrl.u32 %v1037, 7
        %v1039 = vsub.s32 %v1036, %v1038
        %v1040 = vrot.slane %v1032, %v1039
        %v1042 = vunpack.c.l.s4 1966171168
        %v1043 = vunpack.c.0.s8 %v1042
        %v1044 = vlaneseq
        %v1045 = vshrl.u32 %v1044, 7
        %v1046 = vsub.s32 %v1043, %v1045
        %v1047 = vrot.slane %v1033, %v1046
        %v1048 = vcombine.high %v1040, %v1040
        %v1049 = vcombine.high %v1047, %v1047
        %v1051 = vunpack.c.l.s4 1966171168
        %v1052 = vunpack.c.0.s8 %v1051
        %v1053 = vlaneseq
        %v1054 = vshrl.u32 %v1053, 7
        %v1055 = vsub.s32 %v1052, %v1054
        %v1056 = vrot.slane %v542, %v1055
        %v1058 = vunpack.c.l.s4 1966171168
        %v1059 = vunpack.c.0.s8 %v1058
        %v1060 = vlaneseq
        %v1061 = vshrl.u32 %v1060, 7
        %v1062 = vsub.s32 %v1059, %v1061
        %v1063 = vrot.slane %v1056, %v1062
        %v1065 = vunpack.c.l.s4 1966171168
        %v1066 = vunpack.c.0.s8 %v1065
        %v1067 = vlaneseq
        %v1068 = vshrl.u32 %v1067, 7
        %v1069 = vsub.s32 %v1066, %v1068
        %v1070 = vrot.slane %v543, %v1069
        %v1071 = vcombine.high %v1070, %v1070
        %v1073 = vunpack.c.l.s4 1966171168
        %v1074 = vunpack.c.0.s8 %v1073
        %v1075 = vlaneseq
        %v1076 = vshrl.u32 %v1075, 7
        %v1077 = vsub.s32 %v1074, %v1076
        %v1078 = vrot.slane %v1070, %v1077
        %v1080 = vunpack.c.l.s4 1966171168
        %v1081 = vunpack.c.0.s8 %v1080
        %v1082 = vlaneseq
        %v1083 = vshrl.u32 %v1082, 7
        %v1084 = vsub.s32 %v1081, %v1083
        %v1085 = vrot.slane %v1071, %v1084
        %v1086 = vcombine.high %v1078, %v1078
        %v1087 = vcombine.high %v1085, %v1085
        %v1089 = vunpack.c.l.s4 1966171168
        %v1090 = vunpack.c.0.s8 %v1089
        %v1091 = vlaneseq
        %v1092 = vshrl.u32 %v1091, 7
        %v1093 = vsub.s32 %v1090, %v1092
        %v1094 = vrot.slane %v544, %v1093
        %v1095 = vcombine.high %v1094, %v1094
        %v1097 = vunpack.c.l.s4 1966171168
        %v1098 = vunpack.c.0.s8 %v1097
        %v1099 = vlaneseq
        %v1100 = vshrl.u32 %v1099, 7
        %v1101 = vsub.s32 %v1098, %v1100
        %v1102 = vrot.slane %v1094, %v1101
        %v1104 = vunpack.c.l.s4 1966171168
        %v1105 = vunpack.c.0.s8 %v1104
        %v1106 = vlaneseq
        %v1107 = vshrl.u32 %v1106, 7
        %v1108 = vsub.s32 %v1105, %v1107
        %v1109 = vrot.slane %v1095, %v1108
        %v1110 = vcombine.high %v1102, %v1102
        %v1111 = vcombine.high %v1109, %v1109
        %v1113 = vunpack.c.l.s4 1966171168
        %v1114 = vunpack.c.0.s8 %v1113
        %v1115 = vlaneseq
        %v1116 = vshrl.u32 %v1115, 7
        %v1117 = vsub.s32 %v1114, %v1116
        %v1118 = vrot.slane %v545, %v1117
        %v1120 = vunpack.c.l.s4 1966171168
        %v1121 = vunpack.c.0.s8 %v1120
        %v1122 = vlaneseq
        %v1123 = vshrl.u32 %v1122, 7
        %v1124 = vsub.s32 %v1121, %v1123
        %v1125 = vrot.slane %v1118, %v1124
        %v1127 = vunpack.c.l.s4 1966171168
        %v1128 = vunpack.c.0.s8 %v1127
        %v1129 = vlaneseq
        %v1130 = vshrl.u32 %v1129, 7
        %v1131 = vsub.s32 %v1128, %v1130
        %v1132 = vrot.slane %v546, %v1131
        %v1133 = vcombine.high %v1132, %v1132
        %v1135 = vunpack.c.l.s4 1966171168
        %v1136 = vunpack.c.0.s8 %v1135
        %v1137 = vlaneseq
        %v1138 = vshrl.u32 %v1137, 7
        %v1139 = vsub.s32 %v1136, %v1138
        %v1140 = vrot.slane %v1132, %v1139
        %v1142 = vunpack.c.l.s4 1966171168
        %v1143 = vunpack.c.0.s8 %v1142
        %v1144 = vlaneseq
        %v1145 = vshrl.u32 %v1144, 7
        %v1146 = vsub.s32 %v1143, %v1145
        %v1147 = vrot.slane %v1133, %v1146
        %v1148 = vcombine.high %v1140, %v1140
        %v1149 = vcombine.high %v1147, %v1147
        %v1151 = vunpack.c.l.s4 1966171168
        %v1152 = vunpack.c.0.s8 %v1151
        %v1153 = vlaneseq
        %v1154 = vshrl.u32 %v1153, 7
        %v1155 = vsub.s32 %v1152, %v1154
        %v1156 = vrot.slane %v547, %v1155
        %v1157 = vcombine.high %v1156, %v1156
        %v1159 = vunpack.c.l.s4 1966171168
        %v1160 = vunpack.c.0.s8 %v1159
        %v1161 = vlaneseq
        %v1162 = vshrl.u32 %v1161, 7
        %v1163 = vsub.s32 %v1160, %v1162
        %v1164 = vrot.slane %v1156, %v1163
        %v1166 = vunpack.c.l.s4 1966171168
        %v1167 = vunpack.c.0.s8 %v1166
        %v1168 = vlaneseq
        %v1169 = vshrl.u32 %v1168, 7
        %v1170 = vsub.s32 %v1167, %v1169
        %v1171 = vrot.slane %v1157, %v1170
        %v1172 = vcombine.high %v1164, %v1164
        %v1173 = vcombine.high %v1171, %v1171
        %v1175 = vunpack.c.l.s4 1966171168
        %v1176 = vunpack.c.0.s8 %v1175
        %v1177 = vlaneseq
        %v1178 = vshrl.u32 %v1177, 7
        %v1179 = vsub.s32 %v1176, %v1178
        %v1180 = vrot.slane %v548, %v1179
        %v1182 = vunpack.c.l.s4 1966171168
        %v1183 = vunpack.c.0.s8 %v1182
        %v1184 = vlaneseq
        %v1185 = vshrl.u32 %v1184, 7
        %v1186 = vsub.s32 %v1183, %v1185
        %v1187 = vrot.slane %v1180, %v1186
        %v1189 = vunpack.c.l.s4 1966171168
        %v1190 = vunpack.c.0.s8 %v1189
        %v1191 = vlaneseq
        %v1192 = vshrl.u32 %v1191, 7
        %v1193 = vsub.s32 %v1190, %v1192
        %v1194 = vrot.slane %v549, %v1193
        %v1195 = vcombine.high %v1194, %v1194
        %v1197 = vunpack.c.l.s4 1966171168
        %v1198 = vunpack.c.0.s8 %v1197
        %v1199 = vlaneseq
        %v1200 = vshrl.u32 %v1199, 7
        %v1201 = vsub.s32 %v1198, %v1200
        %v1202 = vrot.slane %v1194, %v1201
        %v1204 = vunpack.c.l.s4 1966171168
        %v1205 = vunpack.c.0.s8 %v1204
        %v1206 = vlaneseq
        %v1207 = vshrl.u32 %v1206, 7
        %v1208 = vsub.s32 %v1205, %v1207
        %v1209 = vrot.slane %v1195, %v1208
        %v1210 = vcombine.high %v1202, %v1202
        %v1211 = vcombine.high %v1209, %v1209
        %v1213 = vunpack.c.l.s4 1966171168
        %v1214 = vunpack.c.0.s8 %v1213
        %v1215 = vlaneseq
        %v1216 = vshrl.u32 %v1215, 7
        %v1217 = vsub.s32 %v1214, %v1216
        %v1218 = vrot.slane %v550, %v1217
        %v1219 = vcombine.high %v1218, %v1218
        %v1221 = vunpack.c.l.s4 1966171168
        %v1222 = vunpack.c.0.s8 %v1221
        %v1223 = vlaneseq
        %v1224 = vshrl.u32 %v1223, 7
        %v1225 = vsub.s32 %v1222, %v1224
        %v1226 = vrot.slane %v1218, %v1225
        %v1228 = vunpack.c.l.s4 1966171168
        %v1229 = vunpack.c.0.s8 %v1228
        %v1230 = vlaneseq
        %v1231 = vshrl.u32 %v1230, 7
        %v1232 = vsub.s32 %v1229, %v1231
        %v1233 = vrot.slane %v1219, %v1232
        %v1234 = vcombine.high %v1226, %v1226
        %v1235 = vcombine.high %v1233, %v1233
        %v1237 = vunpack.c.l.s4 1966171168
        %v1238 = vunpack.c.0.s8 %v1237
        %v1239 = vlaneseq
        %v1240 = vshrl.u32 %v1239, 7
        %v1241 = vsub.s32 %v1238, %v1240
        %v1242 = vrot.slane %v551, %v1241
        %v1244 = vunpack.c.l.s4 1966171168
        %v1245 = vunpack.c.0.s8 %v1244
        %v1246 = vlaneseq
        %v1247 = vshrl.u32 %v1246, 7
        %v1248 = vsub.s32 %v1245, %v1247
        %v1249 = vrot.slane %v1242, %v1248
        %v1251 = vunpack.c.l.s4 1966171168
        %v1252 = vunpack.c.0.s8 %v1251
        %v1253 = vlaneseq
        %v1254 = vshrl.u32 %v1253, 7
        %v1255 = vsub.s32 %v1252, %v1254
        %v1256 = vrot.slane %v552, %v1255
        %v1257 = vcombine.high %v1256, %v1256
        %v1259 = vunpack.c.l.s4 1966171168
        %v1260 = vunpack.c.0.s8 %v1259
        %v1261 = vlaneseq
        %v1262 = vshrl.u32 %v1261, 7
        %v1263 = vsub.s32 %v1260, %v1262
        %v1264 = vrot.slane %v1256, %v1263
        %v1266 = vunpack.c.l.s4 1966171168
        %v1267 = vunpack.c.0.s8 %v1266
        %v1268 = vlaneseq
        %v1269 = vshrl.u32 %v1268, 7
        %v1270 = vsub.s32 %v1267, %v1269
        %v1271 = vrot.slane %v1257, %v1270
        %v1272 = vcombine.high %v1264, %v1264
        %v1273 = vcombine.high %v1271, %v1271
        %v1275 = vunpack.c.l.s4 1966171168
        %v1276 = vunpack.c.0.s8 %v1275
        %v1277 = vlaneseq
        %v1278 = vshrl.u32 %v1277, 7
        %v1279 = vsub.s32 %v1276, %v1278
        %v1280 = vrot.slane %v553, %v1279
        %v1281 = vcombine.high %v1280, %v1280
        %v1283 = vunpack.c.l.s4 1966171168
        %v1284 = vunpack.c.0.s8 %v1283
        %v1285 = vlaneseq
        %v1286 = vshrl.u32 %v1285, 7
        %v1287 = vsub.s32 %v1284, %v1286
        %v1288 = vrot.slane %v1280, %v1287
        %v1290 = vunpack.c.l.s4 1966171168
        %v1291 = vunpack.c.0.s8 %v1290
        %v1292 = vlaneseq
        %v1293 = vshrl.u32 %v1292, 7
        %v1294 = vsub.s32 %v1291, %v1293
        %v1295 = vrot.slane %v1281, %v1294
        %v1296 = vcombine.high %v1288, %v1288
        %v1297 = vcombine.high %v1295, %v1295
        %v1299 = vunpack.c.l.s4 1966171168
        %v1300 = vunpack.c.0.s8 %v1299
        %v1301 = vlaneseq
        %v1302 = vshrl.u32 %v1301, 7
        %v1303 = vsub.s32 %v1300, %v1302
        %v1304 = vrot.slane %v554, %v1303
        %v1306 = vunpack.c.l.s4 1966171168
        %v1307 = vunpack.c.0.s8 %v1306
        %v1308 = vlaneseq
        %v1309 = vshrl.u32 %v1308, 7
        %v1310 = vsub.s32 %v1307, %v1309
        %v1311 = vrot.slane %v1304, %v1310
        %v1313 = vunpack.c.l.s4 1966171168
        %v1314 = vunpack.c.0.s8 %v1313
        %v1315 = vlaneseq
        %v1316 = vshrl.u32 %v1315, 7
        %v1317 = vsub.s32 %v1314, %v1316
        %v1318 = vrot.slane %v555, %v1317
        %v1319 = vcombine.high %v1318, %v1318
        %v1321 = vunpack.c.l.s4 1966171168
        %v1322 = vunpack.c.0.s8 %v1321
        %v1323 = vlaneseq
        %v1324 = vshrl.u32 %v1323, 7
        %v1325 = vsub.s32 %v1322, %v1324
        %v1326 = vrot.slane %v1318, %v1325
        %v1328 = vunpack.c.l.s4 1966171168
        %v1329 = vunpack.c.0.s8 %v1328
        %v1330 = vlaneseq
        %v1331 = vshrl.u32 %v1330, 7
        %v1332 = vsub.s32 %v1329, %v1331
        %v1333 = vrot.slane %v1319, %v1332
        %v1334 = vcombine.high %v1326, %v1326
        %v1335 = vcombine.high %v1333, %v1333
        %v1337 = vunpack.c.l.s4 1966171168
        %v1338 = vunpack.c.0.s8 %v1337
        %v1339 = vlaneseq
        %v1340 = vshrl.u32 %v1339, 7
        %v1341 = vsub.s32 %v1338, %v1340
        %v1342 = vrot.slane %v556, %v1341
        %v1343 = vcombine.high %v1342, %v1342
        %v1345 = vunpack.c.l.s4 1966171168
        %v1346 = vunpack.c.0.s8 %v1345
        %v1347 = vlaneseq
        %v1348 = vshrl.u32 %v1347, 7
        %v1349 = vsub.s32 %v1346, %v1348
        %v1350 = vrot.slane %v1342, %v1349
        %v1352 = vunpack.c.l.s4 1966171168
        %v1353 = vunpack.c.0.s8 %v1352
        %v1354 = vlaneseq
        %v1355 = vshrl.u32 %v1354, 7
        %v1356 = vsub.s32 %v1353, %v1355
        %v1357 = vrot.slane %v1343, %v1356
        %v1358 = vcombine.high %v1350, %v1350
        %v1359 = vcombine.high %v1357, %v1357
        %v1361 = vunpack.c.l.s4 1966171168
        %v1362 = vunpack.c.0.s8 %v1361
        %v1363 = vlaneseq
        %v1364 = vshrl.u32 %v1363, 7
        %v1365 = vsub.s32 %v1362, %v1364
        %v1366 = vrot.slane %v557, %v1365
        %v1368 = vunpack.c.l.s4 1966171168
        %v1369 = vunpack.c.0.s8 %v1368
        %v1370 = vlaneseq
        %v1371 = vshrl.u32 %v1370, 7
        %v1372 = vsub.s32 %v1369, %v1371
        %v1373 = vrot.slane %v1366, %v1372
        %v1375 = vunpack.c.l.s4 1966171168
        %v1376 = vunpack.c.0.s8 %v1375
        %v1377 = vlaneseq
        %v1378 = vshrl.u32 %v1377, 7
        %v1379 = vsub.s32 %v1376, %v1378
        %v1380 = vrot.slane %v558, %v1379
        %v1381 = vcombine.high %v1380, %v1380
        %v1383 = vunpack.c.l.s4 1966171168
        %v1384 = vunpack.c.0.s8 %v1383
        %v1385 = vlaneseq
        %v1386 = vshrl.u32 %v1385, 7
        %v1387 = vsub.s32 %v1384, %v1386
        %v1388 = vrot.slane %v1380, %v1387
        %v1390 = vunpack.c.l.s4 1966171168
        %v1391 = vunpack.c.0.s8 %v1390
        %v1392 = vlaneseq
        %v1393 = vshrl.u32 %v1392, 7
        %v1394 = vsub.s32 %v1391, %v1393
        %v1395 = vrot.slane %v1381, %v1394
        %v1396 = vcombine.high %v1388, %v1388
        %v1397 = vcombine.high %v1395, %v1395
        %v1399 = vunpack.c.l.s4 1966171168
        %v1400 = vunpack.c.0.s8 %v1399
        %v1401 = vlaneseq
        %v1402 = vshrl.u32 %v1401, 7
        %v1403 = vsub.s32 %v1400, %v1402
        %v1404 = vrot.slane %v559, %v1403
        %v1405 = vcombine.high %v1404, %v1404
        %v1407 = vunpack.c.l.s4 1966171168
        %v1408 = vunpack.c.0.s8 %v1407
        %v1409 = vlaneseq
        %v1410 = vshrl.u32 %v1409, 7
        %v1411 = vsub.s32 %v1408, %v1410
        %v1412 = vrot.slane %v1404, %v1411
        %v1414 = vunpack.c.l.s4 1966171168
        %v1415 = vunpack.c.0.s8 %v1414
        %v1416 = vlaneseq
        %v1417 = vshrl.u32 %v1416, 7
        %v1418 = vsub.s32 %v1415, %v1417
        %v1419 = vrot.slane %v1405, %v1418
        %v1420 = vcombine.high %v1412, %v1412
        %v1421 = vcombine.high %v1419, %v1419
        %v1423 = vunpack.c.l.s4 1966171168
        %v1424 = vunpack.c.0.s8 %v1423
        %v1425 = vlaneseq
        %v1426 = vshrl.u32 %v1425, 7
        %v1427 = vsub.s32 %v1424, %v1426
        %v1428 = vrot.slane %v560, %v1427
        %v1430 = vunpack.c.l.s4 1966171168
        %v1431 = vunpack.c.0.s8 %v1430
        %v1432 = vlaneseq
        %v1433 = vshrl.u32 %v1432, 7
        %v1434 = vsub.s32 %v1431, %v1433
        %v1435 = vrot.slane %v1428, %v1434
        %v1437 = vunpack.c.l.s4 1966171168
        %v1438 = vunpack.c.0.s8 %v1437
        %v1439 = vlaneseq
        %v1440 = vshrl.u32 %v1439, 7
        %v1441 = vsub.s32 %v1438, %v1440
        %v1442 = vrot.slane %v561, %v1441
        %v1443 = vcombine.high %v1442, %v1442
        %v1445 = vunpack.c.l.s4 1966171168
        %v1446 = vunpack.c.0.s8 %v1445
        %v1447 = vlaneseq
        %v1448 = vshrl.u32 %v1447, 7
        %v1449 = vsub.s32 %v1446, %v1448
        %v1450 = vrot.slane %v1442, %v1449
        %v1452 = vunpack.c.l.s4 1966171168
        %v1453 = vunpack.c.0.s8 %v1452
        %v1454 = vlaneseq
        %v1455 = vshrl.u32 %v1454, 7
        %v1456 = vsub.s32 %v1453, %v1455
        %v1457 = vrot.slane %v1443, %v1456
        %v1458 = vcombine.high %v1450, %v1450
        %v1459 = vcombine.high %v1457, %v1457
        %v1461 = vunpack.c.l.s4 1966171168
        %v1462 = vunpack.c.0.s8 %v1461
        %v1463 = vlaneseq
        %v1464 = vshrl.u32 %v1463, 7
        %v1465 = vsub.s32 %v1462, %v1464
        %v1466 = vrot.slane %v562, %v1465
        %v1467 = vcombine.high %v1466, %v1466
        %v1469 = vunpack.c.l.s4 1966171168
        %v1470 = vunpack.c.0.s8 %v1469
        %v1471 = vlaneseq
        %v1472 = vshrl.u32 %v1471, 7
        %v1473 = vsub.s32 %v1470, %v1472
        %v1474 = vrot.slane %v1466, %v1473
        %v1476 = vunpack.c.l.s4 1966171168
        %v1477 = vunpack.c.0.s8 %v1476
        %v1478 = vlaneseq
        %v1479 = vshrl.u32 %v1478, 7
        %v1480 = vsub.s32 %v1477, %v1479
        %v1481 = vrot.slane %v1467, %v1480
        %v1482 = vcombine.high %v1474, %v1474
        %v1483 = vcombine.high %v1481, %v1481
        %v1485 = vunpack.c.l.s4 1966171168
        %v1486 = vunpack.c.0.s8 %v1485
        %v1487 = vlaneseq
        %v1488 = vshrl.u32 %v1487, 7
        %v1489 = vsub.s32 %v1486, %v1488
        %v1490 = vrot.slane %v563, %v1489
        %v1492 = vunpack.c.l.s4 1966171168
        %v1493 = vunpack.c.0.s8 %v1492
        %v1494 = vlaneseq
        %v1495 = vshrl.u32 %v1494, 7
        %v1496 = vsub.s32 %v1493, %v1495
        %v1497 = vrot.slane %v1490, %v1496
        %v1499 = vunpack.c.l.s4 1966171168
        %v1500 = vunpack.c.0.s8 %v1499
        %v1501 = vlaneseq
        %v1502 = vshrl.u32 %v1501, 7
        %v1503 = vsub.s32 %v1500, %v1502
        %v1504 = vrot.slane %v564, %v1503
        %v1505 = vcombine.high %v1504, %v1504
        %v1507 = vunpack.c.l.s4 1966171168
        %v1508 = vunpack.c.0.s8 %v1507
        %v1509 = vlaneseq
        %v1510 = vshrl.u32 %v1509, 7
        %v1511 = vsub.s32 %v1508, %v1510
        %v1512 = vrot.slane %v1504, %v1511
        %v1514 = vunpack.c.l.s4 1966171168
        %v1515 = vunpack.c.0.s8 %v1514
        %v1516 = vlaneseq
        %v1517 = vshrl.u32 %v1516, 7
        %v1518 = vsub.s32 %v1515, %v1517
        %v1519 = vrot.slane %v1505, %v1518
        %v1520 = vcombine.high %v1512, %v1512
        %v1521 = vcombine.high %v1519, %v1519
        %v1523 = vunpack.c.l.s4 1966171168
        %v1524 = vunpack.c.0.s8 %v1523
        %v1525 = vlaneseq
        %v1526 = vshrl.u32 %v1525, 7
        %v1527 = vsub.s32 %v1524, %v1526
        %v1528 = vrot.slane %v565, %v1527
        %v1529 = vcombine.high %v1528, %v1528
        %v1531 = vunpack.c.l.s4 1966171168
        %v1532 = vunpack.c.0.s8 %v1531
        %v1533 = vlaneseq
        %v1534 = vshrl.u32 %v1533, 7
        %v1535 = vsub.s32 %v1532, %v1534
        %v1536 = vrot.slane %v1528, %v1535
        %v1538 = vunpack.c.l.s4 1966171168
        %v1539 = vunpack.c.0.s8 %v1538
        %v1540 = vlaneseq
        %v1541 = vshrl.u32 %v1540, 7
        %v1542 = vsub.s32 %v1539, %v1541
        %v1543 = vrot.slane %v1529, %v1542
        %v1544 = vcombine.high %v1536, %v1536
        %v1545 = vcombine.high %v1543, %v1543
        %v1547 = vunpack.c.l.s4 1966171168
        %v1548 = vunpack.c.0.s8 %v1547
        %v1549 = vlaneseq
        %v1550 = vshrl.u32 %v1549, 7
        %v1551 = vsub.s32 %v1548, %v1550
        %v1552 = vrot.slane %v566, %v1551
        %v1554 = vunpack.c.l.s4 1966171168
        %v1555 = vunpack.c.0.s8 %v1554
        %v1556 = vlaneseq
        %v1557 = vshrl.u32 %v1556, 7
        %v1558 = vsub.s32 %v1555, %v1557
        %v1559 = vrot.slane %v1552, %v1558
        %v1561 = vunpack.c.l.s4 1966171168
        %v1562 = vunpack.c.0.s8 %v1561
        %v1563 = vlaneseq
        %v1564 = vshrl.u32 %v1563, 7
        %v1565 = vsub.s32 %v1562, %v1564
        %v1566 = vrot.slane %v567, %v1565
        %v1567 = vcombine.high %v1566, %v1566
        %v1569 = vunpack.c.l.s4 1966171168
        %v1570 = vunpack.c.0.s8 %v1569
        %v1571 = vlaneseq
        %v1572 = vshrl.u32 %v1571, 7
        %v1573 = vsub.s32 %v1570, %v1572
        %v1574 = vrot.slane %v1566, %v1573
        %v1576 = vunpack.c.l.s4 1966171168
        %v1577 = vunpack.c.0.s8 %v1576
        %v1578 = vlaneseq
        %v1579 = vshrl.u32 %v1578, 7
        %v1580 = vsub.s32 %v1577, %v1579
        %v1581 = vrot.slane %v1567, %v1580
        %v1582 = vcombine.high %v1574, %v1574
        %v1583 = vcombine.high %v1581, %v1581
        %v1585 = vunpack.c.l.s4 1966171168
        %v1586 = vunpack.c.0.s8 %v1585
        %v1587 = vlaneseq
        %v1588 = vshrl.u32 %v1587, 7
        %v1589 = vsub.s32 %v1586, %v1588
        %v1590 = vrot.slane %v568, %v1589
        %v1591 = vcombine.high %v1590, %v1590
        %v1593 = vunpack.c.l.s4 1966171168
        %v1594 = vunpack.c.0.s8 %v1593
        %v1595 = vlaneseq
        %v1596 = vshrl.u32 %v1595, 7
        %v1597 = vsub.s32 %v1594, %v1596
        %v1598 = vrot.slane %v1590, %v1597
        %v1600 = vunpack.c.l.s4 1966171168
        %v1601 = vunpack.c.0.s8 %v1600
        %v1602 = vlaneseq
        %v1603 = vshrl.u32 %v1602, 7
        %v1604 = vsub.s32 %v1601, %v1603
        %v1605 = vrot.slane %v1591, %v1604
        %v1606 = vcombine.high %v1598, %v1598
        %v1607 = vcombine.high %v1605, %v1605
        %v1609 = vunpack.c.l.s4 1966171168
        %v1610 = vunpack.c.0.s8 %v1609
        %v1611 = vlaneseq
        %v1612 = vshrl.u32 %v1611, 7
        %v1613 = vsub.s32 %v1610, %v1612
        %v1614 = vrot.slane %v569, %v1613
        %v1616 = vunpack.c.l.s4 1966171168
        %v1617 = vunpack.c.0.s8 %v1616
        %v1618 = vlaneseq
        %v1619 = vshrl.u32 %v1618, 7
        %v1620 = vsub.s32 %v1617, %v1619
        %v1621 = vrot.slane %v1614, %v1620
        %v1623 = vunpack.c.l.s4 1966171168
        %v1624 = vunpack.c.0.s8 %v1623
        %v1625 = vlaneseq
        %v1626 = vshrl.u32 %v1625, 7
        %v1627 = vsub.s32 %v1624, %v1626
        %v1628 = vrot.slane %v570, %v1627
        %v1629 = vcombine.high %v1628, %v1628
        %v1631 = vunpack.c.l.s4 1966171168
        %v1632 = vunpack.c.0.s8 %v1631
        %v1633 = vlaneseq
        %v1634 = vshrl.u32 %v1633, 7
        %v1635 = vsub.s32 %v1632, %v1634
        %v1636 = vrot.slane %v1628, %v1635
        %v1638 = vunpack.c.l.s4 1966171168
        %v1639 = vunpack.c.0.s8 %v1638
        %v1640 = vlaneseq
        %v1641 = vshrl.u32 %v1640, 7
        %v1642 = vsub.s32 %v1639, %v1641
        %v1643 = vrot.slane %v1629, %v1642
        %v1644 = vcombine.high %v1636, %v1636
        %v1645 = vcombine.high %v1643, %v1643
        %v1647 = vunpack.c.l.s4 1966171168
        %v1648 = vunpack.c.0.s8 %v1647
        %v1649 = vlaneseq
        %v1650 = vshrl.u32 %v1649, 7
        %v1651 = vsub.s32 %v1648, %v1650
        %v1652 = vrot.slane %v571, %v1651
        %v1653 = vcombine.high %v1652, %v1652
        %v1655 = vunpack.c.l.s4 1966171168
        %v1656 = vunpack.c.0.s8 %v1655
        %v1657 = vlaneseq
        %v1658 = vshrl.u32 %v1657, 7
        %v1659 = vsub.s32 %v1656, %v1658
        %v1660 = vrot.slane %v1652, %v1659
        %v1662 = vunpack.c.l.s4 1966171168
        %v1663 = vunpack.c.0.s8 %v1662
        %v1664 = vlaneseq
        %v1665 = vshrl.u32 %v1664, 7
        %v1666 = vsub.s32 %v1663, %v1665
        %v1667 = vrot.slane %v1653, %v1666
        %v1668 = vcombine.high %v1660, %v1660
        %v1669 = vcombine.high %v1667, %v1667
        %v1671 = vunpack.c.l.s4 1966171168
        %v1672 = vunpack.c.0.s8 %v1671
        %v1673 = vlaneseq
        %v1674 = vshrl.u32 %v1673, 7
        %v1675 = vsub.s32 %v1672, %v1674
        %v1676 = vrot.slane %v572, %v1675
        %v1678 = vunpack.c.l.s4 1966171168
        %v1679 = vunpack.c.0.s8 %v1678
        %v1680 = vlaneseq
        %v1681 = vshrl.u32 %v1680, 7
        %v1682 = vsub.s32 %v1679, %v1681
        %v1683 = vrot.slane %v1676, %v1682
        %v1685 = vunpack.c.l.s4 1966171168
        %v1686 = vunpack.c.0.s8 %v1685
        %v1687 = vlaneseq
        %v1688 = vshrl.u32 %v1687, 7
        %v1689 = vsub.s32 %v1686, %v1688
        %v1690 = vrot.slane %v573, %v1689
        %v1691 = vcombine.high %v1690, %v1690
        %v1693 = vunpack.c.l.s4 1966171168
        %v1694 = vunpack.c.0.s8 %v1693
        %v1695 = vlaneseq
        %v1696 = vshrl.u32 %v1695, 7
        %v1697 = vsub.s32 %v1694, %v1696
        %v1698 = vrot.slane %v1690, %v1697
        %v1700 = vunpack.c.l.s4 1966171168
        %v1701 = vunpack.c.0.s8 %v1700
        %v1702 = vlaneseq
        %v1703 = vshrl.u32 %v1702, 7
        %v1704 = vsub.s32 %v1701, %v1703
        %v1705 = vrot.slane %v1691, %v1704
        %v1706 = vcombine.high %v1698, %v1698
        %v1707 = vcombine.high %v1705, %v1705
        %v1709 = vunpack.c.l.s4 1966171168
        %v1710 = vunpack.c.0.s8 %v1709
        %v1711 = vlaneseq
        %v1712 = vshrl.u32 %v1711, 7
        %v1713 = vsub.s32 %v1710, %v1712
        %v1714 = vrot.slane %v574, %v1713
        %v1715 = vcombine.high %v1714, %v1714
        %v1717 = vunpack.c.l.s4 1966171168
        %v1718 = vunpack.c.0.s8 %v1717
        %v1719 = vlaneseq
        %v1720 = vshrl.u32 %v1719, 7
        %v1721 = vsub.s32 %v1718, %v1720
        %v1722 = vrot.slane %v1714, %v1721
        %v1724 = vunpack.c.l.s4 1966171168
        %v1725 = vunpack.c.0.s8 %v1724
        %v1726 = vlaneseq
        %v1727 = vshrl.u32 %v1726, 7
        %v1728 = vsub.s32 %v1725, %v1727
        %v1729 = vrot.slane %v1715, %v1728
        %v1730 = vcombine.high %v1722, %v1722
        %v1731 = vcombine.high %v1729, %v1729
        %v1733 = vunpack.c.l.s4 1966171168
        %v1734 = vunpack.c.0.s8 %v1733
        %v1735 = vlaneseq
        %v1736 = vshrl.u32 %v1735, 7
        %v1737 = vsub.s32 %v1734, %v1736
        %v1738 = vrot.slane %v575, %v1737
        %v1740 = vunpack.c.l.s4 1966171168
        %v1741 = vunpack.c.0.s8 %v1740
        %v1742 = vlaneseq
        %v1743 = vshrl.u32 %v1742, 7
        %v1744 = vsub.s32 %v1741, %v1743
        %v1745 = vrot.slane %v1738, %v1744
        %v1746 = vld [vmem:[%s3] sm:$0x3]
        %v1747 = vld [vmem:[%s4] sm:$0x1]
        %v1749 = vlaneseq
        %v1750 = vshrl.u32 %v1749, 7
        %v1751 = vsub.s32 0, %v1750
        %v1752 = vrot.slane %v1747, %v1751
        %v1754 = vcombine.low %v644, %v651
        %v1755 = vcombine.low %v652, %v653
        %v1756 = vcombine.low %v668, %v675
        %v1757 = vcombine.low %v676, %v677
        %v1759 = vunpack.c.l.s4 1966171168
        %v1760 = vunpack.c.0.s8 %v1759
        %v1761 = vlaneseq
        %v1762 = vshrl.u32 %v1761, 7
        %v1763 = vsub.s32 %v1760, %v1762
        %v1764 = vrot.slane %v1754, %v1763
        %v1766 = vunpack.c.l.s4 1966171168
        %v1767 = vunpack.c.0.s8 %v1766
        %v1768 = vlaneseq
        %v1769 = vshrl.u32 %v1768, 7
        %v1770 = vsub.s32 %v1767, %v1769
        %v1771 = vrot.slane %v1755, %v1770
        %v1773 = vunpack.c.l.s4 1966171168
        %v1774 = vunpack.c.0.s8 %v1773
        %v1775 = vlaneseq
        %v1776 = vshrl.u32 %v1775, 7
        %v1777 = vsub.s32 %v1774, %v1776
        %v1778 = vrot.slane %v1756, %v1777
        %v1780 = vunpack.c.l.s4 1966171168
        %v1781 = vunpack.c.0.s8 %v1780
        %v1782 = vlaneseq
        %v1783 = vshrl.u32 %v1782, 7
        %v1784 = vsub.s32 %v1781, %v1783
        %v1785 = vrot.slane %v1757, %v1784
        %v1786 = vcombine.low %v1764, %v1771
        %v1787 = vcombine.low %v1778, %v1785
        %v1789 = vunpack.c.l.s4 1966171168
        %v1790 = vunpack.c.0.s8 %v1789
        %v1791 = vlaneseq
        %v1792 = vshrl.u32 %v1791, 7
        %v1793 = vsub.s32 %v1790, %v1792
        %v1794 = vrot.slane %v1786, %v1793
        %v1796 = vunpack.c.l.s4 1966171168
        %v1797 = vunpack.c.0.s8 %v1796
        %v1798 = vlaneseq
        %v1799 = vshrl.u32 %v1798, 7
        %v1800 = vsub.s32 %v1797, %v1799
        %v1801 = vrot.slane %v1787, %v1800
        %v1802 = vcombine.low %v1794, %v1801
        %v1803 = vcombine.low %v691, %v706
        %v1804 = vcombine.low %v713, %v714
        %v1805 = vcombine.low %v715, %v730
        %v1806 = vcombine.low %v737, %v738
        %v1808 = vunpack.c.l.s4 1966171168
        %v1809 = vunpack.c.0.s8 %v1808
        %v1810 = vlaneseq
        %v1811 = vshrl.u32 %v1810, 7
        %v1812 = vsub.s32 %v1809, %v1811
        %v1813 = vrot.slane %v1803, %v1812
        %v1815 = vunpack.c.l.s4 1966171168
        %v1816 = vunpack.c.0.s8 %v1815
        %v1817 = vlaneseq
        %v1818 = vshrl.u32 %v1817, 7
        %v1819 = vsub.s32 %v1816, %v1818
        %v1820 = vrot.slane %v1804, %v1819
        %v1822 = vunpack.c.l.s4 1966171168
        %v1823 = vunpack.c.0.s8 %v1822
        %v1824 = vlaneseq
        %v1825 = vshrl.u32 %v1824, 7
        %v1826 = vsub.s32 %v1823, %v1825
        %v1827 = vrot.slane %v1805, %v1826
        %v1829 = vunpack.c.l.s4 1966171168
        %v1830 = vunpack.c.0.s8 %v1829
        %v1831 = vlaneseq
        %v1832 = vshrl.u32 %v1831, 7
        %v1833 = vsub.s32 %v1830, %v1832
        %v1834 = vrot.slane %v1806, %v1833
        %v1835 = vcombine.low %v1813, %v1820
        %v1836 = vcombine.low %v1827, %v1834
        %v1838 = vunpack.c.l.s4 1966171168
        %v1839 = vunpack.c.0.s8 %v1838
        %v1840 = vlaneseq
        %v1841 = vshrl.u32 %v1840, 7
        %v1842 = vsub.s32 %v1839, %v1841
        %v1843 = vrot.slane %v1835, %v1842
        %v1845 = vunpack.c.l.s4 1966171168
        %v1846 = vunpack.c.0.s8 %v1845
        %v1847 = vlaneseq
        %v1848 = vshrl.u32 %v1847, 7
        %v1849 = vsub.s32 %v1846, %v1848
        %v1850 = vrot.slane %v1836, %v1849
        %v1851 = vcombine.low %v1843, %v1850
        %v1852 = vcombine.low %v739, %v753
        %v1853 = vcombine.low %v768, %v775
        %v1854 = vcombine.low %v776, %v777
        %v1855 = vcombine.low %v792, %v799
        %v1857 = vunpack.c.l.s4 1966171168
        %v1858 = vunpack.c.0.s8 %v1857
        %v1859 = vlaneseq
        %v1860 = vshrl.u32 %v1859, 7
        %v1861 = vsub.s32 %v1858, %v1860
        %v1862 = vrot.slane %v1852, %v1861
        %v1864 = vunpack.c.l.s4 1966171168
        %v1865 = vunpack.c.0.s8 %v1864
        %v1866 = vlaneseq
        %v1867 = vshrl.u32 %v1866, 7
        %v1868 = vsub.s32 %v1865, %v1867
        %v1869 = vrot.slane %v1853, %v1868
        %v1871 = vunpack.c.l.s4 1966171168
        %v1872 = vunpack.c.0.s8 %v1871
        %v1873 = vlaneseq
        %v1874 = vshrl.u32 %v1873, 7
        %v1875 = vsub.s32 %v1872, %v1874
        %v1876 = vrot.slane %v1854, %v1875
        %v1878 = vunpack.c.l.s4 1966171168
        %v1879 = vunpack.c.0.s8 %v1878
        %v1880 = vlaneseq
        %v1881 = vshrl.u32 %v1880, 7
        %v1882 = vsub.s32 %v1879, %v1881
        %v1883 = vrot.slane %v1855, %v1882
        %v1884 = vcombine.low %v1862, %v1869
        %v1885 = vcombine.low %v1876, %v1883
        %v1887 = vunpack.c.l.s4 1966171168
        %v1888 = vunpack.c.0.s8 %v1887
        %v1889 = vlaneseq
        %v1890 = vshrl.u32 %v1889, 7
        %v1891 = vsub.s32 %v1888, %v1890
        %v1892 = vrot.slane %v1884, %v1891
        %v1894 = vunpack.c.l.s4 1966171168
        %v1895 = vunpack.c.0.s8 %v1894
        %v1896 = vlaneseq
        %v1897 = vshrl.u32 %v1896, 7
        %v1898 = vsub.s32 %v1895, %v1897
        %v1899 = vrot.slane %v1885, %v1898
        %v1900 = vcombine.low %v1892, %v1899
        %v1901 = vcombine.low %v800, %v801
        %v1902 = vcombine.low %v815, %v830
        %v1903 = vcombine.low %v837, %v838
        %v1904 = vcombine.low %v839, %v854
        %v1906 = vunpack.c.l.s4 1966171168
        %v1907 = vunpack.c.0.s8 %v1906
        %v1908 = vlaneseq
        %v1909 = vshrl.u32 %v1908, 7
        %v1910 = vsub.s32 %v1907, %v1909
        %v1911 = vrot.slane %v1901, %v1910
        %v1913 = vunpack.c.l.s4 1966171168
        %v1914 = vunpack.c.0.s8 %v1913
        %v1915 = vlaneseq
        %v1916 = vshrl.u32 %v1915, 7
        %v1917 = vsub.s32 %v1914, %v1916
        %v1918 = vrot.slane %v1902, %v1917
        %v1920 = vunpack.c.l.s4 1966171168
        %v1921 = vunpack.c.0.s8 %v1920
        %v1922 = vlaneseq
        %v1923 = vshrl.u32 %v1922, 7
        %v1924 = vsub.s32 %v1921, %v1923
        %v1925 = vrot.slane %v1903, %v1924
        %v1927 = vunpack.c.l.s4 1966171168
        %v1928 = vunpack.c.0.s8 %v1927
        %v1929 = vlaneseq
        %v1930 = vshrl.u32 %v1929, 7
        %v1931 = vsub.s32 %v1928, %v1930
        %v1932 = vrot.slane %v1904, %v1931
        %v1933 = vcombine.low %v1911, %v1918
        %v1934 = vcombine.low %v1925, %v1932
        %v1936 = vunpack.c.l.s4 1966171168
        %v1937 = vunpack.c.0.s8 %v1936
        %v1938 = vlaneseq
        %v1939 = vshrl.u32 %v1938, 7
        %v1940 = vsub.s32 %v1937, %v1939
        %v1941 = vrot.slane %v1933, %v1940
        %v1943 = vunpack.c.l.s4 1966171168
        %v1944 = vunpack.c.0.s8 %v1943
        %v1945 = vlaneseq
        %v1946 = vshrl.u32 %v1945, 7
        %v1947 = vsub.s32 %v1944, %v1946
        %v1948 = vrot.slane %v1934, %v1947
        %v1949 = vcombine.low %v1941, %v1948
        %v1950 = vcombine.low %v861, %v862
        %v1951 = vcombine.low %v863, %v877
        %v1952 = vcombine.low %v892, %v899
        %v1953 = vcombine.low %v900, %v901
        %v1955 = vunpack.c.l.s4 1966171168
        %v1956 = vunpack.c.0.s8 %v1955
        %v1957 = vlaneseq
        %v1958 = vshrl.u32 %v1957, 7
        %v1959 = vsub.s32 %v1956, %v1958
        %v1960 = vrot.slane %v1950, %v1959
        %v1962 = vunpack.c.l.s4 1966171168
        %v1963 = vunpack.c.0.s8 %v1962
        %v1964 = vlaneseq
        %v1965 = vshrl.u32 %v1964, 7
        %v1966 = vsub.s32 %v1963, %v1965
        %v1967 = vrot.slane %v1951, %v1966
        %v1969 = vunpack.c.l.s4 1966171168
        %v1970 = vunpack.c.0.s8 %v1969
        %v1971 = vlaneseq
        %v1972 = vshrl.u32 %v1971, 7
        %v1973 = vsub.s32 %v1970, %v1972
        %v1974 = vrot.slane %v1952, %v1973
        %v1976 = vunpack.c.l.s4 1966171168
        %v1977 = vunpack.c.0.s8 %v1976
        %v1978 = vlaneseq
        %v1979 = vshrl.u32 %v1978, 7
        %v1980 = vsub.s32 %v1977, %v1979
        %v1981 = vrot.slane %v1953, %v1980
        %v1982 = vcombine.low %v1960, %v1967
        %v1983 = vcombine.low %v1974, %v1981
        %v1985 = vunpack.c.l.s4 1966171168
        %v1986 = vunpack.c.0.s8 %v1985
        %v1987 = vlaneseq
        %v1988 = vshrl.u32 %v1987, 7
        %v1989 = vsub.s32 %v1986, %v1988
        %v1990 = vrot.slane %v1982, %v1989
        %v1992 = vunpack.c.l.s4 1966171168
        %v1993 = vunpack.c.0.s8 %v1992
        %v1994 = vlaneseq
        %v1995 = vshrl.u32 %v1994, 7
        %v1996 = vsub.s32 %v1993, %v1995
        %v1997 = vrot.slane %v1983, %v1996
        %v1998 = vcombine.low %v1990, %v1997
        %v1999 = vcombine.low %v916, %v923
        %v2000 = vcombine.low %v924, %v925
        %v2001 = vcombine.low %v939, %v954
        %v2002 = vcombine.low %v961, %v962
        %v2004 = vunpack.c.l.s4 1966171168
        %v2005 = vunpack.c.0.s8 %v2004
        %v2006 = vlaneseq
        %v2007 = vshrl.u32 %v2006, 7
        %v2008 = vsub.s32 %v2005, %v2007
        %v2009 = vrot.slane %v1999, %v2008
        %v2011 = vunpack.c.l.s4 1966171168
        %v2012 = vunpack.c.0.s8 %v2011
        %v2013 = vlaneseq
        %v2014 = vshrl.u32 %v2013, 7
        %v2015 = vsub.s32 %v2012, %v2014
        %v2016 = vrot.slane %v2000, %v2015
        %v2018 = vunpack.c.l.s4 1966171168
        %v2019 = vunpack.c.0.s8 %v2018
        %v2020 = vlaneseq
        %v2021 = vshrl.u32 %v2020, 7
        %v2022 = vsub.s32 %v2019, %v2021
        %v2023 = vrot.slane %v2001, %v2022
        %v2025 = vunpack.c.l.s4 1966171168
        %v2026 = vunpack.c.0.s8 %v2025
        %v2027 = vlaneseq
        %v2028 = vshrl.u32 %v2027, 7
        %v2029 = vsub.s32 %v2026, %v2028
        %v2030 = vrot.slane %v2002, %v2029
        %v2031 = vcombine.low %v2009, %v2016
        %v2032 = vcombine.low %v2023, %v2030
        %v2034 = vunpack.c.l.s4 1966171168
        %v2035 = vunpack.c.0.s8 %v2034
        %v2036 = vlaneseq
        %v2037 = vshrl.u32 %v2036, 7
        %v2038 = vsub.s32 %v2035, %v2037
        %v2039 = vrot.slane %v2031, %v2038
        %v2041 = vunpack.c.l.s4 1966171168
        %v2042 = vunpack.c.0.s8 %v2041
        %v2043 = vlaneseq
        %v2044 = vshrl.u32 %v2043, 7
        %v2045 = vsub.s32 %v2042, %v2044
        %v2046 = vrot.slane %v2032, %v2045
        %v2047 = vcombine.low %v2039, %v2046
        %v2048 = vcombine.low %v963, %v978
        %v2049 = vcombine.low %v985, %v986
        %v2050 = vcombine.low %v987, %v1001
        %v2051 = vcombine.low %v1016, %v1023
        %v2053 = vunpack.c.l.s4 1966171168
        %v2054 = vunpack.c.0.s8 %v2053
        %v2055 = vlaneseq
        %v2056 = vshrl.u32 %v2055, 7
        %v2057 = vsub.s32 %v2054, %v2056
        %v2058 = vrot.slane %v2048, %v2057
        %v2060 = vunpack.c.l.s4 1966171168
        %v2061 = vunpack.c.0.s8 %v2060
        %v2062 = vlaneseq
        %v2063 = vshrl.u32 %v2062, 7
        %v2064 = vsub.s32 %v2061, %v2063
        %v2065 = vrot.slane %v2049, %v2064
        %v2067 = vunpack.c.l.s4 1966171168
        %v2068 = vunpack.c.0.s8 %v2067
        %v2069 = vlaneseq
        %v2070 = vshrl.u32 %v2069, 7
        %v2071 = vsub.s32 %v2068, %v2070
        %v2072 = vrot.slane %v2050, %v2071
        %v2074 = vunpack.c.l.s4 1966171168
        %v2075 = vunpack.c.0.s8 %v2074
        %v2076 = vlaneseq
        %v2077 = vshrl.u32 %v2076, 7
        %v2078 = vsub.s32 %v2075, %v2077
        %v2079 = vrot.slane %v2051, %v2078
        %v2080 = vcombine.low %v2058, %v2065
        %v2081 = vcombine.low %v2072, %v2079
        %v2083 = vunpack.c.l.s4 1966171168
        %v2084 = vunpack.c.0.s8 %v2083
        %v2085 = vlaneseq
        %v2086 = vshrl.u32 %v2085, 7
        %v2087 = vsub.s32 %v2084, %v2086
        %v2088 = vrot.slane %v2080, %v2087
        %v2090 = vunpack.c.l.s4 1966171168
        %v2091 = vunpack.c.0.s8 %v2090
        %v2092 = vlaneseq
        %v2093 = vshrl.u32 %v2092, 7
        %v2094 = vsub.s32 %v2091, %v2093
        %v2095 = vrot.slane %v2081, %v2094
        %v2096 = vcombine.low %v2088, %v2095
        %v2097 = vcombine.low %v1024, %v1025
        %v2098 = vcombine.low %v1040, %v1047
        %v2099 = vcombine.low %v1048, %v1049
        %v2100 = vcombine.low %v1063, %v1078
        %v2102 = vunpack.c.l.s4 1966171168
        %v2103 = vunpack.c.0.s8 %v2102
        %v2104 = vlaneseq
        %v2105 = vshrl.u32 %v2104, 7
        %v2106 = vsub.s32 %v2103, %v2105
        %v2107 = vrot.slane %v2097, %v2106
        %v2109 = vunpack.c.l.s4 1966171168
        %v2110 = vunpack.c.0.s8 %v2109
        %v2111 = vlaneseq
        %v2112 = vshrl.u32 %v2111, 7
        %v2113 = vsub.s32 %v2110, %v2112
        %v2114 = vrot.slane %v2098, %v2113
        %v2116 = vunpack.c.l.s4 1966171168
        %v2117 = vunpack.c.0.s8 %v2116
        %v2118 = vlaneseq
        %v2119 = vshrl.u32 %v2118, 7
        %v2120 = vsub.s32 %v2117, %v2119
        %v2121 = vrot.slane %v2099, %v2120
        %v2123 = vunpack.c.l.s4 1966171168
        %v2124 = vunpack.c.0.s8 %v2123
        %v2125 = vlaneseq
        %v2126 = vshrl.u32 %v2125, 7
        %v2127 = vsub.s32 %v2124, %v2126
        %v2128 = vrot.slane %v2100, %v2127
        %v2129 = vcombine.low %v2107, %v2114
        %v2130 = vcombine.low %v2121, %v2128
        %v2132 = vunpack.c.l.s4 1966171168
        %v2133 = vunpack.c.0.s8 %v2132
        %v2134 = vlaneseq
        %v2135 = vshrl.u32 %v2134, 7
        %v2136 = vsub.s32 %v2133, %v2135
        %v2137 = vrot.slane %v2129, %v2136
        %v2139 = vunpack.c.l.s4 1966171168
        %v2140 = vunpack.c.0.s8 %v2139
        %v2141 = vlaneseq
        %v2142 = vshrl.u32 %v2141, 7
        %v2143 = vsub.s32 %v2140, %v2142
        %v2144 = vrot.slane %v2130, %v2143
        %v2145 = vcombine.low %v2137, %v2144
        %v2146 = vcombine.low %v1085, %v1086
        %v2147 = vcombine.low %v1087, %v1102
        %v2148 = vcombine.low %v1109, %v1110
        %v2149 = vcombine.low %v1111, %v1125
        %v2151 = vunpack.c.l.s4 1966171168
        %v2152 = vunpack.c.0.s8 %v2151
        %v2153 = vlaneseq
        %v2154 = vshrl.u32 %v2153, 7
        %v2155 = vsub.s32 %v2152, %v2154
        %v2156 = vrot.slane %v2146, %v2155
        %v2158 = vunpack.c.l.s4 1966171168
        %v2159 = vunpack.c.0.s8 %v2158
        %v2160 = vlaneseq
        %v2161 = vshrl.u32 %v2160, 7
        %v2162 = vsub.s32 %v2159, %v2161
        %v2163 = vrot.slane %v2147, %v2162
        %v2165 = vunpack.c.l.s4 1966171168
        %v2166 = vunpack.c.0.s8 %v2165
        %v2167 = vlaneseq
        %v2168 = vshrl.u32 %v2167, 7
        %v2169 = vsub.s32 %v2166, %v2168
        %v2170 = vrot.slane %v2148, %v2169
        %v2172 = vunpack.c.l.s4 1966171168
        %v2173 = vunpack.c.0.s8 %v2172
        %v2174 = vlaneseq
        %v2175 = vshrl.u32 %v2174, 7
        %v2176 = vsub.s32 %v2173, %v2175
        %v2177 = vrot.slane %v2149, %v2176
        %v2178 = vcombine.low %v2156, %v2163
        %v2179 = vcombine.low %v2170, %v2177
        %v2181 = vunpack.c.l.s4 1966171168
        %v2182 = vunpack.c.0.s8 %v2181
        %v2183 = vlaneseq
        %v2184 = vshrl.u32 %v2183, 7
        %v2185 = vsub.s32 %v2182, %v2184
        %v2186 = vrot.slane %v2178, %v2185
        %v2188 = vunpack.c.l.s4 1966171168
        %v2189 = vunpack.c.0.s8 %v2188
        %v2190 = vlaneseq
        %v2191 = vshrl.u32 %v2190, 7
        %v2192 = vsub.s32 %v2189, %v2191
        %v2193 = vrot.slane %v2179, %v2192
        %v2194 = vcombine.low %v2186, %v2193
        %v2195 = vcombine.low %v1140, %v1147
        %v2196 = vcombine.low %v1148, %v1149
        %v2197 = vcombine.low %v1164, %v1171
        %v2198 = vcombine.low %v1172, %v1173
        %v2200 = vunpack.c.l.s4 1966171168
        %v2201 = vunpack.c.0.s8 %v2200
        %v2202 = vlaneseq
        %v2203 = vshrl.u32 %v2202, 7
        %v2204 = vsub.s32 %v2201, %v2203
        %v2205 = vrot.slane %v2195, %v2204
        %v2207 = vunpack.c.l.s4 1966171168
        %v2208 = vunpack.c.0.s8 %v2207
        %v2209 = vlaneseq
        %v2210 = vshrl.u32 %v2209, 7
        %v2211 = vsub.s32 %v2208, %v2210
        %v2212 = vrot.slane %v2196, %v2211
        %v2214 = vunpack.c.l.s4 1966171168
        %v2215 = vunpack.c.0.s8 %v2214
        %v2216 = vlaneseq
        %v2217 = vshrl.u32 %v2216, 7
        %v2218 = vsub.s32 %v2215, %v2217
        %v2219 = vrot.slane %v2197, %v2218
        %v2221 = vunpack.c.l.s4 1966171168
        %v2222 = vunpack.c.0.s8 %v2221
        %v2223 = vlaneseq
        %v2224 = vshrl.u32 %v2223, 7
        %v2225 = vsub.s32 %v2222, %v2224
        %v2226 = vrot.slane %v2198, %v2225
        %v2227 = vcombine.low %v2205, %v2212
        %v2228 = vcombine.low %v2219, %v2226
        %v2230 = vunpack.c.l.s4 1966171168
        %v2231 = vunpack.c.0.s8 %v2230
        %v2232 = vlaneseq
        %v2233 = vshrl.u32 %v2232, 7
        %v2234 = vsub.s32 %v2231, %v2233
        %v2235 = vrot.slane %v2227, %v2234
        %v2237 = vunpack.c.l.s4 1966171168
        %v2238 = vunpack.c.0.s8 %v2237
        %v2239 = vlaneseq
        %v2240 = vshrl.u32 %v2239, 7
        %v2241 = vsub.s32 %v2238, %v2240
        %v2242 = vrot.slane %v2228, %v2241
        %v2243 = vcombine.low %v2235, %v2242
        %v2244 = vcombine.low %v1187, %v1202
        %v2245 = vcombine.low %v1209, %v1210
        %v2246 = vcombine.low %v1211, %v1226
        %v2247 = vcombine.low %v1233, %v1234
        %v2249 = vunpack.c.l.s4 1966171168
        %v2250 = vunpack.c.0.s8 %v2249
        %v2251 = vlaneseq
        %v2252 = vshrl.u32 %v2251, 7
        %v2253 = vsub.s32 %v2250, %v2252
        %v2254 = vrot.slane %v2244, %v2253
        %v2256 = vunpack.c.l.s4 1966171168
        %v2257 = vunpack.c.0.s8 %v2256
        %v2258 = vlaneseq
        %v2259 = vshrl.u32 %v2258, 7
        %v2260 = vsub.s32 %v2257, %v2259
        %v2261 = vrot.slane %v2245, %v2260
        %v2263 = vunpack.c.l.s4 1966171168
        %v2264 = vunpack.c.0.s8 %v2263
        %v2265 = vlaneseq
        %v2266 = vshrl.u32 %v2265, 7
        %v2267 = vsub.s32 %v2264, %v2266
        %v2268 = vrot.slane %v2246, %v2267
        %v2270 = vunpack.c.l.s4 1966171168
        %v2271 = vunpack.c.0.s8 %v2270
        %v2272 = vlaneseq
        %v2273 = vshrl.u32 %v2272, 7
        %v2274 = vsub.s32 %v2271, %v2273
        %v2275 = vrot.slane %v2247, %v2274
        %v2276 = vcombine.low %v2254, %v2261
        %v2277 = vcombine.low %v2268, %v2275
        %v2279 = vunpack.c.l.s4 1966171168
        %v2280 = vunpack.c.0.s8 %v2279
        %v2281 = vlaneseq
        %v2282 = vshrl.u32 %v2281, 7
        %v2283 = vsub.s32 %v2280, %v2282
        %v2284 = vrot.slane %v2276, %v2283
        %v2286 = vunpack.c.l.s4 1966171168
        %v2287 = vunpack.c.0.s8 %v2286
        %v2288 = vlaneseq
        %v2289 = vshrl.u32 %v2288, 7
        %v2290 = vsub.s32 %v2287, %v2289
        %v2291 = vrot.slane %v2277, %v2290
        %v2292 = vcombine.low %v2284, %v2291
        %v2293 = vcombine.low %v1235, %v1249
        %v2294 = vcombine.low %v1264, %v1271
        %v2295 = vcombine.low %v1272, %v1273
        %v2296 = vcombine.low %v1288, %v1295
        %v2298 = vunpack.c.l.s4 1966171168
        %v2299 = vunpack.c.0.s8 %v2298
        %v2300 = vlaneseq
        %v2301 = vshrl.u32 %v2300, 7
        %v2302 = vsub.s32 %v2299, %v2301
        %v2303 = vrot.slane %v2293, %v2302
        %v2305 = vunpack.c.l.s4 1966171168
        %v2306 = vunpack.c.0.s8 %v2305
        %v2307 = vlaneseq
        %v2308 = vshrl.u32 %v2307, 7
        %v2309 = vsub.s32 %v2306, %v2308
        %v2310 = vrot.slane %v2294, %v2309
        %v2312 = vunpack.c.l.s4 1966171168
        %v2313 = vunpack.c.0.s8 %v2312
        %v2314 = vlaneseq
        %v2315 = vshrl.u32 %v2314, 7
        %v2316 = vsub.s32 %v2313, %v2315
        %v2317 = vrot.slane %v2295, %v2316
        %v2319 = vunpack.c.l.s4 1966171168
        %v2320 = vunpack.c.0.s8 %v2319
        %v2321 = vlaneseq
        %v2322 = vshrl.u32 %v2321, 7
        %v2323 = vsub.s32 %v2320, %v2322
        %v2324 = vrot.slane %v2296, %v2323
        %v2325 = vcombine.low %v2303, %v2310
        %v2326 = vcombine.low %v2317, %v2324
        %v2328 = vunpack.c.l.s4 1966171168
        %v2329 = vunpack.c.0.s8 %v2328
        %v2330 = vlaneseq
        %v2331 = vshrl.u32 %v2330, 7
        %v2332 = vsub.s32 %v2329, %v2331
        %v2333 = vrot.slane %v2325, %v2332
        %v2335 = vunpack.c.l.s4 1966171168
        %v2336 = vunpack.c.0.s8 %v2335
        %v2337 = vlaneseq
        %v2338 = vshrl.u32 %v2337, 7
        %v2339 = vsub.s32 %v2336, %v2338
        %v2340 = vrot.slane %v2326, %v2339
        %v2341 = vcombine.low %v2333, %v2340
        %v2342 = vcombine.low %v1296, %v1297
        %v2343 = vcombine.low %v1311, %v1326
        %v2344 = vcombine.low %v1333, %v1334
        %v2345 = vcombine.low %v1335, %v1350
        %v2347 = vunpack.c.l.s4 1966171168
        %v2348 = vunpack.c.0.s8 %v2347
        %v2349 = vlaneseq
        %v2350 = vshrl.u32 %v2349, 7
        %v2351 = vsub.s32 %v2348, %v2350
        %v2352 = vrot.slane %v2342, %v2351
        %v2354 = vunpack.c.l.s4 1966171168
        %v2355 = vunpack.c.0.s8 %v2354
        %v2356 = vlaneseq
        %v2357 = vshrl.u32 %v2356, 7
        %v2358 = vsub.s32 %v2355, %v2357
        %v2359 = vrot.slane %v2343, %v2358
        %v2361 = vunpack.c.l.s4 1966171168
        %v2362 = vunpack.c.0.s8 %v2361
        %v2363 = vlaneseq
        %v2364 = vshrl.u32 %v2363, 7
        %v2365 = vsub.s32 %v2362, %v2364
        %v2366 = vrot.slane %v2344, %v2365
        %v2368 = vunpack.c.l.s4 1966171168
        %v2369 = vunpack.c.0.s8 %v2368
        %v2370 = vlaneseq
        %v2371 = vshrl.u32 %v2370, 7
        %v2372 = vsub.s32 %v2369, %v2371
        %v2373 = vrot.slane %v2345, %v2372
        %v2374 = vcombine.low %v2352, %v2359
        %v2375 = vcombine.low %v2366, %v2373
        %v2377 = vunpack.c.l.s4 1966171168
        %v2378 = vunpack.c.0.s8 %v2377
        %v2379 = vlaneseq
        %v2380 = vshrl.u32 %v2379, 7
        %v2381 = vsub.s32 %v2378, %v2380
        %v2382 = vrot.slane %v2374, %v2381
        %v2384 = vunpack.c.l.s4 1966171168
        %v2385 = vunpack.c.0.s8 %v2384
        %v2386 = vlaneseq
        %v2387 = vshrl.u32 %v2386, 7
        %v2388 = vsub.s32 %v2385, %v2387
        %v2389 = vrot.slane %v2375, %v2388
        %v2390 = vcombine.low %v2382, %v2389
        %v2391 = vcombine.low %v1357, %v1358
        %v2392 = vcombine.low %v1359, %v1373
        %v2393 = vcombine.low %v1388, %v1395
        %v2394 = vcombine.low %v1396, %v1397
        %v2396 = vunpack.c.l.s4 1966171168
        %v2397 = vunpack.c.0.s8 %v2396
        %v2398 = vlaneseq
        %v2399 = vshrl.u32 %v2398, 7
        %v2400 = vsub.s32 %v2397, %v2399
        %v2401 = vrot.slane %v2391, %v2400
        %v2403 = vunpack.c.l.s4 1966171168
        %v2404 = vunpack.c.0.s8 %v2403
        %v2405 = vlaneseq
        %v2406 = vshrl.u32 %v2405, 7
        %v2407 = vsub.s32 %v2404, %v2406
        %v2408 = vrot.slane %v2392, %v2407
        %v2410 = vunpack.c.l.s4 1966171168
        %v2411 = vunpack.c.0.s8 %v2410
        %v2412 = vlaneseq
        %v2413 = vshrl.u32 %v2412, 7
        %v2414 = vsub.s32 %v2411, %v2413
        %v2415 = vrot.slane %v2393, %v2414
        %v2417 = vunpack.c.l.s4 1966171168
        %v2418 = vunpack.c.0.s8 %v2417
        %v2419 = vlaneseq
        %v2420 = vshrl.u32 %v2419, 7
        %v2421 = vsub.s32 %v2418, %v2420
        %v2422 = vrot.slane %v2394, %v2421
        %v2423 = vcombine.low %v2401, %v2408
        %v2424 = vcombine.low %v2415, %v2422
        %v2426 = vunpack.c.l.s4 1966171168
        %v2427 = vunpack.c.0.s8 %v2426
        %v2428 = vlaneseq
        %v2429 = vshrl.u32 %v2428, 7
        %v2430 = vsub.s32 %v2427, %v2429
        %v2431 = vrot.slane %v2423, %v2430
        %v2433 = vunpack.c.l.s4 1966171168
        %v2434 = vunpack.c.0.s8 %v2433
        %v2435 = vlaneseq
        %v2436 = vshrl.u32 %v2435, 7
        %v2437 = vsub.s32 %v2434, %v2436
        %v2438 = vrot.slane %v2424, %v2437
        %v2439 = vcombine.low %v2431, %v2438
        %v2440 = vcombine.low %v1412, %v1419
        %v2441 = vcombine.low %v1420, %v1421
        %v2442 = vcombine.low %v1435, %v1450
        %v2443 = vcombine.low %v1457, %v1458
        %v2445 = vunpack.c.l.s4 1966171168
        %v2446 = vunpack.c.0.s8 %v2445
        %v2447 = vlaneseq
        %v2448 = vshrl.u32 %v2447, 7
        %v2449 = vsub.s32 %v2446, %v2448
        %v2450 = vrot.slane %v2440, %v2449
        %v2452 = vunpack.c.l.s4 1966171168
        %v2453 = vunpack.c.0.s8 %v2452
        %v2454 = vlaneseq
        %v2455 = vshrl.u32 %v2454, 7
        %v2456 = vsub.s32 %v2453, %v2455
        %v2457 = vrot.slane %v2441, %v2456
        %v2459 = vunpack.c.l.s4 1966171168
        %v2460 = vunpack.c.0.s8 %v2459
        %v2461 = vlaneseq
        %v2462 = vshrl.u32 %v2461, 7
        %v2463 = vsub.s32 %v2460, %v2462
        %v2464 = vrot.slane %v2442, %v2463
        %v2466 = vunpack.c.l.s4 1966171168
        %v2467 = vunpack.c.0.s8 %v2466
        %v2468 = vlaneseq
        %v2469 = vshrl.u32 %v2468, 7
        %v2470 = vsub.s32 %v2467, %v2469
        %v2471 = vrot.slane %v2443, %v2470
        %v2472 = vcombine.low %v2450, %v2457
        %v2473 = vcombine.low %v2464, %v2471
        %v2475 = vunpack.c.l.s4 1966171168
        %v2476 = vunpack.c.0.s8 %v2475
        %v2477 = vlaneseq
        %v2478 = vshrl.u32 %v2477, 7
        %v2479 = vsub.s32 %v2476, %v2478
        %v2480 = vrot.slane %v2472, %v2479
        %v2482 = vunpack.c.l.s4 1966171168
        %v2483 = vunpack.c.0.s8 %v2482
        %v2484 = vlaneseq
        %v2485 = vshrl.u32 %v2484, 7
        %v2486 = vsub.s32 %v2483, %v2485
        %v2487 = vrot.slane %v2473, %v2486
        %v2488 = vcombine.low %v2480, %v2487
        %v2489 = vcombine.low %v1459, %v1474
        %v2490 = vcombine.low %v1481, %v1482
        %v2491 = vcombine.low %v1483, %v1497
        %v2492 = vcombine.low %v1512, %v1519
        %v2494 = vunpack.c.l.s4 1966171168
        %v2495 = vunpack.c.0.s8 %v2494
        %v2496 = vlaneseq
        %v2497 = vshrl.u32 %v2496, 7
        %v2498 = vsub.s32 %v2495, %v2497
        %v2499 = vrot.slane %v2489, %v2498
        %v2501 = vunpack.c.l.s4 1966171168
        %v2502 = vunpack.c.0.s8 %v2501
        %v2503 = vlaneseq
        %v2504 = vshrl.u32 %v2503, 7
        %v2505 = vsub.s32 %v2502, %v2504
        %v2506 = vrot.slane %v2490, %v2505
        %v2508 = vunpack.c.l.s4 1966171168
        %v2509 = vunpack.c.0.s8 %v2508
        %v2510 = vlaneseq
        %v2511 = vshrl.u32 %v2510, 7
        %v2512 = vsub.s32 %v2509, %v2511
        %v2513 = vrot.slane %v2491, %v2512
        %v2515 = vunpack.c.l.s4 1966171168
        %v2516 = vunpack.c.0.s8 %v2515
        %v2517 = vlaneseq
        %v2518 = vshrl.u32 %v2517, 7
        %v2519 = vsub.s32 %v2516, %v2518
        %v2520 = vrot.slane %v2492, %v2519
        %v2521 = vcombine.low %v2499, %v2506
        %v2522 = vcombine.low %v2513, %v2520
        %v2524 = vunpack.c.l.s4 1966171168
        %v2525 = vunpack.c.0.s8 %v2524
        %v2526 = vlaneseq
        %v2527 = vshrl.u32 %v2526, 7
        %v2528 = vsub.s32 %v2525, %v2527
        %v2529 = vrot.slane %v2521, %v2528
        %v2531 = vunpack.c.l.s4 1966171168
        %v2532 = vunpack.c.0.s8 %v2531
        %v2533 = vlaneseq
        %v2534 = vshrl.u32 %v2533, 7
        %v2535 = vsub.s32 %v2532, %v2534
        %v2536 = vrot.slane %v2522, %v2535
        %v2537 = vcombine.low %v2529, %v2536
        %v2538 = vcombine.low %v1520, %v1521
        %v2539 = vcombine.low %v1536, %v1543
        %v2540 = vcombine.low %v1544, %v1545
        %v2541 = vcombine.low %v1559, %v1574
        %v2543 = vunpack.c.l.s4 1966171168
        %v2544 = vunpack.c.0.s8 %v2543
        %v2545 = vlaneseq
        %v2546 = vshrl.u32 %v2545, 7
        %v2547 = vsub.s32 %v2544, %v2546
        %v2548 = vrot.slane %v2538, %v2547
        %v2550 = vunpack.c.l.s4 1966171168
        %v2551 = vunpack.c.0.s8 %v2550
        %v2552 = vlaneseq
        %v2553 = vshrl.u32 %v2552, 7
        %v2554 = vsub.s32 %v2551, %v2553
        %v2555 = vrot.slane %v2539, %v2554
        %v2557 = vunpack.c.l.s4 1966171168
        %v2558 = vunpack.c.0.s8 %v2557
        %v2559 = vlaneseq
        %v2560 = vshrl.u32 %v2559, 7
        %v2561 = vsub.s32 %v2558, %v2560
        %v2562 = vrot.slane %v2540, %v2561
        %v2564 = vunpack.c.l.s4 1966171168
        %v2565 = vunpack.c.0.s8 %v2564
        %v2566 = vlaneseq
        %v2567 = vshrl.u32 %v2566, 7
        %v2568 = vsub.s32 %v2565, %v2567
        %v2569 = vrot.slane %v2541, %v2568
        %v2570 = vcombine.low %v2548, %v2555
        %v2571 = vcombine.low %v2562, %v2569
        %v2573 = vunpack.c.l.s4 1966171168
        %v2574 = vunpack.c.0.s8 %v2573
        %v2575 = vlaneseq
        %v2576 = vshrl.u32 %v2575, 7
        %v2577 = vsub.s32 %v2574, %v2576
        %v2578 = vrot.slane %v2570, %v2577
        %v2580 = vunpack.c.l.s4 1966171168
        %v2581 = vunpack.c.0.s8 %v2580
        %v2582 = vlaneseq
        %v2583 = vshrl.u32 %v2582, 7
        %v2584 = vsub.s32 %v2581, %v2583
        %v2585 = vrot.slane %v2571, %v2584
        %v2586 = vcombine.low %v2578, %v2585
        %v2587 = vcombine.low %v1581, %v1582
        %v2588 = vcombine.low %v1583, %v1598
        %v2589 = vcombine.low %v1605, %v1606
        %v2590 = vcombine.low %v1607, %v1621
        %v2592 = vunpack.c.l.s4 1966171168
        %v2593 = vunpack.c.0.s8 %v2592
        %v2594 = vlaneseq
        %v2595 = vshrl.u32 %v2594, 7
        %v2596 = vsub.s32 %v2593, %v2595
        %v2597 = vrot.slane %v2587, %v2596
        %v2599 = vunpack.c.l.s4 1966171168
        %v2600 = vunpack.c.0.s8 %v2599
        %v2601 = vlaneseq
        %v2602 = vshrl.u32 %v2601, 7
        %v2603 = vsub.s32 %v2600, %v2602
        %v2604 = vrot.slane %v2588, %v2603
        %v2606 = vunpack.c.l.s4 1966171168
        %v2607 = vunpack.c.0.s8 %v2606
        %v2608 = vlaneseq
        %v2609 = vshrl.u32 %v2608, 7
        %v2610 = vsub.s32 %v2607, %v2609
        %v2611 = vrot.slane %v2589, %v2610
        %v2613 = vunpack.c.l.s4 1966171168
        %v2614 = vunpack.c.0.s8 %v2613
        %v2615 = vlaneseq
        %v2616 = vshrl.u32 %v2615, 7
        %v2617 = vsub.s32 %v2614, %v2616
        %v2618 = vrot.slane %v2590, %v2617
        %v2619 = vcombine.low %v2597, %v2604
        %v2620 = vcombine.low %v2611, %v2618
        %v2622 = vunpack.c.l.s4 1966171168
        %v2623 = vunpack.c.0.s8 %v2622
        %v2624 = vlaneseq
        %v2625 = vshrl.u32 %v2624, 7
        %v2626 = vsub.s32 %v2623, %v2625
        %v2627 = vrot.slane %v2619, %v2626
        %v2629 = vunpack.c.l.s4 1966171168
        %v2630 = vunpack.c.0.s8 %v2629
        %v2631 = vlaneseq
        %v2632 = vshrl.u32 %v2631, 7
        %v2633 = vsub.s32 %v2630, %v2632
        %v2634 = vrot.slane %v2620, %v2633
        %v2635 = vcombine.low %v2627, %v2634
        %v2636 = vcombine.low %v1636, %v1643
        %v2637 = vcombine.low %v1644, %v1645
        %v2638 = vcombine.low %v1660, %v1667
        %v2639 = vcombine.low %v1668, %v1669
        %v2641 = vunpack.c.l.s4 1966171168
        %v2642 = vunpack.c.0.s8 %v2641
        %v2643 = vlaneseq
        %v2644 = vshrl.u32 %v2643, 7
        %v2645 = vsub.s32 %v2642, %v2644
        %v2646 = vrot.slane %v2636, %v2645
        %v2648 = vunpack.c.l.s4 1966171168
        %v2649 = vunpack.c.0.s8 %v2648
        %v2650 = vlaneseq
        %v2651 = vshrl.u32 %v2650, 7
        %v2652 = vsub.s32 %v2649, %v2651
        %v2653 = vrot.slane %v2637, %v2652
        %v2655 = vunpack.c.l.s4 1966171168
        %v2656 = vunpack.c.0.s8 %v2655
        %v2657 = vlaneseq
        %v2658 = vshrl.u32 %v2657, 7
        %v2659 = vsub.s32 %v2656, %v2658
        %v2660 = vrot.slane %v2638, %v2659
        %v2662 = vunpack.c.l.s4 1966171168
        %v2663 = vunpack.c.0.s8 %v2662
        %v2664 = vlaneseq
        %v2665 = vshrl.u32 %v2664, 7
        %v2666 = vsub.s32 %v2663, %v2665
        %v2667 = vrot.slane %v2639, %v2666
        %v2668 = vcombine.low %v2646, %v2653
        %v2669 = vcombine.low %v2660, %v2667
        %v2671 = vunpack.c.l.s4 1966171168
        %v2672 = vunpack.c.0.s8 %v2671
        %v2673 = vlaneseq
        %v2674 = vshrl.u32 %v2673, 7
        %v2675 = vsub.s32 %v2672, %v2674
        %v2676 = vrot.slane %v2668, %v2675
        %v2678 = vunpack.c.l.s4 1966171168
        %v2679 = vunpack.c.0.s8 %v2678
        %v2680 = vlaneseq
        %v2681 = vshrl.u32 %v2680, 7
        %v2682 = vsub.s32 %v2679, %v2681
        %v2683 = vrot.slane %v2669, %v2682
        %v2684 = vcombine.low %v2676, %v2683
        %v2685 = vcombine.low %v1683, %v1698
        %v2686 = vcombine.low %v1705, %v1706
        %v2687 = vcombine.low %v1707, %v1722
        %v2688 = vcombine.low %v1729, %v1730
        %v2690 = vunpack.c.l.s4 1966171168
        %v2691 = vunpack.c.0.s8 %v2690
        %v2692 = vlaneseq
        %v2693 = vshrl.u32 %v2692, 7
        %v2694 = vsub.s32 %v2691, %v2693
        %v2695 = vrot.slane %v2685, %v2694
        %v2697 = vunpack.c.l.s4 1966171168
        %v2698 = vunpack.c.0.s8 %v2697
        %v2699 = vlaneseq
        %v2700 = vshrl.u32 %v2699, 7
        %v2701 = vsub.s32 %v2698, %v2700
        %v2702 = vrot.slane %v2686, %v2701
        %v2704 = vunpack.c.l.s4 1966171168
        %v2705 = vunpack.c.0.s8 %v2704
        %v2706 = vlaneseq
        %v2707 = vshrl.u32 %v2706, 7
        %v2708 = vsub.s32 %v2705, %v2707
        %v2709 = vrot.slane %v2687, %v2708
        %v2711 = vunpack.c.l.s4 1966171168
        %v2712 = vunpack.c.0.s8 %v2711
        %v2713 = vlaneseq
        %v2714 = vshrl.u32 %v2713, 7
        %v2715 = vsub.s32 %v2712, %v2714
        %v2716 = vrot.slane %v2688, %v2715
        %v2717 = vcombine.low %v2695, %v2702
        %v2718 = vcombine.low %v2709, %v2716
        %v2720 = vunpack.c.l.s4 1966171168
        %v2721 = vunpack.c.0.s8 %v2720
        %v2722 = vlaneseq
        %v2723 = vshrl.u32 %v2722, 7
        %v2724 = vsub.s32 %v2721, %v2723
        %v2725 = vrot.slane %v2717, %v2724
        %v2727 = vunpack.c.l.s4 1966171168
        %v2728 = vunpack.c.0.s8 %v2727
        %v2729 = vlaneseq
        %v2730 = vshrl.u32 %v2729, 7
        %v2731 = vsub.s32 %v2728, %v2730
        %v2732 = vrot.slane %v2718, %v2731
        %v2733 = vcombine.low %v2725, %v2732
        %v2734 = vcombine.low %v1731, %v1745
        %v2736 = vunpack.c.l.s4 1966171168
        %v2737 = vunpack.c.0.s8 %v2736
        %v2738 = vlaneseq
        %v2739 = vshrl.u32 %v2738, 7
        %v2740 = vsub.s32 %v2737, %v2739
        %v2741 = vrot.slane %v2734, %v2740
        %v2743 = vunpack.c.l.s4 1966171168
        %v2744 = vunpack.c.0.s8 %v2743
        %v2745 = vlaneseq
        %v2746 = vshrl.u32 %v2745, 7
        %v2747 = vsub.s32 %v2744, %v2746
        %v2748 = vrot.slane %v2741, %v2747
        %vm2749 = vcmask 31744
        %v2751 = vsel %vm2749, %v1802, 0
        %v2754 = vsel %vm2749, %v1851, 0
        %v2757 = vsel %vm2749, %v1900, 0
        %v2760 = vsel %vm2749, %v1949, 0
        %v2763 = vsel %vm2749, %v1998, 0
        %v2766 = vsel %vm2749, %v2047, 0
        %v2769 = vsel %vm2749, %v2096, 0
        %v2772 = vsel %vm2749, %v2145, 0
        %v2775 = vsel %vm2749, %v2194, 0
        %v2778 = vsel %vm2749, %v2243, 0
        %v2781 = vsel %vm2749, %v2292, 0
        %v2784 = vsel %vm2749, %v2341, 0
        %v2787 = vsel %vm2749, %v2390, 0
        %v2790 = vsel %vm2749, %v2439, 0
        %v2793 = vsel %vm2749, %v2488, 0
        %v2796 = vsel %vm2749, %v2537, 0
        %v2799 = vsel %vm2749, %v2586, 0
        %v2802 = vsel %vm2749, %v2635, 0
        %v2805 = vsel %vm2749, %v2684, 0
        %v2808 = vsel %vm2749, %v2733, 0
        %v2811 = vsel %vm2749, %v2748, 0
        %vm2813 = vcmask 1041408
        %v2815 = vsel %vm2813, %v1746, 0
        %2817 = vmatprep.subr.bf16.mxu0 0
        %2818 = vmatpush1.bf16.msra.mxu0 %v2815
        %2819 = vmatprep.subr.bf16.mxu0 0
        %2820 = vmatpush1.bf16.msra.mxu0 0
        %2821 = vmatprep.subr.bf16.mxu0 0
        %2822 = vmatpush1.bf16.msra.mxu0 0
        %2823 = vmatprep.subr.bf16.mxu0 0
        %2824 = vmatpush1.bf16.msra.mxu0 0
        %2825 = vmatprep.subr.bf16.mxu0 0
        %2826 = vmatpush1.bf16.msra.mxu0 0
        %2827 = vmatprep.subr.bf16.mxu0 0
        %2828 = vmatpush1.bf16.msra.mxu0 0
        %2829 = vmatprep.subr.bf16.mxu0 0
        %2830 = vmatpush1.bf16.msra.mxu0 0
        %2831 = vmatprep.subr.bf16.mxu0 0
        %2832 = vmatpush1.bf16.msra.mxu0 0
        %2833 = vmatprep.subr.bf16.mxu0 0
        %2834 = vmatpush1.bf16.msra.mxu0 0
        %2835 = vmatprep.subr.bf16.mxu0 0
        %2836 = vmatpush1.bf16.msra.mxu0 0
        %2837 = vmatprep.subr.bf16.mxu0 0
        %2838 = vmatpush1.bf16.msra.mxu0 0
        %2839 = vmatprep.subr.bf16.mxu0 0
        %2840 = vmatpush1.bf16.msra.mxu0 0
        %2841 = vmatprep.subr.bf16.mxu0 0
        %2842 = vmatpush1.bf16.msra.mxu0 0
        %2843 = vmatprep.subr.bf16.mxu0 0
        %2844 = vmatpush1.bf16.msra.mxu0 0
        %2845 = vmatprep.subr.bf16.mxu0 0
        %2846 = vmatpush1.bf16.msra.mxu0 0
        %2847 = vmatprep.subr.bf16.mxu0 0
        %2848 = vmatpush1.bf16.msra.mxu0 0
        %2849 = vmatprep.mubr.bf16.mxu0 0
        %2850 = vmatmul.mubr.bf16.gmra.mrb[0].mxu0 %v2751
        %v2851 = vpop.f32.mrb[0].mxu0
        %v2852 = vadd.f32 %v1752, %v2851
        %v2853 = vpop.f32.mrb[0].mxu0
        %v2854 = vpop.f32.mrb[0].mxu0
        %v2855 = vadd.f32 %v1752, %v2854
        %v2856 = vpop.f32.mrb[0].mxu0
        %2857 = vmatprep.mubr.bf16.mxu0 0
        %2858 = vmatmul.mubr.bf16.gmra.mrb[0].mxu0 %v2754
        %v2859 = vpop.f32.mrb[0].mxu0
        %v2860 = vadd.f32 %v1752, %v2859
        %v2861 = vpop.f32.mrb[0].mxu0
        %v2862 = vpop.f32.mrb[0].mxu0
        %v2863 = vadd.f32 %v1752, %v2862
        %v2864 = vpop.f32.mrb[0].mxu0
        %2865 = vmatprep.mubr.bf16.mxu0 0
        %2866 = vmatmul.mubr.bf16.gmra.mrb[0].mxu0 %v2757
        %v2867 = vpop.f32.mrb[0].mxu0
        %v2868 = vadd.f32 %v1752, %v2867
        %v2869 = vpop.f32.mrb[0].mxu0
        %v2870 = vpop.f32.mrb[0].mxu0
        %v2871 = vadd.f32 %v1752, %v2870
        %v2872 = vpop.f32.mrb[0].mxu0
        %2873 = vmatprep.mubr.bf16.mxu0 0
        %2874 = vmatmul.mubr.bf16.gmra.mrb[0].mxu0 %v2760
        %v2875 = vpop.f32.mrb[0].mxu0
        %v2876 = vadd.f32 %v1752, %v2875
        %v2877 = vpop.f32.mrb[0].mxu0
        %v2878 = vpop.f32.mrb[0].mxu0
        %v2879 = vadd.f32 %v1752, %v2878
        %v2880 = vpop.f32.mrb[0].mxu0
        %2881 = vmatprep.mubr.bf16.mxu0 0
        %2882 = vmatmul.mubr.bf16.gmra.mrb[0].mxu0 %v2763
        %v2883 = vpop.f32.mrb[0].mxu0
        %v2884 = vadd.f32 %v1752, %v2883
        %v2885 = vpop.f32.mrb[0].mxu0
        %v2886 = vpop.f32.mrb[0].mxu0
        %v2887 = vadd.f32 %v1752, %v2886
        %v2888 = vpop.f32.mrb[0].mxu0
        %2889 = vmatprep.mubr.bf16.mxu0 0
        %2890 = vmatmul.mubr.bf16.gmra.mrb[0].mxu0 %v2766
        %v2891 = vpop.f32.mrb[0].mxu0
        %v2892 = vadd.f32 %v1752, %v2891
        %v2893 = vpop.f32.mrb[0].mxu0
        %v2894 = vpop.f32.mrb[0].mxu0
        %v2895 = vadd.f32 %v1752, %v2894
        %v2896 = vpop.f32.mrb[0].mxu0
        %2897 = vmatprep.mubr.bf16.mxu0 0
        %2898 = vmatmul.mubr.bf16.gmra.mrb[0].mxu0 %v2769
        %v2899 = vpop.f32.mrb[0].mxu0
        %v2900 = vadd.f32 %v1752, %v2899
        %v2901 = vpop.f32.mrb[0].mxu0
        %v2902 = vpop.f32.mrb[0].mxu0
        %v2903 = vadd.f32 %v1752, %v2902
        %v2904 = vpop.f32.mrb[0].mxu0
        %2905 = vmatprep.mubr.bf16.mxu0 0
        %2906 = vmatmul.mubr.bf16.gmra.mrb[0].mxu0 %v2772
        %v2907 = vpop.f32.mrb[0].mxu0
        %v2908 = vadd.f32 %v1752, %v2907
        %v2909 = vpop.f32.mrb[0].mxu0
        %v2910 = vpop.f32.mrb[0].mxu0
        %v2911 = vadd.f32 %v1752, %v2910
        %v2912 = vpop.f32.mrb[0].mxu0
        %2913 = vmatprep.mubr.bf16.mxu0 0
        %2914 = vmatmul.mubr.bf16.gmra.mrb[0].mxu0 %v2775
        %v2915 = vpop.f32.mrb[0].mxu0
        %v2916 = vadd.f32 %v1752, %v2915
        %v2917 = vpop.f32.mrb[0].mxu0
        %v2918 = vpop.f32.mrb[0].mxu0
        %v2919 = vadd.f32 %v1752, %v2918
        %v2920 = vpop.f32.mrb[0].mxu0
        %2921 = vmatprep.mubr.bf16.mxu0 0
        %2922 = vmatmul.mubr.bf16.gmra.mrb[0].mxu0 %v2778
        %v2923 = vpop.f32.mrb[0].mxu0
        %v2924 = vadd.f32 %v1752, %v2923
        %v2925 = vpop.f32.mrb[0].mxu0
        %v2926 = vpop.f32.mrb[0].mxu0
        %v2927 = vadd.f32 %v1752, %v2926
        %v2928 = vpop.f32.mrb[0].mxu0
        %2929 = vmatprep.mubr.bf16.mxu0 0
        %2930 = vmatmul.mubr.bf16.gmra.mrb[0].mxu0 %v2781
        %v2931 = vpop.f32.mrb[0].mxu0
        %v2932 = vadd.f32 %v1752, %v2931
        %v2933 = vpop.f32.mrb[0].mxu0
        %v2934 = vpop.f32.mrb[0].mxu0
        %v2935 = vadd.f32 %v1752, %v2934
        %v2936 = vpop.f32.mrb[0].mxu0
        %2937 = vmatprep.mubr.bf16.mxu0 0
        %2938 = vmatmul.mubr.bf16.gmra.mrb[0].mxu0 %v2784
        %v2939 = vpop.f32.mrb[0].mxu0
        %v2940 = vadd.f32 %v1752, %v2939
        %v2941 = vpop.f32.mrb[0].mxu0
        %v2942 = vpop.f32.mrb[0].mxu0
        %v2943 = vadd.f32 %v1752, %v2942
        %v2944 = vpop.f32.mrb[0].mxu0
        %2945 = vmatprep.mubr.bf16.mxu0 0
        %2946 = vmatmul.mubr.bf16.gmra.mrb[0].mxu0 %v2787
        %v2947 = vpop.f32.mrb[0].mxu0
        %v2948 = vadd.f32 %v1752, %v2947
        %v2949 = vpop.f32.mrb[0].mxu0
        %v2950 = vpop.f32.mrb[0].mxu0
        %v2951 = vadd.f32 %v1752, %v2950
        %v2952 = vpop.f32.mrb[0].mxu0
        %2953 = vmatprep.mubr.bf16.mxu0 0
        %2954 = vmatmul.mubr.bf16.gmra.mrb[0].mxu0 %v2790
        %v2955 = vpop.f32.mrb[0].mxu0
        %v2956 = vadd.f32 %v1752, %v2955
        %v2957 = vpop.f32.mrb[0].mxu0
        %v2958 = vpop.f32.mrb[0].mxu0
        %v2959 = vadd.f32 %v1752, %v2958
        %v2960 = vpop.f32.mrb[0].mxu0
        %2961 = vmatprep.mubr.bf16.mxu0 0
        %2962 = vmatmul.mubr.bf16.gmra.mrb[0].mxu0 %v2793
        %v2963 = vpop.f32.mrb[0].mxu0
        %v2964 = vadd.f32 %v1752, %v2963
        %v2965 = vpop.f32.mrb[0].mxu0
        %v2966 = vpop.f32.mrb[0].mxu0
        %v2967 = vadd.f32 %v1752, %v2966
        %v2968 = vpop.f32.mrb[0].mxu0
        %2969 = vmatprep.mubr.bf16.mxu0 0
        %2970 = vmatmul.mubr.bf16.gmra.mrb[0].mxu0 %v2796
        %v2971 = vpop.f32.mrb[0].mxu0
        %v2972 = vadd.f32 %v1752, %v2971
        %v2973 = vpop.f32.mrb[0].mxu0
        %v2974 = vpop.f32.mrb[0].mxu0
        %v2975 = vadd.f32 %v1752, %v2974
        %v2976 = vpop.f32.mrb[0].mxu0
        %2977 = vmatprep.mubr.bf16.mxu0 0
        %2978 = vmatmul.mubr.bf16.gmra.mrb[0].mxu0 %v2799
        %v2979 = vpop.f32.mrb[0].mxu0
        %v2980 = vadd.f32 %v1752, %v2979
        %v2981 = vpop.f32.mrb[0].mxu0
        %v2982 = vpop.f32.mrb[0].mxu0
        %v2983 = vadd.f32 %v1752, %v2982
        %v2984 = vpop.f32.mrb[0].mxu0
        %2985 = vmatprep.mubr.bf16.mxu0 0
        %2986 = vmatmul.mubr.bf16.gmra.mrb[0].mxu0 %v2802
        %v2987 = vpop.f32.mrb[0].mxu0
        %v2988 = vadd.f32 %v1752, %v2987
        %v2989 = vpop.f32.mrb[0].mxu0
        %v2990 = vpop.f32.mrb[0].mxu0
        %v2991 = vadd.f32 %v1752, %v2990
        %v2992 = vpop.f32.mrb[0].mxu0
        %2993 = vmatprep.mubr.bf16.mxu0 0
        %2994 = vmatmul.mubr.bf16.gmra.mrb[0].mxu0 %v2805
        %v2995 = vpop.f32.mrb[0].mxu0
        %v2996 = vadd.f32 %v1752, %v2995
        %v2997 = vpop.f32.mrb[0].mxu0
        %v2998 = vpop.f32.mrb[0].mxu0
        %v2999 = vadd.f32 %v1752, %v2998
        %v3000 = vpop.f32.mrb[0].mxu0
        %3001 = vmatprep.mubr.bf16.mxu0 0
        %3002 = vmatmul.mubr.bf16.gmra.mrb[0].mxu0 %v2808
        %v3003 = vpop.f32.mrb[0].mxu0
        %v3004 = vadd.f32 %v1752, %v3003
        %v3005 = vpop.f32.mrb[0].mxu0
        %v3006 = vpop.f32.mrb[0].mxu0
        %v3007 = vadd.f32 %v1752, %v3006
        %v3008 = vpop.f32.mrb[0].mxu0
        %3009 = vmatprep.mubr.bf16.mxu0 0
        %3010 = vmatmul.mubr.bf16.gmra.mrb[0].mxu0 %v2811
        %v3011 = vpop.f32.mrb[0].mxu0
        %v3012 = vadd.f32 %v1752, %v3011
        %v3013 = vpop.f32.mrb[0].mxu0
        %v3014 = vpop.f32.mrb[0].mxu0
        %v3015 = vpop.f32.mrb[0].mxu0
        %3016 = vdwg.mxu0
        %v3017 = vmax.f32 %v2852, 0.0
        %v3018 = vmax.f32 %v2855, 0.0
        %v3019 = vmax.f32 %v2860, 0.0
        %v3020 = vmax.f32 %v2863, 0.0
        %v3021 = vmax.f32 %v2868, 0.0
        %v3022 = vmax.f32 %v2871, 0.0
        %v3023 = vmax.f32 %v2876, 0.0
        %v3024 = vmax.f32 %v2879, 0.0
        %v3025 = vmax.f32 %v2884, 0.0
        %v3026 = vmax.f32 %v2887, 0.0
        %v3027 = vmax.f32 %v2892, 0.0
        %v3028 = vmax.f32 %v2895, 0.0
        %v3029 = vmax.f32 %v2900, 0.0
        %v3030 = vmax.f32 %v2903, 0.0
        %v3031 = vmax.f32 %v2908, 0.0
        %v3032 = vmax.f32 %v2911, 0.0
        %v3033 = vmax.f32 %v2916, 0.0
        %v3034 = vmax.f32 %v2919, 0.0
        %v3035 = vmax.f32 %v2924, 0.0
        %v3036 = vmax.f32 %v2927, 0.0
        %v3037 = vmax.f32 %v2932, 0.0
        %v3038 = vmax.f32 %v2935, 0.0
        %v3039 = vmax.f32 %v2940, 0.0
        %v3040 = vmax.f32 %v2943, 0.0
        %v3041 = vmax.f32 %v2948, 0.0
        %v3042 = vmax.f32 %v2951, 0.0
        %v3043 = vmax.f32 %v2956, 0.0
        %v3044 = vmax.f32 %v2959, 0.0
        %v3045 = vmax.f32 %v2964, 0.0
        %v3046 = vmax.f32 %v2967, 0.0
        %v3047 = vmax.f32 %v2972, 0.0
        %v3048 = vmax.f32 %v2975, 0.0
        %v3049 = vmax.f32 %v2980, 0.0
        %v3050 = vmax.f32 %v2983, 0.0
        %v3051 = vmax.f32 %v2988, 0.0
        %v3052 = vmax.f32 %v2991, 0.0
        %v3053 = vmax.f32 %v2996, 0.0
        %v3054 = vmax.f32 %v2999, 0.0
        %v3055 = vmax.f32 %v3004, 0.0
        %v3056 = vmax.f32 %v3007, 0.0
        %v3057 = vmax.f32 %v3012, 0.0
        %v3099 = vcombine.high %v3017, %v3017
        %v3101 = vunpack.c.l.s4 1983009808
        %v3102 = vunpack.c.0.s8 %v3101
        %v3103 = vlaneseq
        %v3104 = vshrl.u32 %v3103, 7
        %v3105 = vsub.s32 %v3102, %v3104
        %v3106 = vrot.slane %v3017, %v3105
        %v3108 = vunpack.c.l.s4 1983009808
        %v3109 = vunpack.c.0.s8 %v3108
        %v3110 = vlaneseq
        %v3111 = vshrl.u32 %v3110, 7
        %v3112 = vsub.s32 %v3109, %v3111
        %v3113 = vrot.slane %v3099, %v3112
        %v3114 = vcombine.high %v3106, %v3106
        %v3115 = vcombine.high %v3113, %v3113
        %v3116 = vcombine.high %v3018, %v3018
        %v3118 = vunpack.c.l.s4 1983009808
        %v3119 = vunpack.c.0.s8 %v3118
        %v3120 = vlaneseq
        %v3121 = vshrl.u32 %v3120, 7
        %v3122 = vsub.s32 %v3119, %v3121
        %v3123 = vrot.slane %v3018, %v3122
        %v3125 = vunpack.c.l.s4 1983009808
        %v3126 = vunpack.c.0.s8 %v3125
        %v3127 = vlaneseq
        %v3128 = vshrl.u32 %v3127, 7
        %v3129 = vsub.s32 %v3126, %v3128
        %v3130 = vrot.slane %v3116, %v3129
        %v3131 = vcombine.high %v3123, %v3123
        %v3132 = vcombine.high %v3130, %v3130
        %v3133 = vcombine.high %v3019, %v3019
        %v3135 = vunpack.c.l.s4 1983009808
        %v3136 = vunpack.c.0.s8 %v3135
        %v3137 = vlaneseq
        %v3138 = vshrl.u32 %v3137, 7
        %v3139 = vsub.s32 %v3136, %v3138
        %v3140 = vrot.slane %v3019, %v3139
        %v3142 = vunpack.c.l.s4 1983009808
        %v3143 = vunpack.c.0.s8 %v3142
        %v3144 = vlaneseq
        %v3145 = vshrl.u32 %v3144, 7
        %v3146 = vsub.s32 %v3143, %v3145
        %v3147 = vrot.slane %v3133, %v3146
        %v3148 = vcombine.high %v3140, %v3140
        %v3149 = vcombine.high %v3147, %v3147
        %v3150 = vcombine.high %v3020, %v3020
        %v3152 = vunpack.c.l.s4 1983009808
        %v3153 = vunpack.c.0.s8 %v3152
        %v3154 = vlaneseq
        %v3155 = vshrl.u32 %v3154, 7
        %v3156 = vsub.s32 %v3153, %v3155
        %v3157 = vrot.slane %v3020, %v3156
        %v3159 = vunpack.c.l.s4 1983009808
        %v3160 = vunpack.c.0.s8 %v3159
        %v3161 = vlaneseq
        %v3162 = vshrl.u32 %v3161, 7
        %v3163 = vsub.s32 %v3160, %v3162
        %v3164 = vrot.slane %v3150, %v3163
        %v3165 = vcombine.high %v3157, %v3157
        %v3166 = vcombine.high %v3164, %v3164
        %v3167 = vcombine.high %v3021, %v3021
        %v3169 = vunpack.c.l.s4 1983009808
        %v3170 = vunpack.c.0.s8 %v3169
        %v3171 = vlaneseq
        %v3172 = vshrl.u32 %v3171, 7
        %v3173 = vsub.s32 %v3170, %v3172
        %v3174 = vrot.slane %v3021, %v3173
        %v3176 = vunpack.c.l.s4 1983009808
        %v3177 = vunpack.c.0.s8 %v3176
        %v3178 = vlaneseq
        %v3179 = vshrl.u32 %v3178, 7
        %v3180 = vsub.s32 %v3177, %v3179
        %v3181 = vrot.slane %v3167, %v3180
        %v3182 = vcombine.high %v3174, %v3174
        %v3183 = vcombine.high %v3181, %v3181
        %v3184 = vcombine.high %v3022, %v3022
        %v3186 = vunpack.c.l.s4 1983009808
        %v3187 = vunpack.c.0.s8 %v3186
        %v3188 = vlaneseq
        %v3189 = vshrl.u32 %v3188, 7
        %v3190 = vsub.s32 %v3187, %v3189
        %v3191 = vrot.slane %v3022, %v3190
        %v3193 = vunpack.c.l.s4 1983009808
        %v3194 = vunpack.c.0.s8 %v3193
        %v3195 = vlaneseq
        %v3196 = vshrl.u32 %v3195, 7
        %v3197 = vsub.s32 %v3194, %v3196
        %v3198 = vrot.slane %v3184, %v3197
        %v3199 = vcombine.high %v3191, %v3191
        %v3200 = vcombine.high %v3198, %v3198
        %v3201 = vcombine.high %v3023, %v3023
        %v3203 = vunpack.c.l.s4 1983009808
        %v3204 = vunpack.c.0.s8 %v3203
        %v3205 = vlaneseq
        %v3206 = vshrl.u32 %v3205, 7
        %v3207 = vsub.s32 %v3204, %v3206
        %v3208 = vrot.slane %v3023, %v3207
        %v3210 = vunpack.c.l.s4 1983009808
        %v3211 = vunpack.c.0.s8 %v3210
        %v3212 = vlaneseq
        %v3213 = vshrl.u32 %v3212, 7
        %v3214 = vsub.s32 %v3211, %v3213
        %v3215 = vrot.slane %v3201, %v3214
        %v3216 = vcombine.high %v3208, %v3208
        %v3217 = vcombine.high %v3215, %v3215
        %v3218 = vcombine.high %v3024, %v3024
        %v3220 = vunpack.c.l.s4 1983009808
        %v3221 = vunpack.c.0.s8 %v3220
        %v3222 = vlaneseq
        %v3223 = vshrl.u32 %v3222, 7
        %v3224 = vsub.s32 %v3221, %v3223
        %v3225 = vrot.slane %v3024, %v3224
        %v3227 = vunpack.c.l.s4 1983009808
        %v3228 = vunpack.c.0.s8 %v3227
        %v3229 = vlaneseq
        %v3230 = vshrl.u32 %v3229, 7
        %v3231 = vsub.s32 %v3228, %v3230
        %v3232 = vrot.slane %v3218, %v3231
        %v3233 = vcombine.high %v3225, %v3225
        %v3234 = vcombine.high %v3232, %v3232
        %v3235 = vcombine.high %v3025, %v3025
        %v3237 = vunpack.c.l.s4 1983009808
        %v3238 = vunpack.c.0.s8 %v3237
        %v3239 = vlaneseq
        %v3240 = vshrl.u32 %v3239, 7
        %v3241 = vsub.s32 %v3238, %v3240
        %v3242 = vrot.slane %v3025, %v3241
        %v3244 = vunpack.c.l.s4 1983009808
        %v3245 = vunpack.c.0.s8 %v3244
        %v3246 = vlaneseq
        %v3247 = vshrl.u32 %v3246, 7
        %v3248 = vsub.s32 %v3245, %v3247
        %v3249 = vrot.slane %v3235, %v3248
        %v3250 = vcombine.high %v3242, %v3242
        %v3251 = vcombine.high %v3249, %v3249
        %v3252 = vcombine.high %v3026, %v3026
        %v3254 = vunpack.c.l.s4 1983009808
        %v3255 = vunpack.c.0.s8 %v3254
        %v3256 = vlaneseq
        %v3257 = vshrl.u32 %v3256, 7
        %v3258 = vsub.s32 %v3255, %v3257
        %v3259 = vrot.slane %v3026, %v3258
        %v3261 = vunpack.c.l.s4 1983009808
        %v3262 = vunpack.c.0.s8 %v3261
        %v3263 = vlaneseq
        %v3264 = vshrl.u32 %v3263, 7
        %v3265 = vsub.s32 %v3262, %v3264
        %v3266 = vrot.slane %v3252, %v3265
        %v3267 = vcombine.high %v3259, %v3259
        %v3268 = vcombine.high %v3266, %v3266
        %v3269 = vcombine.high %v3027, %v3027
        %v3271 = vunpack.c.l.s4 1983009808
        %v3272 = vunpack.c.0.s8 %v3271
        %v3273 = vlaneseq
        %v3274 = vshrl.u32 %v3273, 7
        %v3275 = vsub.s32 %v3272, %v3274
        %v3276 = vrot.slane %v3027, %v3275
        %v3278 = vunpack.c.l.s4 1983009808
        %v3279 = vunpack.c.0.s8 %v3278
        %v3280 = vlaneseq
        %v3281 = vshrl.u32 %v3280, 7
        %v3282 = vsub.s32 %v3279, %v3281
        %v3283 = vrot.slane %v3269, %v3282
        %v3284 = vcombine.high %v3276, %v3276
        %v3285 = vcombine.high %v3283, %v3283
        %v3286 = vcombine.high %v3028, %v3028
        %v3288 = vunpack.c.l.s4 1983009808
        %v3289 = vunpack.c.0.s8 %v3288
        %v3290 = vlaneseq
        %v3291 = vshrl.u32 %v3290, 7
        %v3292 = vsub.s32 %v3289, %v3291
        %v3293 = vrot.slane %v3028, %v3292
        %v3295 = vunpack.c.l.s4 1983009808
        %v3296 = vunpack.c.0.s8 %v3295
        %v3297 = vlaneseq
        %v3298 = vshrl.u32 %v3297, 7
        %v3299 = vsub.s32 %v3296, %v3298
        %v3300 = vrot.slane %v3286, %v3299
        %v3301 = vcombine.high %v3293, %v3293
        %v3302 = vcombine.high %v3300, %v3300
        %v3303 = vcombine.high %v3029, %v3029
        %v3305 = vunpack.c.l.s4 1983009808
        %v3306 = vunpack.c.0.s8 %v3305
        %v3307 = vlaneseq
        %v3308 = vshrl.u32 %v3307, 7
        %v3309 = vsub.s32 %v3306, %v3308
        %v3310 = vrot.slane %v3029, %v3309
        %v3312 = vunpack.c.l.s4 1983009808
        %v3313 = vunpack.c.0.s8 %v3312
        %v3314 = vlaneseq
        %v3315 = vshrl.u32 %v3314, 7
        %v3316 = vsub.s32 %v3313, %v3315
        %v3317 = vrot.slane %v3303, %v3316
        %v3318 = vcombine.high %v3310, %v3310
        %v3319 = vcombine.high %v3317, %v3317
        %v3320 = vcombine.high %v3030, %v3030
        %v3322 = vunpack.c.l.s4 1983009808
        %v3323 = vunpack.c.0.s8 %v3322
        %v3324 = vlaneseq
        %v3325 = vshrl.u32 %v3324, 7
        %v3326 = vsub.s32 %v3323, %v3325
        %v3327 = vrot.slane %v3030, %v3326
        %v3329 = vunpack.c.l.s4 1983009808
        %v3330 = vunpack.c.0.s8 %v3329
        %v3331 = vlaneseq
        %v3332 = vshrl.u32 %v3331, 7
        %v3333 = vsub.s32 %v3330, %v3332
        %v3334 = vrot.slane %v3320, %v3333
        %v3335 = vcombine.high %v3327, %v3327
        %v3336 = vcombine.high %v3334, %v3334
        %v3337 = vcombine.high %v3031, %v3031
        %v3339 = vunpack.c.l.s4 1983009808
        %v3340 = vunpack.c.0.s8 %v3339
        %v3341 = vlaneseq
        %v3342 = vshrl.u32 %v3341, 7
        %v3343 = vsub.s32 %v3340, %v3342
        %v3344 = vrot.slane %v3031, %v3343
        %v3346 = vunpack.c.l.s4 1983009808
        %v3347 = vunpack.c.0.s8 %v3346
        %v3348 = vlaneseq
        %v3349 = vshrl.u32 %v3348, 7
        %v3350 = vsub.s32 %v3347, %v3349
        %v3351 = vrot.slane %v3337, %v3350
        %v3352 = vcombine.high %v3344, %v3344
        %v3353 = vcombine.high %v3351, %v3351
        %v3354 = vcombine.high %v3032, %v3032
        %v3356 = vunpack.c.l.s4 1983009808
        %v3357 = vunpack.c.0.s8 %v3356
        %v3358 = vlaneseq
        %v3359 = vshrl.u32 %v3358, 7
        %v3360 = vsub.s32 %v3357, %v3359
        %v3361 = vrot.slane %v3032, %v3360
        %v3363 = vunpack.c.l.s4 1983009808
        %v3364 = vunpack.c.0.s8 %v3363
        %v3365 = vlaneseq
        %v3366 = vshrl.u32 %v3365, 7
        %v3367 = vsub.s32 %v3364, %v3366
        %v3368 = vrot.slane %v3354, %v3367
        %v3369 = vcombine.high %v3361, %v3361
        %v3370 = vcombine.high %v3368, %v3368
        %v3371 = vcombine.high %v3033, %v3033
        %v3373 = vunpack.c.l.s4 1983009808
        %v3374 = vunpack.c.0.s8 %v3373
        %v3375 = vlaneseq
        %v3376 = vshrl.u32 %v3375, 7
        %v3377 = vsub.s32 %v3374, %v3376
        %v3378 = vrot.slane %v3033, %v3377
        %v3380 = vunpack.c.l.s4 1983009808
        %v3381 = vunpack.c.0.s8 %v3380
        %v3382 = vlaneseq
        %v3383 = vshrl.u32 %v3382, 7
        %v3384 = vsub.s32 %v3381, %v3383
        %v3385 = vrot.slane %v3371, %v3384
        %v3386 = vcombine.high %v3378, %v3378
        %v3387 = vcombine.high %v3385, %v3385
        %v3388 = vcombine.high %v3034, %v3034
        %v3390 = vunpack.c.l.s4 1983009808
        %v3391 = vunpack.c.0.s8 %v3390
        %v3392 = vlaneseq
        %v3393 = vshrl.u32 %v3392, 7
        %v3394 = vsub.s32 %v3391, %v3393
        %v3395 = vrot.slane %v3034, %v3394
        %v3397 = vunpack.c.l.s4 1983009808
        %v3398 = vunpack.c.0.s8 %v3397
        %v3399 = vlaneseq
        %v3400 = vshrl.u32 %v3399, 7
        %v3401 = vsub.s32 %v3398, %v3400
        %v3402 = vrot.slane %v3388, %v3401
        %v3403 = vcombine.high %v3395, %v3395
        %v3404 = vcombine.high %v3402, %v3402
        %v3405 = vcombine.high %v3035, %v3035
        %v3407 = vunpack.c.l.s4 1983009808
        %v3408 = vunpack.c.0.s8 %v3407
        %v3409 = vlaneseq
        %v3410 = vshrl.u32 %v3409, 7
        %v3411 = vsub.s32 %v3408, %v3410
        %v3412 = vrot.slane %v3035, %v3411
        %v3414 = vunpack.c.l.s4 1983009808
        %v3415 = vunpack.c.0.s8 %v3414
        %v3416 = vlaneseq
        %v3417 = vshrl.u32 %v3416, 7
        %v3418 = vsub.s32 %v3415, %v3417
        %v3419 = vrot.slane %v3405, %v3418
        %v3420 = vcombine.high %v3412, %v3412
        %v3421 = vcombine.high %v3419, %v3419
        %v3422 = vcombine.high %v3036, %v3036
        %v3424 = vunpack.c.l.s4 1983009808
        %v3425 = vunpack.c.0.s8 %v3424
        %v3426 = vlaneseq
        %v3427 = vshrl.u32 %v3426, 7
        %v3428 = vsub.s32 %v3425, %v3427
        %v3429 = vrot.slane %v3036, %v3428
        %v3431 = vunpack.c.l.s4 1983009808
        %v3432 = vunpack.c.0.s8 %v3431
        %v3433 = vlaneseq
        %v3434 = vshrl.u32 %v3433, 7
        %v3435 = vsub.s32 %v3432, %v3434
        %v3436 = vrot.slane %v3422, %v3435
        %v3437 = vcombine.high %v3429, %v3429
        %v3438 = vcombine.high %v3436, %v3436
        %v3439 = vcombine.high %v3037, %v3037
        %v3441 = vunpack.c.l.s4 1983009808
        %v3442 = vunpack.c.0.s8 %v3441
        %v3443 = vlaneseq
        %v3444 = vshrl.u32 %v3443, 7
        %v3445 = vsub.s32 %v3442, %v3444
        %v3446 = vrot.slane %v3037, %v3445
        %v3448 = vunpack.c.l.s4 1983009808
        %v3449 = vunpack.c.0.s8 %v3448
        %v3450 = vlaneseq
        %v3451 = vshrl.u32 %v3450, 7
        %v3452 = vsub.s32 %v3449, %v3451
        %v3453 = vrot.slane %v3439, %v3452
        %v3454 = vcombine.high %v3446, %v3446
        %v3455 = vcombine.high %v3453, %v3453
        %v3456 = vcombine.high %v3038, %v3038
        %v3458 = vunpack.c.l.s4 1983009808
        %v3459 = vunpack.c.0.s8 %v3458
        %v3460 = vlaneseq
        %v3461 = vshrl.u32 %v3460, 7
        %v3462 = vsub.s32 %v3459, %v3461
        %v3463 = vrot.slane %v3038, %v3462
        %v3465 = vunpack.c.l.s4 1983009808
        %v3466 = vunpack.c.0.s8 %v3465
        %v3467 = vlaneseq
        %v3468 = vshrl.u32 %v3467, 7
        %v3469 = vsub.s32 %v3466, %v3468
        %v3470 = vrot.slane %v3456, %v3469
        %v3471 = vcombine.high %v3463, %v3463
        %v3472 = vcombine.high %v3470, %v3470
        %v3473 = vcombine.high %v3039, %v3039
        %v3475 = vunpack.c.l.s4 1983009808
        %v3476 = vunpack.c.0.s8 %v3475
        %v3477 = vlaneseq
        %v3478 = vshrl.u32 %v3477, 7
        %v3479 = vsub.s32 %v3476, %v3478
        %v3480 = vrot.slane %v3039, %v3479
        %v3482 = vunpack.c.l.s4 1983009808
        %v3483 = vunpack.c.0.s8 %v3482
        %v3484 = vlaneseq
        %v3485 = vshrl.u32 %v3484, 7
        %v3486 = vsub.s32 %v3483, %v3485
        %v3487 = vrot.slane %v3473, %v3486
        %v3488 = vcombine.high %v3480, %v3480
        %v3489 = vcombine.high %v3487, %v3487
        %v3490 = vcombine.high %v3040, %v3040
        %v3492 = vunpack.c.l.s4 1983009808
        %v3493 = vunpack.c.0.s8 %v3492
        %v3494 = vlaneseq
        %v3495 = vshrl.u32 %v3494, 7
        %v3496 = vsub.s32 %v3493, %v3495
        %v3497 = vrot.slane %v3040, %v3496
        %v3499 = vunpack.c.l.s4 1983009808
        %v3500 = vunpack.c.0.s8 %v3499
        %v3501 = vlaneseq
        %v3502 = vshrl.u32 %v3501, 7
        %v3503 = vsub.s32 %v3500, %v3502
        %v3504 = vrot.slane %v3490, %v3503
        %v3505 = vcombine.high %v3497, %v3497
        %v3506 = vcombine.high %v3504, %v3504
        %v3507 = vcombine.high %v3041, %v3041
        %v3509 = vunpack.c.l.s4 1983009808
        %v3510 = vunpack.c.0.s8 %v3509
        %v3511 = vlaneseq
        %v3512 = vshrl.u32 %v3511, 7
        %v3513 = vsub.s32 %v3510, %v3512
        %v3514 = vrot.slane %v3041, %v3513
        %v3516 = vunpack.c.l.s4 1983009808
        %v3517 = vunpack.c.0.s8 %v3516
        %v3518 = vlaneseq
        %v3519 = vshrl.u32 %v3518, 7
        %v3520 = vsub.s32 %v3517, %v3519
        %v3521 = vrot.slane %v3507, %v3520
        %v3522 = vcombine.high %v3514, %v3514
        %v3523 = vcombine.high %v3521, %v3521
        %v3524 = vcombine.high %v3042, %v3042
        %v3526 = vunpack.c.l.s4 1983009808
        %v3527 = vunpack.c.0.s8 %v3526
        %v3528 = vlaneseq
        %v3529 = vshrl.u32 %v3528, 7
        %v3530 = vsub.s32 %v3527, %v3529
        %v3531 = vrot.slane %v3042, %v3530
        %v3533 = vunpack.c.l.s4 1983009808
        %v3534 = vunpack.c.0.s8 %v3533
        %v3535 = vlaneseq
        %v3536 = vshrl.u32 %v3535, 7
        %v3537 = vsub.s32 %v3534, %v3536
        %v3538 = vrot.slane %v3524, %v3537
        %v3539 = vcombine.high %v3531, %v3531
        %v3540 = vcombine.high %v3538, %v3538
        %v3541 = vcombine.high %v3043, %v3043
        %v3543 = vunpack.c.l.s4 1983009808
        %v3544 = vunpack.c.0.s8 %v3543
        %v3545 = vlaneseq
        %v3546 = vshrl.u32 %v3545, 7
        %v3547 = vsub.s32 %v3544, %v3546
        %v3548 = vrot.slane %v3043, %v3547
        %v3550 = vunpack.c.l.s4 1983009808
        %v3551 = vunpack.c.0.s8 %v3550
        %v3552 = vlaneseq
        %v3553 = vshrl.u32 %v3552, 7
        %v3554 = vsub.s32 %v3551, %v3553
        %v3555 = vrot.slane %v3541, %v3554
        %v3556 = vcombine.high %v3548, %v3548
        %v3557 = vcombine.high %v3555, %v3555
        %v3558 = vcombine.high %v3044, %v3044
        %v3560 = vunpack.c.l.s4 1983009808
        %v3561 = vunpack.c.0.s8 %v3560
        %v3562 = vlaneseq
        %v3563 = vshrl.u32 %v3562, 7
        %v3564 = vsub.s32 %v3561, %v3563
        %v3565 = vrot.slane %v3044, %v3564
        %v3567 = vunpack.c.l.s4 1983009808
        %v3568 = vunpack.c.0.s8 %v3567
        %v3569 = vlaneseq
        %v3570 = vshrl.u32 %v3569, 7
        %v3571 = vsub.s32 %v3568, %v3570
        %v3572 = vrot.slane %v3558, %v3571
        %v3573 = vcombine.high %v3565, %v3565
        %v3574 = vcombine.high %v3572, %v3572
        %v3575 = vcombine.high %v3045, %v3045
        %v3577 = vunpack.c.l.s4 1983009808
        %v3578 = vunpack.c.0.s8 %v3577
        %v3579 = vlaneseq
        %v3580 = vshrl.u32 %v3579, 7
        %v3581 = vsub.s32 %v3578, %v3580
        %v3582 = vrot.slane %v3045, %v3581
        %v3584 = vunpack.c.l.s4 1983009808
        %v3585 = vunpack.c.0.s8 %v3584
        %v3586 = vlaneseq
        %v3587 = vshrl.u32 %v3586, 7
        %v3588 = vsub.s32 %v3585, %v3587
        %v3589 = vrot.slane %v3575, %v3588
        %v3590 = vcombine.high %v3582, %v3582
        %v3591 = vcombine.high %v3589, %v3589
        %v3592 = vcombine.high %v3046, %v3046
        %v3594 = vunpack.c.l.s4 1983009808
        %v3595 = vunpack.c.0.s8 %v3594
        %v3596 = vlaneseq
        %v3597 = vshrl.u32 %v3596, 7
        %v3598 = vsub.s32 %v3595, %v3597
        %v3599 = vrot.slane %v3046, %v3598
        %v3601 = vunpack.c.l.s4 1983009808
        %v3602 = vunpack.c.0.s8 %v3601
        %v3603 = vlaneseq
        %v3604 = vshrl.u32 %v3603, 7
        %v3605 = vsub.s32 %v3602, %v3604
        %v3606 = vrot.slane %v3592, %v3605
        %v3607 = vcombine.high %v3599, %v3599
        %v3608 = vcombine.high %v3606, %v3606
        %v3609 = vcombine.high %v3047, %v3047
        %v3611 = vunpack.c.l.s4 1983009808
        %v3612 = vunpack.c.0.s8 %v3611
        %v3613 = vlaneseq
        %v3614 = vshrl.u32 %v3613, 7
        %v3615 = vsub.s32 %v3612, %v3614
        %v3616 = vrot.slane %v3047, %v3615
        %v3618 = vunpack.c.l.s4 1983009808
        %v3619 = vunpack.c.0.s8 %v3618
        %v3620 = vlaneseq
        %v3621 = vshrl.u32 %v3620, 7
        %v3622 = vsub.s32 %v3619, %v3621
        %v3623 = vrot.slane %v3609, %v3622
        %v3624 = vcombine.high %v3616, %v3616
        %v3625 = vcombine.high %v3623, %v3623
        %v3626 = vcombine.high %v3048, %v3048
        %v3628 = vunpack.c.l.s4 1983009808
        %v3629 = vunpack.c.0.s8 %v3628
        %v3630 = vlaneseq
        %v3631 = vshrl.u32 %v3630, 7
        %v3632 = vsub.s32 %v3629, %v3631
        %v3633 = vrot.slane %v3048, %v3632
        %v3635 = vunpack.c.l.s4 1983009808
        %v3636 = vunpack.c.0.s8 %v3635
        %v3637 = vlaneseq
        %v3638 = vshrl.u32 %v3637, 7
        %v3639 = vsub.s32 %v3636, %v3638
        %v3640 = vrot.slane %v3626, %v3639
        %v3641 = vcombine.high %v3633, %v3633
        %v3642 = vcombine.high %v3640, %v3640
        %v3643 = vcombine.high %v3049, %v3049
        %v3645 = vunpack.c.l.s4 1983009808
        %v3646 = vunpack.c.0.s8 %v3645
        %v3647 = vlaneseq
        %v3648 = vshrl.u32 %v3647, 7
        %v3649 = vsub.s32 %v3646, %v3648
        %v3650 = vrot.slane %v3049, %v3649
        %v3652 = vunpack.c.l.s4 1983009808
        %v3653 = vunpack.c.0.s8 %v3652
        %v3654 = vlaneseq
        %v3655 = vshrl.u32 %v3654, 7
        %v3656 = vsub.s32 %v3653, %v3655
        %v3657 = vrot.slane %v3643, %v3656
        %v3658 = vcombine.high %v3650, %v3650
        %v3659 = vcombine.high %v3657, %v3657
        %v3660 = vcombine.high %v3050, %v3050
        %v3662 = vunpack.c.l.s4 1983009808
        %v3663 = vunpack.c.0.s8 %v3662
        %v3664 = vlaneseq
        %v3665 = vshrl.u32 %v3664, 7
        %v3666 = vsub.s32 %v3663, %v3665
        %v3667 = vrot.slane %v3050, %v3666
        %v3669 = vunpack.c.l.s4 1983009808
        %v3670 = vunpack.c.0.s8 %v3669
        %v3671 = vlaneseq
        %v3672 = vshrl.u32 %v3671, 7
        %v3673 = vsub.s32 %v3670, %v3672
        %v3674 = vrot.slane %v3660, %v3673
        %v3675 = vcombine.high %v3667, %v3667
        %v3676 = vcombine.high %v3674, %v3674
        %v3677 = vcombine.high %v3051, %v3051
        %v3679 = vunpack.c.l.s4 1983009808
        %v3680 = vunpack.c.0.s8 %v3679
        %v3681 = vlaneseq
        %v3682 = vshrl.u32 %v3681, 7
        %v3683 = vsub.s32 %v3680, %v3682
        %v3684 = vrot.slane %v3051, %v3683
        %v3686 = vunpack.c.l.s4 1983009808
        %v3687 = vunpack.c.0.s8 %v3686
        %v3688 = vlaneseq
        %v3689 = vshrl.u32 %v3688, 7
        %v3690 = vsub.s32 %v3687, %v3689
        %v3691 = vrot.slane %v3677, %v3690
        %v3692 = vcombine.high %v3684, %v3684
        %v3693 = vcombine.high %v3691, %v3691
        %v3694 = vcombine.high %v3052, %v3052
        %v3696 = vunpack.c.l.s4 1983009808
        %v3697 = vunpack.c.0.s8 %v3696
        %v3698 = vlaneseq
        %v3699 = vshrl.u32 %v3698, 7
        %v3700 = vsub.s32 %v3697, %v3699
        %v3701 = vrot.slane %v3052, %v3700
        %v3703 = vunpack.c.l.s4 1983009808
        %v3704 = vunpack.c.0.s8 %v3703
        %v3705 = vlaneseq
        %v3706 = vshrl.u32 %v3705, 7
        %v3707 = vsub.s32 %v3704, %v3706
        %v3708 = vrot.slane %v3694, %v3707
        %v3709 = vcombine.high %v3701, %v3701
        %v3710 = vcombine.high %v3708, %v3708
        %v3711 = vcombine.high %v3053, %v3053
        %v3713 = vunpack.c.l.s4 1983009808
        %v3714 = vunpack.c.0.s8 %v3713
        %v3715 = vlaneseq
        %v3716 = vshrl.u32 %v3715, 7
        %v3717 = vsub.s32 %v3714, %v3716
        %v3718 = vrot.slane %v3053, %v3717
        %v3720 = vunpack.c.l.s4 1983009808
        %v3721 = vunpack.c.0.s8 %v3720
        %v3722 = vlaneseq
        %v3723 = vshrl.u32 %v3722, 7
        %v3724 = vsub.s32 %v3721, %v3723
        %v3725 = vrot.slane %v3711, %v3724
        %v3726 = vcombine.high %v3718, %v3718
        %v3727 = vcombine.high %v3725, %v3725
        %v3728 = vcombine.high %v3054, %v3054
        %v3730 = vunpack.c.l.s4 1983009808
        %v3731 = vunpack.c.0.s8 %v3730
        %v3732 = vlaneseq
        %v3733 = vshrl.u32 %v3732, 7
        %v3734 = vsub.s32 %v3731, %v3733
        %v3735 = vrot.slane %v3054, %v3734
        %v3737 = vunpack.c.l.s4 1983009808
        %v3738 = vunpack.c.0.s8 %v3737
        %v3739 = vlaneseq
        %v3740 = vshrl.u32 %v3739, 7
        %v3741 = vsub.s32 %v3738, %v3740
        %v3742 = vrot.slane %v3728, %v3741
        %v3743 = vcombine.high %v3735, %v3735
        %v3744 = vcombine.high %v3742, %v3742
        %v3745 = vcombine.high %v3055, %v3055
        %v3747 = vunpack.c.l.s4 1983009808
        %v3748 = vunpack.c.0.s8 %v3747
        %v3749 = vlaneseq
        %v3750 = vshrl.u32 %v3749, 7
        %v3751 = vsub.s32 %v3748, %v3750
        %v3752 = vrot.slane %v3055, %v3751
        %v3754 = vunpack.c.l.s4 1983009808
        %v3755 = vunpack.c.0.s8 %v3754
        %v3756 = vlaneseq
        %v3757 = vshrl.u32 %v3756, 7
        %v3758 = vsub.s32 %v3755, %v3757
        %v3759 = vrot.slane %v3745, %v3758
        %v3760 = vcombine.high %v3752, %v3752
        %v3761 = vcombine.high %v3759, %v3759
        %v3762 = vcombine.high %v3056, %v3056
        %v3764 = vunpack.c.l.s4 1983009808
        %v3765 = vunpack.c.0.s8 %v3764
        %v3766 = vlaneseq
        %v3767 = vshrl.u32 %v3766, 7
        %v3768 = vsub.s32 %v3765, %v3767
        %v3769 = vrot.slane %v3056, %v3768
        %v3771 = vunpack.c.l.s4 1983009808
        %v3772 = vunpack.c.0.s8 %v3771
        %v3773 = vlaneseq
        %v3774 = vshrl.u32 %v3773, 7
        %v3775 = vsub.s32 %v3772, %v3774
        %v3776 = vrot.slane %v3762, %v3775
        %v3777 = vcombine.high %v3769, %v3769
        %v3778 = vcombine.high %v3776, %v3776
        %v3780 = vunpack.c.l.s4 1983009808
        %v3781 = vunpack.c.0.s8 %v3780
        %v3782 = vlaneseq
        %v3783 = vshrl.u32 %v3782, 7
        %v3784 = vsub.s32 %v3781, %v3783
        %v3785 = vrot.slane %v3057, %v3784
        %v3786 = vcombine.high %v3785, %v3785
        %v3949 = vlaneseq
        %v3950 = vshrl.u32 %v3949, 7
        %v3951 = vadd.s32 %v3950, 8
        %v3952 = vadd.s32 %v3950, 16
        %v3953 = vstv %s521
        %v3954 = vadd.s32 %v3950, %v3953
        %v3955 = vadd.s32 %v3951, %v3953
        %v3956 = vadd.s32 %v3952, %v3953
        %v3957 = vlaneseq
        %v3958 = vand.u32 %v3957, 127
        %vm3959 = vcmp.ge.s32.totalorder %v3954, 1
        %vm3960 = vcmp.ge.s32.totalorder %v3955, 1
        %vm3961 = vcmp.ge.s32.totalorder %v3956, 1
        %vm3962 = vcmp.le.s32.totalorder %v3954, 16
        %vm3963 = vcmp.le.s32.totalorder %v3955, 16
        %vm3964 = vcmp.le.s32.totalorder %v3956, 16
        %vm3965 = vmand %vm3959, %vm3962
        %vm3966 = vmand %vm3960, %vm3963
        %vm3967 = vmand %vm3961, %vm3964
        %vm3968 = vcmp.ge.s32.totalorder %v3958, 1
        %vm3969 = vcmp.le.s32.totalorder %v3958, 16
        %vm3970 = vmand %vm3968, %vm3969
        %v3971 = vsel %vm3965, 1, 0
        %v3972 = vsel %vm3966, 1, 0
        %v3973 = vsel %vm3967, 1, 0
        %vm3974 = vcmp.eq.s32.totalorder %v3971, 1
        %vm3975 = vcmp.eq.s32.totalorder %v3972, 1
        %vm3976 = vcmp.eq.s32.totalorder %v3973, 1
        %v3977 = vsel %vm3970, 1, 0
        %vm3978 = vcmp.eq.s32.totalorder %v3977, 1
        %vm3979 = vmand %vm3974, %vm3978
        %vm3980 = vmand %vm3975, %vm3978
        %vm3981 = vmand %vm3976, %vm3978
        %v3982 = vsel %vm3979, 1, 0
        %v3983 = vsel %vm3980, 1, 0
        %v3984 = vsel %vm3981, 1, 0
        %v3985 = vcvt.s32.f32 %v3982
        %v3986 = vcvt.s32.f32 %v3983
        %v3987 = vcvt.s32.f32 %v3984
        %v3988 = vlaneseq
        %v3989 = vshrl.u32 %v3988, 7
        %v3990 = vsub.s32 0, %v3989
        %v3991 = vrot.slane %v3985, %v3990
        %3993 = vbcast.lane.b32.xlu0 %v3991, 256
        %v3994 = vpop.permute.xlu0 %3993
        %s3996 = sor.u32 256, 8
        %3997 = vbcast.lane.b32.xlu0 %v3991, %s3996
        %v3998 = vpop.permute.xlu0 %3997
        %s4000 = sor.u32 256, 16
        %4001 = vbcast.lane.b32.xlu0 %v3991, %s4000
        %v4002 = vpop.permute.xlu0 %4001
        %v4003 = vlaneseq
        %v4004 = vshrl.u32 %v4003, 7
        %v4005 = vsub.s32 1, %v4004
        %v4006 = vrot.slane %v3985, %v4005
        %4008 = vbcast.lane.b32.xlu0 %v4006, 256
        %v4009 = vpop.permute.xlu0 %4008
        %s4011 = sor.u32 256, 8
        %4012 = vbcast.lane.b32.xlu0 %v4006, %s4011
        %v4013 = vpop.permute.xlu0 %4012
        %s4015 = sor.u32 256, 16
        %4016 = vbcast.lane.b32.xlu0 %v4006, %s4015
        %v4017 = vpop.permute.xlu0 %4016
        %v4018 = vlaneseq
        %v4019 = vshrl.u32 %v4018, 7
        %v4020 = vsub.s32 2, %v4019
        %v4021 = vrot.slane %v3985, %v4020
        %4023 = vbcast.lane.b32.xlu0 %v4021, 256
        %v4024 = vpop.permute.xlu0 %4023
        %s4026 = sor.u32 256, 8
        %4027 = vbcast.lane.b32.xlu0 %v4021, %s4026
        %v4028 = vpop.permute.xlu0 %4027
        %s4030 = sor.u32 256, 16
        %4031 = vbcast.lane.b32.xlu0 %v4021, %s4030
        %v4032 = vpop.permute.xlu0 %4031
        %v4033 = vlaneseq
        %v4034 = vshrl.u32 %v4033, 7
        %v4035 = vsub.s32 3, %v4034
        %v4036 = vrot.slane %v3985, %v4035
        %4038 = vbcast.lane.b32.xlu0 %v4036, 256
        %v4039 = vpop.permute.xlu0 %4038
        %s4041 = sor.u32 256, 8
        %4042 = vbcast.lane.b32.xlu0 %v4036, %s4041
        %v4043 = vpop.permute.xlu0 %4042
        %s4045 = sor.u32 256, 16
        %4046 = vbcast.lane.b32.xlu0 %v4036, %s4045
        %v4047 = vpop.permute.xlu0 %4046
        %v4048 = vlaneseq
        %v4049 = vshrl.u32 %v4048, 7
        %v4050 = vsub.s32 4, %v4049
        %v4051 = vrot.slane %v3985, %v4050
        %4053 = vbcast.lane.b32.xlu0 %v4051, 256
        %v4054 = vpop.permute.xlu0 %4053
        %s4056 = sor.u32 256, 8
        %4057 = vbcast.lane.b32.xlu0 %v4051, %s4056
        %v4058 = vpop.permute.xlu0 %4057
        %s4060 = sor.u32 256, 16
        %4061 = vbcast.lane.b32.xlu0 %v4051, %s4060
        %v4062 = vpop.permute.xlu0 %4061
        %v4063 = vlaneseq
        %v4064 = vshrl.u32 %v4063, 7
        %v4065 = vsub.s32 5, %v4064
        %v4066 = vrot.slane %v3985, %v4065
        %4068 = vbcast.lane.b32.xlu0 %v4066, 256
        %v4069 = vpop.permute.xlu0 %4068
        %s4071 = sor.u32 256, 8
        %4072 = vbcast.lane.b32.xlu0 %v4066, %s4071
        %v4073 = vpop.permute.xlu0 %4072
        %s4075 = sor.u32 256, 16
        %4076 = vbcast.lane.b32.xlu0 %v4066, %s4075
        %v4077 = vpop.permute.xlu0 %4076
        %v4078 = vlaneseq
        %v4079 = vshrl.u32 %v4078, 7
        %v4080 = vsub.s32 6, %v4079
        %v4081 = vrot.slane %v3985, %v4080
        %4083 = vbcast.lane.b32.xlu0 %v4081, 256
        %v4084 = vpop.permute.xlu0 %4083
        %s4086 = sor.u32 256, 8
        %4087 = vbcast.lane.b32.xlu0 %v4081, %s4086
        %v4088 = vpop.permute.xlu0 %4087
        %s4090 = sor.u32 256, 16
        %4091 = vbcast.lane.b32.xlu0 %v4081, %s4090
        %v4092 = vpop.permute.xlu0 %4091
        %v4093 = vlaneseq
        %v4094 = vshrl.u32 %v4093, 7
        %v4095 = vsub.s32 7, %v4094
        %v4096 = vrot.slane %v3985, %v4095
        %4098 = vbcast.lane.b32.xlu0 %v4096, 256
        %v4099 = vpop.permute.xlu0 %4098
        %s4101 = sor.u32 256, 8
        %4102 = vbcast.lane.b32.xlu0 %v4096, %s4101
        %v4103 = vpop.permute.xlu0 %4102
        %s4105 = sor.u32 256, 16
        %4106 = vbcast.lane.b32.xlu0 %v4096, %s4105
        %v4107 = vpop.permute.xlu0 %4106
        %v4108 = vlaneseq
        %v4109 = vshrl.u32 %v4108, 7
        %v4110 = vsub.s32 0, %v4109
        %v4111 = vrot.slane %v3986, %v4110
        %4113 = vbcast.lane.b32.xlu0 %v4111, 256
        %v4114 = vpop.permute.xlu0 %4113
        %s4116 = sor.u32 256, 8
        %4117 = vbcast.lane.b32.xlu0 %v4111, %s4116
        %v4118 = vpop.permute.xlu0 %4117
        %s4120 = sor.u32 256, 16
        %4121 = vbcast.lane.b32.xlu0 %v4111, %s4120
        %v4122 = vpop.permute.xlu0 %4121
        %v4123 = vlaneseq
        %v4124 = vshrl.u32 %v4123, 7
        %v4125 = vsub.s32 1, %v4124
        %v4126 = vrot.slane %v3986, %v4125
        %4128 = vbcast.lane.b32.xlu0 %v4126, 256
        %v4129 = vpop.permute.xlu0 %4128
        %s4131 = sor.u32 256, 8
        %4132 = vbcast.lane.b32.xlu0 %v4126, %s4131
        %v4133 = vpop.permute.xlu0 %4132
        %s4135 = sor.u32 256, 16
        %4136 = vbcast.lane.b32.xlu0 %v4126, %s4135
        %v4137 = vpop.permute.xlu0 %4136
        %v4138 = vlaneseq
        %v4139 = vshrl.u32 %v4138, 7
        %v4140 = vsub.s32 2, %v4139
        %v4141 = vrot.slane %v3986, %v4140
        %4143 = vbcast.lane.b32.xlu0 %v4141, 256
        %v4144 = vpop.permute.xlu0 %4143
        %s4146 = sor.u32 256, 8
        %4147 = vbcast.lane.b32.xlu0 %v4141, %s4146
        %v4148 = vpop.permute.xlu0 %4147
        %s4150 = sor.u32 256, 16
        %4151 = vbcast.lane.b32.xlu0 %v4141, %s4150
        %v4152 = vpop.permute.xlu0 %4151
        %v4153 = vlaneseq
        %v4154 = vshrl.u32 %v4153, 7
        %v4155 = vsub.s32 3, %v4154
        %v4156 = vrot.slane %v3986, %v4155
        %4158 = vbcast.lane.b32.xlu0 %v4156, 256
        %v4159 = vpop.permute.xlu0 %4158
        %s4161 = sor.u32 256, 8
        %4162 = vbcast.lane.b32.xlu0 %v4156, %s4161
        %v4163 = vpop.permute.xlu0 %4162
        %s4165 = sor.u32 256, 16
        %4166 = vbcast.lane.b32.xlu0 %v4156, %s4165
        %v4167 = vpop.permute.xlu0 %4166
        %v4168 = vlaneseq
        %v4169 = vshrl.u32 %v4168, 7
        %v4170 = vsub.s32 4, %v4169
        %v4171 = vrot.slane %v3986, %v4170
        %4173 = vbcast.lane.b32.xlu0 %v4171, 256
        %v4174 = vpop.permute.xlu0 %4173
        %s4176 = sor.u32 256, 8
        %4177 = vbcast.lane.b32.xlu0 %v4171, %s4176
        %v4178 = vpop.permute.xlu0 %4177
        %s4180 = sor.u32 256, 16
        %4181 = vbcast.lane.b32.xlu0 %v4171, %s4180
        %v4182 = vpop.permute.xlu0 %4181
        %v4183 = vlaneseq
        %v4184 = vshrl.u32 %v4183, 7
        %v4185 = vsub.s32 5, %v4184
        %v4186 = vrot.slane %v3986, %v4185
        %4188 = vbcast.lane.b32.xlu0 %v4186, 256
        %v4189 = vpop.permute.xlu0 %4188
        %s4191 = sor.u32 256, 8
        %4192 = vbcast.lane.b32.xlu0 %v4186, %s4191
        %v4193 = vpop.permute.xlu0 %4192
        %s4195 = sor.u32 256, 16
        %4196 = vbcast.lane.b32.xlu0 %v4186, %s4195
        %v4197 = vpop.permute.xlu0 %4196
        %v4198 = vlaneseq
        %v4199 = vshrl.u32 %v4198, 7
        %v4200 = vsub.s32 6, %v4199
        %v4201 = vrot.slane %v3986, %v4200
        %4203 = vbcast.lane.b32.xlu0 %v4201, 256
        %v4204 = vpop.permute.xlu0 %4203
        %s4206 = sor.u32 256, 8
        %4207 = vbcast.lane.b32.xlu0 %v4201, %s4206
        %v4208 = vpop.permute.xlu0 %4207
        %s4210 = sor.u32 256, 16
        %4211 = vbcast.lane.b32.xlu0 %v4201, %s4210
        %v4212 = vpop.permute.xlu0 %4211
        %v4213 = vlaneseq
        %v4214 = vshrl.u32 %v4213, 7
        %v4215 = vsub.s32 7, %v4214
        %v4216 = vrot.slane %v3986, %v4215
        %4218 = vbcast.lane.b32.xlu0 %v4216, 256
        %v4219 = vpop.permute.xlu0 %4218
        %s4221 = sor.u32 256, 8
        %4222 = vbcast.lane.b32.xlu0 %v4216, %s4221
        %v4223 = vpop.permute.xlu0 %4222
        %s4225 = sor.u32 256, 16
        %4226 = vbcast.lane.b32.xlu0 %v4216, %s4225
        %v4227 = vpop.permute.xlu0 %4226
        %v4228 = vlaneseq
        %v4229 = vshrl.u32 %v4228, 7
        %v4230 = vsub.s32 0, %v4229
        %v4231 = vrot.slane %v3987, %v4230
        %4233 = vbcast.lane.b32.xlu0 %v4231, 256
        %v4234 = vpop.permute.xlu0 %4233
        %s4236 = sor.u32 256, 8
        %4237 = vbcast.lane.b32.xlu0 %v4231, %s4236
        %v4238 = vpop.permute.xlu0 %4237
        %s4240 = sor.u32 256, 16
        %4241 = vbcast.lane.b32.xlu0 %v4231, %s4240
        %v4242 = vpop.permute.xlu0 %4241
        %v4243 = vlaneseq
        %v4244 = vshrl.u32 %v4243, 7
        %v4245 = vsub.s32 1, %v4244
        %v4246 = vrot.slane %v3987, %v4245
        %4248 = vbcast.lane.b32.xlu0 %v4246, 256
        %v4249 = vpop.permute.xlu0 %4248
        %s4251 = sor.u32 256, 8
        %4252 = vbcast.lane.b32.xlu0 %v4246, %s4251
        %v4253 = vpop.permute.xlu0 %4252
        %s4255 = sor.u32 256, 16
        %4256 = vbcast.lane.b32.xlu0 %v4246, %s4255
        %v4257 = vpop.permute.xlu0 %4256
        %v4313 = vunpack.c.l.s4 269488144
        %v4314 = vunpack.c.0.s8 %v4313
        %v4315 = vlaneseq
        %v4316 = vshrl.u32 %v4315, 7
        %v4317 = vsub.s32 %v4314, %v4316
        %v4318 = vrot.slane %v3994, %v4317
        %v4320 = vunpack.c.l.s4 842150450
        %v4321 = vunpack.c.0.s8 %v4320
        %v4322 = vlaneseq
        %v4323 = vshrl.u32 %v4322, 7
        %v4324 = vsub.s32 %v4321, %v4323
        %v4325 = vrot.slane %v3994, %v4324
        %v4327 = vunpack.c.l.s4 1414812756
        %v4328 = vunpack.c.0.s8 %v4327
        %v4329 = vlaneseq
        %v4330 = vshrl.u32 %v4329, 7
        %v4331 = vsub.s32 %v4328, %v4330
        %v4332 = vrot.slane %v3994, %v4331
        %v4334 = vunpack.c.l.s4 1987475062
        %v4335 = vunpack.c.0.s8 %v4334
        %v4336 = vlaneseq
        %v4337 = vshrl.u32 %v4336, 7
        %v4338 = vsub.s32 %v4335, %v4337
        %v4339 = vrot.slane %v3994, %v4338
        %v4341 = vunpack.c.l.s4 269488144
        %v4342 = vunpack.c.0.s8 %v4341
        %v4343 = vlaneseq
        %v4344 = vshrl.u32 %v4343, 7
        %v4345 = vsub.s32 %v4342, %v4344
        %v4346 = vrot.slane %v3998, %v4345
        %v4348 = vunpack.c.l.s4 842150450
        %v4349 = vunpack.c.0.s8 %v4348
        %v4350 = vlaneseq
        %v4351 = vshrl.u32 %v4350, 7
        %v4352 = vsub.s32 %v4349, %v4351
        %v4353 = vrot.slane %v3998, %v4352
        %v4355 = vunpack.c.l.s4 1414812756
        %v4356 = vunpack.c.0.s8 %v4355
        %v4357 = vlaneseq
        %v4358 = vshrl.u32 %v4357, 7
        %v4359 = vsub.s32 %v4356, %v4358
        %v4360 = vrot.slane %v3998, %v4359
        %v4362 = vunpack.c.l.s4 1987475062
        %v4363 = vunpack.c.0.s8 %v4362
        %v4364 = vlaneseq
        %v4365 = vshrl.u32 %v4364, 7
        %v4366 = vsub.s32 %v4363, %v4365
        %v4367 = vrot.slane %v3998, %v4366
        %v4369 = vunpack.c.l.s4 269488144
        %v4370 = vunpack.c.0.s8 %v4369
        %v4371 = vlaneseq
        %v4372 = vshrl.u32 %v4371, 7
        %v4373 = vsub.s32 %v4370, %v4372
        %v4374 = vrot.slane %v4002, %v4373
        %v4376 = vunpack.c.l.s4 269488144
        %v4377 = vunpack.c.0.s8 %v4376
        %v4378 = vlaneseq
        %v4379 = vshrl.u32 %v4378, 7
        %v4380 = vsub.s32 %v4377, %v4379
        %v4381 = vrot.slane %v4009, %v4380
        %v4383 = vunpack.c.l.s4 842150450
        %v4384 = vunpack.c.0.s8 %v4383
        %v4385 = vlaneseq
        %v4386 = vshrl.u32 %v4385, 7
        %v4387 = vsub.s32 %v4384, %v4386
        %v4388 = vrot.slane %v4009, %v4387
        %v4390 = vunpack.c.l.s4 1414812756
        %v4391 = vunpack.c.0.s8 %v4390
        %v4392 = vlaneseq
        %v4393 = vshrl.u32 %v4392, 7
        %v4394 = vsub.s32 %v4391, %v4393
        %v4395 = vrot.slane %v4009, %v4394
        %v4397 = vunpack.c.l.s4 1987475062
        %v4398 = vunpack.c.0.s8 %v4397
        %v4399 = vlaneseq
        %v4400 = vshrl.u32 %v4399, 7
        %v4401 = vsub.s32 %v4398, %v4400
        %v4402 = vrot.slane %v4009, %v4401
        %v4404 = vunpack.c.l.s4 269488144
        %v4405 = vunpack.c.0.s8 %v4404
        %v4406 = vlaneseq
        %v4407 = vshrl.u32 %v4406, 7
        %v4408 = vsub.s32 %v4405, %v4407
        %v4409 = vrot.slane %v4013, %v4408
        %v4411 = vunpack.c.l.s4 842150450
        %v4412 = vunpack.c.0.s8 %v4411
        %v4413 = vlaneseq
        %v4414 = vshrl.u32 %v4413, 7
        %v4415 = vsub.s32 %v4412, %v4414
        %v4416 = vrot.slane %v4013, %v4415
        %v4418 = vunpack.c.l.s4 1414812756
        %v4419 = vunpack.c.0.s8 %v4418
        %v4420 = vlaneseq
        %v4421 = vshrl.u32 %v4420, 7
        %v4422 = vsub.s32 %v4419, %v4421
        %v4423 = vrot.slane %v4013, %v4422
        %v4425 = vunpack.c.l.s4 1987475062
        %v4426 = vunpack.c.0.s8 %v4425
        %v4427 = vlaneseq
        %v4428 = vshrl.u32 %v4427, 7
        %v4429 = vsub.s32 %v4426, %v4428
        %v4430 = vrot.slane %v4013, %v4429
        %v4432 = vunpack.c.l.s4 269488144
        %v4433 = vunpack.c.0.s8 %v4432
        %v4434 = vlaneseq
        %v4435 = vshrl.u32 %v4434, 7
        %v4436 = vsub.s32 %v4433, %v4435
        %v4437 = vrot.slane %v4017, %v4436
        %v4439 = vunpack.c.l.s4 269488144
        %v4440 = vunpack.c.0.s8 %v4439
        %v4441 = vlaneseq
        %v4442 = vshrl.u32 %v4441, 7
        %v4443 = vsub.s32 %v4440, %v4442
        %v4444 = vrot.slane %v4024, %v4443
        %v4446 = vunpack.c.l.s4 842150450
        %v4447 = vunpack.c.0.s8 %v4446
        %v4448 = vlaneseq
        %v4449 = vshrl.u32 %v4448, 7
        %v4450 = vsub.s32 %v4447, %v4449
        %v4451 = vrot.slane %v4024, %v4450
        %v4453 = vunpack.c.l.s4 1414812756
        %v4454 = vunpack.c.0.s8 %v4453
        %v4455 = vlaneseq
        %v4456 = vshrl.u32 %v4455, 7
        %v4457 = vsub.s32 %v4454, %v4456
        %v4458 = vrot.slane %v4024, %v4457
        %v4460 = vunpack.c.l.s4 1987475062
        %v4461 = vunpack.c.0.s8 %v4460
        %v4462 = vlaneseq
        %v4463 = vshrl.u32 %v4462, 7
        %v4464 = vsub.s32 %v4461, %v4463
        %v4465 = vrot.slane %v4024, %v4464
        %v4467 = vunpack.c.l.s4 269488144
        %v4468 = vunpack.c.0.s8 %v4467
        %v4469 = vlaneseq
        %v4470 = vshrl.u32 %v4469, 7
        %v4471 = vsub.s32 %v4468, %v4470
        %v4472 = vrot.slane %v4028, %v4471
        %v4474 = vunpack.c.l.s4 842150450
        %v4475 = vunpack.c.0.s8 %v4474
        %v4476 = vlaneseq
        %v4477 = vshrl.u32 %v4476, 7
        %v4478 = vsub.s32 %v4475, %v4477
        %v4479 = vrot.slane %v4028, %v4478
        %v4481 = vunpack.c.l.s4 1414812756
        %v4482 = vunpack.c.0.s8 %v4481
        %v4483 = vlaneseq
        %v4484 = vshrl.u32 %v4483, 7
        %v4485 = vsub.s32 %v4482, %v4484
        %v4486 = vrot.slane %v4028, %v4485
        %v4488 = vunpack.c.l.s4 1987475062
        %v4489 = vunpack.c.0.s8 %v4488
        %v4490 = vlaneseq
        %v4491 = vshrl.u32 %v4490, 7
        %v4492 = vsub.s32 %v4489, %v4491
        %v4493 = vrot.slane %v4028, %v4492
        %v4495 = vunpack.c.l.s4 269488144
        %v4496 = vunpack.c.0.s8 %v4495
        %v4497 = vlaneseq
        %v4498 = vshrl.u32 %v4497, 7
        %v4499 = vsub.s32 %v4496, %v4498
        %v4500 = vrot.slane %v4032, %v4499
        %v4502 = vunpack.c.l.s4 269488144
        %v4503 = vunpack.c.0.s8 %v4502
        %v4504 = vlaneseq
        %v4505 = vshrl.u32 %v4504, 7
        %v4506 = vsub.s32 %v4503, %v4505
        %v4507 = vrot.slane %v4039, %v4506
        %v4509 = vunpack.c.l.s4 842150450
        %v4510 = vunpack.c.0.s8 %v4509
        %v4511 = vlaneseq
        %v4512 = vshrl.u32 %v4511, 7
        %v4513 = vsub.s32 %v4510, %v4512
        %v4514 = vrot.slane %v4039, %v4513
        %v4516 = vunpack.c.l.s4 1414812756
        %v4517 = vunpack.c.0.s8 %v4516
        %v4518 = vlaneseq
        %v4519 = vshrl.u32 %v4518, 7
        %v4520 = vsub.s32 %v4517, %v4519
        %v4521 = vrot.slane %v4039, %v4520
        %v4523 = vunpack.c.l.s4 1987475062
        %v4524 = vunpack.c.0.s8 %v4523
        %v4525 = vlaneseq
        %v4526 = vshrl.u32 %v4525, 7
        %v4527 = vsub.s32 %v4524, %v4526
        %v4528 = vrot.slane %v4039, %v4527
        %v4530 = vunpack.c.l.s4 269488144
        %v4531 = vunpack.c.0.s8 %v4530
        %v4532 = vlaneseq
        %v4533 = vshrl.u32 %v4532, 7
        %v4534 = vsub.s32 %v4531, %v4533
        %v4535 = vrot.slane %v4043, %v4534
        %v4537 = vunpack.c.l.s4 842150450
        %v4538 = vunpack.c.0.s8 %v4537
        %v4539 = vlaneseq
        %v4540 = vshrl.u32 %v4539, 7
        %v4541 = vsub.s32 %v4538, %v4540
        %v4542 = vrot.slane %v4043, %v4541
        %v4544 = vunpack.c.l.s4 1414812756
        %v4545 = vunpack.c.0.s8 %v4544
        %v4546 = vlaneseq
        %v4547 = vshrl.u32 %v4546, 7
        %v4548 = vsub.s32 %v4545, %v4547
        %v4549 = vrot.slane %v4043, %v4548
        %v4551 = vunpack.c.l.s4 1987475062
        %v4552 = vunpack.c.0.s8 %v4551
        %v4553 = vlaneseq
        %v4554 = vshrl.u32 %v4553, 7
        %v4555 = vsub.s32 %v4552, %v4554
        %v4556 = vrot.slane %v4043, %v4555
        %v4558 = vunpack.c.l.s4 269488144
        %v4559 = vunpack.c.0.s8 %v4558
        %v4560 = vlaneseq
        %v4561 = vshrl.u32 %v4560, 7
        %v4562 = vsub.s32 %v4559, %v4561
        %v4563 = vrot.slane %v4047, %v4562
        %v4565 = vunpack.c.l.s4 269488144
        %v4566 = vunpack.c.0.s8 %v4565
        %v4567 = vlaneseq
        %v4568 = vshrl.u32 %v4567, 7
        %v4569 = vsub.s32 %v4566, %v4568
        %v4570 = vrot.slane %v4054, %v4569
        %v4572 = vunpack.c.l.s4 842150450
        %v4573 = vunpack.c.0.s8 %v4572
        %v4574 = vlaneseq
        %v4575 = vshrl.u32 %v4574, 7
        %v4576 = vsub.s32 %v4573, %v4575
        %v4577 = vrot.slane %v4054, %v4576
        %v4579 = vunpack.c.l.s4 1414812756
        %v4580 = vunpack.c.0.s8 %v4579
        %v4581 = vlaneseq
        %v4582 = vshrl.u32 %v4581, 7
        %v4583 = vsub.s32 %v4580, %v4582
        %v4584 = vrot.slane %v4054, %v4583
        %v4586 = vunpack.c.l.s4 1987475062
        %v4587 = vunpack.c.0.s8 %v4586
        %v4588 = vlaneseq
        %v4589 = vshrl.u32 %v4588, 7
        %v4590 = vsub.s32 %v4587, %v4589
        %v4591 = vrot.slane %v4054, %v4590
        %v4593 = vunpack.c.l.s4 269488144
        %v4594 = vunpack.c.0.s8 %v4593
        %v4595 = vlaneseq
        %v4596 = vshrl.u32 %v4595, 7
        %v4597 = vsub.s32 %v4594, %v4596
        %v4598 = vrot.slane %v4058, %v4597
        %v4600 = vunpack.c.l.s4 842150450
        %v4601 = vunpack.c.0.s8 %v4600
        %v4602 = vlaneseq
        %v4603 = vshrl.u32 %v4602, 7
        %v4604 = vsub.s32 %v4601, %v4603
        %v4605 = vrot.slane %v4058, %v4604
        %v4607 = vunpack.c.l.s4 1414812756
        %v4608 = vunpack.c.0.s8 %v4607
        %v4609 = vlaneseq
        %v4610 = vshrl.u32 %v4609, 7
        %v4611 = vsub.s32 %v4608, %v4610
        %v4612 = vrot.slane %v4058, %v4611
        %v4614 = vunpack.c.l.s4 1987475062
        %v4615 = vunpack.c.0.s8 %v4614
        %v4616 = vlaneseq
        %v4617 = vshrl.u32 %v4616, 7
        %v4618 = vsub.s32 %v4615, %v4617
        %v4619 = vrot.slane %v4058, %v4618
        %v4621 = vunpack.c.l.s4 269488144
        %v4622 = vunpack.c.0.s8 %v4621
        %v4623 = vlaneseq
        %v4624 = vshrl.u32 %v4623, 7
        %v4625 = vsub.s32 %v4622, %v4624
        %v4626 = vrot.slane %v4062, %v4625
        %v4628 = vunpack.c.l.s4 269488144
        %v4629 = vunpack.c.0.s8 %v4628
        %v4630 = vlaneseq
        %v4631 = vshrl.u32 %v4630, 7
        %v4632 = vsub.s32 %v4629, %v4631
        %v4633 = vrot.slane %v4069, %v4632
        %v4635 = vunpack.c.l.s4 842150450
        %v4636 = vunpack.c.0.s8 %v4635
        %v4637 = vlaneseq
        %v4638 = vshrl.u32 %v4637, 7
        %v4639 = vsub.s32 %v4636, %v4638
        %v4640 = vrot.slane %v4069, %v4639
        %v4642 = vunpack.c.l.s4 1414812756
        %v4643 = vunpack.c.0.s8 %v4642
        %v4644 = vlaneseq
        %v4645 = vshrl.u32 %v4644, 7
        %v4646 = vsub.s32 %v4643, %v4645
        %v4647 = vrot.slane %v4069, %v4646
        %v4649 = vunpack.c.l.s4 1987475062
        %v4650 = vunpack.c.0.s8 %v4649
        %v4651 = vlaneseq
        %v4652 = vshrl.u32 %v4651, 7
        %v4653 = vsub.s32 %v4650, %v4652
        %v4654 = vrot.slane %v4069, %v4653
        %v4656 = vunpack.c.l.s4 269488144
        %v4657 = vunpack.c.0.s8 %v4656
        %v4658 = vlaneseq
        %v4659 = vshrl.u32 %v4658, 7
        %v4660 = vsub.s32 %v4657, %v4659
        %v4661 = vrot.slane %v4073, %v4660
        %v4663 = vunpack.c.l.s4 842150450
        %v4664 = vunpack.c.0.s8 %v4663
        %v4665 = vlaneseq
        %v4666 = vshrl.u32 %v4665, 7
        %v4667 = vsub.s32 %v4664, %v4666
        %v4668 = vrot.slane %v4073, %v4667
        %v4670 = vunpack.c.l.s4 1414812756
        %v4671 = vunpack.c.0.s8 %v4670
        %v4672 = vlaneseq
        %v4673 = vshrl.u32 %v4672, 7
        %v4674 = vsub.s32 %v4671, %v4673
        %v4675 = vrot.slane %v4073, %v4674
        %v4677 = vunpack.c.l.s4 1987475062
        %v4678 = vunpack.c.0.s8 %v4677
        %v4679 = vlaneseq
        %v4680 = vshrl.u32 %v4679, 7
        %v4681 = vsub.s32 %v4678, %v4680
        %v4682 = vrot.slane %v4073, %v4681
        %v4684 = vunpack.c.l.s4 269488144
        %v4685 = vunpack.c.0.s8 %v4684
        %v4686 = vlaneseq
        %v4687 = vshrl.u32 %v4686, 7
        %v4688 = vsub.s32 %v4685, %v4687
        %v4689 = vrot.slane %v4077, %v4688
        %v4691 = vunpack.c.l.s4 269488144
        %v4692 = vunpack.c.0.s8 %v4691
        %v4693 = vlaneseq
        %v4694 = vshrl.u32 %v4693, 7
        %v4695 = vsub.s32 %v4692, %v4694
        %v4696 = vrot.slane %v4084, %v4695
        %v4698 = vunpack.c.l.s4 842150450
        %v4699 = vunpack.c.0.s8 %v4698
        %v4700 = vlaneseq
        %v4701 = vshrl.u32 %v4700, 7
        %v4702 = vsub.s32 %v4699, %v4701
        %v4703 = vrot.slane %v4084, %v4702
        %v4705 = vunpack.c.l.s4 1414812756
        %v4706 = vunpack.c.0.s8 %v4705
        %v4707 = vlaneseq
        %v4708 = vshrl.u32 %v4707, 7
        %v4709 = vsub.s32 %v4706, %v4708
        %v4710 = vrot.slane %v4084, %v4709
        %v4712 = vunpack.c.l.s4 1987475062
        %v4713 = vunpack.c.0.s8 %v4712
        %v4714 = vlaneseq
        %v4715 = vshrl.u32 %v4714, 7
        %v4716 = vsub.s32 %v4713, %v4715
        %v4717 = vrot.slane %v4084, %v4716
        %v4719 = vunpack.c.l.s4 269488144
        %v4720 = vunpack.c.0.s8 %v4719
        %v4721 = vlaneseq
        %v4722 = vshrl.u32 %v4721, 7
        %v4723 = vsub.s32 %v4720, %v4722
        %v4724 = vrot.slane %v4088, %v4723
        %v4726 = vunpack.c.l.s4 842150450
        %v4727 = vunpack.c.0.s8 %v4726
        %v4728 = vlaneseq
        %v4729 = vshrl.u32 %v4728, 7
        %v4730 = vsub.s32 %v4727, %v4729
        %v4731 = vrot.slane %v4088, %v4730
        %v4733 = vunpack.c.l.s4 1414812756
        %v4734 = vunpack.c.0.s8 %v4733
        %v4735 = vlaneseq
        %v4736 = vshrl.u32 %v4735, 7
        %v4737 = vsub.s32 %v4734, %v4736
        %v4738 = vrot.slane %v4088, %v4737
        %v4740 = vunpack.c.l.s4 1987475062
        %v4741 = vunpack.c.0.s8 %v4740
        %v4742 = vlaneseq
        %v4743 = vshrl.u32 %v4742, 7
        %v4744 = vsub.s32 %v4741, %v4743
        %v4745 = vrot.slane %v4088, %v4744
        %v4747 = vunpack.c.l.s4 269488144
        %v4748 = vunpack.c.0.s8 %v4747
        %v4749 = vlaneseq
        %v4750 = vshrl.u32 %v4749, 7
        %v4751 = vsub.s32 %v4748, %v4750
        %v4752 = vrot.slane %v4092, %v4751
        %v4754 = vunpack.c.l.s4 269488144
        %v4755 = vunpack.c.0.s8 %v4754
        %v4756 = vlaneseq
        %v4757 = vshrl.u32 %v4756, 7
        %v4758 = vsub.s32 %v4755, %v4757
        %v4759 = vrot.slane %v4099, %v4758
        %v4761 = vunpack.c.l.s4 842150450
        %v4762 = vunpack.c.0.s8 %v4761
        %v4763 = vlaneseq
        %v4764 = vshrl.u32 %v4763, 7
        %v4765 = vsub.s32 %v4762, %v4764
        %v4766 = vrot.slane %v4099, %v4765
        %v4768 = vunpack.c.l.s4 1414812756
        %v4769 = vunpack.c.0.s8 %v4768
        %v4770 = vlaneseq
        %v4771 = vshrl.u32 %v4770, 7
        %v4772 = vsub.s32 %v4769, %v4771
        %v4773 = vrot.slane %v4099, %v4772
        %v4775 = vunpack.c.l.s4 1987475062
        %v4776 = vunpack.c.0.s8 %v4775
        %v4777 = vlaneseq
        %v4778 = vshrl.u32 %v4777, 7
        %v4779 = vsub.s32 %v4776, %v4778
        %v4780 = vrot.slane %v4099, %v4779
        %v4782 = vunpack.c.l.s4 269488144
        %v4783 = vunpack.c.0.s8 %v4782
        %v4784 = vlaneseq
        %v4785 = vshrl.u32 %v4784, 7
        %v4786 = vsub.s32 %v4783, %v4785
        %v4787 = vrot.slane %v4103, %v4786
        %v4789 = vunpack.c.l.s4 842150450
        %v4790 = vunpack.c.0.s8 %v4789
        %v4791 = vlaneseq
        %v4792 = vshrl.u32 %v4791, 7
        %v4793 = vsub.s32 %v4790, %v4792
        %v4794 = vrot.slane %v4103, %v4793
        %v4796 = vunpack.c.l.s4 1414812756
        %v4797 = vunpack.c.0.s8 %v4796
        %v4798 = vlaneseq
        %v4799 = vshrl.u32 %v4798, 7
        %v4800 = vsub.s32 %v4797, %v4799
        %v4801 = vrot.slane %v4103, %v4800
        %v4803 = vunpack.c.l.s4 1987475062
        %v4804 = vunpack.c.0.s8 %v4803
        %v4805 = vlaneseq
        %v4806 = vshrl.u32 %v4805, 7
        %v4807 = vsub.s32 %v4804, %v4806
        %v4808 = vrot.slane %v4103, %v4807
        %v4810 = vunpack.c.l.s4 269488144
        %v4811 = vunpack.c.0.s8 %v4810
        %v4812 = vlaneseq
        %v4813 = vshrl.u32 %v4812, 7
        %v4814 = vsub.s32 %v4811, %v4813
        %v4815 = vrot.slane %v4107, %v4814
        %v4817 = vunpack.c.l.s4 269488144
        %v4818 = vunpack.c.0.s8 %v4817
        %v4819 = vlaneseq
        %v4820 = vshrl.u32 %v4819, 7
        %v4821 = vsub.s32 %v4818, %v4820
        %v4822 = vrot.slane %v4114, %v4821
        %v4824 = vunpack.c.l.s4 842150450
        %v4825 = vunpack.c.0.s8 %v4824
        %v4826 = vlaneseq
        %v4827 = vshrl.u32 %v4826, 7
        %v4828 = vsub.s32 %v4825, %v4827
        %v4829 = vrot.slane %v4114, %v4828
        %v4831 = vunpack.c.l.s4 1414812756
        %v4832 = vunpack.c.0.s8 %v4831
        %v4833 = vlaneseq
        %v4834 = vshrl.u32 %v4833, 7
        %v4835 = vsub.s32 %v4832, %v4834
        %v4836 = vrot.slane %v4114, %v4835
        %v4838 = vunpack.c.l.s4 1987475062
        %v4839 = vunpack.c.0.s8 %v4838
        %v4840 = vlaneseq
        %v4841 = vshrl.u32 %v4840, 7
        %v4842 = vsub.s32 %v4839, %v4841
        %v4843 = vrot.slane %v4114, %v4842
        %v4845 = vunpack.c.l.s4 269488144
        %v4846 = vunpack.c.0.s8 %v4845
        %v4847 = vlaneseq
        %v4848 = vshrl.u32 %v4847, 7
        %v4849 = vsub.s32 %v4846, %v4848
        %v4850 = vrot.slane %v4118, %v4849
        %v4852 = vunpack.c.l.s4 842150450
        %v4853 = vunpack.c.0.s8 %v4852
        %v4854 = vlaneseq
        %v4855 = vshrl.u32 %v4854, 7
        %v4856 = vsub.s32 %v4853, %v4855
        %v4857 = vrot.slane %v4118, %v4856
        %v4859 = vunpack.c.l.s4 1414812756
        %v4860 = vunpack.c.0.s8 %v4859
        %v4861 = vlaneseq
        %v4862 = vshrl.u32 %v4861, 7
        %v4863 = vsub.s32 %v4860, %v4862
        %v4864 = vrot.slane %v4118, %v4863
        %v4866 = vunpack.c.l.s4 1987475062
        %v4867 = vunpack.c.0.s8 %v4866
        %v4868 = vlaneseq
        %v4869 = vshrl.u32 %v4868, 7
        %v4870 = vsub.s32 %v4867, %v4869
        %v4871 = vrot.slane %v4118, %v4870
        %v4873 = vunpack.c.l.s4 269488144
        %v4874 = vunpack.c.0.s8 %v4873
        %v4875 = vlaneseq
        %v4876 = vshrl.u32 %v4875, 7
        %v4877 = vsub.s32 %v4874, %v4876
        %v4878 = vrot.slane %v4122, %v4877
        %v4880 = vunpack.c.l.s4 269488144
        %v4881 = vunpack.c.0.s8 %v4880
        %v4882 = vlaneseq
        %v4883 = vshrl.u32 %v4882, 7
        %v4884 = vsub.s32 %v4881, %v4883
        %v4885 = vrot.slane %v4129, %v4884
        %v4887 = vunpack.c.l.s4 842150450
        %v4888 = vunpack.c.0.s8 %v4887
        %v4889 = vlaneseq
        %v4890 = vshrl.u32 %v4889, 7
        %v4891 = vsub.s32 %v4888, %v4890
        %v4892 = vrot.slane %v4129, %v4891
        %v4894 = vunpack.c.l.s4 1414812756
        %v4895 = vunpack.c.0.s8 %v4894
        %v4896 = vlaneseq
        %v4897 = vshrl.u32 %v4896, 7
        %v4898 = vsub.s32 %v4895, %v4897
        %v4899 = vrot.slane %v4129, %v4898
        %v4901 = vunpack.c.l.s4 1987475062
        %v4902 = vunpack.c.0.s8 %v4901
        %v4903 = vlaneseq
        %v4904 = vshrl.u32 %v4903, 7
        %v4905 = vsub.s32 %v4902, %v4904
        %v4906 = vrot.slane %v4129, %v4905
        %v4908 = vunpack.c.l.s4 269488144
        %v4909 = vunpack.c.0.s8 %v4908
        %v4910 = vlaneseq
        %v4911 = vshrl.u32 %v4910, 7
        %v4912 = vsub.s32 %v4909, %v4911
        %v4913 = vrot.slane %v4133, %v4912
        %v4915 = vunpack.c.l.s4 842150450
        %v4916 = vunpack.c.0.s8 %v4915
        %v4917 = vlaneseq
        %v4918 = vshrl.u32 %v4917, 7
        %v4919 = vsub.s32 %v4916, %v4918
        %v4920 = vrot.slane %v4133, %v4919
        %v4922 = vunpack.c.l.s4 1414812756
        %v4923 = vunpack.c.0.s8 %v4922
        %v4924 = vlaneseq
        %v4925 = vshrl.u32 %v4924, 7
        %v4926 = vsub.s32 %v4923, %v4925
        %v4927 = vrot.slane %v4133, %v4926
        %v4929 = vunpack.c.l.s4 1987475062
        %v4930 = vunpack.c.0.s8 %v4929
        %v4931 = vlaneseq
        %v4932 = vshrl.u32 %v4931, 7
        %v4933 = vsub.s32 %v4930, %v4932
        %v4934 = vrot.slane %v4133, %v4933
        %v4936 = vunpack.c.l.s4 269488144
        %v4937 = vunpack.c.0.s8 %v4936
        %v4938 = vlaneseq
        %v4939 = vshrl.u32 %v4938, 7
        %v4940 = vsub.s32 %v4937, %v4939
        %v4941 = vrot.slane %v4137, %v4940
        %v4943 = vunpack.c.l.s4 269488144
        %v4944 = vunpack.c.0.s8 %v4943
        %v4945 = vlaneseq
        %v4946 = vshrl.u32 %v4945, 7
        %v4947 = vsub.s32 %v4944, %v4946
        %v4948 = vrot.slane %v4144, %v4947
        %v4950 = vunpack.c.l.s4 842150450
        %v4951 = vunpack.c.0.s8 %v4950
        %v4952 = vlaneseq
        %v4953 = vshrl.u32 %v4952, 7
        %v4954 = vsub.s32 %v4951, %v4953
        %v4955 = vrot.slane %v4144, %v4954
        %v4957 = vunpack.c.l.s4 1414812756
        %v4958 = vunpack.c.0.s8 %v4957
        %v4959 = vlaneseq
        %v4960 = vshrl.u32 %v4959, 7
        %v4961 = vsub.s32 %v4958, %v4960
        %v4962 = vrot.slane %v4144, %v4961
        %v4964 = vunpack.c.l.s4 1987475062
        %v4965 = vunpack.c.0.s8 %v4964
        %v4966 = vlaneseq
        %v4967 = vshrl.u32 %v4966, 7
        %v4968 = vsub.s32 %v4965, %v4967
        %v4969 = vrot.slane %v4144, %v4968
        %v4971 = vunpack.c.l.s4 269488144
        %v4972 = vunpack.c.0.s8 %v4971
        %v4973 = vlaneseq
        %v4974 = vshrl.u32 %v4973, 7
        %v4975 = vsub.s32 %v4972, %v4974
        %v4976 = vrot.slane %v4148, %v4975
        %v4978 = vunpack.c.l.s4 842150450
        %v4979 = vunpack.c.0.s8 %v4978
        %v4980 = vlaneseq
        %v4981 = vshrl.u32 %v4980, 7
        %v4982 = vsub.s32 %v4979, %v4981
        %v4983 = vrot.slane %v4148, %v4982
        %v4985 = vunpack.c.l.s4 1414812756
        %v4986 = vunpack.c.0.s8 %v4985
        %v4987 = vlaneseq
        %v4988 = vshrl.u32 %v4987, 7
        %v4989 = vsub.s32 %v4986, %v4988
        %v4990 = vrot.slane %v4148, %v4989
        %v4992 = vunpack.c.l.s4 1987475062
        %v4993 = vunpack.c.0.s8 %v4992
        %v4994 = vlaneseq
        %v4995 = vshrl.u32 %v4994, 7
        %v4996 = vsub.s32 %v4993, %v4995
        %v4997 = vrot.slane %v4148, %v4996
        %v4999 = vunpack.c.l.s4 269488144
        %v5000 = vunpack.c.0.s8 %v4999
        %v5001 = vlaneseq
        %v5002 = vshrl.u32 %v5001, 7
        %v5003 = vsub.s32 %v5000, %v5002
        %v5004 = vrot.slane %v4152, %v5003
        %v5006 = vunpack.c.l.s4 269488144
        %v5007 = vunpack.c.0.s8 %v5006
        %v5008 = vlaneseq
        %v5009 = vshrl.u32 %v5008, 7
        %v5010 = vsub.s32 %v5007, %v5009
        %v5011 = vrot.slane %v4159, %v5010
        %v5013 = vunpack.c.l.s4 842150450
        %v5014 = vunpack.c.0.s8 %v5013
        %v5015 = vlaneseq
        %v5016 = vshrl.u32 %v5015, 7
        %v5017 = vsub.s32 %v5014, %v5016
        %v5018 = vrot.slane %v4159, %v5017
        %v5020 = vunpack.c.l.s4 1414812756
        %v5021 = vunpack.c.0.s8 %v5020
        %v5022 = vlaneseq
        %v5023 = vshrl.u32 %v5022, 7
        %v5024 = vsub.s32 %v5021, %v5023
        %v5025 = vrot.slane %v4159, %v5024
        %v5027 = vunpack.c.l.s4 1987475062
        %v5028 = vunpack.c.0.s8 %v5027
        %v5029 = vlaneseq
        %v5030 = vshrl.u32 %v5029, 7
        %v5031 = vsub.s32 %v5028, %v5030
        %v5032 = vrot.slane %v4159, %v5031
        %v5034 = vunpack.c.l.s4 269488144
        %v5035 = vunpack.c.0.s8 %v5034
        %v5036 = vlaneseq
        %v5037 = vshrl.u32 %v5036, 7
        %v5038 = vsub.s32 %v5035, %v5037
        %v5039 = vrot.slane %v4163, %v5038
        %v5041 = vunpack.c.l.s4 842150450
        %v5042 = vunpack.c.0.s8 %v5041
        %v5043 = vlaneseq
        %v5044 = vshrl.u32 %v5043, 7
        %v5045 = vsub.s32 %v5042, %v5044
        %v5046 = vrot.slane %v4163, %v5045
        %v5048 = vunpack.c.l.s4 1414812756
        %v5049 = vunpack.c.0.s8 %v5048
        %v5050 = vlaneseq
        %v5051 = vshrl.u32 %v5050, 7
        %v5052 = vsub.s32 %v5049, %v5051
        %v5053 = vrot.slane %v4163, %v5052
        %v5055 = vunpack.c.l.s4 1987475062
        %v5056 = vunpack.c.0.s8 %v5055
        %v5057 = vlaneseq
        %v5058 = vshrl.u32 %v5057, 7
        %v5059 = vsub.s32 %v5056, %v5058
        %v5060 = vrot.slane %v4163, %v5059
        %v5062 = vunpack.c.l.s4 269488144
        %v5063 = vunpack.c.0.s8 %v5062
        %v5064 = vlaneseq
        %v5065 = vshrl.u32 %v5064, 7
        %v5066 = vsub.s32 %v5063, %v5065
        %v5067 = vrot.slane %v4167, %v5066
        %v5069 = vunpack.c.l.s4 269488144
        %v5070 = vunpack.c.0.s8 %v5069
        %v5071 = vlaneseq
        %v5072 = vshrl.u32 %v5071, 7
        %v5073 = vsub.s32 %v5070, %v5072
        %v5074 = vrot.slane %v4174, %v5073
        %v5076 = vunpack.c.l.s4 842150450
        %v5077 = vunpack.c.0.s8 %v5076
        %v5078 = vlaneseq
        %v5079 = vshrl.u32 %v5078, 7
        %v5080 = vsub.s32 %v5077, %v5079
        %v5081 = vrot.slane %v4174, %v5080
        %v5083 = vunpack.c.l.s4 1414812756
        %v5084 = vunpack.c.0.s8 %v5083
        %v5085 = vlaneseq
        %v5086 = vshrl.u32 %v5085, 7
        %v5087 = vsub.s32 %v5084, %v5086
        %v5088 = vrot.slane %v4174, %v5087
        %v5090 = vunpack.c.l.s4 1987475062
        %v5091 = vunpack.c.0.s8 %v5090
        %v5092 = vlaneseq
        %v5093 = vshrl.u32 %v5092, 7
        %v5094 = vsub.s32 %v5091, %v5093
        %v5095 = vrot.slane %v4174, %v5094
        %v5097 = vunpack.c.l.s4 269488144
        %v5098 = vunpack.c.0.s8 %v5097
        %v5099 = vlaneseq
        %v5100 = vshrl.u32 %v5099, 7
        %v5101 = vsub.s32 %v5098, %v5100
        %v5102 = vrot.slane %v4178, %v5101
        %v5104 = vunpack.c.l.s4 842150450
        %v5105 = vunpack.c.0.s8 %v5104
        %v5106 = vlaneseq
        %v5107 = vshrl.u32 %v5106, 7
        %v5108 = vsub.s32 %v5105, %v5107
        %v5109 = vrot.slane %v4178, %v5108
        %v5111 = vunpack.c.l.s4 1414812756
        %v5112 = vunpack.c.0.s8 %v5111
        %v5113 = vlaneseq
        %v5114 = vshrl.u32 %v5113, 7
        %v5115 = vsub.s32 %v5112, %v5114
        %v5116 = vrot.slane %v4178, %v5115
        %v5118 = vunpack.c.l.s4 1987475062
        %v5119 = vunpack.c.0.s8 %v5118
        %v5120 = vlaneseq
        %v5121 = vshrl.u32 %v5120, 7
        %v5122 = vsub.s32 %v5119, %v5121
        %v5123 = vrot.slane %v4178, %v5122
        %v5125 = vunpack.c.l.s4 269488144
        %v5126 = vunpack.c.0.s8 %v5125
        %v5127 = vlaneseq
        %v5128 = vshrl.u32 %v5127, 7
        %v5129 = vsub.s32 %v5126, %v5128
        %v5130 = vrot.slane %v4182, %v5129
        %v5132 = vunpack.c.l.s4 269488144
        %v5133 = vunpack.c.0.s8 %v5132
        %v5134 = vlaneseq
        %v5135 = vshrl.u32 %v5134, 7
        %v5136 = vsub.s32 %v5133, %v5135
        %v5137 = vrot.slane %v4189, %v5136
        %v5139 = vunpack.c.l.s4 842150450
        %v5140 = vunpack.c.0.s8 %v5139
        %v5141 = vlaneseq
        %v5142 = vshrl.u32 %v5141, 7
        %v5143 = vsub.s32 %v5140, %v5142
        %v5144 = vrot.slane %v4189, %v5143
        %v5146 = vunpack.c.l.s4 1414812756
        %v5147 = vunpack.c.0.s8 %v5146
        %v5148 = vlaneseq
        %v5149 = vshrl.u32 %v5148, 7
        %v5150 = vsub.s32 %v5147, %v5149
        %v5151 = vrot.slane %v4189, %v5150
        %v5153 = vunpack.c.l.s4 1987475062
        %v5154 = vunpack.c.0.s8 %v5153
        %v5155 = vlaneseq
        %v5156 = vshrl.u32 %v5155, 7
        %v5157 = vsub.s32 %v5154, %v5156
        %v5158 = vrot.slane %v4189, %v5157
        %v5160 = vunpack.c.l.s4 269488144
        %v5161 = vunpack.c.0.s8 %v5160
        %v5162 = vlaneseq
        %v5163 = vshrl.u32 %v5162, 7
        %v5164 = vsub.s32 %v5161, %v5163
        %v5165 = vrot.slane %v4193, %v5164
        %v5167 = vunpack.c.l.s4 842150450
        %v5168 = vunpack.c.0.s8 %v5167
        %v5169 = vlaneseq
        %v5170 = vshrl.u32 %v5169, 7
        %v5171 = vsub.s32 %v5168, %v5170
        %v5172 = vrot.slane %v4193, %v5171
        %v5174 = vunpack.c.l.s4 1414812756
        %v5175 = vunpack.c.0.s8 %v5174
        %v5176 = vlaneseq
        %v5177 = vshrl.u32 %v5176, 7
        %v5178 = vsub.s32 %v5175, %v5177
        %v5179 = vrot.slane %v4193, %v5178
        %v5181 = vunpack.c.l.s4 1987475062
        %v5182 = vunpack.c.0.s8 %v5181
        %v5183 = vlaneseq
        %v5184 = vshrl.u32 %v5183, 7
        %v5185 = vsub.s32 %v5182, %v5184
        %v5186 = vrot.slane %v4193, %v5185
        %v5188 = vunpack.c.l.s4 269488144
        %v5189 = vunpack.c.0.s8 %v5188
        %v5190 = vlaneseq
        %v5191 = vshrl.u32 %v5190, 7
        %v5192 = vsub.s32 %v5189, %v5191
        %v5193 = vrot.slane %v4197, %v5192
        %v5195 = vunpack.c.l.s4 269488144
        %v5196 = vunpack.c.0.s8 %v5195
        %v5197 = vlaneseq
        %v5198 = vshrl.u32 %v5197, 7
        %v5199 = vsub.s32 %v5196, %v5198
        %v5200 = vrot.slane %v4204, %v5199
        %v5202 = vunpack.c.l.s4 842150450
        %v5203 = vunpack.c.0.s8 %v5202
        %v5204 = vlaneseq
        %v5205 = vshrl.u32 %v5204, 7
        %v5206 = vsub.s32 %v5203, %v5205
        %v5207 = vrot.slane %v4204, %v5206
        %v5209 = vunpack.c.l.s4 1414812756
        %v5210 = vunpack.c.0.s8 %v5209
        %v5211 = vlaneseq
        %v5212 = vshrl.u32 %v5211, 7
        %v5213 = vsub.s32 %v5210, %v5212
        %v5214 = vrot.slane %v4204, %v5213
        %v5216 = vunpack.c.l.s4 1987475062
        %v5217 = vunpack.c.0.s8 %v5216
        %v5218 = vlaneseq
        %v5219 = vshrl.u32 %v5218, 7
        %v5220 = vsub.s32 %v5217, %v5219
        %v5221 = vrot.slane %v4204, %v5220
        %v5223 = vunpack.c.l.s4 269488144
        %v5224 = vunpack.c.0.s8 %v5223
        %v5225 = vlaneseq
        %v5226 = vshrl.u32 %v5225, 7
        %v5227 = vsub.s32 %v5224, %v5226
        %v5228 = vrot.slane %v4208, %v5227
        %v5230 = vunpack.c.l.s4 842150450
        %v5231 = vunpack.c.0.s8 %v5230
        %v5232 = vlaneseq
        %v5233 = vshrl.u32 %v5232, 7
        %v5234 = vsub.s32 %v5231, %v5233
        %v5235 = vrot.slane %v4208, %v5234
        %v5237 = vunpack.c.l.s4 1414812756
        %v5238 = vunpack.c.0.s8 %v5237
        %v5239 = vlaneseq
        %v5240 = vshrl.u32 %v5239, 7
        %v5241 = vsub.s32 %v5238, %v5240
        %v5242 = vrot.slane %v4208, %v5241
        %v5244 = vunpack.c.l.s4 1987475062
        %v5245 = vunpack.c.0.s8 %v5244
        %v5246 = vlaneseq
        %v5247 = vshrl.u32 %v5246, 7
        %v5248 = vsub.s32 %v5245, %v5247
        %v5249 = vrot.slane %v4208, %v5248
        %v5251 = vunpack.c.l.s4 269488144
        %v5252 = vunpack.c.0.s8 %v5251
        %v5253 = vlaneseq
        %v5254 = vshrl.u32 %v5253, 7
        %v5255 = vsub.s32 %v5252, %v5254
        %v5256 = vrot.slane %v4212, %v5255
        %v5258 = vunpack.c.l.s4 269488144
        %v5259 = vunpack.c.0.s8 %v5258
        %v5260 = vlaneseq
        %v5261 = vshrl.u32 %v5260, 7
        %v5262 = vsub.s32 %v5259, %v5261
        %v5263 = vrot.slane %v4219, %v5262
        %v5265 = vunpack.c.l.s4 842150450
        %v5266 = vunpack.c.0.s8 %v5265
        %v5267 = vlaneseq
        %v5268 = vshrl.u32 %v5267, 7
        %v5269 = vsub.s32 %v5266, %v5268
        %v5270 = vrot.slane %v4219, %v5269
        %v5272 = vunpack.c.l.s4 1414812756
        %v5273 = vunpack.c.0.s8 %v5272
        %v5274 = vlaneseq
        %v5275 = vshrl.u32 %v5274, 7
        %v5276 = vsub.s32 %v5273, %v5275
        %v5277 = vrot.slane %v4219, %v5276
        %v5279 = vunpack.c.l.s4 1987475062
        %v5280 = vunpack.c.0.s8 %v5279
        %v5281 = vlaneseq
        %v5282 = vshrl.u32 %v5281, 7
        %v5283 = vsub.s32 %v5280, %v5282
        %v5284 = vrot.slane %v4219, %v5283
        %v5286 = vunpack.c.l.s4 269488144
        %v5287 = vunpack.c.0.s8 %v5286
        %v5288 = vlaneseq
        %v5289 = vshrl.u32 %v5288, 7
        %v5290 = vsub.s32 %v5287, %v5289
        %v5291 = vrot.slane %v4223, %v5290
        %v5293 = vunpack.c.l.s4 842150450
        %v5294 = vunpack.c.0.s8 %v5293
        %v5295 = vlaneseq
        %v5296 = vshrl.u32 %v5295, 7
        %v5297 = vsub.s32 %v5294, %v5296
        %v5298 = vrot.slane %v4223, %v5297
        %v5300 = vunpack.c.l.s4 1414812756
        %v5301 = vunpack.c.0.s8 %v5300
        %v5302 = vlaneseq
        %v5303 = vshrl.u32 %v5302, 7
        %v5304 = vsub.s32 %v5301, %v5303
        %v5305 = vrot.slane %v4223, %v5304
        %v5307 = vunpack.c.l.s4 1987475062
        %v5308 = vunpack.c.0.s8 %v5307
        %v5309 = vlaneseq
        %v5310 = vshrl.u32 %v5309, 7
        %v5311 = vsub.s32 %v5308, %v5310
        %v5312 = vrot.slane %v4223, %v5311
        %v5314 = vunpack.c.l.s4 269488144
        %v5315 = vunpack.c.0.s8 %v5314
        %v5316 = vlaneseq
        %v5317 = vshrl.u32 %v5316, 7
        %v5318 = vsub.s32 %v5315, %v5317
        %v5319 = vrot.slane %v4227, %v5318
        %v5321 = vunpack.c.l.s4 269488144
        %v5322 = vunpack.c.0.s8 %v5321
        %v5323 = vlaneseq
        %v5324 = vshrl.u32 %v5323, 7
        %v5325 = vsub.s32 %v5322, %v5324
        %v5326 = vrot.slane %v4234, %v5325
        %v5328 = vunpack.c.l.s4 842150450
        %v5329 = vunpack.c.0.s8 %v5328
        %v5330 = vlaneseq
        %v5331 = vshrl.u32 %v5330, 7
        %v5332 = vsub.s32 %v5329, %v5331
        %v5333 = vrot.slane %v4234, %v5332
        %v5335 = vunpack.c.l.s4 1414812756
        %v5336 = vunpack.c.0.s8 %v5335
        %v5337 = vlaneseq
        %v5338 = vshrl.u32 %v5337, 7
        %v5339 = vsub.s32 %v5336, %v5338
        %v5340 = vrot.slane %v4234, %v5339
        %v5342 = vunpack.c.l.s4 1987475062
        %v5343 = vunpack.c.0.s8 %v5342
        %v5344 = vlaneseq
        %v5345 = vshrl.u32 %v5344, 7
        %v5346 = vsub.s32 %v5343, %v5345
        %v5347 = vrot.slane %v4234, %v5346
        %v5349 = vunpack.c.l.s4 269488144
        %v5350 = vunpack.c.0.s8 %v5349
        %v5351 = vlaneseq
        %v5352 = vshrl.u32 %v5351, 7
        %v5353 = vsub.s32 %v5350, %v5352
        %v5354 = vrot.slane %v4238, %v5353
        %v5356 = vunpack.c.l.s4 842150450
        %v5357 = vunpack.c.0.s8 %v5356
        %v5358 = vlaneseq
        %v5359 = vshrl.u32 %v5358, 7
        %v5360 = vsub.s32 %v5357, %v5359
        %v5361 = vrot.slane %v4238, %v5360
        %v5363 = vunpack.c.l.s4 1414812756
        %v5364 = vunpack.c.0.s8 %v5363
        %v5365 = vlaneseq
        %v5366 = vshrl.u32 %v5365, 7
        %v5367 = vsub.s32 %v5364, %v5366
        %v5368 = vrot.slane %v4238, %v5367
        %v5370 = vunpack.c.l.s4 1987475062
        %v5371 = vunpack.c.0.s8 %v5370
        %v5372 = vlaneseq
        %v5373 = vshrl.u32 %v5372, 7
        %v5374 = vsub.s32 %v5371, %v5373
        %v5375 = vrot.slane %v4238, %v5374
        %v5377 = vunpack.c.l.s4 269488144
        %v5378 = vunpack.c.0.s8 %v5377
        %v5379 = vlaneseq
        %v5380 = vshrl.u32 %v5379, 7
        %v5381 = vsub.s32 %v5378, %v5380
        %v5382 = vrot.slane %v4242, %v5381
        %v5384 = vunpack.c.l.s4 269488144
        %v5385 = vunpack.c.0.s8 %v5384
        %v5386 = vlaneseq
        %v5387 = vshrl.u32 %v5386, 7
        %v5388 = vsub.s32 %v5385, %v5387
        %v5389 = vrot.slane %v4249, %v5388
        %v5391 = vunpack.c.l.s4 842150450
        %v5392 = vunpack.c.0.s8 %v5391
        %v5393 = vlaneseq
        %v5394 = vshrl.u32 %v5393, 7
        %v5395 = vsub.s32 %v5392, %v5394
        %v5396 = vrot.slane %v4249, %v5395
        %v5398 = vunpack.c.l.s4 1414812756
        %v5399 = vunpack.c.0.s8 %v5398
        %v5400 = vlaneseq
        %v5401 = vshrl.u32 %v5400, 7
        %v5402 = vsub.s32 %v5399, %v5401
        %v5403 = vrot.slane %v4249, %v5402
        %v5405 = vunpack.c.l.s4 1987475062
        %v5406 = vunpack.c.0.s8 %v5405
        %v5407 = vlaneseq
        %v5408 = vshrl.u32 %v5407, 7
        %v5409 = vsub.s32 %v5406, %v5408
        %v5410 = vrot.slane %v4249, %v5409
        %v5412 = vunpack.c.l.s4 269488144
        %v5413 = vunpack.c.0.s8 %v5412
        %v5414 = vlaneseq
        %v5415 = vshrl.u32 %v5414, 7
        %v5416 = vsub.s32 %v5413, %v5415
        %v5417 = vrot.slane %v4253, %v5416
        %v5419 = vunpack.c.l.s4 842150450
        %v5420 = vunpack.c.0.s8 %v5419
        %v5421 = vlaneseq
        %v5422 = vshrl.u32 %v5421, 7
        %v5423 = vsub.s32 %v5420, %v5422
        %v5424 = vrot.slane %v4253, %v5423
        %v5426 = vunpack.c.l.s4 1414812756
        %v5427 = vunpack.c.0.s8 %v5426
        %v5428 = vlaneseq
        %v5429 = vshrl.u32 %v5428, 7
        %v5430 = vsub.s32 %v5427, %v5429
        %v5431 = vrot.slane %v4253, %v5430
        %v5433 = vunpack.c.l.s4 1987475062
        %v5434 = vunpack.c.0.s8 %v5433
        %v5435 = vlaneseq
        %v5436 = vshrl.u32 %v5435, 7
        %v5437 = vsub.s32 %v5434, %v5436
        %v5438 = vrot.slane %v4253, %v5437
        %v5440 = vunpack.c.l.s4 269488144
        %v5441 = vunpack.c.0.s8 %v5440
        %v5442 = vlaneseq
        %v5443 = vshrl.u32 %v5442, 7
        %v5444 = vsub.s32 %v5441, %v5443
        %v5445 = vrot.slane %v4257, %v5444
        %v5608 = vmul.f32 %v3106, %v4318
        %v5609 = vmul.f32 %v3114, %v4325
        %v5610 = vmul.f32 %v3113, %v4332
        %v5611 = vmul.f32 %v3115, %v4339
        %v5612 = vmul.f32 %v3123, %v4346
        %v5613 = vmul.f32 %v3131, %v4353
        %v5614 = vmul.f32 %v3130, %v4360
        %v5615 = vmul.f32 %v3132, %v4367
        %v5616 = vmul.f32 %v3140, %v4374
        %v5617 = vmul.f32 %v3148, %v4381
        %v5618 = vmul.f32 %v3147, %v4388
        %v5619 = vmul.f32 %v3149, %v4395
        %v5620 = vmul.f32 %v3157, %v4402
        %v5621 = vmul.f32 %v3165, %v4409
        %v5622 = vmul.f32 %v3164, %v4416
        %v5623 = vmul.f32 %v3166, %v4423
        %v5624 = vmul.f32 %v3174, %v4430
        %v5625 = vmul.f32 %v3182, %v4437
        %v5626 = vmul.f32 %v3181, %v4444
        %v5627 = vmul.f32 %v3183, %v4451
        %v5628 = vmul.f32 %v3191, %v4458
        %v5629 = vmul.f32 %v3199, %v4465
        %v5630 = vmul.f32 %v3198, %v4472
        %v5631 = vmul.f32 %v3200, %v4479
        %v5632 = vmul.f32 %v3208, %v4486
        %v5633 = vmul.f32 %v3216, %v4493
        %v5634 = vmul.f32 %v3215, %v4500
        %v5635 = vmul.f32 %v3217, %v4507
        %v5636 = vmul.f32 %v3225, %v4514
        %v5637 = vmul.f32 %v3233, %v4521
        %v5638 = vmul.f32 %v3232, %v4528
        %v5639 = vmul.f32 %v3234, %v4535
        %v5640 = vmul.f32 %v3242, %v4542
        %v5641 = vmul.f32 %v3250, %v4549
        %v5642 = vmul.f32 %v3249, %v4556
        %v5643 = vmul.f32 %v3251, %v4563
        %v5644 = vmul.f32 %v3259, %v4570
        %v5645 = vmul.f32 %v3267, %v4577
        %v5646 = vmul.f32 %v3266, %v4584
        %v5647 = vmul.f32 %v3268, %v4591
        %v5648 = vmul.f32 %v3276, %v4598
        %v5649 = vmul.f32 %v3284, %v4605
        %v5650 = vmul.f32 %v3283, %v4612
        %v5651 = vmul.f32 %v3285, %v4619
        %v5652 = vmul.f32 %v3293, %v4626
        %v5653 = vmul.f32 %v3301, %v4633
        %v5654 = vmul.f32 %v3300, %v4640
        %v5655 = vmul.f32 %v3302, %v4647
        %v5656 = vmul.f32 %v3310, %v4654
        %v5657 = vmul.f32 %v3318, %v4661
        %v5658 = vmul.f32 %v3317, %v4668
        %v5659 = vmul.f32 %v3319, %v4675
        %v5660 = vmul.f32 %v3327, %v4682
        %v5661 = vmul.f32 %v3335, %v4689
        %v5662 = vmul.f32 %v3334, %v4696
        %v5663 = vmul.f32 %v3336, %v4703
        %v5664 = vmul.f32 %v3344, %v4710
        %v5665 = vmul.f32 %v3352, %v4717
        %v5666 = vmul.f32 %v3351, %v4724
        %v5667 = vmul.f32 %v3353, %v4731
        %v5668 = vmul.f32 %v3361, %v4738
        %v5669 = vmul.f32 %v3369, %v4745
        %v5670 = vmul.f32 %v3368, %v4752
        %v5671 = vmul.f32 %v3370, %v4759
        %v5672 = vmul.f32 %v3378, %v4766
        %v5673 = vmul.f32 %v3386, %v4773
        %v5674 = vmul.f32 %v3385, %v4780
        %v5675 = vmul.f32 %v3387, %v4787
        %v5676 = vmul.f32 %v3395, %v4794
        %v5677 = vmul.f32 %v3403, %v4801
        %v5678 = vmul.f32 %v3402, %v4808
        %v5679 = vmul.f32 %v3404, %v4815
        %v5680 = vmul.f32 %v3412, %v4822
        %v5681 = vmul.f32 %v3420, %v4829
        %v5682 = vmul.f32 %v3419, %v4836
        %v5683 = vmul.f32 %v3421, %v4843
        %v5684 = vmul.f32 %v3429, %v4850
        %v5685 = vmul.f32 %v3437, %v4857
        %v5686 = vmul.f32 %v3436, %v4864
        %v5687 = vmul.f32 %v3438, %v4871
        %v5688 = vmul.f32 %v3446, %v4878
        %v5689 = vmul.f32 %v3454, %v4885
        %v5690 = vmul.f32 %v3453, %v4892
        %v5691 = vmul.f32 %v3455, %v4899
        %v5692 = vmul.f32 %v3463, %v4906
        %v5693 = vmul.f32 %v3471, %v4913
        %v5694 = vmul.f32 %v3470, %v4920
        %v5695 = vmul.f32 %v3472, %v4927
        %v5696 = vmul.f32 %v3480, %v4934
        %v5697 = vmul.f32 %v3488, %v4941
        %v5698 = vmul.f32 %v3487, %v4948
        %v5699 = vmul.f32 %v3489, %v4955
        %v5700 = vmul.f32 %v3497, %v4962
        %v5701 = vmul.f32 %v3505, %v4969
        %v5702 = vmul.f32 %v3504, %v4976
        %v5703 = vmul.f32 %v3506, %v4983
        %v5704 = vmul.f32 %v3514, %v4990
        %v5705 = vmul.f32 %v3522, %v4997
        %v5706 = vmul.f32 %v3521, %v5004
        %v5707 = vmul.f32 %v3523, %v5011
        %v5708 = vmul.f32 %v3531, %v5018
        %v5709 = vmul.f32 %v3539, %v5025
        %v5710 = vmul.f32 %v3538, %v5032
        %v5711 = vmul.f32 %v3540, %v5039
        %v5712 = vmul.f32 %v3548, %v5046
        %v5713 = vmul.f32 %v3556, %v5053
        %v5714 = vmul.f32 %v3555, %v5060
        %v5715 = vmul.f32 %v3557, %v5067
        %v5716 = vmul.f32 %v3565, %v5074
        %v5717 = vmul.f32 %v3573, %v5081
        %v5718 = vmul.f32 %v3572, %v5088
        %v5719 = vmul.f32 %v3574, %v5095
        %v5720 = vmul.f32 %v3582, %v5102
        %v5721 = vmul.f32 %v3590, %v5109
        %v5722 = vmul.f32 %v3589, %v5116
        %v5723 = vmul.f32 %v3591, %v5123
        %v5724 = vmul.f32 %v3599, %v5130
        %v5725 = vmul.f32 %v3607, %v5137
        %v5726 = vmul.f32 %v3606, %v5144
        %v5727 = vmul.f32 %v3608, %v5151
        %v5728 = vmul.f32 %v3616, %v5158
        %v5729 = vmul.f32 %v3624, %v5165
        %v5730 = vmul.f32 %v3623, %v5172
        %v5731 = vmul.f32 %v3625, %v5179
        %v5732 = vmul.f32 %v3633, %v5186
        %v5733 = vmul.f32 %v3641, %v5193
        %v5734 = vmul.f32 %v3640, %v5200
        %v5735 = vmul.f32 %v3642, %v5207
        %v5736 = vmul.f32 %v3650, %v5214
        %v5737 = vmul.f32 %v3658, %v5221
        %v5738 = vmul.f32 %v3657, %v5228
        %v5739 = vmul.f32 %v3659, %v5235
        %v5740 = vmul.f32 %v3667, %v5242
        %v5741 = vmul.f32 %v3675, %v5249
        %v5742 = vmul.f32 %v3674, %v5256
        %v5743 = vmul.f32 %v3676, %v5263
        %v5744 = vmul.f32 %v3684, %v5270
        %v5745 = vmul.f32 %v3692, %v5277
        %v5746 = vmul.f32 %v3691, %v5284
        %v5747 = vmul.f32 %v3693, %v5291
        %v5748 = vmul.f32 %v3701, %v5298
        %v5749 = vmul.f32 %v3709, %v5305
        %v5750 = vmul.f32 %v3708, %v5312
        %v5751 = vmul.f32 %v3710, %v5319
        %v5752 = vmul.f32 %v3718, %v5326
        %v5753 = vmul.f32 %v3726, %v5333
        %v5754 = vmul.f32 %v3725, %v5340
        %v5755 = vmul.f32 %v3727, %v5347
        %v5756 = vmul.f32 %v3735, %v5354
        %v5757 = vmul.f32 %v3743, %v5361
        %v5758 = vmul.f32 %v3742, %v5368
        %v5759 = vmul.f32 %v3744, %v5375
        %v5760 = vmul.f32 %v3752, %v5382
        %v5761 = vmul.f32 %v3760, %v5389
        %v5762 = vmul.f32 %v3759, %v5396
        %v5763 = vmul.f32 %v3761, %v5403
        %v5764 = vmul.f32 %v3769, %v5410
        %v5765 = vmul.f32 %v3777, %v5417
        %v5766 = vmul.f32 %v3776, %v5424
        %v5767 = vmul.f32 %v3778, %v5431
        %v5768 = vmul.f32 %v3785, %v5438
        %v5769 = vmul.f32 %v3786, %v5445
        %v5932 = vcombine.low %v5608, %v5609
        %v5933 = vcombine.low %v5610, %v5611
        %v5935 = vunpack.c.l.s4 1983009808
        %v5936 = vunpack.c.0.s8 %v5935
        %v5937 = vlaneseq
        %v5938 = vshrl.u32 %v5937, 7
        %v5939 = vsub.s32 %v5936, %v5938
        %v5940 = vrot.slane %v5932, %v5939
        %v5942 = vunpack.c.l.s4 1983009808
        %v5943 = vunpack.c.0.s8 %v5942
        %v5944 = vlaneseq
        %v5945 = vshrl.u32 %v5944, 7
        %v5946 = vsub.s32 %v5943, %v5945
        %v5947 = vrot.slane %v5933, %v5946
        %v5948 = vcombine.low %v5940, %v5947
        %v5949 = vcombine.low %v5612, %v5613
        %v5950 = vcombine.low %v5614, %v5615
        %v5952 = vunpack.c.l.s4 1983009808
        %v5953 = vunpack.c.0.s8 %v5952
        %v5954 = vlaneseq
        %v5955 = vshrl.u32 %v5954, 7
        %v5956 = vsub.s32 %v5953, %v5955
        %v5957 = vrot.slane %v5949, %v5956
        %v5959 = vunpack.c.l.s4 1983009808
        %v5960 = vunpack.c.0.s8 %v5959
        %v5961 = vlaneseq
        %v5962 = vshrl.u32 %v5961, 7
        %v5963 = vsub.s32 %v5960, %v5962
        %v5964 = vrot.slane %v5950, %v5963
        %v5965 = vcombine.low %v5957, %v5964
        %v5967 = vunpack.c.l.s4 1983009808
        %v5968 = vunpack.c.0.s8 %v5967
        %v5969 = vlaneseq
        %v5970 = vshrl.u32 %v5969, 7
        %v5971 = vsub.s32 %v5968, %v5970
        %v5972 = vrot.slane %v5616, %v5971
        %v5973 = vcombine.low %v5617, %v5618
        %v5974 = vcombine.low %v5619, %v5620
        %v5976 = vunpack.c.l.s4 1983009808
        %v5977 = vunpack.c.0.s8 %v5976
        %v5978 = vlaneseq
        %v5979 = vshrl.u32 %v5978, 7
        %v5980 = vsub.s32 %v5977, %v5979
        %v5981 = vrot.slane %v5973, %v5980
        %v5983 = vunpack.c.l.s4 1983009808
        %v5984 = vunpack.c.0.s8 %v5983
        %v5985 = vlaneseq
        %v5986 = vshrl.u32 %v5985, 7
        %v5987 = vsub.s32 %v5984, %v5986
        %v5988 = vrot.slane %v5974, %v5987
        %v5989 = vcombine.low %v5981, %v5988
        %v5990 = vcombine.low %v5621, %v5622
        %v5991 = vcombine.low %v5623, %v5624
        %v5993 = vunpack.c.l.s4 1983009808
        %v5994 = vunpack.c.0.s8 %v5993
        %v5995 = vlaneseq
        %v5996 = vshrl.u32 %v5995, 7
        %v5997 = vsub.s32 %v5994, %v5996
        %v5998 = vrot.slane %v5990, %v5997
        %v6000 = vunpack.c.l.s4 1983009808
        %v6001 = vunpack.c.0.s8 %v6000
        %v6002 = vlaneseq
        %v6003 = vshrl.u32 %v6002, 7
        %v6004 = vsub.s32 %v6001, %v6003
        %v6005 = vrot.slane %v5991, %v6004
        %v6006 = vcombine.low %v5998, %v6005
        %v6008 = vunpack.c.l.s4 1983009808
        %v6009 = vunpack.c.0.s8 %v6008
        %v6010 = vlaneseq
        %v6011 = vshrl.u32 %v6010, 7
        %v6012 = vsub.s32 %v6009, %v6011
        %v6013 = vrot.slane %v5625, %v6012
        %v6014 = vcombine.low %v5626, %v5627
        %v6015 = vcombine.low %v5628, %v5629
        %v6017 = vunpack.c.l.s4 1983009808
        %v6018 = vunpack.c.0.s8 %v6017
        %v6019 = vlaneseq
        %v6020 = vshrl.u32 %v6019, 7
        %v6021 = vsub.s32 %v6018, %v6020
        %v6022 = vrot.slane %v6014, %v6021
        %v6024 = vunpack.c.l.s4 1983009808
        %v6025 = vunpack.c.0.s8 %v6024
        %v6026 = vlaneseq
        %v6027 = vshrl.u32 %v6026, 7
        %v6028 = vsub.s32 %v6025, %v6027
        %v6029 = vrot.slane %v6015, %v6028
        %v6030 = vcombine.low %v6022, %v6029
        %v6031 = vcombine.low %v5630, %v5631
        %v6032 = vcombine.low %v5632, %v5633
        %v6034 = vunpack.c.l.s4 1983009808
        %v6035 = vunpack.c.0.s8 %v6034
        %v6036 = vlaneseq
        %v6037 = vshrl.u32 %v6036, 7
        %v6038 = vsub.s32 %v6035, %v6037
        %v6039 = vrot.slane %v6031, %v6038
        %v6041 = vunpack.c.l.s4 1983009808
        %v6042 = vunpack.c.0.s8 %v6041
        %v6043 = vlaneseq
        %v6044 = vshrl.u32 %v6043, 7
        %v6045 = vsub.s32 %v6042, %v6044
        %v6046 = vrot.slane %v6032, %v6045
        %v6047 = vcombine.low %v6039, %v6046
        %v6049 = vunpack.c.l.s4 1983009808
        %v6050 = vunpack.c.0.s8 %v6049
        %v6051 = vlaneseq
        %v6052 = vshrl.u32 %v6051, 7
        %v6053 = vsub.s32 %v6050, %v6052
        %v6054 = vrot.slane %v5634, %v6053
        %v6055 = vcombine.low %v5635, %v5636
        %v6056 = vcombine.low %v5637, %v5638
        %v6058 = vunpack.c.l.s4 1983009808
        %v6059 = vunpack.c.0.s8 %v6058
        %v6060 = vlaneseq
        %v6061 = vshrl.u32 %v6060, 7
        %v6062 = vsub.s32 %v6059, %v6061
        %v6063 = vrot.slane %v6055, %v6062
        %v6065 = vunpack.c.l.s4 1983009808
        %v6066 = vunpack.c.0.s8 %v6065
        %v6067 = vlaneseq
        %v6068 = vshrl.u32 %v6067, 7
        %v6069 = vsub.s32 %v6066, %v6068
        %v6070 = vrot.slane %v6056, %v6069
        %v6071 = vcombine.low %v6063, %v6070
        %v6072 = vcombine.low %v5639, %v5640
        %v6073 = vcombine.low %v5641, %v5642
        %v6075 = vunpack.c.l.s4 1983009808
        %v6076 = vunpack.c.0.s8 %v6075
        %v6077 = vlaneseq
        %v6078 = vshrl.u32 %v6077, 7
        %v6079 = vsub.s32 %v6076, %v6078
        %v6080 = vrot.slane %v6072, %v6079
        %v6082 = vunpack.c.l.s4 1983009808
        %v6083 = vunpack.c.0.s8 %v6082
        %v6084 = vlaneseq
        %v6085 = vshrl.u32 %v6084, 7
        %v6086 = vsub.s32 %v6083, %v6085
        %v6087 = vrot.slane %v6073, %v6086
        %v6088 = vcombine.low %v6080, %v6087
        %v6090 = vunpack.c.l.s4 1983009808
        %v6091 = vunpack.c.0.s8 %v6090
        %v6092 = vlaneseq
        %v6093 = vshrl.u32 %v6092, 7
        %v6094 = vsub.s32 %v6091, %v6093
        %v6095 = vrot.slane %v5643, %v6094
        %v6096 = vcombine.low %v5644, %v5645
        %v6097 = vcombine.low %v5646, %v5647
        %v6099 = vunpack.c.l.s4 1983009808
        %v6100 = vunpack.c.0.s8 %v6099
        %v6101 = vlaneseq
        %v6102 = vshrl.u32 %v6101, 7
        %v6103 = vsub.s32 %v6100, %v6102
        %v6104 = vrot.slane %v6096, %v6103
        %v6106 = vunpack.c.l.s4 1983009808
        %v6107 = vunpack.c.0.s8 %v6106
        %v6108 = vlaneseq
        %v6109 = vshrl.u32 %v6108, 7
        %v6110 = vsub.s32 %v6107, %v6109
        %v6111 = vrot.slane %v6097, %v6110
        %v6112 = vcombine.low %v6104, %v6111
        %v6113 = vcombine.low %v5648, %v5649
        %v6114 = vcombine.low %v5650, %v5651
        %v6116 = vunpack.c.l.s4 1983009808
        %v6117 = vunpack.c.0.s8 %v6116
        %v6118 = vlaneseq
        %v6119 = vshrl.u32 %v6118, 7
        %v6120 = vsub.s32 %v6117, %v6119
        %v6121 = vrot.slane %v6113, %v6120
        %v6123 = vunpack.c.l.s4 1983009808
        %v6124 = vunpack.c.0.s8 %v6123
        %v6125 = vlaneseq
        %v6126 = vshrl.u32 %v6125, 7
        %v6127 = vsub.s32 %v6124, %v6126
        %v6128 = vrot.slane %v6114, %v6127
        %v6129 = vcombine.low %v6121, %v6128
        %v6131 = vunpack.c.l.s4 1983009808
        %v6132 = vunpack.c.0.s8 %v6131
        %v6133 = vlaneseq
        %v6134 = vshrl.u32 %v6133, 7
        %v6135 = vsub.s32 %v6132, %v6134
        %v6136 = vrot.slane %v5652, %v6135
        %v6137 = vcombine.low %v5653, %v5654
        %v6138 = vcombine.low %v5655, %v5656
        %v6140 = vunpack.c.l.s4 1983009808
        %v6141 = vunpack.c.0.s8 %v6140
        %v6142 = vlaneseq
        %v6143 = vshrl.u32 %v6142, 7
        %v6144 = vsub.s32 %v6141, %v6143
        %v6145 = vrot.slane %v6137, %v6144
        %v6147 = vunpack.c.l.s4 1983009808
        %v6148 = vunpack.c.0.s8 %v6147
        %v6149 = vlaneseq
        %v6150 = vshrl.u32 %v6149, 7
        %v6151 = vsub.s32 %v6148, %v6150
        %v6152 = vrot.slane %v6138, %v6151
        %v6153 = vcombine.low %v6145, %v6152
        %v6154 = vcombine.low %v5657, %v5658
        %v6155 = vcombine.low %v5659, %v5660
        %v6157 = vunpack.c.l.s4 1983009808
        %v6158 = vunpack.c.0.s8 %v6157
        %v6159 = vlaneseq
        %v6160 = vshrl.u32 %v6159, 7
        %v6161 = vsub.s32 %v6158, %v6160
        %v6162 = vrot.slane %v6154, %v6161
        %v6164 = vunpack.c.l.s4 1983009808
        %v6165 = vunpack.c.0.s8 %v6164
        %v6166 = vlaneseq
        %v6167 = vshrl.u32 %v6166, 7
        %v6168 = vsub.s32 %v6165, %v6167
        %v6169 = vrot.slane %v6155, %v6168
        %v6170 = vcombine.low %v6162, %v6169
        %v6172 = vunpack.c.l.s4 1983009808
        %v6173 = vunpack.c.0.s8 %v6172
        %v6174 = vlaneseq
        %v6175 = vshrl.u32 %v6174, 7
        %v6176 = vsub.s32 %v6173, %v6175
        %v6177 = vrot.slane %v5661, %v6176
        %v6178 = vcombine.low %v5662, %v5663
        %v6179 = vcombine.low %v5664, %v5665
        %v6181 = vunpack.c.l.s4 1983009808
        %v6182 = vunpack.c.0.s8 %v6181
        %v6183 = vlaneseq
        %v6184 = vshrl.u32 %v6183, 7
        %v6185 = vsub.s32 %v6182, %v6184
        %v6186 = vrot.slane %v6178, %v6185
        %v6188 = vunpack.c.l.s4 1983009808
        %v6189 = vunpack.c.0.s8 %v6188
        %v6190 = vlaneseq
        %v6191 = vshrl.u32 %v6190, 7
        %v6192 = vsub.s32 %v6189, %v6191
        %v6193 = vrot.slane %v6179, %v6192
        %v6194 = vcombine.low %v6186, %v6193
        %v6195 = vcombine.low %v5666, %v5667
        %v6196 = vcombine.low %v5668, %v5669
        %v6198 = vunpack.c.l.s4 1983009808
        %v6199 = vunpack.c.0.s8 %v6198
        %v6200 = vlaneseq
        %v6201 = vshrl.u32 %v6200, 7
        %v6202 = vsub.s32 %v6199, %v6201
        %v6203 = vrot.slane %v6195, %v6202
        %v6205 = vunpack.c.l.s4 1983009808
        %v6206 = vunpack.c.0.s8 %v6205
        %v6207 = vlaneseq
        %v6208 = vshrl.u32 %v6207, 7
        %v6209 = vsub.s32 %v6206, %v6208
        %v6210 = vrot.slane %v6196, %v6209
        %v6211 = vcombine.low %v6203, %v6210
        %v6213 = vunpack.c.l.s4 1983009808
        %v6214 = vunpack.c.0.s8 %v6213
        %v6215 = vlaneseq
        %v6216 = vshrl.u32 %v6215, 7
        %v6217 = vsub.s32 %v6214, %v6216
        %v6218 = vrot.slane %v5670, %v6217
        %v6219 = vcombine.low %v5671, %v5672
        %v6220 = vcombine.low %v5673, %v5674
        %v6222 = vunpack.c.l.s4 1983009808
        %v6223 = vunpack.c.0.s8 %v6222
        %v6224 = vlaneseq
        %v6225 = vshrl.u32 %v6224, 7
        %v6226 = vsub.s32 %v6223, %v6225
        %v6227 = vrot.slane %v6219, %v6226
        %v6229 = vunpack.c.l.s4 1983009808
        %v6230 = vunpack.c.0.s8 %v6229
        %v6231 = vlaneseq
        %v6232 = vshrl.u32 %v6231, 7
        %v6233 = vsub.s32 %v6230, %v6232
        %v6234 = vrot.slane %v6220, %v6233
        %v6235 = vcombine.low %v6227, %v6234
        %v6236 = vcombine.low %v5675, %v5676
        %v6237 = vcombine.low %v5677, %v5678
        %v6239 = vunpack.c.l.s4 1983009808
        %v6240 = vunpack.c.0.s8 %v6239
        %v6241 = vlaneseq
        %v6242 = vshrl.u32 %v6241, 7
        %v6243 = vsub.s32 %v6240, %v6242
        %v6244 = vrot.slane %v6236, %v6243
        %v6246 = vunpack.c.l.s4 1983009808
        %v6247 = vunpack.c.0.s8 %v6246
        %v6248 = vlaneseq
        %v6249 = vshrl.u32 %v6248, 7
        %v6250 = vsub.s32 %v6247, %v6249
        %v6251 = vrot.slane %v6237, %v6250
        %v6252 = vcombine.low %v6244, %v6251
        %v6254 = vunpack.c.l.s4 1983009808
        %v6255 = vunpack.c.0.s8 %v6254
        %v6256 = vlaneseq
        %v6257 = vshrl.u32 %v6256, 7
        %v6258 = vsub.s32 %v6255, %v6257
        %v6259 = vrot.slane %v5679, %v6258
        %v6260 = vcombine.low %v5680, %v5681
        %v6261 = vcombine.low %v5682, %v5683
        %v6263 = vunpack.c.l.s4 1983009808
        %v6264 = vunpack.c.0.s8 %v6263
        %v6265 = vlaneseq
        %v6266 = vshrl.u32 %v6265, 7
        %v6267 = vsub.s32 %v6264, %v6266
        %v6268 = vrot.slane %v6260, %v6267
        %v6270 = vunpack.c.l.s4 1983009808
        %v6271 = vunpack.c.0.s8 %v6270
        %v6272 = vlaneseq
        %v6273 = vshrl.u32 %v6272, 7
        %v6274 = vsub.s32 %v6271, %v6273
        %v6275 = vrot.slane %v6261, %v6274
        %v6276 = vcombine.low %v6268, %v6275
        %v6277 = vcombine.low %v5684, %v5685
        %v6278 = vcombine.low %v5686, %v5687
        %v6280 = vunpack.c.l.s4 1983009808
        %v6281 = vunpack.c.0.s8 %v6280
        %v6282 = vlaneseq
        %v6283 = vshrl.u32 %v6282, 7
        %v6284 = vsub.s32 %v6281, %v6283
        %v6285 = vrot.slane %v6277, %v6284
        %v6287 = vunpack.c.l.s4 1983009808
        %v6288 = vunpack.c.0.s8 %v6287
        %v6289 = vlaneseq
        %v6290 = vshrl.u32 %v6289, 7
        %v6291 = vsub.s32 %v6288, %v6290
        %v6292 = vrot.slane %v6278, %v6291
        %v6293 = vcombine.low %v6285, %v6292
        %v6295 = vunpack.c.l.s4 1983009808
        %v6296 = vunpack.c.0.s8 %v6295
        %v6297 = vlaneseq
        %v6298 = vshrl.u32 %v6297, 7
        %v6299 = vsub.s32 %v6296, %v6298
        %v6300 = vrot.slane %v5688, %v6299
        %v6301 = vcombine.low %v5689, %v5690
        %v6302 = vcombine.low %v5691, %v5692
        %v6304 = vunpack.c.l.s4 1983009808
        %v6305 = vunpack.c.0.s8 %v6304
        %v6306 = vlaneseq
        %v6307 = vshrl.u32 %v6306, 7
        %v6308 = vsub.s32 %v6305, %v6307
        %v6309 = vrot.slane %v6301, %v6308
        %v6311 = vunpack.c.l.s4 1983009808
        %v6312 = vunpack.c.0.s8 %v6311
        %v6313 = vlaneseq
        %v6314 = vshrl.u32 %v6313, 7
        %v6315 = vsub.s32 %v6312, %v6314
        %v6316 = vrot.slane %v6302, %v6315
        %v6317 = vcombine.low %v6309, %v6316
        %v6318 = vcombine.low %v5693, %v5694
        %v6319 = vcombine.low %v5695, %v5696
        %v6321 = vunpack.c.l.s4 1983009808
        %v6322 = vunpack.c.0.s8 %v6321
        %v6323 = vlaneseq
        %v6324 = vshrl.u32 %v6323, 7
        %v6325 = vsub.s32 %v6322, %v6324
        %v6326 = vrot.slane %v6318, %v6325
        %v6328 = vunpack.c.l.s4 1983009808
        %v6329 = vunpack.c.0.s8 %v6328
        %v6330 = vlaneseq
        %v6331 = vshrl.u32 %v6330, 7
        %v6332 = vsub.s32 %v6329, %v6331
        %v6333 = vrot.slane %v6319, %v6332
        %v6334 = vcombine.low %v6326, %v6333
        %v6336 = vunpack.c.l.s4 1983009808
        %v6337 = vunpack.c.0.s8 %v6336
        %v6338 = vlaneseq
        %v6339 = vshrl.u32 %v6338, 7
        %v6340 = vsub.s32 %v6337, %v6339
        %v6341 = vrot.slane %v5697, %v6340
        %v6342 = vcombine.low %v5698, %v5699
        %v6343 = vcombine.low %v5700, %v5701
        %v6345 = vunpack.c.l.s4 1983009808
        %v6346 = vunpack.c.0.s8 %v6345
        %v6347 = vlaneseq
        %v6348 = vshrl.u32 %v6347, 7
        %v6349 = vsub.s32 %v6346, %v6348
        %v6350 = vrot.slane %v6342, %v6349
        %v6352 = vunpack.c.l.s4 1983009808
        %v6353 = vunpack.c.0.s8 %v6352
        %v6354 = vlaneseq
        %v6355 = vshrl.u32 %v6354, 7
        %v6356 = vsub.s32 %v6353, %v6355
        %v6357 = vrot.slane %v6343, %v6356
        %v6358 = vcombine.low %v6350, %v6357
        %v6359 = vcombine.low %v5702, %v5703
        %v6360 = vcombine.low %v5704, %v5705
        %v6362 = vunpack.c.l.s4 1983009808
        %v6363 = vunpack.c.0.s8 %v6362
        %v6364 = vlaneseq
        %v6365 = vshrl.u32 %v6364, 7
        %v6366 = vsub.s32 %v6363, %v6365
        %v6367 = vrot.slane %v6359, %v6366
        %v6369 = vunpack.c.l.s4 1983009808
        %v6370 = vunpack.c.0.s8 %v6369
        %v6371 = vlaneseq
        %v6372 = vshrl.u32 %v6371, 7
        %v6373 = vsub.s32 %v6370, %v6372
        %v6374 = vrot.slane %v6360, %v6373
        %v6375 = vcombine.low %v6367, %v6374
        %v6377 = vunpack.c.l.s4 1983009808
        %v6378 = vunpack.c.0.s8 %v6377
        %v6379 = vlaneseq
        %v6380 = vshrl.u32 %v6379, 7
        %v6381 = vsub.s32 %v6378, %v6380
        %v6382 = vrot.slane %v5706, %v6381
        %v6383 = vcombine.low %v5707, %v5708
        %v6384 = vcombine.low %v5709, %v5710
        %v6386 = vunpack.c.l.s4 1983009808
        %v6387 = vunpack.c.0.s8 %v6386
        %v6388 = vlaneseq
        %v6389 = vshrl.u32 %v6388, 7
        %v6390 = vsub.s32 %v6387, %v6389
        %v6391 = vrot.slane %v6383, %v6390
        %v6393 = vunpack.c.l.s4 1983009808
        %v6394 = vunpack.c.0.s8 %v6393
        %v6395 = vlaneseq
        %v6396 = vshrl.u32 %v6395, 7
        %v6397 = vsub.s32 %v6394, %v6396
        %v6398 = vrot.slane %v6384, %v6397
        %v6399 = vcombine.low %v6391, %v6398
        %v6400 = vcombine.low %v5711, %v5712
        %v6401 = vcombine.low %v5713, %v5714
        %v6403 = vunpack.c.l.s4 1983009808
        %v6404 = vunpack.c.0.s8 %v6403
        %v6405 = vlaneseq
        %v6406 = vshrl.u32 %v6405, 7
        %v6407 = vsub.s32 %v6404, %v6406
        %v6408 = vrot.slane %v6400, %v6407
        %v6410 = vunpack.c.l.s4 1983009808
        %v6411 = vunpack.c.0.s8 %v6410
        %v6412 = vlaneseq
        %v6413 = vshrl.u32 %v6412, 7
        %v6414 = vsub.s32 %v6411, %v6413
        %v6415 = vrot.slane %v6401, %v6414
        %v6416 = vcombine.low %v6408, %v6415
        %v6418 = vunpack.c.l.s4 1983009808
        %v6419 = vunpack.c.0.s8 %v6418
        %v6420 = vlaneseq
        %v6421 = vshrl.u32 %v6420, 7
        %v6422 = vsub.s32 %v6419, %v6421
        %v6423 = vrot.slane %v5715, %v6422
        %v6424 = vcombine.low %v5716, %v5717
        %v6425 = vcombine.low %v5718, %v5719
        %v6427 = vunpack.c.l.s4 1983009808
        %v6428 = vunpack.c.0.s8 %v6427
        %v6429 = vlaneseq
        %v6430 = vshrl.u32 %v6429, 7
        %v6431 = vsub.s32 %v6428, %v6430
        %v6432 = vrot.slane %v6424, %v6431
        %v6434 = vunpack.c.l.s4 1983009808
        %v6435 = vunpack.c.0.s8 %v6434
        %v6436 = vlaneseq
        %v6437 = vshrl.u32 %v6436, 7
        %v6438 = vsub.s32 %v6435, %v6437
        %v6439 = vrot.slane %v6425, %v6438
        %v6440 = vcombine.low %v6432, %v6439
        %v6441 = vcombine.low %v5720, %v5721
        %v6442 = vcombine.low %v5722, %v5723
        %v6444 = vunpack.c.l.s4 1983009808
        %v6445 = vunpack.c.0.s8 %v6444
        %v6446 = vlaneseq
        %v6447 = vshrl.u32 %v6446, 7
        %v6448 = vsub.s32 %v6445, %v6447
        %v6449 = vrot.slane %v6441, %v6448
        %v6451 = vunpack.c.l.s4 1983009808
        %v6452 = vunpack.c.0.s8 %v6451
        %v6453 = vlaneseq
        %v6454 = vshrl.u32 %v6453, 7
        %v6455 = vsub.s32 %v6452, %v6454
        %v6456 = vrot.slane %v6442, %v6455
        %v6457 = vcombine.low %v6449, %v6456
        %v6459 = vunpack.c.l.s4 1983009808
        %v6460 = vunpack.c.0.s8 %v6459
        %v6461 = vlaneseq
        %v6462 = vshrl.u32 %v6461, 7
        %v6463 = vsub.s32 %v6460, %v6462
        %v6464 = vrot.slane %v5724, %v6463
        %v6465 = vcombine.low %v5725, %v5726
        %v6466 = vcombine.low %v5727, %v5728
        %v6468 = vunpack.c.l.s4 1983009808
        %v6469 = vunpack.c.0.s8 %v6468
        %v6470 = vlaneseq
        %v6471 = vshrl.u32 %v6470, 7
        %v6472 = vsub.s32 %v6469, %v6471
        %v6473 = vrot.slane %v6465, %v6472
        %v6475 = vunpack.c.l.s4 1983009808
        %v6476 = vunpack.c.0.s8 %v6475
        %v6477 = vlaneseq
        %v6478 = vshrl.u32 %v6477, 7
        %v6479 = vsub.s32 %v6476, %v6478
        %v6480 = vrot.slane %v6466, %v6479
        %v6481 = vcombine.low %v6473, %v6480
        %v6482 = vcombine.low %v5729, %v5730
        %v6483 = vcombine.low %v5731, %v5732
        %v6485 = vunpack.c.l.s4 1983009808
        %v6486 = vunpack.c.0.s8 %v6485
        %v6487 = vlaneseq
        %v6488 = vshrl.u32 %v6487, 7
        %v6489 = vsub.s32 %v6486, %v6488
        %v6490 = vrot.slane %v6482, %v6489
        %v6492 = vunpack.c.l.s4 1983009808
        %v6493 = vunpack.c.0.s8 %v6492
        %v6494 = vlaneseq
        %v6495 = vshrl.u32 %v6494, 7
        %v6496 = vsub.s32 %v6493, %v6495
        %v6497 = vrot.slane %v6483, %v6496
        %v6498 = vcombine.low %v6490, %v6497
        %v6500 = vunpack.c.l.s4 1983009808
        %v6501 = vunpack.c.0.s8 %v6500
        %v6502 = vlaneseq
        %v6503 = vshrl.u32 %v6502, 7
        %v6504 = vsub.s32 %v6501, %v6503
        %v6505 = vrot.slane %v5733, %v6504
        %v6506 = vcombine.low %v5734, %v5735
        %v6507 = vcombine.low %v5736, %v5737
        %v6509 = vunpack.c.l.s4 1983009808
        %v6510 = vunpack.c.0.s8 %v6509
        %v6511 = vlaneseq
        %v6512 = vshrl.u32 %v6511, 7
        %v6513 = vsub.s32 %v6510, %v6512
        %v6514 = vrot.slane %v6506, %v6513
        %v6516 = vunpack.c.l.s4 1983009808
        %v6517 = vunpack.c.0.s8 %v6516
        %v6518 = vlaneseq
        %v6519 = vshrl.u32 %v6518, 7
        %v6520 = vsub.s32 %v6517, %v6519
        %v6521 = vrot.slane %v6507, %v6520
        %v6522 = vcombine.low %v6514, %v6521
        %v6523 = vcombine.low %v5738, %v5739
        %v6524 = vcombine.low %v5740, %v5741
        %v6526 = vunpack.c.l.s4 1983009808
        %v6527 = vunpack.c.0.s8 %v6526
        %v6528 = vlaneseq
        %v6529 = vshrl.u32 %v6528, 7
        %v6530 = vsub.s32 %v6527, %v6529
        %v6531 = vrot.slane %v6523, %v6530
        %v6533 = vunpack.c.l.s4 1983009808
        %v6534 = vunpack.c.0.s8 %v6533
        %v6535 = vlaneseq
        %v6536 = vshrl.u32 %v6535, 7
        %v6537 = vsub.s32 %v6534, %v6536
        %v6538 = vrot.slane %v6524, %v6537
        %v6539 = vcombine.low %v6531, %v6538
        %v6541 = vunpack.c.l.s4 1983009808
        %v6542 = vunpack.c.0.s8 %v6541
        %v6543 = vlaneseq
        %v6544 = vshrl.u32 %v6543, 7
        %v6545 = vsub.s32 %v6542, %v6544
        %v6546 = vrot.slane %v5742, %v6545
        %v6547 = vcombine.low %v5743, %v5744
        %v6548 = vcombine.low %v5745, %v5746
        %v6550 = vunpack.c.l.s4 1983009808
        %v6551 = vunpack.c.0.s8 %v6550
        %v6552 = vlaneseq
        %v6553 = vshrl.u32 %v6552, 7
        %v6554 = vsub.s32 %v6551, %v6553
        %v6555 = vrot.slane %v6547, %v6554
        %v6557 = vunpack.c.l.s4 1983009808
        %v6558 = vunpack.c.0.s8 %v6557
        %v6559 = vlaneseq
        %v6560 = vshrl.u32 %v6559, 7
        %v6561 = vsub.s32 %v6558, %v6560
        %v6562 = vrot.slane %v6548, %v6561
        %v6563 = vcombine.low %v6555, %v6562
        %v6564 = vcombine.low %v5747, %v5748
        %v6565 = vcombine.low %v5749, %v5750
        %v6567 = vunpack.c.l.s4 1983009808
        %v6568 = vunpack.c.0.s8 %v6567
        %v6569 = vlaneseq
        %v6570 = vshrl.u32 %v6569, 7
        %v6571 = vsub.s32 %v6568, %v6570
        %v6572 = vrot.slane %v6564, %v6571
        %v6574 = vunpack.c.l.s4 1983009808
        %v6575 = vunpack.c.0.s8 %v6574
        %v6576 = vlaneseq
        %v6577 = vshrl.u32 %v6576, 7
        %v6578 = vsub.s32 %v6575, %v6577
        %v6579 = vrot.slane %v6565, %v6578
        %v6580 = vcombine.low %v6572, %v6579
        %v6582 = vunpack.c.l.s4 1983009808
        %v6583 = vunpack.c.0.s8 %v6582
        %v6584 = vlaneseq
        %v6585 = vshrl.u32 %v6584, 7
        %v6586 = vsub.s32 %v6583, %v6585
        %v6587 = vrot.slane %v5751, %v6586
        %v6588 = vcombine.low %v5752, %v5753
        %v6589 = vcombine.low %v5754, %v5755
        %v6591 = vunpack.c.l.s4 1983009808
        %v6592 = vunpack.c.0.s8 %v6591
        %v6593 = vlaneseq
        %v6594 = vshrl.u32 %v6593, 7
        %v6595 = vsub.s32 %v6592, %v6594
        %v6596 = vrot.slane %v6588, %v6595
        %v6598 = vunpack.c.l.s4 1983009808
        %v6599 = vunpack.c.0.s8 %v6598
        %v6600 = vlaneseq
        %v6601 = vshrl.u32 %v6600, 7
        %v6602 = vsub.s32 %v6599, %v6601
        %v6603 = vrot.slane %v6589, %v6602
        %v6604 = vcombine.low %v6596, %v6603
        %v6605 = vcombine.low %v5756, %v5757
        %v6606 = vcombine.low %v5758, %v5759
        %v6608 = vunpack.c.l.s4 1983009808
        %v6609 = vunpack.c.0.s8 %v6608
        %v6610 = vlaneseq
        %v6611 = vshrl.u32 %v6610, 7
        %v6612 = vsub.s32 %v6609, %v6611
        %v6613 = vrot.slane %v6605, %v6612
        %v6615 = vunpack.c.l.s4 1983009808
        %v6616 = vunpack.c.0.s8 %v6615
        %v6617 = vlaneseq
        %v6618 = vshrl.u32 %v6617, 7
        %v6619 = vsub.s32 %v6616, %v6618
        %v6620 = vrot.slane %v6606, %v6619
        %v6621 = vcombine.low %v6613, %v6620
        %v6623 = vunpack.c.l.s4 1983009808
        %v6624 = vunpack.c.0.s8 %v6623
        %v6625 = vlaneseq
        %v6626 = vshrl.u32 %v6625, 7
        %v6627 = vsub.s32 %v6624, %v6626
        %v6628 = vrot.slane %v5760, %v6627
        %v6629 = vcombine.low %v5761, %v5762
        %v6630 = vcombine.low %v5763, %v5764
        %v6632 = vunpack.c.l.s4 1983009808
        %v6633 = vunpack.c.0.s8 %v6632
        %v6634 = vlaneseq
        %v6635 = vshrl.u32 %v6634, 7
        %v6636 = vsub.s32 %v6633, %v6635
        %v6637 = vrot.slane %v6629, %v6636
        %v6639 = vunpack.c.l.s4 1983009808
        %v6640 = vunpack.c.0.s8 %v6639
        %v6641 = vlaneseq
        %v6642 = vshrl.u32 %v6641, 7
        %v6643 = vsub.s32 %v6640, %v6642
        %v6644 = vrot.slane %v6630, %v6643
        %v6645 = vcombine.low %v6637, %v6644
        %v6646 = vcombine.low %v5765, %v5766
        %v6647 = vcombine.low %v5767, %v5768
        %v6649 = vunpack.c.l.s4 1983009808
        %v6650 = vunpack.c.0.s8 %v6649
        %v6651 = vlaneseq
        %v6652 = vshrl.u32 %v6651, 7
        %v6653 = vsub.s32 %v6650, %v6652
        %v6654 = vrot.slane %v6646, %v6653
        %v6656 = vunpack.c.l.s4 1983009808
        %v6657 = vunpack.c.0.s8 %v6656
        %v6658 = vlaneseq
        %v6659 = vshrl.u32 %v6658, 7
        %v6660 = vsub.s32 %v6657, %v6659
        %v6661 = vrot.slane %v6647, %v6660
        %v6662 = vcombine.low %v6654, %v6661
        %v6664 = vunpack.c.l.s4 1983009808
        %v6665 = vunpack.c.0.s8 %v6664
        %v6666 = vlaneseq
        %v6667 = vshrl.u32 %v6666, 7
        %v6668 = vsub.s32 %v6665, %v6667
        %v6669 = vrot.slane %v5769, %v6668
        %v6724 = vpack.c.bf16 %v5965, %v5948
        %v6725 = vpack.c.bf16 %v5972, %v5972
        %v6726 = vpack.c.bf16 %v6006, %v5989
        %v6727 = vpack.c.bf16 %v6013, %v6013
        %v6728 = vpack.c.bf16 %v6047, %v6030
        %v6729 = vpack.c.bf16 %v6054, %v6054
        %v6730 = vpack.c.bf16 %v6088, %v6071
        %v6731 = vpack.c.bf16 %v6095, %v6095
        %v6732 = vpack.c.bf16 %v6129, %v6112
        %v6733 = vpack.c.bf16 %v6136, %v6136
        %v6734 = vpack.c.bf16 %v6170, %v6153
        %v6735 = vpack.c.bf16 %v6177, %v6177
        %v6736 = vpack.c.bf16 %v6211, %v6194
        %v6737 = vpack.c.bf16 %v6218, %v6218
        %v6738 = vpack.c.bf16 %v6252, %v6235
        %v6739 = vpack.c.bf16 %v6259, %v6259
        %v6740 = vpack.c.bf16 %v6293, %v6276
        %v6741 = vpack.c.bf16 %v6300, %v6300
        %v6742 = vpack.c.bf16 %v6334, %v6317
        %v6743 = vpack.c.bf16 %v6341, %v6341
        %v6744 = vpack.c.bf16 %v6375, %v6358
        %v6745 = vpack.c.bf16 %v6382, %v6382
        %v6746 = vpack.c.bf16 %v6416, %v6399
        %v6747 = vpack.c.bf16 %v6423, %v6423
        %v6748 = vpack.c.bf16 %v6457, %v6440
        %v6749 = vpack.c.bf16 %v6464, %v6464
        %v6750 = vpack.c.bf16 %v6498, %v6481
        %v6751 = vpack.c.bf16 %v6505, %v6505
        %v6752 = vpack.c.bf16 %v6539, %v6522
        %v6753 = vpack.c.bf16 %v6546, %v6546
        %v6754 = vpack.c.bf16 %v6580, %v6563
        %v6755 = vpack.c.bf16 %v6587, %v6587
        %v6756 = vpack.c.bf16 %v6621, %v6604
        %v6757 = vpack.c.bf16 %v6628, %v6628
        %v6758 = vpack.c.bf16 %v6662, %v6645
        %v6759 = vpack.c.bf16 %v6669, %v6669
        %v6760 = vld [vmem:[%s5] sm:$0xf]
        %vm6761 = vsmask.f32 7424
        %v6763 = vshrl.u32 %v6724, 16
        %v6765 = vshll.u32 %v6724, 16
        %v6767 = vrot.slane %v6765, 1
        %v6768 = vor.u32 %v6763, %v6767
        %v6770 = vshll.u32 %v6725, 16
        %v6772 = vrot.slane %v6770, 1
        %v6773 = vsel %vm6761, %v6768, %v6772
        %v6775 = vshrl.u32 %v6726, 16
        %v6777 = vshll.u32 %v6726, 16
        %v6779 = vrot.slane %v6777, 1
        %v6780 = vor.u32 %v6775, %v6779
        %v6782 = vshll.u32 %v6727, 16
        %v6784 = vrot.slane %v6782, 1
        %v6785 = vsel %vm6761, %v6780, %v6784
        %v6787 = vshrl.u32 %v6728, 16
        %v6789 = vshll.u32 %v6728, 16
        %v6791 = vrot.slane %v6789, 1
        %v6792 = vor.u32 %v6787, %v6791
        %v6794 = vshll.u32 %v6729, 16
        %v6796 = vrot.slane %v6794, 1
        %v6797 = vsel %vm6761, %v6792, %v6796
        %v6799 = vshrl.u32 %v6730, 16
        %v6801 = vshll.u32 %v6730, 16
        %v6803 = vrot.slane %v6801, 1
        %v6804 = vor.u32 %v6799, %v6803
        %v6806 = vshll.u32 %v6731, 16
        %v6808 = vrot.slane %v6806, 1
        %v6809 = vsel %vm6761, %v6804, %v6808
        %v6811 = vshrl.u32 %v6732, 16
        %v6813 = vshll.u32 %v6732, 16
        %v6815 = vrot.slane %v6813, 1
        %v6816 = vor.u32 %v6811, %v6815
        %v6818 = vshll.u32 %v6733, 16
        %v6820 = vrot.slane %v6818, 1
        %v6821 = vsel %vm6761, %v6816, %v6820
        %v6823 = vshrl.u32 %v6734, 16
        %v6825 = vshll.u32 %v6734, 16
        %v6827 = vrot.slane %v6825, 1
        %v6828 = vor.u32 %v6823, %v6827
        %v6830 = vshll.u32 %v6735, 16
        %v6832 = vrot.slane %v6830, 1
        %v6833 = vsel %vm6761, %v6828, %v6832
        %v6835 = vshrl.u32 %v6736, 16
        %v6837 = vshll.u32 %v6736, 16
        %v6839 = vrot.slane %v6837, 1
        %v6840 = vor.u32 %v6835, %v6839
        %v6842 = vshll.u32 %v6737, 16
        %v6844 = vrot.slane %v6842, 1
        %v6845 = vsel %vm6761, %v6840, %v6844
        %v6847 = vshrl.u32 %v6738, 16
        %v6849 = vshll.u32 %v6738, 16
        %v6851 = vrot.slane %v6849, 1
        %v6852 = vor.u32 %v6847, %v6851
        %v6854 = vshll.u32 %v6739, 16
        %v6856 = vrot.slane %v6854, 1
        %v6857 = vsel %vm6761, %v6852, %v6856
        %v6859 = vshrl.u32 %v6740, 16
        %v6861 = vshll.u32 %v6740, 16
        %v6863 = vrot.slane %v6861, 1
        %v6864 = vor.u32 %v6859, %v6863
        %v6866 = vshll.u32 %v6741, 16
        %v6868 = vrot.slane %v6866, 1
        %v6869 = vsel %vm6761, %v6864, %v6868
        %v6871 = vshrl.u32 %v6742, 16
        %v6873 = vshll.u32 %v6742, 16
        %v6875 = vrot.slane %v6873, 1
        %v6876 = vor.u32 %v6871, %v6875
        %v6878 = vshll.u32 %v6743, 16
        %v6880 = vrot.slane %v6878, 1
        %v6881 = vsel %vm6761, %v6876, %v6880
        %v6883 = vshrl.u32 %v6744, 16
        %v6885 = vshll.u32 %v6744, 16
        %v6887 = vrot.slane %v6885, 1
        %v6888 = vor.u32 %v6883, %v6887
        %v6890 = vshll.u32 %v6745, 16
        %v6892 = vrot.slane %v6890, 1
        %v6893 = vsel %vm6761, %v6888, %v6892
        %v6895 = vshrl.u32 %v6746, 16
        %v6897 = vshll.u32 %v6746, 16
        %v6899 = vrot.slane %v6897, 1
        %v6900 = vor.u32 %v6895, %v6899
        %v6902 = vshll.u32 %v6747, 16
        %v6904 = vrot.slane %v6902, 1
        %v6905 = vsel %vm6761, %v6900, %v6904
        %v6907 = vshrl.u32 %v6748, 16
        %v6909 = vshll.u32 %v6748, 16
        %v6911 = vrot.slane %v6909, 1
        %v6912 = vor.u32 %v6907, %v6911
        %v6914 = vshll.u32 %v6749, 16
        %v6916 = vrot.slane %v6914, 1
        %v6917 = vsel %vm6761, %v6912, %v6916
        %v6919 = vshrl.u32 %v6750, 16
        %v6921 = vshll.u32 %v6750, 16
        %v6923 = vrot.slane %v6921, 1
        %v6924 = vor.u32 %v6919, %v6923
        %v6926 = vshll.u32 %v6751, 16
        %v6928 = vrot.slane %v6926, 1
        %v6929 = vsel %vm6761, %v6924, %v6928
        %v6931 = vshrl.u32 %v6752, 16
        %v6933 = vshll.u32 %v6752, 16
        %v6935 = vrot.slane %v6933, 1
        %v6936 = vor.u32 %v6931, %v6935
        %v6938 = vshll.u32 %v6753, 16
        %v6940 = vrot.slane %v6938, 1
        %v6941 = vsel %vm6761, %v6936, %v6940
        %v6943 = vshrl.u32 %v6754, 16
        %v6945 = vshll.u32 %v6754, 16
        %v6947 = vrot.slane %v6945, 1
        %v6948 = vor.u32 %v6943, %v6947
        %v6950 = vshll.u32 %v6755, 16
        %v6952 = vrot.slane %v6950, 1
        %v6953 = vsel %vm6761, %v6948, %v6952
        %s6954 = scalar_lea.vmem %s5, 4
        %v6955 = vld [vmem:[%s6954] sm:$0xf]
        %vm6956 = vcmask 64512
        %v6958 = vsel %vm6956, %v6773, 0
        %v6961 = vsel %vm6956, %v6785, 0
        %v6964 = vsel %vm6956, %v6797, 0
        %v6967 = vsel %vm6956, %v6809, 0
        %v6970 = vsel %vm6956, %v6821, 0
        %v6973 = vsel %vm6956, %v6833, 0
        %v6976 = vsel %vm6956, %v6845, 0
        %v6979 = vsel %vm6956, %v6857, 0
        %v6982 = vsel %vm6956, %v6869, 0
        %v6985 = vsel %vm6956, %v6881, 0
        %v6988 = vsel %vm6956, %v6893, 0
        %v6991 = vsel %vm6956, %v6905, 0
        %v6994 = vsel %vm6956, %v6917, 0
        %v6997 = vsel %vm6956, %v6929, 0
        %v7000 = vsel %vm6956, %v6941, 0
        %v7003 = vsel %vm6956, %v6953, 0
        %vm7005 = vcmask 1043456
        %v7007 = vsel %vm7005, %v6955, 0
        %7009 = vmatprep.subr.bf16.mxu0 0
        %7010 = vmatpush1.bf16.msra.mxu0 %v7007
        %7011 = vmatprep.subr.bf16.mxu0 0
        %7012 = vmatpush1.bf16.msra.mxu0 0
        %7013 = vmatprep.subr.bf16.mxu0 0
        %7014 = vmatpush1.bf16.msra.mxu0 0
        %7015 = vmatprep.subr.bf16.mxu0 0
        %7016 = vmatpush1.bf16.msra.mxu0 0
        %7017 = vmatprep.subr.bf16.mxu0 0
        %7018 = vmatpush1.bf16.msra.mxu0 0
        %7019 = vmatprep.subr.bf16.mxu0 0
        %7020 = vmatpush1.bf16.msra.mxu0 0
        %7021 = vmatprep.subr.bf16.mxu0 0
        %7022 = vmatpush1.bf16.msra.mxu0 0
        %7023 = vmatprep.subr.bf16.mxu0 0
        %7024 = vmatpush1.bf16.msra.mxu0 0
        %7025 = vmatprep.subr.bf16.mxu0 0
        %7026 = vmatpush1.bf16.msra.mxu0 0
        %7027 = vmatprep.subr.bf16.mxu0 0
        %7028 = vmatpush1.bf16.msra.mxu0 0
        %7029 = vmatprep.subr.bf16.mxu0 0
        %7030 = vmatpush1.bf16.msra.mxu0 0
        %7031 = vmatprep.subr.bf16.mxu0 0
        %7032 = vmatpush1.bf16.msra.mxu0 0
        %7033 = vmatprep.subr.bf16.mxu0 0
        %7034 = vmatpush1.bf16.msra.mxu0 0
        %7035 = vmatprep.subr.bf16.mxu0 0
        %7036 = vmatpush1.bf16.msra.mxu0 0
        %7037 = vmatprep.subr.bf16.mxu0 0
        %7038 = vmatpush1.bf16.msra.mxu0 0
        %7039 = vmatprep.subr.bf16.mxu0 0
        %7040 = vmatpush1.bf16.msra.mxu0 0
        %7041 = vmatprep.mubr.bf16.mxu0 0
        %7042 = vmatmul.mubr.bf16.gmra.mrb[0].mxu0 %v6958
        %v7043 = vpop.f32.mrb[0].mxu0
        %v7044 = vadd.f32 0.0, %v7043
        %v7045 = vpop.f32.mrb[0].mxu0
        %v7046 = vpop.f32.mrb[0].mxu0
        %v7047 = vadd.f32 0.0, %v7046
        %v7048 = vpop.f32.mrb[0].mxu0
        %7049 = vmatprep.mubr.bf16.mxu0 0
        %7050 = vmatmul.mubr.bf16.gmra.mrb[0].mxu0 %v6961
        %v7051 = vpop.f32.mrb[0].mxu0
        %v7052 = vadd.f32 0.0, %v7051
        %v7053 = vpop.f32.mrb[0].mxu0
        %v7054 = vpop.f32.mrb[0].mxu0
        %v7055 = vadd.f32 0.0, %v7054
        %v7056 = vpop.f32.mrb[0].mxu0
        %7057 = vmatprep.mubr.bf16.mxu0 0
        %7058 = vmatmul.mubr.bf16.gmra.mrb[0].mxu0 %v6964
        %v7059 = vpop.f32.mrb[0].mxu0
        %v7060 = vadd.f32 0.0, %v7059
        %v7061 = vpop.f32.mrb[0].mxu0
        %v7062 = vpop.f32.mrb[0].mxu0
        %v7063 = vadd.f32 0.0, %v7062
        %v7064 = vpop.f32.mrb[0].mxu0
        %7065 = vmatprep.mubr.bf16.mxu0 0
        %7066 = vmatmul.mubr.bf16.gmra.mrb[0].mxu0 %v6967
        %v7067 = vpop.f32.mrb[0].mxu0
        %v7068 = vadd.f32 0.0, %v7067
        %v7069 = vpop.f32.mrb[0].mxu0
        %v7070 = vpop.f32.mrb[0].mxu0
        %v7071 = vadd.f32 0.0, %v7070
        %v7072 = vpop.f32.mrb[0].mxu0
        %7073 = vmatprep.mubr.bf16.mxu0 0
        %7074 = vmatmul.mubr.bf16.gmra.mrb[0].mxu0 %v6970
        %v7075 = vpop.f32.mrb[0].mxu0
        %v7076 = vadd.f32 0.0, %v7075
        %v7077 = vpop.f32.mrb[0].mxu0
        %v7078 = vpop.f32.mrb[0].mxu0
        %v7079 = vadd.f32 0.0, %v7078
        %v7080 = vpop.f32.mrb[0].mxu0
        %7081 = vmatprep.mubr.bf16.mxu0 0
        %7082 = vmatmul.mubr.bf16.gmra.mrb[0].mxu0 %v6973
        %v7083 = vpop.f32.mrb[0].mxu0
        %v7084 = vadd.f32 0.0, %v7083
        %v7085 = vpop.f32.mrb[0].mxu0
        %v7086 = vpop.f32.mrb[0].mxu0
        %v7087 = vadd.f32 0.0, %v7086
        %v7088 = vpop.f32.mrb[0].mxu0
        %7089 = vmatprep.mubr.bf16.mxu0 0
        %7090 = vmatmul.mubr.bf16.gmra.mrb[0].mxu0 %v6976
        %v7091 = vpop.f32.mrb[0].mxu0
        %v7092 = vadd.f32 0.0, %v7091
        %v7093 = vpop.f32.mrb[0].mxu0
        %v7094 = vpop.f32.mrb[0].mxu0
        %v7095 = vadd.f32 0.0, %v7094
        %v7096 = vpop.f32.mrb[0].mxu0
        %7097 = vmatprep.mubr.bf16.mxu0 0
        %7098 = vmatmul.mubr.bf16.gmra.mrb[0].mxu0 %v6979
        %v7099 = vpop.f32.mrb[0].mxu0
        %v7100 = vadd.f32 0.0, %v7099
        %v7101 = vpop.f32.mrb[0].mxu0
        %v7102 = vpop.f32.mrb[0].mxu0
        %v7103 = vadd.f32 0.0, %v7102
        %v7104 = vpop.f32.mrb[0].mxu0
        %7105 = vmatprep.mubr.bf16.mxu0 0
        %7106 = vmatmul.mubr.bf16.gmra.mrb[0].mxu0 %v6982
        %v7107 = vpop.f32.mrb[0].mxu0
        %v7108 = vadd.f32 0.0, %v7107
        %v7109 = vpop.f32.mrb[0].mxu0
        %v7110 = vpop.f32.mrb[0].mxu0
        %v7111 = vadd.f32 0.0, %v7110
        %v7112 = vpop.f32.mrb[0].mxu0
        %7113 = vmatprep.mubr.bf16.mxu0 0
        %7114 = vmatmul.mubr.bf16.gmra.mrb[0].mxu0 %v6985
        %v7115 = vpop.f32.mrb[0].mxu0
        %v7116 = vadd.f32 0.0, %v7115
        %v7117 = vpop.f32.mrb[0].mxu0
        %v7118 = vpop.f32.mrb[0].mxu0
        %v7119 = vadd.f32 0.0, %v7118
        %v7120 = vpop.f32.mrb[0].mxu0
        %7121 = vmatprep.mubr.bf16.mxu0 0
        %7122 = vmatmul.mubr.bf16.gmra.mrb[0].mxu0 %v6988
        %v7123 = vpop.f32.mrb[0].mxu0
        %v7124 = vadd.f32 0.0, %v7123
        %v7125 = vpop.f32.mrb[0].mxu0
        %v7126 = vpop.f32.mrb[0].mxu0
        %v7127 = vadd.f32 0.0, %v7126
        %v7128 = vpop.f32.mrb[0].mxu0
        %7129 = vmatprep.mubr.bf16.mxu0 0
        %7130 = vmatmul.mubr.bf16.gmra.mrb[0].mxu0 %v6991
        %v7131 = vpop.f32.mrb[0].mxu0
        %v7132 = vadd.f32 0.0, %v7131
        %v7133 = vpop.f32.mrb[0].mxu0
        %v7134 = vpop.f32.mrb[0].mxu0
        %v7135 = vadd.f32 0.0, %v7134
        %v7136 = vpop.f32.mrb[0].mxu0
        %7137 = vmatprep.mubr.bf16.mxu0 0
        %7138 = vmatmul.mubr.bf16.gmra.mrb[0].mxu0 %v6994
        %v7139 = vpop.f32.mrb[0].mxu0
        %v7140 = vadd.f32 0.0, %v7139
        %v7141 = vpop.f32.mrb[0].mxu0
        %v7142 = vpop.f32.mrb[0].mxu0
        %v7143 = vadd.f32 0.0, %v7142
        %v7144 = vpop.f32.mrb[0].mxu0
        %7145 = vmatprep.mubr.bf16.mxu0 0
        %7146 = vmatmul.mubr.bf16.gmra.mrb[0].mxu0 %v6997
        %v7147 = vpop.f32.mrb[0].mxu0
        %v7148 = vadd.f32 0.0, %v7147
        %v7149 = vpop.f32.mrb[0].mxu0
        %v7150 = vpop.f32.mrb[0].mxu0
        %v7151 = vadd.f32 0.0, %v7150
        %v7152 = vpop.f32.mrb[0].mxu0
        %7153 = vmatprep.mubr.bf16.mxu0 0
        %7154 = vmatmul.mubr.bf16.gmra.mrb[0].mxu0 %v7000
        %v7155 = vpop.f32.mrb[0].mxu0
        %v7156 = vadd.f32 0.0, %v7155
        %v7157 = vpop.f32.mrb[0].mxu0
        %v7158 = vpop.f32.mrb[0].mxu0
        %v7159 = vadd.f32 0.0, %v7158
        %v7160 = vpop.f32.mrb[0].mxu0
        %7161 = vmatprep.mubr.bf16.mxu0 0
        %7162 = vmatmul.mubr.bf16.gmra.mrb[0].mxu0 %v7003
        %v7163 = vpop.f32.mrb[0].mxu0
        %v7164 = vadd.f32 0.0, %v7163
        %v7165 = vpop.f32.mrb[0].mxu0
        %v7166 = vpop.f32.mrb[0].mxu0
        %v7167 = vadd.f32 0.0, %v7166
        %v7168 = vpop.f32.mrb[0].mxu0
        %7169 = vdwg.mxu0
        %v7170 = vsel %vm6956, %v6724, 0
        %v7172 = vsel %vm6956, %v6726, 0
        %v7174 = vsel %vm6956, %v6728, 0
        %v7176 = vsel %vm6956, %v6730, 0
        %v7178 = vsel %vm6956, %v6732, 0
        %v7180 = vsel %vm6956, %v6734, 0
        %v7182 = vsel %vm6956, %v6736, 0
        %v7184 = vsel %vm6956, %v6738, 0
        %v7186 = vsel %vm6956, %v6740, 0
        %v7188 = vsel %vm6956, %v6742, 0
        %v7190 = vsel %vm6956, %v6744, 0
        %v7192 = vsel %vm6956, %v6746, 0
        %v7194 = vsel %vm6956, %v6748, 0
        %v7196 = vsel %vm6956, %v6750, 0
        %v7198 = vsel %vm6956, %v6752, 0
        %v7200 = vsel %vm6956, %v6754, 0
        %v7203 = vsel %vm7005, %v6760, 0
        %7205 = vmatprep.subr.bf16.mxu0 0
        %7206 = vmatpush1.bf16.msra.mxu0 %v7203
        %7207 = vmatprep.subr.bf16.mxu0 0
        %7208 = vmatpush1.bf16.msra.mxu0 0
        %7209 = vmatprep.subr.bf16.mxu0 0
        %7210 = vmatpush1.bf16.msra.mxu0 0
        %7211 = vmatprep.subr.bf16.mxu0 0
        %7212 = vmatpush1.bf16.msra.mxu0 0
        %7213 = vmatprep.subr.bf16.mxu0 0
        %7214 = vmatpush1.bf16.msra.mxu0 0
        %7215 = vmatprep.subr.bf16.mxu0 0
        %7216 = vmatpush1.bf16.msra.mxu0 0
        %7217 = vmatprep.subr.bf16.mxu0 0
        %7218 = vmatpush1.bf16.msra.mxu0 0
        %7219 = vmatprep.subr.bf16.mxu0 0
        %7220 = vmatpush1.bf16.msra.mxu0 0
        %7221 = vmatprep.subr.bf16.mxu0 0
        %7222 = vmatpush1.bf16.msra.mxu0 0
        %7223 = vmatprep.subr.bf16.mxu0 0
        %7224 = vmatpush1.bf16.msra.mxu0 0
        %7225 = vmatprep.subr.bf16.mxu0 0
        %7226 = vmatpush1.bf16.msra.mxu0 0
        %7227 = vmatprep.subr.bf16.mxu0 0
        %7228 = vmatpush1.bf16.msra.mxu0 0
        %7229 = vmatprep.subr.bf16.mxu0 0
        %7230 = vmatpush1.bf16.msra.mxu0 0
        %7231 = vmatprep.subr.bf16.mxu0 0
        %7232 = vmatpush1.bf16.msra.mxu0 0
        %7233 = vmatprep.subr.bf16.mxu0 0
        %7234 = vmatpush1.bf16.msra.mxu0 0
        %7235 = vmatprep.subr.bf16.mxu0 0
        %7236 = vmatpush1.bf16.msra.mxu0 0
        %7237 = vmatprep.mubr.bf16.mxu0 0
        %7238 = vmatmul.mubr.bf16.gmra.mrb[0].mxu0 %v7170
        %v7239 = vpop.f32.mrb[0].mxu0
        %v7240 = vadd.f32 %v7044, %v7239
        %v7241 = vpop.f32.mrb[0].mxu0
        %v7242 = vpop.f32.mrb[0].mxu0
        %v7243 = vadd.f32 %v7047, %v7242
        %v7244 = vpop.f32.mrb[0].mxu0
        %7245 = vmatprep.mubr.bf16.mxu0 0
        %7246 = vmatmul.mubr.bf16.gmra.mrb[0].mxu0 %v7172
        %v7247 = vpop.f32.mrb[0].mxu0
        %v7248 = vadd.f32 %v7052, %v7247
        %v7249 = vpop.f32.mrb[0].mxu0
        %v7250 = vpop.f32.mrb[0].mxu0
        %v7251 = vadd.f32 %v7055, %v7250
        %v7252 = vpop.f32.mrb[0].mxu0
        %7253 = vmatprep.mubr.bf16.mxu0 0
        %7254 = vmatmul.mubr.bf16.gmra.mrb[0].mxu0 %v7174
        %v7255 = vpop.f32.mrb[0].mxu0
        %v7256 = vadd.f32 %v7060, %v7255
        %v7257 = vpop.f32.mrb[0].mxu0
        %v7258 = vpop.f32.mrb[0].mxu0
        %v7259 = vadd.f32 %v7063, %v7258
        %v7260 = vpop.f32.mrb[0].mxu0
        %7261 = vmatprep.mubr.bf16.mxu0 0
        %7262 = vmatmul.mubr.bf16.gmra.mrb[0].mxu0 %v7176
        %v7263 = vpop.f32.mrb[0].mxu0
        %v7264 = vadd.f32 %v7068, %v7263
        %v7265 = vpop.f32.mrb[0].mxu0
        %v7266 = vpop.f32.mrb[0].mxu0
        %v7267 = vadd.f32 %v7071, %v7266
        %v7268 = vpop.f32.mrb[0].mxu0
        %7269 = vmatprep.mubr.bf16.mxu0 0
        %7270 = vmatmul.mubr.bf16.gmra.mrb[0].mxu0 %v7178
        %v7271 = vpop.f32.mrb[0].mxu0
        %v7272 = vadd.f32 %v7076, %v7271
        %v7273 = vpop.f32.mrb[0].mxu0
        %v7274 = vpop.f32.mrb[0].mxu0
        %v7275 = vadd.f32 %v7079, %v7274
        %v7276 = vpop.f32.mrb[0].mxu0
        %7277 = vmatprep.mubr.bf16.mxu0 0
        %7278 = vmatmul.mubr.bf16.gmra.mrb[0].mxu0 %v7180
        %v7279 = vpop.f32.mrb[0].mxu0
        %v7280 = vadd.f32 %v7084, %v7279
        %v7281 = vpop.f32.mrb[0].mxu0
        %v7282 = vpop.f32.mrb[0].mxu0
        %v7283 = vadd.f32 %v7087, %v7282
        %v7284 = vpop.f32.mrb[0].mxu0
        %7285 = vmatprep.mubr.bf16.mxu0 0
        %7286 = vmatmul.mubr.bf16.gmra.mrb[0].mxu0 %v7182
        %v7287 = vpop.f32.mrb[0].mxu0
        %v7288 = vadd.f32 %v7092, %v7287
        %v7289 = vpop.f32.mrb[0].mxu0
        %v7290 = vpop.f32.mrb[0].mxu0
        %v7291 = vadd.f32 %v7095, %v7290
        %v7292 = vpop.f32.mrb[0].mxu0
        %7293 = vmatprep.mubr.bf16.mxu0 0
        %7294 = vmatmul.mubr.bf16.gmra.mrb[0].mxu0 %v7184
        %v7295 = vpop.f32.mrb[0].mxu0
        %v7296 = vadd.f32 %v7100, %v7295
        %v7297 = vpop.f32.mrb[0].mxu0
        %v7298 = vpop.f32.mrb[0].mxu0
        %v7299 = vadd.f32 %v7103, %v7298
        %v7300 = vpop.f32.mrb[0].mxu0
        %7301 = vmatprep.mubr.bf16.mxu0 0
        %7302 = vmatmul.mubr.bf16.gmra.mrb[0].mxu0 %v7186
        %v7303 = vpop.f32.mrb[0].mxu0
        %v7304 = vadd.f32 %v7108, %v7303
        %v7305 = vpop.f32.mrb[0].mxu0
        %v7306 = vpop.f32.mrb[0].mxu0
        %v7307 = vadd.f32 %v7111, %v7306
        %v7308 = vpop.f32.mrb[0].mxu0
        %7309 = vmatprep.mubr.bf16.mxu0 0
        %7310 = vmatmul.mubr.bf16.gmra.mrb[0].mxu0 %v7188
        %v7311 = vpop.f32.mrb[0].mxu0
        %v7312 = vadd.f32 %v7116, %v7311
        %v7313 = vpop.f32.mrb[0].mxu0
        %v7314 = vpop.f32.mrb[0].mxu0
        %v7315 = vadd.f32 %v7119, %v7314
        %v7316 = vpop.f32.mrb[0].mxu0
        %7317 = vmatprep.mubr.bf16.mxu0 0
        %7318 = vmatmul.mubr.bf16.gmra.mrb[0].mxu0 %v7190
        %v7319 = vpop.f32.mrb[0].mxu0
        %v7320 = vadd.f32 %v7124, %v7319
        %v7321 = vpop.f32.mrb[0].mxu0
        %v7322 = vpop.f32.mrb[0].mxu0
        %v7323 = vadd.f32 %v7127, %v7322
        %v7324 = vpop.f32.mrb[0].mxu0
        %7325 = vmatprep.mubr.bf16.mxu0 0
        %7326 = vmatmul.mubr.bf16.gmra.mrb[0].mxu0 %v7192
        %v7327 = vpop.f32.mrb[0].mxu0
        %v7328 = vadd.f32 %v7132, %v7327
        %v7329 = vpop.f32.mrb[0].mxu0
        %v7330 = vpop.f32.mrb[0].mxu0
        %v7331 = vadd.f32 %v7135, %v7330
        %v7332 = vpop.f32.mrb[0].mxu0
        %7333 = vmatprep.mubr.bf16.mxu0 0
        %7334 = vmatmul.mubr.bf16.gmra.mrb[0].mxu0 %v7194
        %v7335 = vpop.f32.mrb[0].mxu0
        %v7336 = vadd.f32 %v7140, %v7335
        %v7337 = vpop.f32.mrb[0].mxu0
        %v7338 = vpop.f32.mrb[0].mxu0
        %v7339 = vadd.f32 %v7143, %v7338
        %v7340 = vpop.f32.mrb[0].mxu0
        %7341 = vmatprep.mubr.bf16.mxu0 0
        %7342 = vmatmul.mubr.bf16.gmra.mrb[0].mxu0 %v7196
        %v7343 = vpop.f32.mrb[0].mxu0
        %v7344 = vadd.f32 %v7148, %v7343
        %v7345 = vpop.f32.mrb[0].mxu0
        %v7346 = vpop.f32.mrb[0].mxu0
        %v7347 = vadd.f32 %v7151, %v7346
        %v7348 = vpop.f32.mrb[0].mxu0
        %7349 = vmatprep.mubr.bf16.mxu0 0
        %7350 = vmatmul.mubr.bf16.gmra.mrb[0].mxu0 %v7198
        %v7351 = vpop.f32.mrb[0].mxu0
        %v7352 = vadd.f32 %v7156, %v7351
        %v7353 = vpop.f32.mrb[0].mxu0
        %v7354 = vpop.f32.mrb[0].mxu0
        %v7355 = vadd.f32 %v7159, %v7354
        %v7356 = vpop.f32.mrb[0].mxu0
        %7357 = vmatprep.mubr.bf16.mxu0 0
        %7358 = vmatmul.mubr.bf16.gmra.mrb[0].mxu0 %v7200
        %v7359 = vpop.f32.mrb[0].mxu0
        %v7360 = vadd.f32 %v7164, %v7359
        %v7361 = vpop.f32.mrb[0].mxu0
        %v7362 = vpop.f32.mrb[0].mxu0
        %v7363 = vadd.f32 %v7167, %v7362
        %v7364 = vpop.f32.mrb[0].mxu0
        %7365 = vdwg.mxu0
        %vm7398 = vcmask 1046528
        %v7399 = vrot.slane %v6724, 1
        %v7400 = vrot.slane %v6725, 1
        %v7401 = vsel %vm7398, %v7399, %v7400
        %v7402 = vrot.slane %v6726, 1
        %v7403 = vrot.slane %v6727, 1
        %v7404 = vsel %vm7398, %v7402, %v7403
        %v7405 = vrot.slane %v6728, 1
        %v7406 = vrot.slane %v6729, 1
        %v7407 = vsel %vm7398, %v7405, %v7406
        %v7408 = vrot.slane %v6730, 1
        %v7409 = vrot.slane %v6731, 1
        %v7410 = vsel %vm7398, %v7408, %v7409
        %v7411 = vrot.slane %v6732, 1
        %v7412 = vrot.slane %v6733, 1
        %v7413 = vsel %vm7398, %v7411, %v7412
        %v7414 = vrot.slane %v6734, 1
        %v7415 = vrot.slane %v6735, 1
        %v7416 = vsel %vm7398, %v7414, %v7415
        %v7417 = vrot.slane %v6736, 1
        %v7418 = vrot.slane %v6737, 1
        %v7419 = vsel %vm7398, %v7417, %v7418
        %v7420 = vrot.slane %v6738, 1
        %v7421 = vrot.slane %v6739, 1
        %v7422 = vsel %vm7398, %v7420, %v7421
        %v7423 = vrot.slane %v6740, 1
        %v7424 = vrot.slane %v6741, 1
        %v7425 = vsel %vm7398, %v7423, %v7424
        %v7426 = vrot.slane %v6742, 1
        %v7427 = vrot.slane %v6743, 1
        %v7428 = vsel %vm7398, %v7426, %v7427
        %v7429 = vrot.slane %v6744, 1
        %v7430 = vrot.slane %v6745, 1
        %v7431 = vsel %vm7398, %v7429, %v7430
        %v7432 = vrot.slane %v6746, 1
        %v7433 = vrot.slane %v6747, 1
        %v7434 = vsel %vm7398, %v7432, %v7433
        %v7435 = vrot.slane %v6748, 1
        %v7436 = vrot.slane %v6749, 1
        %v7437 = vsel %vm7398, %v7435, %v7436
        %v7438 = vrot.slane %v6750, 1
        %v7439 = vrot.slane %v6751, 1
        %v7440 = vsel %vm7398, %v7438, %v7439
        %v7441 = vrot.slane %v6752, 1
        %v7442 = vrot.slane %v6753, 1
        %v7443 = vsel %vm7398, %v7441, %v7442
        %v7444 = vrot.slane %v6754, 1
        %v7445 = vrot.slane %v6755, 1
        %v7446 = vsel %vm7398, %v7444, %v7445
        %s7447 = scalar_lea.vmem %s5, 8
        %v7448 = vld [vmem:[%s7447] sm:$0xf]
        %v7450 = vsel %vm6956, %v7401, 0
        %v7453 = vsel %vm6956, %v7404, 0
        %v7456 = vsel %vm6956, %v7407, 0
        %v7459 = vsel %vm6956, %v7410, 0
        %v7462 = vsel %vm6956, %v7413, 0
        %v7465 = vsel %vm6956, %v7416, 0
        %v7468 = vsel %vm6956, %v7419, 0
        %v7471 = vsel %vm6956, %v7422, 0
        %v7474 = vsel %vm6956, %v7425, 0
        %v7477 = vsel %vm6956, %v7428, 0
        %v7480 = vsel %vm6956, %v7431, 0
        %v7483 = vsel %vm6956, %v7434, 0
        %v7486 = vsel %vm6956, %v7437, 0
        %v7489 = vsel %vm6956, %v7440, 0
        %v7492 = vsel %vm6956, %v7443, 0
        %v7495 = vsel %vm6956, %v7446, 0
        %v7498 = vsel %vm7005, %v7448, 0
        %7500 = vmatprep.subr.bf16.mxu0 0
        %7501 = vmatpush1.bf16.msra.mxu0 %v7498
        %7502 = vmatprep.subr.bf16.mxu0 0
        %7503 = vmatpush1.bf16.msra.mxu0 0
        %7504 = vmatprep.subr.bf16.mxu0 0
        %7505 = vmatpush1.bf16.msra.mxu0 0
        %7506 = vmatprep.subr.bf16.mxu0 0
        %7507 = vmatpush1.bf16.msra.mxu0 0
        %7508 = vmatprep.subr.bf16.mxu0 0
        %7509 = vmatpush1.bf16.msra.mxu0 0
        %7510 = vmatprep.subr.bf16.mxu0 0
        %7511 = vmatpush1.bf16.msra.mxu0 0
        %7512 = vmatprep.subr.bf16.mxu0 0
        %7513 = vmatpush1.bf16.msra.mxu0 0
        %7514 = vmatprep.subr.bf16.mxu0 0
        %7515 = vmatpush1.bf16.msra.mxu0 0
        %7516 = vmatprep.subr.bf16.mxu0 0
        %7517 = vmatpush1.bf16.msra.mxu0 0
        %7518 = vmatprep.subr.bf16.mxu0 0
        %7519 = vmatpush1.bf16.msra.mxu0 0
        %7520 = vmatprep.subr.bf16.mxu0 0
        %7521 = vmatpush1.bf16.msra.mxu0 0
        %7522 = vmatprep.subr.bf16.mxu0 0
        %7523 = vmatpush1.bf16.msra.mxu0 0
        %7524 = vmatprep.subr.bf16.mxu0 0
        %7525 = vmatpush1.bf16.msra.mxu0 0
        %7526 = vmatprep.subr.bf16.mxu0 0
        %7527 = vmatpush1.bf16.msra.mxu0 0
        %7528 = vmatprep.subr.bf16.mxu0 0
        %7529 = vmatpush1.bf16.msra.mxu0 0
        %7530 = vmatprep.subr.bf16.mxu0 0
        %7531 = vmatpush1.bf16.msra.mxu0 0
        %7532 = vmatprep.mubr.bf16.mxu0 0
        %7533 = vmatmul.mubr.bf16.gmra.mrb[0].mxu0 %v7450
        %v7534 = vpop.f32.mrb[0].mxu0
        %v7535 = vadd.f32 0.0, %v7534
        %v7536 = vpop.f32.mrb[0].mxu0
        %v7537 = vpop.f32.mrb[0].mxu0
        %v7538 = vadd.f32 0.0, %v7537
        %v7539 = vpop.f32.mrb[0].mxu0
        %7540 = vmatprep.mubr.bf16.mxu0 0
        %7541 = vmatmul.mubr.bf16.gmra.mrb[0].mxu0 %v7453
        %v7542 = vpop.f32.mrb[0].mxu0
        %v7543 = vadd.f32 0.0, %v7542
        %v7544 = vpop.f32.mrb[0].mxu0
        %v7545 = vpop.f32.mrb[0].mxu0
        %v7546 = vadd.f32 0.0, %v7545
        %v7547 = vpop.f32.mrb[0].mxu0
        %7548 = vmatprep.mubr.bf16.mxu0 0
        %7549 = vmatmul.mubr.bf16.gmra.mrb[0].mxu0 %v7456
        %v7550 = vpop.f32.mrb[0].mxu0
        %v7551 = vadd.f32 0.0, %v7550
        %v7552 = vpop.f32.mrb[0].mxu0
        %v7553 = vpop.f32.mrb[0].mxu0
        %v7554 = vadd.f32 0.0, %v7553
        %v7555 = vpop.f32.mrb[0].mxu0
        %7556 = vmatprep.mubr.bf16.mxu0 0
        %7557 = vmatmul.mubr.bf16.gmra.mrb[0].mxu0 %v7459
        %v7558 = vpop.f32.mrb[0].mxu0
        %v7559 = vadd.f32 0.0, %v7558
        %v7560 = vpop.f32.mrb[0].mxu0
        %v7561 = vpop.f32.mrb[0].mxu0
        %v7562 = vadd.f32 0.0, %v7561
        %v7563 = vpop.f32.mrb[0].mxu0
        %7564 = vmatprep.mubr.bf16.mxu0 0
        %7565 = vmatmul.mubr.bf16.gmra.mrb[0].mxu0 %v7462
        %v7566 = vpop.f32.mrb[0].mxu0
        %v7567 = vadd.f32 0.0, %v7566
        %v7568 = vpop.f32.mrb[0].mxu0
        %v7569 = vpop.f32.mrb[0].mxu0
        %v7570 = vadd.f32 0.0, %v7569
        %v7571 = vpop.f32.mrb[0].mxu0
        %7572 = vmatprep.mubr.bf16.mxu0 0
        %7573 = vmatmul.mubr.bf16.gmra.mrb[0].mxu0 %v7465
        %v7574 = vpop.f32.mrb[0].mxu0
        %v7575 = vadd.f32 0.0, %v7574
        %v7576 = vpop.f32.mrb[0].mxu0
        %v7577 = vpop.f32.mrb[0].mxu0
        %v7578 = vadd.f32 0.0, %v7577
        %v7579 = vpop.f32.mrb[0].mxu0
        %7580 = vmatprep.mubr.bf16.mxu0 0
        %7581 = vmatmul.mubr.bf16.gmra.mrb[0].mxu0 %v7468
        %v7582 = vpop.f32.mrb[0].mxu0
        %v7583 = vadd.f32 0.0, %v7582
        %v7584 = vpop.f32.mrb[0].mxu0
        %v7585 = vpop.f32.mrb[0].mxu0
        %v7586 = vadd.f32 0.0, %v7585
        %v7587 = vpop.f32.mrb[0].mxu0
        %7588 = vmatprep.mubr.bf16.mxu0 0
        %7589 = vmatmul.mubr.bf16.gmra.mrb[0].mxu0 %v7471
        %v7590 = vpop.f32.mrb[0].mxu0
        %v7591 = vadd.f32 0.0, %v7590
        %v7592 = vpop.f32.mrb[0].mxu0
        %v7593 = vpop.f32.mrb[0].mxu0
        %v7594 = vadd.f32 0.0, %v7593
        %v7595 = vpop.f32.mrb[0].mxu0
        %7596 = vmatprep.mubr.bf16.mxu0 0
        %7597 = vmatmul.mubr.bf16.gmra.mrb[0].mxu0 %v7474
        %v7598 = vpop.f32.mrb[0].mxu0
        %v7599 = vadd.f32 0.0, %v7598
        %v7600 = vpop.f32.mrb[0].mxu0
        %v7601 = vpop.f32.mrb[0].mxu0
        %v7602 = vadd.f32 0.0, %v7601
        %v7603 = vpop.f32.mrb[0].mxu0
        %7604 = vmatprep.mubr.bf16.mxu0 0
        %7605 = vmatmul.mubr.bf16.gmra.mrb[0].mxu0 %v7477
        %v7606 = vpop.f32.mrb[0].mxu0
        %v7607 = vadd.f32 0.0, %v7606
        %v7608 = vpop.f32.mrb[0].mxu0
        %v7609 = vpop.f32.mrb[0].mxu0
        %v7610 = vadd.f32 0.0, %v7609
        %v7611 = vpop.f32.mrb[0].mxu0
        %7612 = vmatprep.mubr.bf16.mxu0 0
        %7613 = vmatmul.mubr.bf16.gmra.mrb[0].mxu0 %v7480
        %v7614 = vpop.f32.mrb[0].mxu0
        %v7615 = vadd.f32 0.0, %v7614
        %v7616 = vpop.f32.mrb[0].mxu0
        %v7617 = vpop.f32.mrb[0].mxu0
        %v7618 = vadd.f32 0.0, %v7617
        %v7619 = vpop.f32.mrb[0].mxu0
        %7620 = vmatprep.mubr.bf16.mxu0 0
        %7621 = vmatmul.mubr.bf16.gmra.mrb[0].mxu0 %v7483
        %v7622 = vpop.f32.mrb[0].mxu0
        %v7623 = vadd.f32 0.0, %v7622
        %v7624 = vpop.f32.mrb[0].mxu0
        %v7625 = vpop.f32.mrb[0].mxu0
        %v7626 = vadd.f32 0.0, %v7625
        %v7627 = vpop.f32.mrb[0].mxu0
        %7628 = vmatprep.mubr.bf16.mxu0 0
        %7629 = vmatmul.mubr.bf16.gmra.mrb[0].mxu0 %v7486
        %v7630 = vpop.f32.mrb[0].mxu0
        %v7631 = vadd.f32 0.0, %v7630
        %v7632 = vpop.f32.mrb[0].mxu0
        %v7633 = vpop.f32.mrb[0].mxu0
        %v7634 = vadd.f32 0.0, %v7633
        %v7635 = vpop.f32.mrb[0].mxu0
        %7636 = vmatprep.mubr.bf16.mxu0 0
        %7637 = vmatmul.mubr.bf16.gmra.mrb[0].mxu0 %v7489
        %v7638 = vpop.f32.mrb[0].mxu0
        %v7639 = vadd.f32 0.0, %v7638
        %v7640 = vpop.f32.mrb[0].mxu0
        %v7641 = vpop.f32.mrb[0].mxu0
        %v7642 = vadd.f32 0.0, %v7641
        %v7643 = vpop.f32.mrb[0].mxu0
        %7644 = vmatprep.mubr.bf16.mxu0 0
        %7645 = vmatmul.mubr.bf16.gmra.mrb[0].mxu0 %v7492
        %v7646 = vpop.f32.mrb[0].mxu0
        %v7647 = vadd.f32 0.0, %v7646
        %v7648 = vpop.f32.mrb[0].mxu0
        %v7649 = vpop.f32.mrb[0].mxu0
        %v7650 = vadd.f32 0.0, %v7649
        %v7651 = vpop.f32.mrb[0].mxu0
        %7652 = vmatprep.mubr.bf16.mxu0 0
        %7653 = vmatmul.mubr.bf16.gmra.mrb[0].mxu0 %v7495
        %v7654 = vpop.f32.mrb[0].mxu0
        %v7655 = vadd.f32 0.0, %v7654
        %v7656 = vpop.f32.mrb[0].mxu0
        %v7657 = vpop.f32.mrb[0].mxu0
        %v7658 = vadd.f32 0.0, %v7657
        %v7659 = vpop.f32.mrb[0].mxu0
        %7660 = vdwg.mxu0
        %v7661 = vadd.f32 %v7240, %v7535
        %v7662 = vadd.f32 %v7243, %v7538
        %v7663 = vadd.f32 %v7248, %v7543
        %v7664 = vadd.f32 %v7251, %v7546
        %v7665 = vadd.f32 %v7256, %v7551
        %v7666 = vadd.f32 %v7259, %v7554
        %v7667 = vadd.f32 %v7264, %v7559
        %v7668 = vadd.f32 %v7267, %v7562
        %v7669 = vadd.f32 %v7272, %v7567
        %v7670 = vadd.f32 %v7275, %v7570
        %v7671 = vadd.f32 %v7280, %v7575
        %v7672 = vadd.f32 %v7283, %v7578
        %v7673 = vadd.f32 %v7288, %v7583
        %v7674 = vadd.f32 %v7291, %v7586
        %v7675 = vadd.f32 %v7296, %v7591
        %v7676 = vadd.f32 %v7299, %v7594
        %v7677 = vadd.f32 %v7304, %v7599
        %v7678 = vadd.f32 %v7307, %v7602
        %v7679 = vadd.f32 %v7312, %v7607
        %v7680 = vadd.f32 %v7315, %v7610
        %v7681 = vadd.f32 %v7320, %v7615
        %v7682 = vadd.f32 %v7323, %v7618
        %v7683 = vadd.f32 %v7328, %v7623
        %v7684 = vadd.f32 %v7331, %v7626
        %v7685 = vadd.f32 %v7336, %v7631
        %v7686 = vadd.f32 %v7339, %v7634
        %v7687 = vadd.f32 %v7344, %v7639
        %v7688 = vadd.f32 %v7347, %v7642
        %v7689 = vadd.f32 %v7352, %v7647
        %v7690 = vadd.f32 %v7355, %v7650
        %v7691 = vadd.f32 %v7360, %v7655
        %v7692 = vadd.f32 %v7363, %v7658
        %s7693 = scalar_lea.vmem %s5, 12
        %v7694 = vld [vmem:[%s7693] sm:$0xf]
        %v7696 = vsel %vm6956, %v6756, 0
        %v7699 = vsel %vm7005, %v7694, 0
        %7701 = vmatprep.subr.bf16.mxu0 0
        %7702 = vmatpush1.bf16.msra.mxu0 %v7699
        %7703 = vmatprep.subr.bf16.mxu0 0
        %7704 = vmatpush1.bf16.msra.mxu0 0
        %7705 = vmatprep.subr.bf16.mxu0 0
        %7706 = vmatpush1.bf16.msra.mxu0 0
        %7707 = vmatprep.subr.bf16.mxu0 0
        %7708 = vmatpush1.bf16.msra.mxu0 0
        %7709 = vmatprep.subr.bf16.mxu0 0
        %7710 = vmatpush1.bf16.msra.mxu0 0
        %7711 = vmatprep.subr.bf16.mxu0 0
        %7712 = vmatpush1.bf16.msra.mxu0 0
        %7713 = vmatprep.subr.bf16.mxu0 0
        %7714 = vmatpush1.bf16.msra.mxu0 0
        %7715 = vmatprep.subr.bf16.mxu0 0
        %7716 = vmatpush1.bf16.msra.mxu0 0
        %7717 = vmatprep.subr.bf16.mxu0 0
        %7718 = vmatpush1.bf16.msra.mxu0 0
        %7719 = vmatprep.subr.bf16.mxu0 0
        %7720 = vmatpush1.bf16.msra.mxu0 0
        %7721 = vmatprep.subr.bf16.mxu0 0
        %7722 = vmatpush1.bf16.msra.mxu0 0
        %7723 = vmatprep.subr.bf16.mxu0 0
        %7724 = vmatpush1.bf16.msra.mxu0 0
        %7725 = vmatprep.subr.bf16.mxu0 0
        %7726 = vmatpush1.bf16.msra.mxu0 0
        %7727 = vmatprep.subr.bf16.mxu0 0
        %7728 = vmatpush1.bf16.msra.mxu0 0
        %7729 = vmatprep.subr.bf16.mxu0 0
        %7730 = vmatpush1.bf16.msra.mxu0 0
        %7731 = vmatprep.subr.bf16.mxu0 0
        %7732 = vmatpush1.bf16.msra.mxu0 0
        %7733 = vmatprep.mubr.bf16.mxu0 0
        %7734 = vmatmul.mubr.bf16.gmra.mrb[0].mxu0 %v7172
        %v7735 = vpop.f32.mrb[0].mxu0
        %v7736 = vadd.f32 0.0, %v7735
        %v7737 = vpop.f32.mrb[0].mxu0
        %v7738 = vpop.f32.mrb[0].mxu0
        %v7739 = vadd.f32 0.0, %v7738
        %v7740 = vpop.f32.mrb[0].mxu0
        %7741 = vmatprep.mubr.bf16.mxu0 0
        %7742 = vmatmul.mubr.bf16.gmra.mrb[0].mxu0 %v7174
        %v7743 = vpop.f32.mrb[0].mxu0
        %v7744 = vadd.f32 0.0, %v7743
        %v7745 = vpop.f32.mrb[0].mxu0
        %v7746 = vpop.f32.mrb[0].mxu0
        %v7747 = vadd.f32 0.0, %v7746
        %v7748 = vpop.f32.mrb[0].mxu0
        %7749 = vmatprep.mubr.bf16.mxu0 0
        %7750 = vmatmul.mubr.bf16.gmra.mrb[0].mxu0 %v7176
        %v7751 = vpop.f32.mrb[0].mxu0
        %v7752 = vadd.f32 0.0, %v7751
        %v7753 = vpop.f32.mrb[0].mxu0
        %v7754 = vpop.f32.mrb[0].mxu0
        %v7755 = vadd.f32 0.0, %v7754
        %v7756 = vpop.f32.mrb[0].mxu0
        %7757 = vmatprep.mubr.bf16.mxu0 0
        %7758 = vmatmul.mubr.bf16.gmra.mrb[0].mxu0 %v7178
        %v7759 = vpop.f32.mrb[0].mxu0
        %v7760 = vadd.f32 0.0, %v7759
        %v7761 = vpop.f32.mrb[0].mxu0
        %v7762 = vpop.f32.mrb[0].mxu0
        %v7763 = vadd.f32 0.0, %v7762
        %v7764 = vpop.f32.mrb[0].mxu0
        %7765 = vmatprep.mubr.bf16.mxu0 0
        %7766 = vmatmul.mubr.bf16.gmra.mrb[0].mxu0 %v7180
        %v7767 = vpop.f32.mrb[0].mxu0
        %v7768 = vadd.f32 0.0, %v7767
        %v7769 = vpop.f32.mrb[0].mxu0
        %v7770 = vpop.f32.mrb[0].mxu0
        %v7771 = vadd.f32 0.0, %v7770
        %v7772 = vpop.f32.mrb[0].mxu0
        %7773 = vmatprep.mubr.bf16.mxu0 0
        %7774 = vmatmul.mubr.bf16.gmra.mrb[0].mxu0 %v7182
        %v7775 = vpop.f32.mrb[0].mxu0
        %v7776 = vadd.f32 0.0, %v7775
        %v7777 = vpop.f32.mrb[0].mxu0
        %v7778 = vpop.f32.mrb[0].mxu0
        %v7779 = vadd.f32 0.0, %v7778
        %v7780 = vpop.f32.mrb[0].mxu0
        %7781 = vmatprep.mubr.bf16.mxu0 0
        %7782 = vmatmul.mubr.bf16.gmra.mrb[0].mxu0 %v7184
        %v7783 = vpop.f32.mrb[0].mxu0
        %v7784 = vadd.f32 0.0, %v7783
        %v7785 = vpop.f32.mrb[0].mxu0
        %v7786 = vpop.f32.mrb[0].mxu0
        %v7787 = vadd.f32 0.0, %v7786
        %v7788 = vpop.f32.mrb[0].mxu0
        %7789 = vmatprep.mubr.bf16.mxu0 0
        %7790 = vmatmul.mubr.bf16.gmra.mrb[0].mxu0 %v7186
        %v7791 = vpop.f32.mrb[0].mxu0
        %v7792 = vadd.f32 0.0, %v7791
        %v7793 = vpop.f32.mrb[0].mxu0
        %v7794 = vpop.f32.mrb[0].mxu0
        %v7795 = vadd.f32 0.0, %v7794
        %v7796 = vpop.f32.mrb[0].mxu0
        %7797 = vmatprep.mubr.bf16.mxu0 0
        %7798 = vmatmul.mubr.bf16.gmra.mrb[0].mxu0 %v7188
        %v7799 = vpop.f32.mrb[0].mxu0
        %v7800 = vadd.f32 0.0, %v7799
        %v7801 = vpop.f32.mrb[0].mxu0
        %v7802 = vpop.f32.mrb[0].mxu0
        %v7803 = vadd.f32 0.0, %v7802
        %v7804 = vpop.f32.mrb[0].mxu0
        %7805 = vmatprep.mubr.bf16.mxu0 0
        %7806 = vmatmul.mubr.bf16.gmra.mrb[0].mxu0 %v7190
        %v7807 = vpop.f32.mrb[0].mxu0
        %v7808 = vadd.f32 0.0, %v7807
        %v7809 = vpop.f32.mrb[0].mxu0
        %v7810 = vpop.f32.mrb[0].mxu0
        %v7811 = vadd.f32 0.0, %v7810
        %v7812 = vpop.f32.mrb[0].mxu0
        %7813 = vmatprep.mubr.bf16.mxu0 0
        %7814 = vmatmul.mubr.bf16.gmra.mrb[0].mxu0 %v7192
        %v7815 = vpop.f32.mrb[0].mxu0
        %v7816 = vadd.f32 0.0, %v7815
        %v7817 = vpop.f32.mrb[0].mxu0
        %v7818 = vpop.f32.mrb[0].mxu0
        %v7819 = vadd.f32 0.0, %v7818
        %v7820 = vpop.f32.mrb[0].mxu0
        %7821 = vmatprep.mubr.bf16.mxu0 0
        %7822 = vmatmul.mubr.bf16.gmra.mrb[0].mxu0 %v7194
        %v7823 = vpop.f32.mrb[0].mxu0
        %v7824 = vadd.f32 0.0, %v7823
        %v7825 = vpop.f32.mrb[0].mxu0
        %v7826 = vpop.f32.mrb[0].mxu0
        %v7827 = vadd.f32 0.0, %v7826
        %v7828 = vpop.f32.mrb[0].mxu0
        %7829 = vmatprep.mubr.bf16.mxu0 0
        %7830 = vmatmul.mubr.bf16.gmra.mrb[0].mxu0 %v7196
        %v7831 = vpop.f32.mrb[0].mxu0
        %v7832 = vadd.f32 0.0, %v7831
        %v7833 = vpop.f32.mrb[0].mxu0
        %v7834 = vpop.f32.mrb[0].mxu0
        %v7835 = vadd.f32 0.0, %v7834
        %v7836 = vpop.f32.mrb[0].mxu0
        %7837 = vmatprep.mubr.bf16.mxu0 0
        %7838 = vmatmul.mubr.bf16.gmra.mrb[0].mxu0 %v7198
        %v7839 = vpop.f32.mrb[0].mxu0
        %v7840 = vadd.f32 0.0, %v7839
        %v7841 = vpop.f32.mrb[0].mxu0
        %v7842 = vpop.f32.mrb[0].mxu0
        %v7843 = vadd.f32 0.0, %v7842
        %v7844 = vpop.f32.mrb[0].mxu0
        %7845 = vmatprep.mubr.bf16.mxu0 0
        %7846 = vmatmul.mubr.bf16.gmra.mrb[0].mxu0 %v7200
        %v7847 = vpop.f32.mrb[0].mxu0
        %v7848 = vadd.f32 0.0, %v7847
        %v7849 = vpop.f32.mrb[0].mxu0
        %v7850 = vpop.f32.mrb[0].mxu0
        %v7851 = vadd.f32 0.0, %v7850
        %v7852 = vpop.f32.mrb[0].mxu0
        %7853 = vmatprep.mubr.bf16.mxu0 0
        %7854 = vmatmul.mubr.bf16.gmra.mrb[0].mxu0 %v7696
        %v7855 = vpop.f32.mrb[0].mxu0
        %v7856 = vadd.f32 0.0, %v7855
        %v7857 = vpop.f32.mrb[0].mxu0
        %v7858 = vpop.f32.mrb[0].mxu0
        %v7859 = vadd.f32 0.0, %v7858
        %v7860 = vpop.f32.mrb[0].mxu0
        %7861 = vdwg.mxu0
        %v7862 = vadd.f32 %v7661, %v7736
        %v7863 = vadd.f32 %v7662, %v7739
        %v7864 = vadd.f32 %v7663, %v7744
        %v7865 = vadd.f32 %v7664, %v7747
        %v7866 = vadd.f32 %v7665, %v7752
        %v7867 = vadd.f32 %v7666, %v7755
        %v7868 = vadd.f32 %v7667, %v7760
        %v7869 = vadd.f32 %v7668, %v7763
        %v7870 = vadd.f32 %v7669, %v7768
        %v7871 = vadd.f32 %v7670, %v7771
        %v7872 = vadd.f32 %v7671, %v7776
        %v7873 = vadd.f32 %v7672, %v7779
        %v7874 = vadd.f32 %v7673, %v7784
        %v7875 = vadd.f32 %v7674, %v7787
        %v7876 = vadd.f32 %v7675, %v7792
        %v7877 = vadd.f32 %v7676, %v7795
        %v7878 = vadd.f32 %v7677, %v7800
        %v7879 = vadd.f32 %v7678, %v7803
        %v7880 = vadd.f32 %v7679, %v7808
        %v7881 = vadd.f32 %v7680, %v7811
        %v7882 = vadd.f32 %v7681, %v7816
        %v7883 = vadd.f32 %v7682, %v7819
        %v7884 = vadd.f32 %v7683, %v7824
        %v7885 = vadd.f32 %v7684, %v7827
        %v7886 = vadd.f32 %v7685, %v7832
        %v7887 = vadd.f32 %v7686, %v7835
        %v7888 = vadd.f32 %v7687, %v7840
        %v7889 = vadd.f32 %v7688, %v7843
        %v7890 = vadd.f32 %v7689, %v7848
        %v7891 = vadd.f32 %v7690, %v7851
        %v7892 = vadd.f32 %v7691, %v7856
        %v7893 = vadd.f32 %v7692, %v7859
        %v7894 = vshrl.u32 %v6756, 16
        %v7896 = vshll.u32 %v6756, 16
        %v7898 = vrot.slane %v7896, 1
        %v7899 = vor.u32 %v7894, %v7898
        %v7901 = vshll.u32 %v6757, 16
        %v7903 = vrot.slane %v7901, 1
        %v7904 = vsel %vm6761, %v7899, %v7903
        %s7905 = scalar_lea.vmem %s5, 16
        %v7906 = vld [vmem:[%s7905] sm:$0xf]
        %v7908 = vsel %vm6956, %v7904, 0
        %v7911 = vsel %vm7005, %v7906, 0
        %7913 = vmatprep.subr.bf16.mxu0 0
        %7914 = vmatpush1.bf16.msra.mxu0 %v7911
        %7915 = vmatprep.subr.bf16.mxu0 0
        %7916 = vmatpush1.bf16.msra.mxu0 0
        %7917 = vmatprep.subr.bf16.mxu0 0
        %7918 = vmatpush1.bf16.msra.mxu0 0
        %7919 = vmatprep.subr.bf16.mxu0 0
        %7920 = vmatpush1.bf16.msra.mxu0 0
        %7921 = vmatprep.subr.bf16.mxu0 0
        %7922 = vmatpush1.bf16.msra.mxu0 0
        %7923 = vmatprep.subr.bf16.mxu0 0
        %7924 = vmatpush1.bf16.msra.mxu0 0
        %7925 = vmatprep.subr.bf16.mxu0 0
        %7926 = vmatpush1.bf16.msra.mxu0 0
        %7927 = vmatprep.subr.bf16.mxu0 0
        %7928 = vmatpush1.bf16.msra.mxu0 0
        %7929 = vmatprep.subr.bf16.mxu0 0
        %7930 = vmatpush1.bf16.msra.mxu0 0
        %7931 = vmatprep.subr.bf16.mxu0 0
        %7932 = vmatpush1.bf16.msra.mxu0 0
        %7933 = vmatprep.subr.bf16.mxu0 0
        %7934 = vmatpush1.bf16.msra.mxu0 0
        %7935 = vmatprep.subr.bf16.mxu0 0
        %7936 = vmatpush1.bf16.msra.mxu0 0
        %7937 = vmatprep.subr.bf16.mxu0 0
        %7938 = vmatpush1.bf16.msra.mxu0 0
        %7939 = vmatprep.subr.bf16.mxu0 0
        %7940 = vmatpush1.bf16.msra.mxu0 0
        %7941 = vmatprep.subr.bf16.mxu0 0
        %7942 = vmatpush1.bf16.msra.mxu0 0
        %7943 = vmatprep.subr.bf16.mxu0 0
        %7944 = vmatpush1.bf16.msra.mxu0 0
        %7945 = vmatprep.mubr.bf16.mxu0 0
        %7946 = vmatmul.mubr.bf16.gmra.mrb[0].mxu0 %v6961
        %v7947 = vpop.f32.mrb[0].mxu0
        %v7948 = vadd.f32 0.0, %v7947
        %v7949 = vpop.f32.mrb[0].mxu0
        %v7950 = vpop.f32.mrb[0].mxu0
        %v7951 = vadd.f32 0.0, %v7950
        %v7952 = vpop.f32.mrb[0].mxu0
        %7953 = vmatprep.mubr.bf16.mxu0 0
        %7954 = vmatmul.mubr.bf16.gmra.mrb[0].mxu0 %v6964
        %v7955 = vpop.f32.mrb[0].mxu0
        %v7956 = vadd.f32 0.0, %v7955
        %v7957 = vpop.f32.mrb[0].mxu0
        %v7958 = vpop.f32.mrb[0].mxu0
        %v7959 = vadd.f32 0.0, %v7958
        %v7960 = vpop.f32.mrb[0].mxu0
        %7961 = vmatprep.mubr.bf16.mxu0 0
        %7962 = vmatmul.mubr.bf16.gmra.mrb[0].mxu0 %v6967
        %v7963 = vpop.f32.mrb[0].mxu0
        %v7964 = vadd.f32 0.0, %v7963
        %v7965 = vpop.f32.mrb[0].mxu0
        %v7966 = vpop.f32.mrb[0].mxu0
        %v7967 = vadd.f32 0.0, %v7966
        %v7968 = vpop.f32.mrb[0].mxu0
        %7969 = vmatprep.mubr.bf16.mxu0 0
        %7970 = vmatmul.mubr.bf16.gmra.mrb[0].mxu0 %v6970
        %v7971 = vpop.f32.mrb[0].mxu0
        %v7972 = vadd.f32 0.0, %v7971
        %v7973 = vpop.f32.mrb[0].mxu0
        %v7974 = vpop.f32.mrb[0].mxu0
        %v7975 = vadd.f32 0.0, %v7974
        %v7976 = vpop.f32.mrb[0].mxu0
        %7977 = vmatprep.mubr.bf16.mxu0 0
        %7978 = vmatmul.mubr.bf16.gmra.mrb[0].mxu0 %v6973
        %v7979 = vpop.f32.mrb[0].mxu0
        %v7980 = vadd.f32 0.0, %v7979
        %v7981 = vpop.f32.mrb[0].mxu0
        %v7982 = vpop.f32.mrb[0].mxu0
        %v7983 = vadd.f32 0.0, %v7982
        %v7984 = vpop.f32.mrb[0].mxu0
        %7985 = vmatprep.mubr.bf16.mxu0 0
        %7986 = vmatmul.mubr.bf16.gmra.mrb[0].mxu0 %v6976
        %v7987 = vpop.f32.mrb[0].mxu0
        %v7988 = vadd.f32 0.0, %v7987
        %v7989 = vpop.f32.mrb[0].mxu0
        %v7990 = vpop.f32.mrb[0].mxu0
        %v7991 = vadd.f32 0.0, %v7990
        %v7992 = vpop.f32.mrb[0].mxu0
        %7993 = vmatprep.mubr.bf16.mxu0 0
        %7994 = vmatmul.mubr.bf16.gmra.mrb[0].mxu0 %v6979
        %v7995 = vpop.f32.mrb[0].mxu0
        %v7996 = vadd.f32 0.0, %v7995
        %v7997 = vpop.f32.mrb[0].mxu0
        %v7998 = vpop.f32.mrb[0].mxu0
        %v7999 = vadd.f32 0.0, %v7998
        %v8000 = vpop.f32.mrb[0].mxu0
        %8001 = vmatprep.mubr.bf16.mxu0 0
        %8002 = vmatmul.mubr.bf16.gmra.mrb[0].mxu0 %v6982
        %v8003 = vpop.f32.mrb[0].mxu0
        %v8004 = vadd.f32 0.0, %v8003
        %v8005 = vpop.f32.mrb[0].mxu0
        %v8006 = vpop.f32.mrb[0].mxu0
        %v8007 = vadd.f32 0.0, %v8006
        %v8008 = vpop.f32.mrb[0].mxu0
        %8009 = vmatprep.mubr.bf16.mxu0 0
        %8010 = vmatmul.mubr.bf16.gmra.mrb[0].mxu0 %v6985
        %v8011 = vpop.f32.mrb[0].mxu0
        %v8012 = vadd.f32 0.0, %v8011
        %v8013 = vpop.f32.mrb[0].mxu0
        %v8014 = vpop.f32.mrb[0].mxu0
        %v8015 = vadd.f32 0.0, %v8014
        %v8016 = vpop.f32.mrb[0].mxu0
        %8017 = vmatprep.mubr.bf16.mxu0 0
        %8018 = vmatmul.mubr.bf16.gmra.mrb[0].mxu0 %v6988
        %v8019 = vpop.f32.mrb[0].mxu0
        %v8020 = vadd.f32 0.0, %v8019
        %v8021 = vpop.f32.mrb[0].mxu0
        %v8022 = vpop.f32.mrb[0].mxu0
        %v8023 = vadd.f32 0.0, %v8022
        %v8024 = vpop.f32.mrb[0].mxu0
        %8025 = vmatprep.mubr.bf16.mxu0 0
        %8026 = vmatmul.mubr.bf16.gmra.mrb[0].mxu0 %v6991
        %v8027 = vpop.f32.mrb[0].mxu0
        %v8028 = vadd.f32 0.0, %v8027
        %v8029 = vpop.f32.mrb[0].mxu0
        %v8030 = vpop.f32.mrb[0].mxu0
        %v8031 = vadd.f32 0.0, %v8030
        %v8032 = vpop.f32.mrb[0].mxu0
        %8033 = vmatprep.mubr.bf16.mxu0 0
        %8034 = vmatmul.mubr.bf16.gmra.mrb[0].mxu0 %v6994
        %v8035 = vpop.f32.mrb[0].mxu0
        %v8036 = vadd.f32 0.0, %v8035
        %v8037 = vpop.f32.mrb[0].mxu0
        %v8038 = vpop.f32.mrb[0].mxu0
        %v8039 = vadd.f32 0.0, %v8038
        %v8040 = vpop.f32.mrb[0].mxu0
        %8041 = vmatprep.mubr.bf16.mxu0 0
        %8042 = vmatmul.mubr.bf16.gmra.mrb[0].mxu0 %v6997
        %v8043 = vpop.f32.mrb[0].mxu0
        %v8044 = vadd.f32 0.0, %v8043
        %v8045 = vpop.f32.mrb[0].mxu0
        %v8046 = vpop.f32.mrb[0].mxu0
        %v8047 = vadd.f32 0.0, %v8046
        %v8048 = vpop.f32.mrb[0].mxu0
        %8049 = vmatprep.mubr.bf16.mxu0 0
        %8050 = vmatmul.mubr.bf16.gmra.mrb[0].mxu0 %v7000
        %v8051 = vpop.f32.mrb[0].mxu0
        %v8052 = vadd.f32 0.0, %v8051
        %v8053 = vpop.f32.mrb[0].mxu0
        %v8054 = vpop.f32.mrb[0].mxu0
        %v8055 = vadd.f32 0.0, %v8054
        %v8056 = vpop.f32.mrb[0].mxu0
        %8057 = vmatprep.mubr.bf16.mxu0 0
        %8058 = vmatmul.mubr.bf16.gmra.mrb[0].mxu0 %v7003
        %v8059 = vpop.f32.mrb[0].mxu0
        %v8060 = vadd.f32 0.0, %v8059
        %v8061 = vpop.f32.mrb[0].mxu0
        %v8062 = vpop.f32.mrb[0].mxu0
        %v8063 = vadd.f32 0.0, %v8062
        %v8064 = vpop.f32.mrb[0].mxu0
        %8065 = vmatprep.mubr.bf16.mxu0 0
        %8066 = vmatmul.mubr.bf16.gmra.mrb[0].mxu0 %v7908
        %v8067 = vpop.f32.mrb[0].mxu0
        %v8068 = vadd.f32 0.0, %v8067
        %v8069 = vpop.f32.mrb[0].mxu0
        %v8070 = vpop.f32.mrb[0].mxu0
        %v8071 = vadd.f32 0.0, %v8070
        %v8072 = vpop.f32.mrb[0].mxu0
        %8073 = vdwg.mxu0
        %v8074 = vadd.f32 %v7862, %v7948
        %v8075 = vadd.f32 %v7863, %v7951
        %v8076 = vadd.f32 %v7864, %v7956
        %v8077 = vadd.f32 %v7865, %v7959
        %v8078 = vadd.f32 %v7866, %v7964
        %v8079 = vadd.f32 %v7867, %v7967
        %v8080 = vadd.f32 %v7868, %v7972
        %v8081 = vadd.f32 %v7869, %v7975
        %v8082 = vadd.f32 %v7870, %v7980
        %v8083 = vadd.f32 %v7871, %v7983
        %v8084 = vadd.f32 %v7872, %v7988
        %v8085 = vadd.f32 %v7873, %v7991
        %v8086 = vadd.f32 %v7874, %v7996
        %v8087 = vadd.f32 %v7875, %v7999
        %v8088 = vadd.f32 %v7876, %v8004
        %v8089 = vadd.f32 %v7877, %v8007
        %v8090 = vadd.f32 %v7878, %v8012
        %v8091 = vadd.f32 %v7879, %v8015
        %v8092 = vadd.f32 %v7880, %v8020
        %v8093 = vadd.f32 %v7881, %v8023
        %v8094 = vadd.f32 %v7882, %v8028
        %v8095 = vadd.f32 %v7883, %v8031
        %v8096 = vadd.f32 %v7884, %v8036
        %v8097 = vadd.f32 %v7885, %v8039
        %v8098 = vadd.f32 %v7886, %v8044
        %v8099 = vadd.f32 %v7887, %v8047
        %v8100 = vadd.f32 %v7888, %v8052
        %v8101 = vadd.f32 %v7889, %v8055
        %v8102 = vadd.f32 %v7890, %v8060
        %v8103 = vadd.f32 %v7891, %v8063
        %v8104 = vadd.f32 %v7892, %v8068
        %v8105 = vadd.f32 %v7893, %v8071
        %v8108 = vrot.slane %v6756, 1
        %v8109 = vrot.slane %v6757, 1
        %v8110 = vsel %vm7398, %v8108, %v8109
        %s8111 = scalar_lea.vmem %s5, 20
        %v8112 = vld [vmem:[%s8111] sm:$0xf]
        %v8114 = vsel %vm6956, %v8110, 0
        %v8117 = vsel %vm7005, %v8112, 0
        %8119 = vmatprep.subr.bf16.mxu0 0
        %8120 = vmatpush1.bf16.msra.mxu0 %v8117
        %8121 = vmatprep.subr.bf16.mxu0 0
        %8122 = vmatpush1.bf16.msra.mxu0 0
        %8123 = vmatprep.subr.bf16.mxu0 0
        %8124 = vmatpush1.bf16.msra.mxu0 0
        %8125 = vmatprep.subr.bf16.mxu0 0
        %8126 = vmatpush1.bf16.msra.mxu0 0
        %8127 = vmatprep.subr.bf16.mxu0 0
        %8128 = vmatpush1.bf16.msra.mxu0 0
        %8129 = vmatprep.subr.bf16.mxu0 0
        %8130 = vmatpush1.bf16.msra.mxu0 0
        %8131 = vmatprep.subr.bf16.mxu0 0
        %8132 = vmatpush1.bf16.msra.mxu0 0
        %8133 = vmatprep.subr.bf16.mxu0 0
        %8134 = vmatpush1.bf16.msra.mxu0 0
        %8135 = vmatprep.subr.bf16.mxu0 0
        %8136 = vmatpush1.bf16.msra.mxu0 0
        %8137 = vmatprep.subr.bf16.mxu0 0
        %8138 = vmatpush1.bf16.msra.mxu0 0
        %8139 = vmatprep.subr.bf16.mxu0 0
        %8140 = vmatpush1.bf16.msra.mxu0 0
        %8141 = vmatprep.subr.bf16.mxu0 0
        %8142 = vmatpush1.bf16.msra.mxu0 0
        %8143 = vmatprep.subr.bf16.mxu0 0
        %8144 = vmatpush1.bf16.msra.mxu0 0
        %8145 = vmatprep.subr.bf16.mxu0 0
        %8146 = vmatpush1.bf16.msra.mxu0 0
        %8147 = vmatprep.subr.bf16.mxu0 0
        %8148 = vmatpush1.bf16.msra.mxu0 0
        %8149 = vmatprep.subr.bf16.mxu0 0
        %8150 = vmatpush1.bf16.msra.mxu0 0
        %8151 = vmatprep.mubr.bf16.mxu0 0
        %8152 = vmatmul.mubr.bf16.gmra.mrb[0].mxu0 %v7453
        %v8153 = vpop.f32.mrb[0].mxu0
        %v8154 = vadd.f32 0.0, %v8153
        %v8155 = vpop.f32.mrb[0].mxu0
        %v8156 = vpop.f32.mrb[0].mxu0
        %v8157 = vadd.f32 0.0, %v8156
        %v8158 = vpop.f32.mrb[0].mxu0
        %8159 = vmatprep.mubr.bf16.mxu0 0
        %8160 = vmatmul.mubr.bf16.gmra.mrb[0].mxu0 %v7456
        %v8161 = vpop.f32.mrb[0].mxu0
        %v8162 = vadd.f32 0.0, %v8161
        %v8163 = vpop.f32.mrb[0].mxu0
        %v8164 = vpop.f32.mrb[0].mxu0
        %v8165 = vadd.f32 0.0, %v8164
        %v8166 = vpop.f32.mrb[0].mxu0
        %8167 = vmatprep.mubr.bf16.mxu0 0
        %8168 = vmatmul.mubr.bf16.gmra.mrb[0].mxu0 %v7459
        %v8169 = vpop.f32.mrb[0].mxu0
        %v8170 = vadd.f32 0.0, %v8169
        %v8171 = vpop.f32.mrb[0].mxu0
        %v8172 = vpop.f32.mrb[0].mxu0
        %v8173 = vadd.f32 0.0, %v8172
        %v8174 = vpop.f32.mrb[0].mxu0
        %8175 = vmatprep.mubr.bf16.mxu0 0
        %8176 = vmatmul.mubr.bf16.gmra.mrb[0].mxu0 %v7462
        %v8177 = vpop.f32.mrb[0].mxu0
        %v8178 = vadd.f32 0.0, %v8177
        %v8179 = vpop.f32.mrb[0].mxu0
        %v8180 = vpop.f32.mrb[0].mxu0
        %v8181 = vadd.f32 0.0, %v8180
        %v8182 = vpop.f32.mrb[0].mxu0
        %8183 = vmatprep.mubr.bf16.mxu0 0
        %8184 = vmatmul.mubr.bf16.gmra.mrb[0].mxu0 %v7465
        %v8185 = vpop.f32.mrb[0].mxu0
        %v8186 = vadd.f32 0.0, %v8185
        %v8187 = vpop.f32.mrb[0].mxu0
        %v8188 = vpop.f32.mrb[0].mxu0
        %v8189 = vadd.f32 0.0, %v8188
        %v8190 = vpop.f32.mrb[0].mxu0
        %8191 = vmatprep.mubr.bf16.mxu0 0
        %8192 = vmatmul.mubr.bf16.gmra.mrb[0].mxu0 %v7468
        %v8193 = vpop.f32.mrb[0].mxu0
        %v8194 = vadd.f32 0.0, %v8193
        %v8195 = vpop.f32.mrb[0].mxu0
        %v8196 = vpop.f32.mrb[0].mxu0
        %v8197 = vadd.f32 0.0, %v8196
        %v8198 = vpop.f32.mrb[0].mxu0
        %8199 = vmatprep.mubr.bf16.mxu0 0
        %8200 = vmatmul.mubr.bf16.gmra.mrb[0].mxu0 %v7471
        %v8201 = vpop.f32.mrb[0].mxu0
        %v8202 = vadd.f32 0.0, %v8201
        %v8203 = vpop.f32.mrb[0].mxu0
        %v8204 = vpop.f32.mrb[0].mxu0
        %v8205 = vadd.f32 0.0, %v8204
        %v8206 = vpop.f32.mrb[0].mxu0
        %8207 = vmatprep.mubr.bf16.mxu0 0
        %8208 = vmatmul.mubr.bf16.gmra.mrb[0].mxu0 %v7474
        %v8209 = vpop.f32.mrb[0].mxu0
        %v8210 = vadd.f32 0.0, %v8209
        %v8211 = vpop.f32.mrb[0].mxu0
        %v8212 = vpop.f32.mrb[0].mxu0
        %v8213 = vadd.f32 0.0, %v8212
        %v8214 = vpop.f32.mrb[0].mxu0
        %8215 = vmatprep.mubr.bf16.mxu0 0
        %8216 = vmatmul.mubr.bf16.gmra.mrb[0].mxu0 %v7477
        %v8217 = vpop.f32.mrb[0].mxu0
        %v8218 = vadd.f32 0.0, %v8217
        %v8219 = vpop.f32.mrb[0].mxu0
        %v8220 = vpop.f32.mrb[0].mxu0
        %v8221 = vadd.f32 0.0, %v8220
        %v8222 = vpop.f32.mrb[0].mxu0
        %8223 = vmatprep.mubr.bf16.mxu0 0
        %8224 = vmatmul.mubr.bf16.gmra.mrb[0].mxu0 %v7480
        %v8225 = vpop.f32.mrb[0].mxu0
        %v8226 = vadd.f32 0.0, %v8225
        %v8227 = vpop.f32.mrb[0].mxu0
        %v8228 = vpop.f32.mrb[0].mxu0
        %v8229 = vadd.f32 0.0, %v8228
        %v8230 = vpop.f32.mrb[0].mxu0
        %8231 = vmatprep.mubr.bf16.mxu0 0
        %8232 = vmatmul.mubr.bf16.gmra.mrb[0].mxu0 %v7483
        %v8233 = vpop.f32.mrb[0].mxu0
        %v8234 = vadd.f32 0.0, %v8233
        %v8235 = vpop.f32.mrb[0].mxu0
        %v8236 = vpop.f32.mrb[0].mxu0
        %v8237 = vadd.f32 0.0, %v8236
        %v8238 = vpop.f32.mrb[0].mxu0
        %8239 = vmatprep.mubr.bf16.mxu0 0
        %8240 = vmatmul.mubr.bf16.gmra.mrb[0].mxu0 %v7486
        %v8241 = vpop.f32.mrb[0].mxu0
        %v8242 = vadd.f32 0.0, %v8241
        %v8243 = vpop.f32.mrb[0].mxu0
        %v8244 = vpop.f32.mrb[0].mxu0
        %v8245 = vadd.f32 0.0, %v8244
        %v8246 = vpop.f32.mrb[0].mxu0
        %8247 = vmatprep.mubr.bf16.mxu0 0
        %8248 = vmatmul.mubr.bf16.gmra.mrb[0].mxu0 %v7489
        %v8249 = vpop.f32.mrb[0].mxu0
        %v8250 = vadd.f32 0.0, %v8249
        %v8251 = vpop.f32.mrb[0].mxu0
        %v8252 = vpop.f32.mrb[0].mxu0
        %v8253 = vadd.f32 0.0, %v8252
        %v8254 = vpop.f32.mrb[0].mxu0
        %8255 = vmatprep.mubr.bf16.mxu0 0
        %8256 = vmatmul.mubr.bf16.gmra.mrb[0].mxu0 %v7492
        %v8257 = vpop.f32.mrb[0].mxu0
        %v8258 = vadd.f32 0.0, %v8257
        %v8259 = vpop.f32.mrb[0].mxu0
        %v8260 = vpop.f32.mrb[0].mxu0
        %v8261 = vadd.f32 0.0, %v8260
        %v8262 = vpop.f32.mrb[0].mxu0
        %8263 = vmatprep.mubr.bf16.mxu0 0
        %8264 = vmatmul.mubr.bf16.gmra.mrb[0].mxu0 %v7495
        %v8265 = vpop.f32.mrb[0].mxu0
        %v8266 = vadd.f32 0.0, %v8265
        %v8267 = vpop.f32.mrb[0].mxu0
        %v8268 = vpop.f32.mrb[0].mxu0
        %v8269 = vadd.f32 0.0, %v8268
        %v8270 = vpop.f32.mrb[0].mxu0
        %8271 = vmatprep.mubr.bf16.mxu0 0
        %8272 = vmatmul.mubr.bf16.gmra.mrb[0].mxu0 %v8114
        %v8273 = vpop.f32.mrb[0].mxu0
        %v8274 = vadd.f32 0.0, %v8273
        %v8275 = vpop.f32.mrb[0].mxu0
        %v8276 = vpop.f32.mrb[0].mxu0
        %v8277 = vadd.f32 0.0, %v8276
        %v8278 = vpop.f32.mrb[0].mxu0
        %8279 = vdwg.mxu0
        %v8280 = vadd.f32 %v8074, %v8154
        %v8281 = vadd.f32 %v8075, %v8157
        %v8282 = vadd.f32 %v8076, %v8162
        %v8283 = vadd.f32 %v8077, %v8165
        %v8284 = vadd.f32 %v8078, %v8170
        %v8285 = vadd.f32 %v8079, %v8173
        %v8286 = vadd.f32 %v8080, %v8178
        %v8287 = vadd.f32 %v8081, %v8181
        %v8288 = vadd.f32 %v8082, %v8186
        %v8289 = vadd.f32 %v8083, %v8189
        %v8290 = vadd.f32 %v8084, %v8194
        %v8291 = vadd.f32 %v8085, %v8197
        %v8292 = vadd.f32 %v8086, %v8202
        %v8293 = vadd.f32 %v8087, %v8205
        %v8294 = vadd.f32 %v8088, %v8210
        %v8295 = vadd.f32 %v8089, %v8213
        %v8296 = vadd.f32 %v8090, %v8218
        %v8297 = vadd.f32 %v8091, %v8221
        %v8298 = vadd.f32 %v8092, %v8226
        %v8299 = vadd.f32 %v8093, %v8229
        %v8300 = vadd.f32 %v8094, %v8234
        %v8301 = vadd.f32 %v8095, %v8237
        %v8302 = vadd.f32 %v8096, %v8242
        %v8303 = vadd.f32 %v8097, %v8245
        %v8304 = vadd.f32 %v8098, %v8250
        %v8305 = vadd.f32 %v8099, %v8253
        %v8306 = vadd.f32 %v8100, %v8258
        %v8307 = vadd.f32 %v8101, %v8261
        %v8308 = vadd.f32 %v8102, %v8266
        %v8309 = vadd.f32 %v8103, %v8269
        %v8310 = vadd.f32 %v8104, %v8274
        %v8311 = vadd.f32 %v8105, %v8277
        %s8312 = scalar_lea.vmem %s5, 24
        %v8313 = vld [vmem:[%s8312] sm:$0xf]
        %v8315 = vsel %vm6956, %v6758, 0
        %v8318 = vsel %vm7005, %v8313, 0
        %8320 = vmatprep.subr.bf16.mxu0 0
        %8321 = vmatpush1.bf16.msra.mxu0 %v8318
        %8322 = vmatprep.subr.bf16.mxu0 0
        %8323 = vmatpush1.bf16.msra.mxu0 0
        %8324 = vmatprep.subr.bf16.mxu0 0
        %8325 = vmatpush1.bf16.msra.mxu0 0
        %8326 = vmatprep.subr.bf16.mxu0 0
        %8327 = vmatpush1.bf16.msra.mxu0 0
        %8328 = vmatprep.subr.bf16.mxu0 0
        %8329 = vmatpush1.bf16.msra.mxu0 0
        %8330 = vmatprep.subr.bf16.mxu0 0
        %8331 = vmatpush1.bf16.msra.mxu0 0
        %8332 = vmatprep.subr.bf16.mxu0 0
        %8333 = vmatpush1.bf16.msra.mxu0 0
        %8334 = vmatprep.subr.bf16.mxu0 0
        %8335 = vmatpush1.bf16.msra.mxu0 0
        %8336 = vmatprep.subr.bf16.mxu0 0
        %8337 = vmatpush1.bf16.msra.mxu0 0
        %8338 = vmatprep.subr.bf16.mxu0 0
        %8339 = vmatpush1.bf16.msra.mxu0 0
        %8340 = vmatprep.subr.bf16.mxu0 0
        %8341 = vmatpush1.bf16.msra.mxu0 0
        %8342 = vmatprep.subr.bf16.mxu0 0
        %8343 = vmatpush1.bf16.msra.mxu0 0
        %8344 = vmatprep.subr.bf16.mxu0 0
        %8345 = vmatpush1.bf16.msra.mxu0 0
        %8346 = vmatprep.subr.bf16.mxu0 0
        %8347 = vmatpush1.bf16.msra.mxu0 0
        %8348 = vmatprep.subr.bf16.mxu0 0
        %8349 = vmatpush1.bf16.msra.mxu0 0
        %8350 = vmatprep.subr.bf16.mxu0 0
        %8351 = vmatpush1.bf16.msra.mxu0 0
        %8352 = vmatprep.mubr.bf16.mxu0 0
        %8353 = vmatmul.mubr.bf16.gmra.mrb[0].mxu0 %v7174
        %v8354 = vpop.f32.mrb[0].mxu0
        %v8355 = vadd.f32 0.0, %v8354
        %v8356 = vpop.f32.mrb[0].mxu0
        %v8357 = vpop.f32.mrb[0].mxu0
        %v8358 = vadd.f32 0.0, %v8357
        %v8359 = vpop.f32.mrb[0].mxu0
        %8360 = vmatprep.mubr.bf16.mxu0 0
        %8361 = vmatmul.mubr.bf16.gmra.mrb[0].mxu0 %v7176
        %v8362 = vpop.f32.mrb[0].mxu0
        %v8363 = vadd.f32 0.0, %v8362
        %v8364 = vpop.f32.mrb[0].mxu0
        %v8365 = vpop.f32.mrb[0].mxu0
        %v8366 = vadd.f32 0.0, %v8365
        %v8367 = vpop.f32.mrb[0].mxu0
        %8368 = vmatprep.mubr.bf16.mxu0 0
        %8369 = vmatmul.mubr.bf16.gmra.mrb[0].mxu0 %v7178
        %v8370 = vpop.f32.mrb[0].mxu0
        %v8371 = vadd.f32 0.0, %v8370
        %v8372 = vpop.f32.mrb[0].mxu0
        %v8373 = vpop.f32.mrb[0].mxu0
        %v8374 = vadd.f32 0.0, %v8373
        %v8375 = vpop.f32.mrb[0].mxu0
        %8376 = vmatprep.mubr.bf16.mxu0 0
        %8377 = vmatmul.mubr.bf16.gmra.mrb[0].mxu0 %v7180
        %v8378 = vpop.f32.mrb[0].mxu0
        %v8379 = vadd.f32 0.0, %v8378
        %v8380 = vpop.f32.mrb[0].mxu0
        %v8381 = vpop.f32.mrb[0].mxu0
        %v8382 = vadd.f32 0.0, %v8381
        %v8383 = vpop.f32.mrb[0].mxu0
        %8384 = vmatprep.mubr.bf16.mxu0 0
        %8385 = vmatmul.mubr.bf16.gmra.mrb[0].mxu0 %v7182
        %v8386 = vpop.f32.mrb[0].mxu0
        %v8387 = vadd.f32 0.0, %v8386
        %v8388 = vpop.f32.mrb[0].mxu0
        %v8389 = vpop.f32.mrb[0].mxu0
        %v8390 = vadd.f32 0.0, %v8389
        %v8391 = vpop.f32.mrb[0].mxu0
        %8392 = vmatprep.mubr.bf16.mxu0 0
        %8393 = vmatmul.mubr.bf16.gmra.mrb[0].mxu0 %v7184
        %v8394 = vpop.f32.mrb[0].mxu0
        %v8395 = vadd.f32 0.0, %v8394
        %v8396 = vpop.f32.mrb[0].mxu0
        %v8397 = vpop.f32.mrb[0].mxu0
        %v8398 = vadd.f32 0.0, %v8397
        %v8399 = vpop.f32.mrb[0].mxu0
        %8400 = vmatprep.mubr.bf16.mxu0 0
        %8401 = vmatmul.mubr.bf16.gmra.mrb[0].mxu0 %v7186
        %v8402 = vpop.f32.mrb[0].mxu0
        %v8403 = vadd.f32 0.0, %v8402
        %v8404 = vpop.f32.mrb[0].mxu0
        %v8405 = vpop.f32.mrb[0].mxu0
        %v8406 = vadd.f32 0.0, %v8405
        %v8407 = vpop.f32.mrb[0].mxu0
        %8408 = vmatprep.mubr.bf16.mxu0 0
        %8409 = vmatmul.mubr.bf16.gmra.mrb[0].mxu0 %v7188
        %v8410 = vpop.f32.mrb[0].mxu0
        %v8411 = vadd.f32 0.0, %v8410
        %v8412 = vpop.f32.mrb[0].mxu0
        %v8413 = vpop.f32.mrb[0].mxu0
        %v8414 = vadd.f32 0.0, %v8413
        %v8415 = vpop.f32.mrb[0].mxu0
        %8416 = vmatprep.mubr.bf16.mxu0 0
        %8417 = vmatmul.mubr.bf16.gmra.mrb[0].mxu0 %v7190
        %v8418 = vpop.f32.mrb[0].mxu0
        %v8419 = vadd.f32 0.0, %v8418
        %v8420 = vpop.f32.mrb[0].mxu0
        %v8421 = vpop.f32.mrb[0].mxu0
        %v8422 = vadd.f32 0.0, %v8421
        %v8423 = vpop.f32.mrb[0].mxu0
        %8424 = vmatprep.mubr.bf16.mxu0 0
        %8425 = vmatmul.mubr.bf16.gmra.mrb[0].mxu0 %v7192
        %v8426 = vpop.f32.mrb[0].mxu0
        %v8427 = vadd.f32 0.0, %v8426
        %v8428 = vpop.f32.mrb[0].mxu0
        %v8429 = vpop.f32.mrb[0].mxu0
        %v8430 = vadd.f32 0.0, %v8429
        %v8431 = vpop.f32.mrb[0].mxu0
        %8432 = vmatprep.mubr.bf16.mxu0 0
        %8433 = vmatmul.mubr.bf16.gmra.mrb[0].mxu0 %v7194
        %v8434 = vpop.f32.mrb[0].mxu0
        %v8435 = vadd.f32 0.0, %v8434
        %v8436 = vpop.f32.mrb[0].mxu0
        %v8437 = vpop.f32.mrb[0].mxu0
        %v8438 = vadd.f32 0.0, %v8437
        %v8439 = vpop.f32.mrb[0].mxu0
        %8440 = vmatprep.mubr.bf16.mxu0 0
        %8441 = vmatmul.mubr.bf16.gmra.mrb[0].mxu0 %v7196
        %v8442 = vpop.f32.mrb[0].mxu0
        %v8443 = vadd.f32 0.0, %v8442
        %v8444 = vpop.f32.mrb[0].mxu0
        %v8445 = vpop.f32.mrb[0].mxu0
        %v8446 = vadd.f32 0.0, %v8445
        %v8447 = vpop.f32.mrb[0].mxu0
        %8448 = vmatprep.mubr.bf16.mxu0 0
        %8449 = vmatmul.mubr.bf16.gmra.mrb[0].mxu0 %v7198
        %v8450 = vpop.f32.mrb[0].mxu0
        %v8451 = vadd.f32 0.0, %v8450
        %v8452 = vpop.f32.mrb[0].mxu0
        %v8453 = vpop.f32.mrb[0].mxu0
        %v8454 = vadd.f32 0.0, %v8453
        %v8455 = vpop.f32.mrb[0].mxu0
        %8456 = vmatprep.mubr.bf16.mxu0 0
        %8457 = vmatmul.mubr.bf16.gmra.mrb[0].mxu0 %v7200
        %v8458 = vpop.f32.mrb[0].mxu0
        %v8459 = vadd.f32 0.0, %v8458
        %v8460 = vpop.f32.mrb[0].mxu0
        %v8461 = vpop.f32.mrb[0].mxu0
        %v8462 = vadd.f32 0.0, %v8461
        %v8463 = vpop.f32.mrb[0].mxu0
        %8464 = vmatprep.mubr.bf16.mxu0 0
        %8465 = vmatmul.mubr.bf16.gmra.mrb[0].mxu0 %v7696
        %v8466 = vpop.f32.mrb[0].mxu0
        %v8467 = vadd.f32 0.0, %v8466
        %v8468 = vpop.f32.mrb[0].mxu0
        %v8469 = vpop.f32.mrb[0].mxu0
        %v8470 = vadd.f32 0.0, %v8469
        %v8471 = vpop.f32.mrb[0].mxu0
        %8472 = vmatprep.mubr.bf16.mxu0 0
        %8473 = vmatmul.mubr.bf16.gmra.mrb[0].mxu0 %v8315
        %v8474 = vpop.f32.mrb[0].mxu0
        %v8475 = vadd.f32 0.0, %v8474
        %v8476 = vpop.f32.mrb[0].mxu0
        %v8477 = vpop.f32.mrb[0].mxu0
        %v8478 = vadd.f32 0.0, %v8477
        %v8479 = vpop.f32.mrb[0].mxu0
        %8480 = vdwg.mxu0
        %v8481 = vadd.f32 %v8280, %v8355
        %v8482 = vadd.f32 %v8281, %v8358
        %v8483 = vadd.f32 %v8282, %v8363
        %v8484 = vadd.f32 %v8283, %v8366
        %v8485 = vadd.f32 %v8284, %v8371
        %v8486 = vadd.f32 %v8285, %v8374
        %v8487 = vadd.f32 %v8286, %v8379
        %v8488 = vadd.f32 %v8287, %v8382
        %v8489 = vadd.f32 %v8288, %v8387
        %v8490 = vadd.f32 %v8289, %v8390
        %v8491 = vadd.f32 %v8290, %v8395
        %v8492 = vadd.f32 %v8291, %v8398
        %v8493 = vadd.f32 %v8292, %v8403
        %v8494 = vadd.f32 %v8293, %v8406
        %v8495 = vadd.f32 %v8294, %v8411
        %v8496 = vadd.f32 %v8295, %v8414
        %v8497 = vadd.f32 %v8296, %v8419
        %v8498 = vadd.f32 %v8297, %v8422
        %v8499 = vadd.f32 %v8298, %v8427
        %v8500 = vadd.f32 %v8299, %v8430
        %v8501 = vadd.f32 %v8300, %v8435
        %v8502 = vadd.f32 %v8301, %v8438
        %v8503 = vadd.f32 %v8302, %v8443
        %v8504 = vadd.f32 %v8303, %v8446
        %v8505 = vadd.f32 %v8304, %v8451
        %v8506 = vadd.f32 %v8305, %v8454
        %v8507 = vadd.f32 %v8306, %v8459
        %v8508 = vadd.f32 %v8307, %v8462
        %v8509 = vadd.f32 %v8308, %v8467
        %v8510 = vadd.f32 %v8309, %v8470
        %v8511 = vadd.f32 %v8310, %v8475
        %v8512 = vadd.f32 %v8311, %v8478
        %v8513 = vshrl.u32 %v6758, 16
        %v8515 = vshll.u32 %v6758, 16
        %v8517 = vrot.slane %v8515, 1
        %v8518 = vor.u32 %v8513, %v8517
        %v8520 = vshll.u32 %v6759, 16
        %v8522 = vrot.slane %v8520, 1
        %v8523 = vsel %vm6761, %v8518, %v8522
        %s8524 = scalar_lea.vmem %s5, 28
        %v8525 = vld [vmem:[%s8524] sm:$0xf]
        %v8527 = vsel %vm6956, %v8523, 0
        %v8530 = vsel %vm7005, %v8525, 0
        %8532 = vmatprep.subr.bf16.mxu0 0
        %8533 = vmatpush1.bf16.msra.mxu0 %v8530
        %8534 = vmatprep.subr.bf16.mxu0 0
        %8535 = vmatpush1.bf16.msra.mxu0 0
        %8536 = vmatprep.subr.bf16.mxu0 0
        %8537 = vmatpush1.bf16.msra.mxu0 0
        %8538 = vmatprep.subr.bf16.mxu0 0
        %8539 = vmatpush1.bf16.msra.mxu0 0
        %8540 = vmatprep.subr.bf16.mxu0 0
        %8541 = vmatpush1.bf16.msra.mxu0 0
        %8542 = vmatprep.subr.bf16.mxu0 0
        %8543 = vmatpush1.bf16.msra.mxu0 0
        %8544 = vmatprep.subr.bf16.mxu0 0
        %8545 = vmatpush1.bf16.msra.mxu0 0
        %8546 = vmatprep.subr.bf16.mxu0 0
        %8547 = vmatpush1.bf16.msra.mxu0 0
        %8548 = vmatprep.subr.bf16.mxu0 0
        %8549 = vmatpush1.bf16.msra.mxu0 0
        %8550 = vmatprep.subr.bf16.mxu0 0
        %8551 = vmatpush1.bf16.msra.mxu0 0
        %8552 = vmatprep.subr.bf16.mxu0 0
        %8553 = vmatpush1.bf16.msra.mxu0 0
        %8554 = vmatprep.subr.bf16.mxu0 0
        %8555 = vmatpush1.bf16.msra.mxu0 0
        %8556 = vmatprep.subr.bf16.mxu0 0
        %8557 = vmatpush1.bf16.msra.mxu0 0
        %8558 = vmatprep.subr.bf16.mxu0 0
        %8559 = vmatpush1.bf16.msra.mxu0 0
        %8560 = vmatprep.subr.bf16.mxu0 0
        %8561 = vmatpush1.bf16.msra.mxu0 0
        %8562 = vmatprep.subr.bf16.mxu0 0
        %8563 = vmatpush1.bf16.msra.mxu0 0
        %8564 = vmatprep.mubr.bf16.mxu0 0
        %8565 = vmatmul.mubr.bf16.gmra.mrb[0].mxu0 %v6964
        %v8566 = vpop.f32.mrb[0].mxu0
        %v8567 = vadd.f32 0.0, %v8566
        %v8568 = vpop.f32.mrb[0].mxu0
        %v8569 = vpop.f32.mrb[0].mxu0
        %v8570 = vadd.f32 0.0, %v8569
        %v8571 = vpop.f32.mrb[0].mxu0
        %8572 = vmatprep.mubr.bf16.mxu0 0
        %8573 = vmatmul.mubr.bf16.gmra.mrb[0].mxu0 %v6967
        %v8574 = vpop.f32.mrb[0].mxu0
        %v8575 = vadd.f32 0.0, %v8574
        %v8576 = vpop.f32.mrb[0].mxu0
        %v8577 = vpop.f32.mrb[0].mxu0
        %v8578 = vadd.f32 0.0, %v8577
        %v8579 = vpop.f32.mrb[0].mxu0
        %8580 = vmatprep.mubr.bf16.mxu0 0
        %8581 = vmatmul.mubr.bf16.gmra.mrb[0].mxu0 %v6970
        %v8582 = vpop.f32.mrb[0].mxu0
        %v8583 = vadd.f32 0.0, %v8582
        %v8584 = vpop.f32.mrb[0].mxu0
        %v8585 = vpop.f32.mrb[0].mxu0
        %v8586 = vadd.f32 0.0, %v8585
        %v8587 = vpop.f32.mrb[0].mxu0
        %8588 = vmatprep.mubr.bf16.mxu0 0
        %8589 = vmatmul.mubr.bf16.gmra.mrb[0].mxu0 %v6973
        %v8590 = vpop.f32.mrb[0].mxu0
        %v8591 = vadd.f32 0.0, %v8590
        %v8592 = vpop.f32.mrb[0].mxu0
        %v8593 = vpop.f32.mrb[0].mxu0
        %v8594 = vadd.f32 0.0, %v8593
        %v8595 = vpop.f32.mrb[0].mxu0
        %8596 = vmatprep.mubr.bf16.mxu0 0
        %8597 = vmatmul.mubr.bf16.gmra.mrb[0].mxu0 %v6976
        %v8598 = vpop.f32.mrb[0].mxu0
        %v8599 = vadd.f32 0.0, %v8598
        %v8600 = vpop.f32.mrb[0].mxu0
        %v8601 = vpop.f32.mrb[0].mxu0
        %v8602 = vadd.f32 0.0, %v8601
        %v8603 = vpop.f32.mrb[0].mxu0
        %8604 = vmatprep.mubr.bf16.mxu0 0
        %8605 = vmatmul.mubr.bf16.gmra.mrb[0].mxu0 %v6979
        %v8606 = vpop.f32.mrb[0].mxu0
        %v8607 = vadd.f32 0.0, %v8606
        %v8608 = vpop.f32.mrb[0].mxu0
        %v8609 = vpop.f32.mrb[0].mxu0
        %v8610 = vadd.f32 0.0, %v8609
        %v8611 = vpop.f32.mrb[0].mxu0
        %8612 = vmatprep.mubr.bf16.mxu0 0
        %8613 = vmatmul.mubr.bf16.gmra.mrb[0].mxu0 %v6982
        %v8614 = vpop.f32.mrb[0].mxu0
        %v8615 = vadd.f32 0.0, %v8614
        %v8616 = vpop.f32.mrb[0].mxu0
        %v8617 = vpop.f32.mrb[0].mxu0
        %v8618 = vadd.f32 0.0, %v8617
        %v8619 = vpop.f32.mrb[0].mxu0
        %8620 = vmatprep.mubr.bf16.mxu0 0
        %8621 = vmatmul.mubr.bf16.gmra.mrb[0].mxu0 %v6985
        %v8622 = vpop.f32.mrb[0].mxu0
        %v8623 = vadd.f32 0.0, %v8622
        %v8624 = vpop.f32.mrb[0].mxu0
        %v8625 = vpop.f32.mrb[0].mxu0
        %v8626 = vadd.f32 0.0, %v8625
        %v8627 = vpop.f32.mrb[0].mxu0
        %8628 = vmatprep.mubr.bf16.mxu0 0
        %8629 = vmatmul.mubr.bf16.gmra.mrb[0].mxu0 %v6988
        %v8630 = vpop.f32.mrb[0].mxu0
        %v8631 = vadd.f32 0.0, %v8630
        %v8632 = vpop.f32.mrb[0].mxu0
        %v8633 = vpop.f32.mrb[0].mxu0
        %v8634 = vadd.f32 0.0, %v8633
        %v8635 = vpop.f32.mrb[0].mxu0
        %8636 = vmatprep.mubr.bf16.mxu0 0
        %8637 = vmatmul.mubr.bf16.gmra.mrb[0].mxu0 %v6991
        %v8638 = vpop.f32.mrb[0].mxu0
        %v8639 = vadd.f32 0.0, %v8638
        %v8640 = vpop.f32.mrb[0].mxu0
        %v8641 = vpop.f32.mrb[0].mxu0
        %v8642 = vadd.f32 0.0, %v8641
        %v8643 = vpop.f32.mrb[0].mxu0
        %8644 = vmatprep.mubr.bf16.mxu0 0
        %8645 = vmatmul.mubr.bf16.gmra.mrb[0].mxu0 %v6994
        %v8646 = vpop.f32.mrb[0].mxu0
        %v8647 = vadd.f32 0.0, %v8646
        %v8648 = vpop.f32.mrb[0].mxu0
        %v8649 = vpop.f32.mrb[0].mxu0
        %v8650 = vadd.f32 0.0, %v8649
        %v8651 = vpop.f32.mrb[0].mxu0
        %8652 = vmatprep.mubr.bf16.mxu0 0
        %8653 = vmatmul.mubr.bf16.gmra.mrb[0].mxu0 %v6997
        %v8654 = vpop.f32.mrb[0].mxu0
        %v8655 = vadd.f32 0.0, %v8654
        %v8656 = vpop.f32.mrb[0].mxu0
        %v8657 = vpop.f32.mrb[0].mxu0
        %v8658 = vadd.f32 0.0, %v8657
        %v8659 = vpop.f32.mrb[0].mxu0
        %8660 = vmatprep.mubr.bf16.mxu0 0
        %8661 = vmatmul.mubr.bf16.gmra.mrb[0].mxu0 %v7000
        %v8662 = vpop.f32.mrb[0].mxu0
        %v8663 = vadd.f32 0.0, %v8662
        %v8664 = vpop.f32.mrb[0].mxu0
        %v8665 = vpop.f32.mrb[0].mxu0
        %v8666 = vadd.f32 0.0, %v8665
        %v8667 = vpop.f32.mrb[0].mxu0
        %8668 = vmatprep.mubr.bf16.mxu0 0
        %8669 = vmatmul.mubr.bf16.gmra.mrb[0].mxu0 %v7003
        %v8670 = vpop.f32.mrb[0].mxu0
        %v8671 = vadd.f32 0.0, %v8670
        %v8672 = vpop.f32.mrb[0].mxu0
        %v8673 = vpop.f32.mrb[0].mxu0
        %v8674 = vadd.f32 0.0, %v8673
        %v8675 = vpop.f32.mrb[0].mxu0
        %8676 = vmatprep.mubr.bf16.mxu0 0
        %8677 = vmatmul.mubr.bf16.gmra.mrb[0].mxu0 %v7908
        %v8678 = vpop.f32.mrb[0].mxu0
        %v8679 = vadd.f32 0.0, %v8678
        %v8680 = vpop.f32.mrb[0].mxu0
        %v8681 = vpop.f32.mrb[0].mxu0
        %v8682 = vadd.f32 0.0, %v8681
        %v8683 = vpop.f32.mrb[0].mxu0
        %8684 = vmatprep.mubr.bf16.mxu0 0
        %8685 = vmatmul.mubr.bf16.gmra.mrb[0].mxu0 %v8527
        %v8686 = vpop.f32.mrb[0].mxu0
        %v8687 = vadd.f32 0.0, %v8686
        %v8688 = vpop.f32.mrb[0].mxu0
        %v8689 = vpop.f32.mrb[0].mxu0
        %v8690 = vadd.f32 0.0, %v8689
        %v8691 = vpop.f32.mrb[0].mxu0
        %8692 = vdwg.mxu0
        %v8693 = vadd.f32 %v8481, %v8567
        %v8694 = vadd.f32 %v8482, %v8570
        %v8695 = vadd.f32 %v8483, %v8575
        %v8696 = vadd.f32 %v8484, %v8578
        %v8697 = vadd.f32 %v8485, %v8583
        %v8698 = vadd.f32 %v8486, %v8586
        %v8699 = vadd.f32 %v8487, %v8591
        %v8700 = vadd.f32 %v8488, %v8594
        %v8701 = vadd.f32 %v8489, %v8599
        %v8702 = vadd.f32 %v8490, %v8602
        %v8703 = vadd.f32 %v8491, %v8607
        %v8704 = vadd.f32 %v8492, %v8610
        %v8705 = vadd.f32 %v8493, %v8615
        %v8706 = vadd.f32 %v8494, %v8618
        %v8707 = vadd.f32 %v8495, %v8623
        %v8708 = vadd.f32 %v8496, %v8626
        %v8709 = vadd.f32 %v8497, %v8631
        %v8710 = vadd.f32 %v8498, %v8634
        %v8711 = vadd.f32 %v8499, %v8639
        %v8712 = vadd.f32 %v8500, %v8642
        %v8713 = vadd.f32 %v8501, %v8647
        %v8714 = vadd.f32 %v8502, %v8650
        %v8715 = vadd.f32 %v8503, %v8655
        %v8716 = vadd.f32 %v8504, %v8658
        %v8717 = vadd.f32 %v8505, %v8663
        %v8718 = vadd.f32 %v8506, %v8666
        %v8719 = vadd.f32 %v8507, %v8671
        %v8720 = vadd.f32 %v8508, %v8674
        %v8721 = vadd.f32 %v8509, %v8679
        %v8722 = vadd.f32 %v8510, %v8682
        %v8723 = vadd.f32 %v8511, %v8687
        %v8724 = vadd.f32 %v8512, %v8690
        %v8727 = vrot.slane %v6758, 1
        %v8728 = vrot.slane %v6759, 1
        %v8729 = vsel %vm7398, %v8727, %v8728
        %s8730 = scalar_lea.vmem %s5, 32
        %v8731 = vld [vmem:[%s8730] sm:$0xf]
        %v8733 = vsel %vm6956, %v8729, 0
        %v8736 = vsel %vm7005, %v8731, 0
        %8738 = vmatprep.subr.bf16.mxu0 0
        %8739 = vmatpush1.bf16.msra.mxu0 %v8736
        %8740 = vmatprep.subr.bf16.mxu0 0
        %8741 = vmatpush1.bf16.msra.mxu0 0
        %8742 = vmatprep.subr.bf16.mxu0 0
        %8743 = vmatpush1.bf16.msra.mxu0 0
        %8744 = vmatprep.subr.bf16.mxu0 0
        %8745 = vmatpush1.bf16.msra.mxu0 0
        %8746 = vmatprep.subr.bf16.mxu0 0
        %8747 = vmatpush1.bf16.msra.mxu0 0
        %8748 = vmatprep.subr.bf16.mxu0 0
        %8749 = vmatpush1.bf16.msra.mxu0 0
        %8750 = vmatprep.subr.bf16.mxu0 0
        %8751 = vmatpush1.bf16.msra.mxu0 0
        %8752 = vmatprep.subr.bf16.mxu0 0
        %8753 = vmatpush1.bf16.msra.mxu0 0
        %8754 = vmatprep.subr.bf16.mxu0 0
        %8755 = vmatpush1.bf16.msra.mxu0 0
        %8756 = vmatprep.subr.bf16.mxu0 0
        %8757 = vmatpush1.bf16.msra.mxu0 0
        %8758 = vmatprep.subr.bf16.mxu0 0
        %8759 = vmatpush1.bf16.msra.mxu0 0
        %8760 = vmatprep.subr.bf16.mxu0 0
        %8761 = vmatpush1.bf16.msra.mxu0 0
        %8762 = vmatprep.subr.bf16.mxu0 0
        %8763 = vmatpush1.bf16.msra.mxu0 0
        %8764 = vmatprep.subr.bf16.mxu0 0
        %8765 = vmatpush1.bf16.msra.mxu0 0
        %8766 = vmatprep.subr.bf16.mxu0 0
        %8767 = vmatpush1.bf16.msra.mxu0 0
        %8768 = vmatprep.subr.bf16.mxu0 0
        %8769 = vmatpush1.bf16.msra.mxu0 0
        %8770 = vmatprep.mubr.bf16.mxu0 0
        %8771 = vmatmul.mubr.bf16.gmra.mrb[0].mxu0 %v7456
        %v8772 = vpop.f32.mrb[0].mxu0
        %v8773 = vadd.f32 0.0, %v8772
        %v8774 = vpop.f32.mrb[0].mxu0
        %v8775 = vpop.f32.mrb[0].mxu0
        %v8776 = vadd.f32 0.0, %v8775
        %v8777 = vpop.f32.mrb[0].mxu0
        %8778 = vmatprep.mubr.bf16.mxu0 0
        %8779 = vmatmul.mubr.bf16.gmra.mrb[0].mxu0 %v7459
        %v8780 = vpop.f32.mrb[0].mxu0
        %v8781 = vadd.f32 0.0, %v8780
        %v8782 = vpop.f32.mrb[0].mxu0
        %v8783 = vpop.f32.mrb[0].mxu0
        %v8784 = vadd.f32 0.0, %v8783
        %v8785 = vpop.f32.mrb[0].mxu0
        %8786 = vmatprep.mubr.bf16.mxu0 0
        %8787 = vmatmul.mubr.bf16.gmra.mrb[0].mxu0 %v7462
        %v8788 = vpop.f32.mrb[0].mxu0
        %v8789 = vadd.f32 0.0, %v8788
        %v8790 = vpop.f32.mrb[0].mxu0
        %v8791 = vpop.f32.mrb[0].mxu0
        %v8792 = vadd.f32 0.0, %v8791
        %v8793 = vpop.f32.mrb[0].mxu0
        %8794 = vmatprep.mubr.bf16.mxu0 0
        %8795 = vmatmul.mubr.bf16.gmra.mrb[0].mxu0 %v7465
        %v8796 = vpop.f32.mrb[0].mxu0
        %v8797 = vadd.f32 0.0, %v8796
        %v8798 = vpop.f32.mrb[0].mxu0
        %v8799 = vpop.f32.mrb[0].mxu0
        %v8800 = vadd.f32 0.0, %v8799
        %v8801 = vpop.f32.mrb[0].mxu0
        %8802 = vmatprep.mubr.bf16.mxu0 0
        %8803 = vmatmul.mubr.bf16.gmra.mrb[0].mxu0 %v7468
        %v8804 = vpop.f32.mrb[0].mxu0
        %v8805 = vadd.f32 0.0, %v8804
        %v8806 = vpop.f32.mrb[0].mxu0
        %v8807 = vpop.f32.mrb[0].mxu0
        %v8808 = vadd.f32 0.0, %v8807
        %v8809 = vpop.f32.mrb[0].mxu0
        %8810 = vmatprep.mubr.bf16.mxu0 0
        %8811 = vmatmul.mubr.bf16.gmra.mrb[0].mxu0 %v7471
        %v8812 = vpop.f32.mrb[0].mxu0
        %v8813 = vadd.f32 0.0, %v8812
        %v8814 = vpop.f32.mrb[0].mxu0
        %v8815 = vpop.f32.mrb[0].mxu0
        %v8816 = vadd.f32 0.0, %v8815
        %v8817 = vpop.f32.mrb[0].mxu0
        %8818 = vmatprep.mubr.bf16.mxu0 0
        %8819 = vmatmul.mubr.bf16.gmra.mrb[0].mxu0 %v7474
        %v8820 = vpop.f32.mrb[0].mxu0
        %v8821 = vadd.f32 0.0, %v8820
        %v8822 = vpop.f32.mrb[0].mxu0
        %v8823 = vpop.f32.mrb[0].mxu0
        %v8824 = vadd.f32 0.0, %v8823
        %v8825 = vpop.f32.mrb[0].mxu0
        %8826 = vmatprep.mubr.bf16.mxu0 0
        %8827 = vmatmul.mubr.bf16.gmra.mrb[0].mxu0 %v7477
        %v8828 = vpop.f32.mrb[0].mxu0
        %v8829 = vadd.f32 0.0, %v8828
        %v8830 = vpop.f32.mrb[0].mxu0
        %v8831 = vpop.f32.mrb[0].mxu0
        %v8832 = vadd.f32 0.0, %v8831
        %v8833 = vpop.f32.mrb[0].mxu0
        %8834 = vmatprep.mubr.bf16.mxu0 0
        %8835 = vmatmul.mubr.bf16.gmra.mrb[0].mxu0 %v7480
        %v8836 = vpop.f32.mrb[0].mxu0
        %v8837 = vadd.f32 0.0, %v8836
        %v8838 = vpop.f32.mrb[0].mxu0
        %v8839 = vpop.f32.mrb[0].mxu0
        %v8840 = vadd.f32 0.0, %v8839
        %v8841 = vpop.f32.mrb[0].mxu0
        %8842 = vmatprep.mubr.bf16.mxu0 0
        %8843 = vmatmul.mubr.bf16.gmra.mrb[0].mxu0 %v7483
        %v8844 = vpop.f32.mrb[0].mxu0
        %v8845 = vadd.f32 0.0, %v8844
        %v8846 = vpop.f32.mrb[0].mxu0
        %v8847 = vpop.f32.mrb[0].mxu0
        %v8848 = vadd.f32 0.0, %v8847
        %v8849 = vpop.f32.mrb[0].mxu0
        %8850 = vmatprep.mubr.bf16.mxu0 0
        %8851 = vmatmul.mubr.bf16.gmra.mrb[0].mxu0 %v7486
        %v8852 = vpop.f32.mrb[0].mxu0
        %v8853 = vadd.f32 0.0, %v8852
        %v8854 = vpop.f32.mrb[0].mxu0
        %v8855 = vpop.f32.mrb[0].mxu0
        %v8856 = vadd.f32 0.0, %v8855
        %v8857 = vpop.f32.mrb[0].mxu0
        %8858 = vmatprep.mubr.bf16.mxu0 0
        %8859 = vmatmul.mubr.bf16.gmra.mrb[0].mxu0 %v7489
        %v8860 = vpop.f32.mrb[0].mxu0
        %v8861 = vadd.f32 0.0, %v8860
        %v8862 = vpop.f32.mrb[0].mxu0
        %v8863 = vpop.f32.mrb[0].mxu0
        %v8864 = vadd.f32 0.0, %v8863
        %v8865 = vpop.f32.mrb[0].mxu0
        %8866 = vmatprep.mubr.bf16.mxu0 0
        %8867 = vmatmul.mubr.bf16.gmra.mrb[0].mxu0 %v7492
        %v8868 = vpop.f32.mrb[0].mxu0
        %v8869 = vadd.f32 0.0, %v8868
        %v8870 = vpop.f32.mrb[0].mxu0
        %v8871 = vpop.f32.mrb[0].mxu0
        %v8872 = vadd.f32 0.0, %v8871
        %v8873 = vpop.f32.mrb[0].mxu0
        %8874 = vmatprep.mubr.bf16.mxu0 0
        %8875 = vmatmul.mubr.bf16.gmra.mrb[0].mxu0 %v7495
        %v8876 = vpop.f32.mrb[0].mxu0
        %v8877 = vadd.f32 0.0, %v8876
        %v8878 = vpop.f32.mrb[0].mxu0
        %v8879 = vpop.f32.mrb[0].mxu0
        %v8880 = vadd.f32 0.0, %v8879
        %v8881 = vpop.f32.mrb[0].mxu0
        %8882 = vmatprep.mubr.bf16.mxu0 0
        %8883 = vmatmul.mubr.bf16.gmra.mrb[0].mxu0 %v8114
        %v8884 = vpop.f32.mrb[0].mxu0
        %v8885 = vadd.f32 0.0, %v8884
        %v8886 = vpop.f32.mrb[0].mxu0
        %v8887 = vpop.f32.mrb[0].mxu0
        %v8888 = vadd.f32 0.0, %v8887
        %v8889 = vpop.f32.mrb[0].mxu0
        %8890 = vmatprep.mubr.bf16.mxu0 0
        %8891 = vmatmul.mubr.bf16.gmra.mrb[0].mxu0 %v8733
        %v8892 = vpop.f32.mrb[0].mxu0
        %v8893 = vadd.f32 0.0, %v8892
        %v8894 = vpop.f32.mrb[0].mxu0
        %v8895 = vpop.f32.mrb[0].mxu0
        %v8896 = vadd.f32 0.0, %v8895
        %v8897 = vpop.f32.mrb[0].mxu0
        %8898 = vdwg.mxu0
        %v8899 = vadd.f32 %v8693, %v8773
        %v8900 = vadd.f32 %v8694, %v8776
        %v8901 = vadd.f32 %v8695, %v8781
        %v8902 = vadd.f32 %v8696, %v8784
        %v8903 = vadd.f32 %v8697, %v8789
        %v8904 = vadd.f32 %v8698, %v8792
        %v8905 = vadd.f32 %v8699, %v8797
        %v8906 = vadd.f32 %v8700, %v8800
        %v8907 = vadd.f32 %v8701, %v8805
        %v8908 = vadd.f32 %v8702, %v8808
        %v8909 = vadd.f32 %v8703, %v8813
        %v8910 = vadd.f32 %v8704, %v8816
        %v8911 = vadd.f32 %v8705, %v8821
        %v8912 = vadd.f32 %v8706, %v8824
        %v8913 = vadd.f32 %v8707, %v8829
        %v8914 = vadd.f32 %v8708, %v8832
        %v8915 = vadd.f32 %v8709, %v8837
        %v8916 = vadd.f32 %v8710, %v8840
        %v8917 = vadd.f32 %v8711, %v8845
        %v8918 = vadd.f32 %v8712, %v8848
        %v8919 = vadd.f32 %v8713, %v8853
        %v8920 = vadd.f32 %v8714, %v8856
        %v8921 = vadd.f32 %v8715, %v8861
        %v8922 = vadd.f32 %v8716, %v8864
        %v8923 = vadd.f32 %v8717, %v8869
        %v8924 = vadd.f32 %v8718, %v8872
        %v8925 = vadd.f32 %v8719, %v8877
        %v8926 = vadd.f32 %v8720, %v8880
        %v8927 = vadd.f32 %v8721, %v8885
        %v8928 = vadd.f32 %v8722, %v8888
        %v8929 = vadd.f32 %v8723, %v8893
        %v8930 = vadd.f32 %v8724, %v8896
        %v8931 = vld [vmem:[%s6] sm:$0x1]
        %v8933 = vlaneseq
        %v8934 = vshrl.u32 %v8933, 7
        %v8935 = vsub.s32 0, %v8934
        %v8936 = vrot.slane %v8931, %v8935
        %v8938 = vadd.f32 %v8899, %v8936
        %v8939 = vadd.f32 %v8900, %v8936
        %v8940 = vadd.f32 %v8901, %v8936
        %v8941 = vadd.f32 %v8902, %v8936
        %v8942 = vadd.f32 %v8903, %v8936
        %v8943 = vadd.f32 %v8904, %v8936
        %v8944 = vadd.f32 %v8905, %v8936
        %v8945 = vadd.f32 %v8906, %v8936
        %v8946 = vadd.f32 %v8907, %v8936
        %v8947 = vadd.f32 %v8908, %v8936
        %v8948 = vadd.f32 %v8909, %v8936
        %v8949 = vadd.f32 %v8910, %v8936
        %v8950 = vadd.f32 %v8911, %v8936
        %v8951 = vadd.f32 %v8912, %v8936
        %v8952 = vadd.f32 %v8913, %v8936
        %v8953 = vadd.f32 %v8914, %v8936
        %v8954 = vadd.f32 %v8915, %v8936
        %v8955 = vadd.f32 %v8916, %v8936
        %v8956 = vadd.f32 %v8917, %v8936
        %v8957 = vadd.f32 %v8918, %v8936
        %v8958 = vadd.f32 %v8919, %v8936
        %v8959 = vadd.f32 %v8920, %v8936
        %v8960 = vadd.f32 %v8921, %v8936
        %v8961 = vadd.f32 %v8922, %v8936
        %v8962 = vadd.f32 %v8923, %v8936
        %v8963 = vadd.f32 %v8924, %v8936
        %v8964 = vadd.f32 %v8925, %v8936
        %v8965 = vadd.f32 %v8926, %v8936
        %v8966 = vadd.f32 %v8927, %v8936
        %v8967 = vadd.f32 %v8928, %v8936
        %v8968 = vadd.f32 %v8929, %v8936
        %v8969 = vadd.f32 %v8930, %v8936
        %v8970 = vmax.f32 %v8938, 0.0
        %v8971 = vmax.f32 %v8939, 0.0
        %v8972 = vmax.f32 %v8940, 0.0
        %v8973 = vmax.f32 %v8941, 0.0
        %v8974 = vmax.f32 %v8942, 0.0
        %v8975 = vmax.f32 %v8943, 0.0
        %v8976 = vmax.f32 %v8944, 0.0
        %v8977 = vmax.f32 %v8945, 0.0
        %v8978 = vmax.f32 %v8946, 0.0
        %v8979 = vmax.f32 %v8947, 0.0
        %v8980 = vmax.f32 %v8948, 0.0
        %v8981 = vmax.f32 %v8949, 0.0
        %v8982 = vmax.f32 %v8950, 0.0
        %v8983 = vmax.f32 %v8951, 0.0
        %v8984 = vmax.f32 %v8952, 0.0
        %v8985 = vmax.f32 %v8953, 0.0
        %v8986 = vmax.f32 %v8954, 0.0
        %v8987 = vmax.f32 %v8955, 0.0
        %v8988 = vmax.f32 %v8956, 0.0
        %v8989 = vmax.f32 %v8957, 0.0
        %v8990 = vmax.f32 %v8958, 0.0
        %v8991 = vmax.f32 %v8959, 0.0
        %v8992 = vmax.f32 %v8960, 0.0
        %v8993 = vmax.f32 %v8961, 0.0
        %v8994 = vmax.f32 %v8962, 0.0
        %v8995 = vmax.f32 %v8963, 0.0
        %v8996 = vmax.f32 %v8964, 0.0
        %v8997 = vmax.f32 %v8965, 0.0
        %v8998 = vmax.f32 %v8966, 0.0
        %v8999 = vmax.f32 %v8967, 0.0
        %v9000 = vmax.f32 %v8968, 0.0
        %v9001 = vmax.f32 %v8969, 0.0
        %v9002 = vpack.c.bf16 %v8971, %v8970
        %v9003 = vpack.c.bf16 %v8973, %v8972
        %v9004 = vpack.c.bf16 %v8975, %v8974
        %v9005 = vpack.c.bf16 %v8977, %v8976
        %v9006 = vpack.c.bf16 %v8979, %v8978
        %v9007 = vpack.c.bf16 %v8981, %v8980
        %v9008 = vpack.c.bf16 %v8983, %v8982
        %v9009 = vpack.c.bf16 %v8985, %v8984
        %v9010 = vpack.c.bf16 %v8987, %v8986
        %v9011 = vpack.c.bf16 %v8989, %v8988
        %v9012 = vpack.c.bf16 %v8991, %v8990
        %v9013 = vpack.c.bf16 %v8993, %v8992
        %v9014 = vpack.c.bf16 %v8995, %v8994
        %v9015 = vpack.c.bf16 %v8997, %v8996
        %v9016 = vpack.c.bf16 %v8999, %v8998
        %v9017 = vpack.c.bf16 %v9001, %v9000
        %v9018 = vld [vmem:[%s7] sm:$0xf]
        %v9019 = vld [vmem:[%s8] sm:$0x1]
        %v9021 = vlaneseq
        %v9022 = vshrl.u32 %v9021, 7
        %v9023 = vsub.s32 0, %v9022
        %v9024 = vrot.slane %v9019, %v9023
        %v9027 = vsel %vm6956, %v9002, 0
        %v9030 = vsel %vm6956, %v9003, 0
        %v9033 = vsel %vm6956, %v9004, 0
        %v9036 = vsel %vm6956, %v9005, 0
        %v9039 = vsel %vm6956, %v9006, 0
        %v9042 = vsel %vm6956, %v9007, 0
        %v9045 = vsel %vm6956, %v9008, 0
        %v9048 = vsel %vm6956, %v9009, 0
        %v9051 = vsel %vm6956, %v9010, 0
        %v9054 = vsel %vm6956, %v9011, 0
        %v9057 = vsel %vm6956, %v9012, 0
        %v9060 = vsel %vm6956, %v9013, 0
        %v9063 = vsel %vm6956, %v9014, 0
        %v9066 = vsel %vm6956, %v9015, 0
        %v9069 = vsel %vm6956, %v9016, 0
        %v9072 = vsel %vm6956, %v9017, 0
        %v9075 = vsel %vm7005, %v9018, 0
        %9077 = vmatprep.subr.bf16.mxu0 0
        %9078 = vmatpush1.bf16.msra.mxu0 %v9075
        %9079 = vmatprep.subr.bf16.mxu0 0
        %9080 = vmatpush1.bf16.msra.mxu0 0
        %9081 = vmatprep.subr.bf16.mxu0 0
        %9082 = vmatpush1.bf16.msra.mxu0 0
        %9083 = vmatprep.subr.bf16.mxu0 0
        %9084 = vmatpush1.bf16.msra.mxu0 0
        %9085 = vmatprep.subr.bf16.mxu0 0
        %9086 = vmatpush1.bf16.msra.mxu0 0
        %9087 = vmatprep.subr.bf16.mxu0 0
        %9088 = vmatpush1.bf16.msra.mxu0 0
        %9089 = vmatprep.subr.bf16.mxu0 0
        %9090 = vmatpush1.bf16.msra.mxu0 0
        %9091 = vmatprep.subr.bf16.mxu0 0
        %9092 = vmatpush1.bf16.msra.mxu0 0
        %9093 = vmatprep.subr.bf16.mxu0 0
        %9094 = vmatpush1.bf16.msra.mxu0 0
        %9095 = vmatprep.subr.bf16.mxu0 0
        %9096 = vmatpush1.bf16.msra.mxu0 0
        %9097 = vmatprep.subr.bf16.mxu0 0
        %9098 = vmatpush1.bf16.msra.mxu0 0
        %9099 = vmatprep.subr.bf16.mxu0 0
        %9100 = vmatpush1.bf16.msra.mxu0 0
        %9101 = vmatprep.subr.bf16.mxu0 0
        %9102 = vmatpush1.bf16.msra.mxu0 0
        %9103 = vmatprep.subr.bf16.mxu0 0
        %9104 = vmatpush1.bf16.msra.mxu0 0
        %9105 = vmatprep.subr.bf16.mxu0 0
        %9106 = vmatpush1.bf16.msra.mxu0 0
        %9107 = vmatprep.subr.bf16.mxu0 0
        %9108 = vmatpush1.bf16.msra.mxu0 0
        %9109 = vmatprep.mubr.bf16.mxu0 0
        %9110 = vmatmul.mubr.bf16.gmra.mrb[0].mxu0 %v9027
        %v9111 = vpop.f32.mrb[0].mxu0
        %v9112 = vadd.f32 %v9024, %v9111
        %v9113 = vpop.f32.mrb[0].mxu0
        %v9114 = vpop.f32.mrb[0].mxu0
        %v9115 = vadd.f32 %v9024, %v9114
        %v9116 = vpop.f32.mrb[0].mxu0
        %9117 = vmatprep.mubr.bf16.mxu0 0
        %9118 = vmatmul.mubr.bf16.gmra.mrb[0].mxu0 %v9030
        %v9119 = vpop.f32.mrb[0].mxu0
        %v9120 = vadd.f32 %v9024, %v9119
        %v9121 = vpop.f32.mrb[0].mxu0
        %v9122 = vpop.f32.mrb[0].mxu0
        %v9123 = vadd.f32 %v9024, %v9122
        %v9124 = vpop.f32.mrb[0].mxu0
        %9125 = vmatprep.mubr.bf16.mxu0 0
        %9126 = vmatmul.mubr.bf16.gmra.mrb[0].mxu0 %v9033
        %v9127 = vpop.f32.mrb[0].mxu0
        %v9128 = vadd.f32 %v9024, %v9127
        %v9129 = vpop.f32.mrb[0].mxu0
        %v9130 = vpop.f32.mrb[0].mxu0
        %v9131 = vadd.f32 %v9024, %v9130
        %v9132 = vpop.f32.mrb[0].mxu0
        %9133 = vmatprep.mubr.bf16.mxu0 0
        %9134 = vmatmul.mubr.bf16.gmra.mrb[0].mxu0 %v9036
        %v9135 = vpop.f32.mrb[0].mxu0
        %v9136 = vadd.f32 %v9024, %v9135
        %v9137 = vpop.f32.mrb[0].mxu0
        %v9138 = vpop.f32.mrb[0].mxu0
        %v9139 = vadd.f32 %v9024, %v9138
        %v9140 = vpop.f32.mrb[0].mxu0
        %9141 = vmatprep.mubr.bf16.mxu0 0
        %9142 = vmatmul.mubr.bf16.gmra.mrb[0].mxu0 %v9039
        %v9143 = vpop.f32.mrb[0].mxu0
        %v9144 = vadd.f32 %v9024, %v9143
        %v9145 = vpop.f32.mrb[0].mxu0
        %v9146 = vpop.f32.mrb[0].mxu0
        %v9147 = vadd.f32 %v9024, %v9146
        %v9148 = vpop.f32.mrb[0].mxu0
        %9149 = vmatprep.mubr.bf16.mxu0 0
        %9150 = vmatmul.mubr.bf16.gmra.mrb[0].mxu0 %v9042
        %v9151 = vpop.f32.mrb[0].mxu0
        %v9152 = vadd.f32 %v9024, %v9151
        %v9153 = vpop.f32.mrb[0].mxu0
        %v9154 = vpop.f32.mrb[0].mxu0
        %v9155 = vadd.f32 %v9024, %v9154
        %v9156 = vpop.f32.mrb[0].mxu0
        %9157 = vmatprep.mubr.bf16.mxu0 0
        %9158 = vmatmul.mubr.bf16.gmra.mrb[0].mxu0 %v9045
        %v9159 = vpop.f32.mrb[0].mxu0
        %v9160 = vadd.f32 %v9024, %v9159
        %v9161 = vpop.f32.mrb[0].mxu0
        %v9162 = vpop.f32.mrb[0].mxu0
        %v9163 = vadd.f32 %v9024, %v9162
        %v9164 = vpop.f32.mrb[0].mxu0
        %9165 = vmatprep.mubr.bf16.mxu0 0
        %9166 = vmatmul.mubr.bf16.gmra.mrb[0].mxu0 %v9048
        %v9167 = vpop.f32.mrb[0].mxu0
        %v9168 = vadd.f32 %v9024, %v9167
        %v9169 = vpop.f32.mrb[0].mxu0
        %v9170 = vpop.f32.mrb[0].mxu0
        %v9171 = vadd.f32 %v9024, %v9170
        %v9172 = vpop.f32.mrb[0].mxu0
        %9173 = vmatprep.mubr.bf16.mxu0 0
        %9174 = vmatmul.mubr.bf16.gmra.mrb[0].mxu0 %v9051
        %v9175 = vpop.f32.mrb[0].mxu0
        %v9176 = vadd.f32 %v9024, %v9175
        %v9177 = vpop.f32.mrb[0].mxu0
        %v9178 = vpop.f32.mrb[0].mxu0
        %v9179 = vadd.f32 %v9024, %v9178
        %v9180 = vpop.f32.mrb[0].mxu0
        %9181 = vmatprep.mubr.bf16.mxu0 0
        %9182 = vmatmul.mubr.bf16.gmra.mrb[0].mxu0 %v9054
        %v9183 = vpop.f32.mrb[0].mxu0
        %v9184 = vadd.f32 %v9024, %v9183
        %v9185 = vpop.f32.mrb[0].mxu0
        %v9186 = vpop.f32.mrb[0].mxu0
        %v9187 = vadd.f32 %v9024, %v9186
        %v9188 = vpop.f32.mrb[0].mxu0
        %9189 = vmatprep.mubr.bf16.mxu0 0
        %9190 = vmatmul.mubr.bf16.gmra.mrb[0].mxu0 %v9057
        %v9191 = vpop.f32.mrb[0].mxu0
        %v9192 = vadd.f32 %v9024, %v9191
        %v9193 = vpop.f32.mrb[0].mxu0
        %v9194 = vpop.f32.mrb[0].mxu0
        %v9195 = vadd.f32 %v9024, %v9194
        %v9196 = vpop.f32.mrb[0].mxu0
        %9197 = vmatprep.mubr.bf16.mxu0 0
        %9198 = vmatmul.mubr.bf16.gmra.mrb[0].mxu0 %v9060
        %v9199 = vpop.f32.mrb[0].mxu0
        %v9200 = vadd.f32 %v9024, %v9199
        %v9201 = vpop.f32.mrb[0].mxu0
        %v9202 = vpop.f32.mrb[0].mxu0
        %v9203 = vadd.f32 %v9024, %v9202
        %v9204 = vpop.f32.mrb[0].mxu0
        %9205 = vmatprep.mubr.bf16.mxu0 0
        %9206 = vmatmul.mubr.bf16.gmra.mrb[0].mxu0 %v9063
        %v9207 = vpop.f32.mrb[0].mxu0
        %v9208 = vadd.f32 %v9024, %v9207
        %v9209 = vpop.f32.mrb[0].mxu0
        %v9210 = vpop.f32.mrb[0].mxu0
        %v9211 = vadd.f32 %v9024, %v9210
        %v9212 = vpop.f32.mrb[0].mxu0
        %9213 = vmatprep.mubr.bf16.mxu0 0
        %9214 = vmatmul.mubr.bf16.gmra.mrb[0].mxu0 %v9066
        %v9215 = vpop.f32.mrb[0].mxu0
        %v9216 = vadd.f32 %v9024, %v9215
        %v9217 = vpop.f32.mrb[0].mxu0
        %v9218 = vpop.f32.mrb[0].mxu0
        %v9219 = vadd.f32 %v9024, %v9218
        %v9220 = vpop.f32.mrb[0].mxu0
        %9221 = vmatprep.mubr.bf16.mxu0 0
        %9222 = vmatmul.mubr.bf16.gmra.mrb[0].mxu0 %v9069
        %v9223 = vpop.f32.mrb[0].mxu0
        %v9224 = vadd.f32 %v9024, %v9223
        %v9225 = vpop.f32.mrb[0].mxu0
        %v9226 = vpop.f32.mrb[0].mxu0
        %v9227 = vadd.f32 %v9024, %v9226
        %v9228 = vpop.f32.mrb[0].mxu0
        %9229 = vmatprep.mubr.bf16.mxu0 0
        %9230 = vmatmul.mubr.bf16.gmra.mrb[0].mxu0 %v9072
        %v9231 = vpop.f32.mrb[0].mxu0
        %v9232 = vadd.f32 %v9024, %v9231
        %v9233 = vpop.f32.mrb[0].mxu0
        %v9234 = vpop.f32.mrb[0].mxu0
        %v9235 = vadd.f32 %v9024, %v9234
        %v9236 = vpop.f32.mrb[0].mxu0
        %9237 = vdwg.mxu0
        %vm9238 = vsmask.f32 3328
        %vm9239 = vsmask.f32 7440
        %vm9240 = vmor %vm9238, %vm9239
        %v9242 = vshrl.u32 %v525, 16
        %v9244 = vrot.slane %v9242, 4
        %v9245 = vshll.u32 %v525, 16
        %v9247 = vrot.slane %v9245, 5
        %v9248 = vor.u32 %v9244, %v9247
        %v9249 = vrot.slane %v9248, 4
        %v9251 = vshll.u32 %v526, 16
        %v9253 = vrot.slane %v9251, 5
        %v9254 = vsel %vm9240, %v9249, %v9253
        %v9255 = vshrl.u32 %v526, 16
        %v9257 = vrot.slane %v9255, 4
        %v9258 = vor.u32 %v9257, %v9253
        %v9259 = vrot.slane %v9258, 4
        %v9261 = vshll.u32 %v527, 16
        %v9263 = vrot.slane %v9261, 5
        %v9264 = vsel %vm9240, %v9259, %v9263
        %v9266 = vshrl.u32 %v528, 16
        %v9268 = vrot.slane %v9266, 4
        %v9269 = vshll.u32 %v528, 16
        %v9271 = vrot.slane %v9269, 5
        %v9272 = vor.u32 %v9268, %v9271
        %v9273 = vrot.slane %v9272, 4
        %v9275 = vshll.u32 %v529, 16
        %v9277 = vrot.slane %v9275, 5
        %v9278 = vsel %vm9240, %v9273, %v9277
        %v9279 = vshrl.u32 %v529, 16
        %v9281 = vrot.slane %v9279, 4
        %v9282 = vor.u32 %v9281, %v9277
        %v9283 = vrot.slane %v9282, 4
        %v9285 = vshll.u32 %v530, 16
        %v9287 = vrot.slane %v9285, 5
        %v9288 = vsel %vm9240, %v9283, %v9287
        %v9290 = vshrl.u32 %v531, 16
        %v9292 = vrot.slane %v9290, 4
        %v9293 = vshll.u32 %v531, 16
        %v9295 = vrot.slane %v9293, 5
        %v9296 = vor.u32 %v9292, %v9295
        %v9297 = vrot.slane %v9296, 4
        %v9299 = vshll.u32 %v532, 16
        %v9301 = vrot.slane %v9299, 5
        %v9302 = vsel %vm9240, %v9297, %v9301
        %v9303 = vshrl.u32 %v532, 16
        %v9305 = vrot.slane %v9303, 4
        %v9306 = vor.u32 %v9305, %v9301
        %v9307 = vrot.slane %v9306, 4
        %v9309 = vshll.u32 %v533, 16
        %v9311 = vrot.slane %v9309, 5
        %v9312 = vsel %vm9240, %v9307, %v9311
        %v9314 = vshrl.u32 %v534, 16
        %v9316 = vrot.slane %v9314, 4
        %v9317 = vshll.u32 %v534, 16
        %v9319 = vrot.slane %v9317, 5
        %v9320 = vor.u32 %v9316, %v9319
        %v9321 = vrot.slane %v9320, 4
        %v9323 = vshll.u32 %v535, 16
        %v9325 = vrot.slane %v9323, 5
        %v9326 = vsel %vm9240, %v9321, %v9325
        %v9327 = vshrl.u32 %v535, 16
        %v9329 = vrot.slane %v9327, 4
        %v9330 = vor.u32 %v9329, %v9325
        %v9331 = vrot.slane %v9330, 4
        %v9333 = vshll.u32 %v536, 16
        %v9335 = vrot.slane %v9333, 5
        %v9336 = vsel %vm9240, %v9331, %v9335
        %v9338 = vshrl.u32 %v537, 16
        %v9340 = vrot.slane %v9338, 4
        %v9341 = vshll.u32 %v537, 16
        %v9343 = vrot.slane %v9341, 5
        %v9344 = vor.u32 %v9340, %v9343
        %v9345 = vrot.slane %v9344, 4
        %v9347 = vshll.u32 %v538, 16
        %v9349 = vrot.slane %v9347, 5
        %v9350 = vsel %vm9240, %v9345, %v9349
        %v9351 = vshrl.u32 %v538, 16
        %v9353 = vrot.slane %v9351, 4
        %v9354 = vor.u32 %v9353, %v9349
        %v9355 = vrot.slane %v9354, 4
        %v9357 = vshll.u32 %v539, 16
        %v9359 = vrot.slane %v9357, 5
        %v9360 = vsel %vm9240, %v9355, %v9359
        %v9362 = vshrl.u32 %v540, 16
        %v9364 = vrot.slane %v9362, 4
        %v9365 = vshll.u32 %v540, 16
        %v9367 = vrot.slane %v9365, 5
        %v9368 = vor.u32 %v9364, %v9367
        %v9369 = vrot.slane %v9368, 4
        %v9371 = vshll.u32 %v541, 16
        %v9373 = vrot.slane %v9371, 5
        %v9374 = vsel %vm9240, %v9369, %v9373
        %v9375 = vshrl.u32 %v541, 16
        %v9377 = vrot.slane %v9375, 4
        %v9378 = vor.u32 %v9377, %v9373
        %v9379 = vrot.slane %v9378, 4
        %v9381 = vshll.u32 %v542, 16
        %v9383 = vrot.slane %v9381, 5
        %v9384 = vsel %vm9240, %v9379, %v9383
        %v9386 = vshrl.u32 %v543, 16
        %v9388 = vrot.slane %v9386, 4
        %v9389 = vshll.u32 %v543, 16
        %v9391 = vrot.slane %v9389, 5
        %v9392 = vor.u32 %v9388, %v9391
        %v9393 = vrot.slane %v9392, 4
        %v9395 = vshll.u32 %v544, 16
        %v9397 = vrot.slane %v9395, 5
        %v9398 = vsel %vm9240, %v9393, %v9397
        %v9399 = vshrl.u32 %v544, 16
        %v9401 = vrot.slane %v9399, 4
        %v9402 = vor.u32 %v9401, %v9397
        %v9403 = vrot.slane %v9402, 4
        %v9405 = vshll.u32 %v545, 16
        %v9407 = vrot.slane %v9405, 5
        %v9408 = vsel %vm9240, %v9403, %v9407
        %v9410 = vshrl.u32 %v546, 16
        %v9412 = vrot.slane %v9410, 4
        %v9413 = vshll.u32 %v546, 16
        %v9415 = vrot.slane %v9413, 5
        %v9416 = vor.u32 %v9412, %v9415
        %v9417 = vrot.slane %v9416, 4
        %v9419 = vshll.u32 %v547, 16
        %v9421 = vrot.slane %v9419, 5
        %v9422 = vsel %vm9240, %v9417, %v9421
        %v9423 = vshrl.u32 %v547, 16
        %v9425 = vrot.slane %v9423, 4
        %v9426 = vor.u32 %v9425, %v9421
        %v9427 = vrot.slane %v9426, 4
        %v9429 = vshll.u32 %v548, 16
        %v9431 = vrot.slane %v9429, 5
        %v9432 = vsel %vm9240, %v9427, %v9431
        %v9434 = vshrl.u32 %v549, 16
        %v9436 = vrot.slane %v9434, 4
        %v9437 = vshll.u32 %v549, 16
        %v9439 = vrot.slane %v9437, 5
        %v9440 = vor.u32 %v9436, %v9439
        %v9441 = vrot.slane %v9440, 4
        %v9443 = vshll.u32 %v550, 16
        %v9445 = vrot.slane %v9443, 5
        %v9446 = vsel %vm9240, %v9441, %v9445
        %v9447 = vshrl.u32 %v550, 16
        %v9449 = vrot.slane %v9447, 4
        %v9450 = vor.u32 %v9449, %v9445
        %v9451 = vrot.slane %v9450, 4
        %v9453 = vshll.u32 %v551, 16
        %v9455 = vrot.slane %v9453, 5
        %v9456 = vsel %vm9240, %v9451, %v9455
        %v9458 = vshrl.u32 %v552, 16
        %v9460 = vrot.slane %v9458, 4
        %v9461 = vshll.u32 %v552, 16
        %v9463 = vrot.slane %v9461, 5
        %v9464 = vor.u32 %v9460, %v9463
        %v9465 = vrot.slane %v9464, 4
        %v9467 = vshll.u32 %v553, 16
        %v9469 = vrot.slane %v9467, 5
        %v9470 = vsel %vm9240, %v9465, %v9469
        %v9471 = vshrl.u32 %v553, 16
        %v9473 = vrot.slane %v9471, 4
        %v9474 = vor.u32 %v9473, %v9469
        %v9475 = vrot.slane %v9474, 4
        %v9477 = vshll.u32 %v554, 16
        %v9479 = vrot.slane %v9477, 5
        %v9480 = vsel %vm9240, %v9475, %v9479
        %v9482 = vshrl.u32 %v555, 16
        %v9484 = vrot.slane %v9482, 4
        %v9485 = vshll.u32 %v555, 16
        %v9487 = vrot.slane %v9485, 5
        %v9488 = vor.u32 %v9484, %v9487
        %v9489 = vrot.slane %v9488, 4
        %v9491 = vshll.u32 %v556, 16
        %v9493 = vrot.slane %v9491, 5
        %v9494 = vsel %vm9240, %v9489, %v9493
        %v9495 = vshrl.u32 %v556, 16
        %v9497 = vrot.slane %v9495, 4
        %v9498 = vor.u32 %v9497, %v9493
        %v9499 = vrot.slane %v9498, 4
        %v9501 = vshll.u32 %v557, 16
        %v9503 = vrot.slane %v9501, 5
        %v9504 = vsel %vm9240, %v9499, %v9503
        %v9506 = vshrl.u32 %v558, 16
        %v9508 = vrot.slane %v9506, 4
        %v9509 = vshll.u32 %v558, 16
        %v9511 = vrot.slane %v9509, 5
        %v9512 = vor.u32 %v9508, %v9511
        %v9513 = vrot.slane %v9512, 4
        %v9515 = vshll.u32 %v559, 16
        %v9517 = vrot.slane %v9515, 5
        %v9518 = vsel %vm9240, %v9513, %v9517
        %v9519 = vshrl.u32 %v559, 16
        %v9521 = vrot.slane %v9519, 4
        %v9522 = vor.u32 %v9521, %v9517
        %v9523 = vrot.slane %v9522, 4
        %v9525 = vshll.u32 %v560, 16
        %v9527 = vrot.slane %v9525, 5
        %v9528 = vsel %vm9240, %v9523, %v9527
        %v9530 = vshrl.u32 %v561, 16
        %v9532 = vrot.slane %v9530, 4
        %v9533 = vshll.u32 %v561, 16
        %v9535 = vrot.slane %v9533, 5
        %v9536 = vor.u32 %v9532, %v9535
        %v9537 = vrot.slane %v9536, 4
        %v9539 = vshll.u32 %v562, 16
        %v9541 = vrot.slane %v9539, 5
        %v9542 = vsel %vm9240, %v9537, %v9541
        %v9543 = vshrl.u32 %v562, 16
        %v9545 = vrot.slane %v9543, 4
        %v9546 = vor.u32 %v9545, %v9541
        %v9547 = vrot.slane %v9546, 4
        %v9549 = vshll.u32 %v563, 16
        %v9551 = vrot.slane %v9549, 5
        %v9552 = vsel %vm9240, %v9547, %v9551
        %v9554 = vshrl.u32 %v564, 16
        %v9556 = vrot.slane %v9554, 4
        %v9557 = vshll.u32 %v564, 16
        %v9559 = vrot.slane %v9557, 5
        %v9560 = vor.u32 %v9556, %v9559
        %v9561 = vrot.slane %v9560, 4
        %v9563 = vshll.u32 %v565, 16
        %v9565 = vrot.slane %v9563, 5
        %v9566 = vsel %vm9240, %v9561, %v9565
        %v9567 = vshrl.u32 %v565, 16
        %v9569 = vrot.slane %v9567, 4
        %v9570 = vor.u32 %v9569, %v9565
        %v9571 = vrot.slane %v9570, 4
        %v9573 = vshll.u32 %v566, 16
        %v9575 = vrot.slane %v9573, 5
        %v9576 = vsel %vm9240, %v9571, %v9575
        %v9578 = vshrl.u32 %v567, 16
        %v9580 = vrot.slane %v9578, 4
        %v9581 = vshll.u32 %v567, 16
        %v9583 = vrot.slane %v9581, 5
        %v9584 = vor.u32 %v9580, %v9583
        %v9585 = vrot.slane %v9584, 4
        %v9587 = vshll.u32 %v568, 16
        %v9589 = vrot.slane %v9587, 5
        %v9590 = vsel %vm9240, %v9585, %v9589
        %v9591 = vshrl.u32 %v568, 16
        %v9593 = vrot.slane %v9591, 4
        %v9594 = vor.u32 %v9593, %v9589
        %v9595 = vrot.slane %v9594, 4
        %v9597 = vshll.u32 %v569, 16
        %v9599 = vrot.slane %v9597, 5
        %v9600 = vsel %vm9240, %v9595, %v9599
        %v9602 = vshrl.u32 %v570, 16
        %v9604 = vrot.slane %v9602, 4
        %v9605 = vshll.u32 %v570, 16
        %v9607 = vrot.slane %v9605, 5
        %v9608 = vor.u32 %v9604, %v9607
        %v9609 = vrot.slane %v9608, 4
        %v9611 = vshll.u32 %v571, 16
        %v9613 = vrot.slane %v9611, 5
        %v9614 = vsel %vm9240, %v9609, %v9613
        %v9615 = vshrl.u32 %v571, 16
        %v9617 = vrot.slane %v9615, 4
        %v9618 = vor.u32 %v9617, %v9613
        %v9619 = vrot.slane %v9618, 4
        %v9621 = vshll.u32 %v572, 16
        %v9623 = vrot.slane %v9621, 5
        %v9624 = vsel %vm9240, %v9619, %v9623
        %v9625 = vld [vmem:[%s9] sm:$0x3]
        %v9626 = vunpack.c.l.b16 %v9254
        %v9627 = vunpack.c.l.b16 %v9264
        %v9628 = vunpack.c.l.b16 %v9278
        %v9629 = vunpack.c.l.b16 %v9288
        %v9630 = vunpack.c.l.b16 %v9302
        %v9631 = vunpack.c.l.b16 %v9312
        %v9632 = vunpack.c.l.b16 %v9326
        %v9633 = vunpack.c.l.b16 %v9336
        %v9634 = vunpack.c.l.b16 %v9350
        %v9635 = vunpack.c.l.b16 %v9360
        %v9636 = vunpack.c.l.b16 %v9374
        %v9637 = vunpack.c.l.b16 %v9384
        %v9638 = vunpack.c.l.b16 %v9398
        %v9639 = vunpack.c.l.b16 %v9408
        %v9640 = vunpack.c.l.b16 %v9422
        %v9641 = vunpack.c.l.b16 %v9432
        %v9642 = vunpack.c.l.b16 %v9446
        %v9643 = vunpack.c.l.b16 %v9456
        %v9644 = vunpack.c.l.b16 %v9470
        %v9645 = vunpack.c.l.b16 %v9480
        %v9646 = vunpack.c.l.b16 %v9494
        %v9647 = vunpack.c.l.b16 %v9504
        %v9648 = vunpack.c.l.b16 %v9518
        %v9649 = vunpack.c.l.b16 %v9528
        %v9650 = vunpack.c.l.b16 %v9542
        %v9651 = vunpack.c.l.b16 %v9552
        %v9652 = vunpack.c.l.b16 %v9566
        %v9653 = vunpack.c.l.b16 %v9576
        %v9654 = vunpack.c.l.b16 %v9590
        %v9655 = vunpack.c.l.b16 %v9600
        %v9656 = vunpack.c.l.b16 %v9614
        %v9657 = vunpack.c.l.b16 %v9624
        %v9658 = vpack.c.b16 %v9627, %v9626
        %v9659 = vpack.c.b16 %v9629, %v9628
        %v9660 = vpack.c.b16 %v9631, %v9630
        %v9661 = vpack.c.b16 %v9633, %v9632
        %v9662 = vpack.c.b16 %v9635, %v9634
        %v9663 = vpack.c.b16 %v9637, %v9636
        %v9664 = vpack.c.b16 %v9639, %v9638
        %v9665 = vpack.c.b16 %v9641, %v9640
        %v9666 = vpack.c.b16 %v9643, %v9642
        %v9667 = vpack.c.b16 %v9645, %v9644
        %v9668 = vpack.c.b16 %v9647, %v9646
        %v9669 = vpack.c.b16 %v9649, %v9648
        %v9670 = vpack.c.b16 %v9651, %v9650
        %v9671 = vpack.c.b16 %v9653, %v9652
        %v9672 = vpack.c.b16 %v9655, %v9654
        %v9673 = vpack.c.b16 %v9657, %v9656
        %v9675 = vsel %vm2749, %v9658, 0
        %v9678 = vsel %vm2749, %v9659, 0
        %v9681 = vsel %vm2749, %v9660, 0
        %v9684 = vsel %vm2749, %v9661, 0
        %v9687 = vsel %vm2749, %v9662, 0
        %v9690 = vsel %vm2749, %v9663, 0
        %v9693 = vsel %vm2749, %v9664, 0
        %v9696 = vsel %vm2749, %v9665, 0
        %v9699 = vsel %vm2749, %v9666, 0
        %v9702 = vsel %vm2749, %v9667, 0
        %v9705 = vsel %vm2749, %v9668, 0
        %v9708 = vsel %vm2749, %v9669, 0
        %v9711 = vsel %vm2749, %v9670, 0
        %v9714 = vsel %vm2749, %v9671, 0
        %v9717 = vsel %vm2749, %v9672, 0
        %v9720 = vsel %vm2749, %v9673, 0
        %v9723 = vsel %vm2813, %v9625, 0
        %9725 = vmatprep.subr.bf16.mxu0 0
        %9726 = vmatpush1.bf16.msra.mxu0 %v9723
        %9727 = vmatprep.subr.bf16.mxu0 0
        %9728 = vmatpush1.bf16.msra.mxu0 0
        %9729 = vmatprep.subr.bf16.mxu0 0
        %9730 = vmatpush1.bf16.msra.mxu0 0
        %9731 = vmatprep.subr.bf16.mxu0 0
        %9732 = vmatpush1.bf16.msra.mxu0 0
        %9733 = vmatprep.subr.bf16.mxu0 0
        %9734 = vmatpush1.bf16.msra.mxu0 0
        %9735 = vmatprep.subr.bf16.mxu0 0
        %9736 = vmatpush1.bf16.msra.mxu0 0
        %9737 = vmatprep.subr.bf16.mxu0 0
        %9738 = vmatpush1.bf16.msra.mxu0 0
        %9739 = vmatprep.subr.bf16.mxu0 0
        %9740 = vmatpush1.bf16.msra.mxu0 0
        %9741 = vmatprep.subr.bf16.mxu0 0
        %9742 = vmatpush1.bf16.msra.mxu0 0
        %9743 = vmatprep.subr.bf16.mxu0 0
        %9744 = vmatpush1.bf16.msra.mxu0 0
        %9745 = vmatprep.subr.bf16.mxu0 0
        %9746 = vmatpush1.bf16.msra.mxu0 0
        %9747 = vmatprep.subr.bf16.mxu0 0
        %9748 = vmatpush1.bf16.msra.mxu0 0
        %9749 = vmatprep.subr.bf16.mxu0 0
        %9750 = vmatpush1.bf16.msra.mxu0 0
        %9751 = vmatprep.subr.bf16.mxu0 0
        %9752 = vmatpush1.bf16.msra.mxu0 0
        %9753 = vmatprep.subr.bf16.mxu0 0
        %9754 = vmatpush1.bf16.msra.mxu0 0
        %9755 = vmatprep.subr.bf16.mxu0 0
        %9756 = vmatpush1.bf16.msra.mxu0 0
        %9757 = vmatprep.mubr.bf16.mxu0 0
        %9758 = vmatmul.mubr.bf16.gmra.mrb[0].mxu0 %v9675
        %v9759 = vpop.f32.mrb[0].mxu0
        %v9760 = vadd.f32 0.0, %v9759
        %v9761 = vpop.f32.mrb[0].mxu0
        %v9762 = vpop.f32.mrb[0].mxu0
        %v9763 = vadd.f32 0.0, %v9762
        %v9764 = vpop.f32.mrb[0].mxu0
        %9765 = vmatprep.mubr.bf16.mxu0 0
        %9766 = vmatmul.mubr.bf16.gmra.mrb[0].mxu0 %v9678
        %v9767 = vpop.f32.mrb[0].mxu0
        %v9768 = vadd.f32 0.0, %v9767
        %v9769 = vpop.f32.mrb[0].mxu0
        %v9770 = vpop.f32.mrb[0].mxu0
        %v9771 = vadd.f32 0.0, %v9770
        %v9772 = vpop.f32.mrb[0].mxu0
        %9773 = vmatprep.mubr.bf16.mxu0 0
        %9774 = vmatmul.mubr.bf16.gmra.mrb[0].mxu0 %v9681
        %v9775 = vpop.f32.mrb[0].mxu0
        %v9776 = vadd.f32 0.0, %v9775
        %v9777 = vpop.f32.mrb[0].mxu0
        %v9778 = vpop.f32.mrb[0].mxu0
        %v9779 = vadd.f32 0.0, %v9778
        %v9780 = vpop.f32.mrb[0].mxu0
        %9781 = vmatprep.mubr.bf16.mxu0 0
        %9782 = vmatmul.mubr.bf16.gmra.mrb[0].mxu0 %v9684
        %v9783 = vpop.f32.mrb[0].mxu0
        %v9784 = vadd.f32 0.0, %v9783
        %v9785 = vpop.f32.mrb[0].mxu0
        %v9786 = vpop.f32.mrb[0].mxu0
        %v9787 = vadd.f32 0.0, %v9786
        %v9788 = vpop.f32.mrb[0].mxu0
        %9789 = vmatprep.mubr.bf16.mxu0 0
        %9790 = vmatmul.mubr.bf16.gmra.mrb[0].mxu0 %v9687
        %v9791 = vpop.f32.mrb[0].mxu0
        %v9792 = vadd.f32 0.0, %v9791
        %v9793 = vpop.f32.mrb[0].mxu0
        %v9794 = vpop.f32.mrb[0].mxu0
        %v9795 = vadd.f32 0.0, %v9794
        %v9796 = vpop.f32.mrb[0].mxu0
        %9797 = vmatprep.mubr.bf16.mxu0 0
        %9798 = vmatmul.mubr.bf16.gmra.mrb[0].mxu0 %v9690
        %v9799 = vpop.f32.mrb[0].mxu0
        %v9800 = vadd.f32 0.0, %v9799
        %v9801 = vpop.f32.mrb[0].mxu0
        %v9802 = vpop.f32.mrb[0].mxu0
        %v9803 = vadd.f32 0.0, %v9802
        %v9804 = vpop.f32.mrb[0].mxu0
        %9805 = vmatprep.mubr.bf16.mxu0 0
        %9806 = vmatmul.mubr.bf16.gmra.mrb[0].mxu0 %v9693
        %v9807 = vpop.f32.mrb[0].mxu0
        %v9808 = vadd.f32 0.0, %v9807
        %v9809 = vpop.f32.mrb[0].mxu0
        %v9810 = vpop.f32.mrb[0].mxu0
        %v9811 = vadd.f32 0.0, %v9810
        %v9812 = vpop.f32.mrb[0].mxu0
        %9813 = vmatprep.mubr.bf16.mxu0 0
        %9814 = vmatmul.mubr.bf16.gmra.mrb[0].mxu0 %v9696
        %v9815 = vpop.f32.mrb[0].mxu0
        %v9816 = vadd.f32 0.0, %v9815
        %v9817 = vpop.f32.mrb[0].mxu0
        %v9818 = vpop.f32.mrb[0].mxu0
        %v9819 = vadd.f32 0.0, %v9818
        %v9820 = vpop.f32.mrb[0].mxu0
        %9821 = vmatprep.mubr.bf16.mxu0 0
        %9822 = vmatmul.mubr.bf16.gmra.mrb[0].mxu0 %v9699
        %v9823 = vpop.f32.mrb[0].mxu0
        %v9824 = vadd.f32 0.0, %v9823
        %v9825 = vpop.f32.mrb[0].mxu0
        %v9826 = vpop.f32.mrb[0].mxu0
        %v9827 = vadd.f32 0.0, %v9826
        %v9828 = vpop.f32.mrb[0].mxu0
        %9829 = vmatprep.mubr.bf16.mxu0 0
        %9830 = vmatmul.mubr.bf16.gmra.mrb[0].mxu0 %v9702
        %v9831 = vpop.f32.mrb[0].mxu0
        %v9832 = vadd.f32 0.0, %v9831
        %v9833 = vpop.f32.mrb[0].mxu0
        %v9834 = vpop.f32.mrb[0].mxu0
        %v9835 = vadd.f32 0.0, %v9834
        %v9836 = vpop.f32.mrb[0].mxu0
        %9837 = vmatprep.mubr.bf16.mxu0 0
        %9838 = vmatmul.mubr.bf16.gmra.mrb[0].mxu0 %v9705
        %v9839 = vpop.f32.mrb[0].mxu0
        %v9840 = vadd.f32 0.0, %v9839
        %v9841 = vpop.f32.mrb[0].mxu0
        %v9842 = vpop.f32.mrb[0].mxu0
        %v9843 = vadd.f32 0.0, %v9842
        %v9844 = vpop.f32.mrb[0].mxu0
        %9845 = vmatprep.mubr.bf16.mxu0 0
        %9846 = vmatmul.mubr.bf16.gmra.mrb[0].mxu0 %v9708
        %v9847 = vpop.f32.mrb[0].mxu0
        %v9848 = vadd.f32 0.0, %v9847
        %v9849 = vpop.f32.mrb[0].mxu0
        %v9850 = vpop.f32.mrb[0].mxu0
        %v9851 = vadd.f32 0.0, %v9850
        %v9852 = vpop.f32.mrb[0].mxu0
        %9853 = vmatprep.mubr.bf16.mxu0 0
        %9854 = vmatmul.mubr.bf16.gmra.mrb[0].mxu0 %v9711
        %v9855 = vpop.f32.mrb[0].mxu0
        %v9856 = vadd.f32 0.0, %v9855
        %v9857 = vpop.f32.mrb[0].mxu0
        %v9858 = vpop.f32.mrb[0].mxu0
        %v9859 = vadd.f32 0.0, %v9858
        %v9860 = vpop.f32.mrb[0].mxu0
        %9861 = vmatprep.mubr.bf16.mxu0 0
        %9862 = vmatmul.mubr.bf16.gmra.mrb[0].mxu0 %v9714
        %v9863 = vpop.f32.mrb[0].mxu0
        %v9864 = vadd.f32 0.0, %v9863
        %v9865 = vpop.f32.mrb[0].mxu0
        %v9866 = vpop.f32.mrb[0].mxu0
        %v9867 = vadd.f32 0.0, %v9866
        %v9868 = vpop.f32.mrb[0].mxu0
        %9869 = vmatprep.mubr.bf16.mxu0 0
        %9870 = vmatmul.mubr.bf16.gmra.mrb[0].mxu0 %v9717
        %v9871 = vpop.f32.mrb[0].mxu0
        %v9872 = vadd.f32 0.0, %v9871
        %v9873 = vpop.f32.mrb[0].mxu0
        %v9874 = vpop.f32.mrb[0].mxu0
        %v9875 = vadd.f32 0.0, %v9874
        %v9876 = vpop.f32.mrb[0].mxu0
        %9877 = vmatprep.mubr.bf16.mxu0 0
        %9878 = vmatmul.mubr.bf16.gmra.mrb[0].mxu0 %v9720
        %v9879 = vpop.f32.mrb[0].mxu0
        %v9880 = vadd.f32 0.0, %v9879
        %v9881 = vpop.f32.mrb[0].mxu0
        %v9882 = vpop.f32.mrb[0].mxu0
        %v9883 = vadd.f32 0.0, %v9882
        %v9884 = vpop.f32.mrb[0].mxu0
        %9885 = vdwg.mxu0
        %v9886 = vadd.f32 %v9112, %v9760
        %v9887 = vadd.f32 %v9115, %v9763
        %v9888 = vadd.f32 %v9120, %v9768
        %v9889 = vadd.f32 %v9123, %v9771
        %v9890 = vadd.f32 %v9128, %v9776
        %v9891 = vadd.f32 %v9131, %v9779
        %v9892 = vadd.f32 %v9136, %v9784
        %v9893 = vadd.f32 %v9139, %v9787
        %v9894 = vadd.f32 %v9144, %v9792
        %v9895 = vadd.f32 %v9147, %v9795
        %v9896 = vadd.f32 %v9152, %v9800
        %v9897 = vadd.f32 %v9155, %v9803
        %v9898 = vadd.f32 %v9160, %v9808
        %v9899 = vadd.f32 %v9163, %v9811
        %v9900 = vadd.f32 %v9168, %v9816
        %v9901 = vadd.f32 %v9171, %v9819
        %v9902 = vadd.f32 %v9176, %v9824
        %v9903 = vadd.f32 %v9179, %v9827
        %v9904 = vadd.f32 %v9184, %v9832
        %v9905 = vadd.f32 %v9187, %v9835
        %v9906 = vadd.f32 %v9192, %v9840
        %v9907 = vadd.f32 %v9195, %v9843
        %v9908 = vadd.f32 %v9200, %v9848
        %v9909 = vadd.f32 %v9203, %v9851
        %v9910 = vadd.f32 %v9208, %v9856
        %v9911 = vadd.f32 %v9211, %v9859
        %v9912 = vadd.f32 %v9216, %v9864
        %v9913 = vadd.f32 %v9219, %v9867
        %v9914 = vadd.f32 %v9224, %v9872
        %v9915 = vadd.f32 %v9227, %v9875
        %v9916 = vadd.f32 %v9232, %v9880
        %v9917 = vadd.f32 %v9235, %v9883
        %v9918 = vmax.f32 %v9886, 0.0
        %v9919 = vmax.f32 %v9887, 0.0
        %v9920 = vmax.f32 %v9888, 0.0
        %v9921 = vmax.f32 %v9889, 0.0
        %v9922 = vmax.f32 %v9890, 0.0
        %v9923 = vmax.f32 %v9891, 0.0
        %v9924 = vmax.f32 %v9892, 0.0
        %v9925 = vmax.f32 %v9893, 0.0
        %v9926 = vmax.f32 %v9894, 0.0
        %v9927 = vmax.f32 %v9895, 0.0
        %v9928 = vmax.f32 %v9896, 0.0
        %v9929 = vmax.f32 %v9897, 0.0
        %v9930 = vmax.f32 %v9898, 0.0
        %v9931 = vmax.f32 %v9899, 0.0
        %v9932 = vmax.f32 %v9900, 0.0
        %v9933 = vmax.f32 %v9901, 0.0
        %v9934 = vmax.f32 %v9902, 0.0
        %v9935 = vmax.f32 %v9903, 0.0
        %v9936 = vmax.f32 %v9904, 0.0
        %v9937 = vmax.f32 %v9905, 0.0
        %v9938 = vmax.f32 %v9906, 0.0
        %v9939 = vmax.f32 %v9907, 0.0
        %v9940 = vmax.f32 %v9908, 0.0
        %v9941 = vmax.f32 %v9909, 0.0
        %v9942 = vmax.f32 %v9910, 0.0
        %v9943 = vmax.f32 %v9911, 0.0
        %v9944 = vmax.f32 %v9912, 0.0
        %v9945 = vmax.f32 %v9913, 0.0
        %v9946 = vmax.f32 %v9914, 0.0
        %v9947 = vmax.f32 %v9915, 0.0
        %v9948 = vmax.f32 %v9916, 0.0
        %v9949 = vmax.f32 %v9917, 0.0
        %vm9950 = vcmask 261120
        %9951 = vst.msk [vmem:[%s469] sm:$0xff] %vm9950, %v9918
        %9952 = vst.msk [vmem:[%s469 + $0x8] sm:$0xff] %vm9950, %v9919
        %9953 = vst.msk [vmem:[%s469 + $0x10] sm:$0xff] %vm9950, %v9920
        %9954 = vst.msk [vmem:[%s469 + $0x18] sm:$0xff] %vm9950, %v9921
        %9955 = vst.msk [vmem:[%s469 + $0x20] sm:$0xff] %vm9950, %v9922
        %9956 = vst.msk [vmem:[%s469 + $0x28] sm:$0xff] %vm9950, %v9923
        %9957 = vst.msk [vmem:[%s469 + $0x30] sm:$0xff] %vm9950, %v9924
        %9958 = vst.msk [vmem:[%s469 + $0x38] sm:$0xff] %vm9950, %v9925
        %9959 = vst.msk [vmem:[%s469 + $0x40] sm:$0xff] %vm9950, %v9926
        %9960 = vst.msk [vmem:[%s469 + $0x48] sm:$0xff] %vm9950, %v9927
        %9961 = vst.msk [vmem:[%s469 + $0x50] sm:$0xff] %vm9950, %v9928
        %9962 = vst.msk [vmem:[%s469 + $0x58] sm:$0xff] %vm9950, %v9929
        %9963 = vst.msk [vmem:[%s469 + $0x60] sm:$0xff] %vm9950, %v9930
        %9964 = vst.msk [vmem:[%s469 + $0x68] sm:$0xff] %vm9950, %v9931
        %9965 = vst.msk [vmem:[%s469 + $0x70] sm:$0xff] %vm9950, %v9932
        %9966 = vst.msk [vmem:[%s469 + $0x78] sm:$0xff] %vm9950, %v9933
        %9967 = vst.msk [vmem:[%s469 + $0x80] sm:$0xff] %vm9950, %v9934
        %9968 = vst.msk [vmem:[%s469 + $0x88] sm:$0xff] %vm9950, %v9935
        %9969 = vst.msk [vmem:[%s469 + $0x90] sm:$0xff] %vm9950, %v9936
        %9970 = vst.msk [vmem:[%s469 + $0x98] sm:$0xff] %vm9950, %v9937
        %9971 = vst.msk [vmem:[%s469 + $0xa0] sm:$0xff] %vm9950, %v9938
        %9972 = vst.msk [vmem:[%s469 + $0xa8] sm:$0xff] %vm9950, %v9939
        %9973 = vst.msk [vmem:[%s469 + $0xb0] sm:$0xff] %vm9950, %v9940
        %9974 = vst.msk [vmem:[%s469 + $0xb8] sm:$0xff] %vm9950, %v9941
        %9975 = vst.msk [vmem:[%s469 + $0xc0] sm:$0xff] %vm9950, %v9942
        %9976 = vst.msk [vmem:[%s469 + $0xc8] sm:$0xff] %vm9950, %v9943
        %9977 = vst.msk [vmem:[%s469 + $0xd0] sm:$0xff] %vm9950, %v9944
        %9978 = vst.msk [vmem:[%s469 + $0xd8] sm:$0xff] %vm9950, %v9945
        %9979 = vst.msk [vmem:[%s469 + $0xe0] sm:$0xff] %vm9950, %v9946
        %9980 = vst.msk [vmem:[%s469 + $0xe8] sm:$0xff] %vm9950, %v9947
        %9981 = vst.msk [vmem:[%s469 + $0xf0] sm:$0xff] %vm9950, %v9948
        %9982 = vst.msk [vmem:[%s469 + $0xf8] sm:$0xff] %vm9950, %v9949
        %s9983 = sand.u32 %s287, 1
        %s9984 = scalar_lea.sflag [#allocation3], %s9983
        %s9985 = sand.u32 %s287, 1
        %s9986 = smul.addr %s9985, 256
        %s9987 = scalar_lea.vmem [#allocation2], %s9986
        // Predicated region
        $region61: #{tpu_custom_call.1} parent=59 // pred_check
          %p9988 = pneg %p297
        $region62: #{tpu_custom_call.1} parent=59 // pred_check_branch
          %9990 = sbr.rel (%p9988) target = $region64
        $region63: #{tpu_custom_call.1} parent=59 // pred_region
          %s9991 = smul.u32 16, %s29
          %s9993 = ssub.s32 4096, 4096
          %9994 = vsyncadd %s9984, %s9993
          %s9995 = smul.addr %s9991, 2
          %s9996 = smul.addr %s28, 32
          %s9997 = sadd.s32 %s9995, %s9996
          %s9998 = smul.addr %s9997, 128
          %s9999 = scalar_lea.hbm %s10, %s9998
          %s10000 = sshll.u32 %s9987, 4
          %s10001 = int_to_ptr.vmem [resolvable:$true] %s10000
          %10006 = dma.vmem_to_hbm [thread:$0]  %s10001, 4096, %s9999, %s9984, 128, 128, 8
        $region64: #{tpu_custom_call.1} parent=59 // pred_fallthru
          _
      $region60: #{tpu_custom_call.1} parent=5 // pred_fallthru
        _
      %p10007 = scmp.le.s32.totalorder 2, %s19
      // Predicated region
      $region65: #{tpu_custom_call.1} parent=5 // pred_check
        %p10008 = pneg %p10007
      $region66: #{tpu_custom_call.1} parent=5 // pred_check_branch
        %10010 = sbr.rel (%p10008) target = $region68
      $region67: #{tpu_custom_call.1} parent=5 // pred_region
        %s10011 = ssub.s32 %s19, 2
        // Predicated region
        $region69: #{tpu_custom_call.1} parent=67 // pred_check
          %p10012 = pneg %p303
        $region70: #{tpu_custom_call.1} parent=67 // pred_check_branch
          %10014 = sbr.rel (%p10012) target = $region72
        $region71: #{tpu_custom_call.1} parent=67 // pred_region
          %s10015 = sand.u32 %s288, 1
          %s10016 = scalar_lea.sflag [#allocation3], %s10015
          %s10017 = sand.u32 %s288, 1
          %s10018 = smul.addr %s10017, 256
          %s10019 = scalar_lea.vmem [#allocation2], %s10018
          %10020 = dma.done %s10016, 4096
        $region72: #{tpu_custom_call.1} parent=67 // pred_fallthru
          _
      $region68: #{tpu_custom_call.1} parent=5 // pred_fallthru
        _
    $region6: #{tpu_custom_call.1} parent=1 // loop_footer
      %s23 = sadd.s32 1, %s19
    $region7: #{tpu_custom_call.1} parent=1 // loop_footer_branch
      %18 = sbr.rel target = $region3
    $region8: #{tpu_custom_call.1} parent=1 // loop_exit
      _
    %10021 = vsyncpa [#allocation3], 1
    %s10022 = scalar_lea.sflag [#allocation3], 1
    %10023 = vsyncpa %s10022, 1

</llo_original>
